<compile_context>
chip_gen: v6e
topology: v6e:2x2x1
jax: 0.10.0
libtpu: 0.0.40
codegen_flags: <defaults>
</compile_context>

<pallas_src>
import functools

import jax
import jax.numpy as jnp
from jax.experimental import pallas as pl
from jax.experimental.pallas import tpu as pltpu


def _fused_kernel(eps, inv_hw,          # python floats -> compile-time literals
                  xse_ref,    # [1, Cse]       squeeze input (x583 flattened), f32, resident
                  w1_ref,     # [Cmid, Cse]    conv2d186 weight, bf16, resident
                  b1_ref,     # [Cmid, 1]      conv2d186 bias, f32, resident
                  x_ref,      # [Cmid, HW]     big feature map (x580), f32, resident
                  w2_ref,     # [Cblk, Cmid]   conv2d187 weight block, bf16, streamed
                  gamma_ref,  # [Cblk, 1]      BN weight block, f32, streamed
                  beta_ref,   # [Cblk, 1]      BN bias block, f32, streamed
                  out_ref):   # [Cblk, HW]     output block, f32
    # --- conv2d186 (1x1) + sigmoid: one gate value per mid channel.
    # Tiny contraction over Cse: VPU multiply + lane reduction in f32.
    # Recomputed per Cout block (cheap: Cmid x Cse mults).
    w1 = w1_ref[...].astype(jnp.float32)
    s = jnp.sum(w1 * xse_ref[...], axis=1, keepdims=True) + b1_ref[...]
    s = jax.nn.sigmoid(s)                                            # [Cmid, 1] f32

    # --- broadcast multiply over all spatial positions (lane broadcast), f32.
    y = x_ref[...] * s                                               # [Cmid, HW] f32

    # --- conv2d187 (1x1, no bias): K = Cmid contraction on the MXU.
    # bf16 operands, f32 accumulation.
    z = jnp.dot(w2_ref[...], y.astype(jnp.bfloat16),
                preferred_element_type=jnp.float32)                  # [Cblk, HW] f32

    # --- BatchNorm2d, training-mode batch stats (biased variance), two-pass.
    mean = jnp.sum(z, axis=1, keepdims=True) * inv_hw                # [Cblk, 1]
    zc = z - mean
    var = jnp.sum(zc * zc, axis=1, keepdims=True) * inv_hw           # [Cblk, 1]
    inv = jax.lax.rsqrt(var + eps)
    out_ref[...] = zc * (inv * gamma_ref[...]) + beta_ref[...]


def fused_se_conv_bn(x583, x580, w1, b1, w2, gamma, beta, eps=1e-3, nblk=2):
    """x583: [N, Cse, 1, 1]   x580: [N, Cmid, H, W]   -> [N, Cout, H, W]"""
    N, Cmid, H, W = x580.shape
    Cse = x583.shape[1]
    Cout = w2.shape[0]
    assert x583.shape == (N, Cse, 1, 1)
    assert w1.shape == (Cmid, Cse) and b1.shape == (Cmid,)
    assert w2.shape == (Cout, Cmid)
    # TODO(synk): SE-gate broadcast + channels-first flattening implemented for N == 1
    # (as in the reference module); batched inputs would need a per-sample gate.
    assert N == 1

    if Cout % nblk != 0:
        nblk = 1
    Cblk = Cout // nblk
    HW = H * W

    # All of the following are free reshapes of contiguous dims -- no transposes,
    # no extra HBM layout-copy kernels.
    x_cf = x580.reshape(Cmid, HW).astype(jnp.float32)
    xse = x583.reshape(1, Cse).astype(jnp.float32)
    w1_b = w1.astype(jnp.bfloat16)                               # [Cmid, Cse]
    b1_c = b1.reshape(Cmid, 1).astype(jnp.float32)
    w2_b = w2.astype(jnp.bfloat16).reshape(nblk, Cblk, Cmid)     # Cout split into blocks
    gamma_b = gamma.astype(jnp.float32).reshape(nblk, Cblk, 1)
    beta_b = beta.astype(jnp.float32).reshape(nblk, Cblk, 1)

    # Advisory cost hint for XLA scheduling around this tiny custom call.
    flops = 2 * Cout * Cmid * HW + 2 * nblk * Cmid * Cse + 8 * Cout * HW
    bytes_accessed = (xse.size * 4 + w1_b.size * 2 + b1_c.size * 4 + x_cf.size * 4
                      + w2_b.size * 2 + gamma_b.size * 4 + beta_b.size * 4
                      + Cout * HW * 4)
    transcendentals = nblk * Cmid + Cout

    out_blk = pl.pallas_call(
        functools.partial(_fused_kernel, float(eps), 1.0 / float(HW)),
        grid=(nblk,),
        out_shape=jax.ShapeDtypeStruct((nblk, Cblk, HW), jnp.float32),
        in_specs=[
            # Resident across the grid (same block index every step -> DMA'd once).
            pl.BlockSpec((1, Cse), lambda i: (0, 0)),            # xse
            pl.BlockSpec((Cmid, Cse), lambda i: (0, 0)),         # w1 (bf16)
            pl.BlockSpec((Cmid, 1), lambda i: (0, 0)),           # b1
            pl.BlockSpec((Cmid, HW), lambda i: (0, 0)),          # x  (feature map)
            # Streamed per Cout block (pipelined against compute).
            pl.BlockSpec((None, Cblk, Cmid), lambda i: (i, 0, 0)),  # w2 (bf16)
            pl.BlockSpec((None, Cblk, 1), lambda i: (i, 0, 0)),     # gamma
            pl.BlockSpec((None, Cblk, 1), lambda i: (i, 0, 0)),     # beta
        ],
        out_specs=pl.BlockSpec((None, Cblk, HW), lambda i: (i, 0, 0)),
        compiler_params=pltpu.CompilerParams(
            dimension_semantics=("parallel",)),                  # v7x: split across 2 TCs
        cost_estimate=pl.CostEstimate(flops=flops,
                                      transcendentals=transcendentals,
                                      bytes_accessed=bytes_accessed),
    )(xse, w1_b, b1_c, x_cf, w2_b, gamma_b, beta_b)

    # [nblk, Cblk, HW] -> [N, Cout, H, W] (free reshape)
    return out_blk.reshape(N, Cout, H, W)


def reference(x583, x580, w1, b1, w2, gamma, beta, eps=1e-3):
    """Pure-JAX f32 reference mirroring the PyTorch forward (training-mode BN)."""
    s = jax.nn.sigmoid(jnp.einsum("oc,nc->no", w1, x583[:, :, 0, 0]) + b1)   # [N, Cmid]
    y = x580 * s[:, :, None, None]
    z = jnp.einsum("oc,nchw->nohw", w2, y)                                   # [N, Cout, H, W]
    mean = jnp.mean(z, axis=(0, 2, 3), keepdims=True)
    var = jnp.mean((z - mean) ** 2, axis=(0, 2, 3), keepdims=True)
    return (z - mean) * jax.lax.rsqrt(var + eps) * gamma[None, :, None, None] \
        + beta[None, :, None, None]


if __name__ == "__main__":
    # Shapes implied by the module's forward.
    N, Cse, Cmid, Cout, H, W = 1, 86, 2064, 344, 7, 7

    key = jax.random.PRNGKey(0)
    k0, k1, k2, k3, k4, k5 = jax.random.split(key, 6)

    # Deterministic synthetic parameters (shapes from the module __init__).
    w1 = jax.random.normal(k0, (Cmid, Cse), jnp.float32) * 0.05      # conv2d186 weight (1x1)
    b1 = jax.random.normal(k1, (Cmid,), jnp.float32) * 0.05          # conv2d186 bias
    w2 = jax.random.normal(k2, (Cout, Cmid), jnp.float32) * 0.02     # conv2d187 weight (1x1)
    gamma = 1.0 + 0.1 * jax.random.normal(k3, (Cout,), jnp.float32)  # BN weight
    beta = 0.1 * jax.random.normal(k4, (Cout,), jnp.float32)         # BN bias

    # Deterministic example inputs.
    kx1, kx2 = jax.random.split(k5)
    x583 = jax.random.normal(kx1, (N, Cse, 1, 1), jnp.float32)
    x580 = jax.random.normal(kx2, (N, Cmid, H, W), jnp.float32)

    out = fused_se_conv_bn(x583, x580, w1, b1, w2, gamma, beta, eps=1e-3)
    out = jax.block_until_ready(out)

    assert out.shape == (N, Cout, H, W), out.shape

    ref = jax.block_until_ready(reference(x583, x580, w1, b1, w2, gamma, beta, eps=1e-3))
    assert bool(jnp.all(jnp.isfinite(out)))
    # Tolerance accounts for the bf16 MXU operands over the K=2064 contraction
    # (f32 accumulation); f32 reference above.
    assert bool(jnp.allclose(out, ref, rtol=2e-2, atol=2e-2)), \
        float(jnp.max(jnp.abs(out - ref)))

    print("KERNEL_OK")
</pallas_src>

<mosaic_0001>
module attributes {stable_mosaic.version = 11 : i64} {
  func.func @_fused_kernel(%arg0: i32, %arg1: memref<1x86xf32, #tpu.memory_space<vmem>>, %arg2: memref<2064x86xbf16, #tpu.memory_space<vmem>>, %arg3: memref<2064x1xf32, #tpu.memory_space<vmem>>, %arg4: memref<2064x49xf32, #tpu.memory_space<vmem>>, %arg5: memref<1x172x2064xbf16, #tpu.memory_space<vmem>>, %arg6: memref<1x172x1xf32, #tpu.memory_space<vmem>>, %arg7: memref<1x172x1xf32, #tpu.memory_space<vmem>>, %arg8: memref<1x172x49xf32, #tpu.memory_space<vmem>>) attributes {dimension_semantics = [#tpu.dimension_semantics<parallel>], iteration_bounds = array<i64: 2>, scalar_prefetch = 0 : i64, scratch_operands = 0 : i64, tpu.core_type = #tpu.core_type<tc>, window_params = [{pipeline_mode = #tpu.pipeline_mode<synchronous>, transform_indices = @transform_0, window_bounds = array<i64: 1, 86>}, {pipeline_mode = #tpu.pipeline_mode<synchronous>, transform_indices = @transform_1, window_bounds = array<i64: 2064, 86>}, {pipeline_mode = #tpu.pipeline_mode<synchronous>, transform_indices = @transform_2, window_bounds = array<i64: 2064, 1>}, {pipeline_mode = #tpu.pipeline_mode<synchronous>, transform_indices = @transform_3, window_bounds = array<i64: 2064, 49>}, {transform_indices = @transform_4, window_bounds = array<i64: 1, 172, 2064>}, {transform_indices = @transform_5, window_bounds = array<i64: 1, 172, 1>}, {transform_indices = @transform_6, window_bounds = array<i64: 1, 172, 1>}, {transform_indices = @transform_7, window_bounds = array<i64: 1, 172, 49>}]} {
    %c0 = arith.constant 0 : index
    %c0_0 = arith.constant 0 : index
    %0 = vector.load %arg2[%c0, %c0_0] : memref<2064x86xbf16, #tpu.memory_space<vmem>>, vector<2064x86xbf16>
    %1 = arith.extf %0 : vector<2064x86xbf16> to vector<2064x86xf32>
    %c0_1 = arith.constant 0 : index
    %c0_2 = arith.constant 0 : index
    %2 = vector.load %arg1[%c0_1, %c0_2] : memref<1x86xf32, #tpu.memory_space<vmem>>, vector<1x86xf32>
    %3 = vector.broadcast %2 : vector<1x86xf32> to vector<2064x86xf32>
    %4 = arith.mulf %1, %3 : vector<2064x86xf32>
    %cst = arith.constant dense<0.000000e+00> : vector<2064xf32>
    %5 = vector.multi_reduction <add>, %4, %cst [1] : vector<2064x86xf32> to vector<2064xf32>
    %6 = vector.shape_cast %5 : vector<2064xf32> to vector<2064x1xf32>
    %c0_3 = arith.constant 0 : index
    %c0_4 = arith.constant 0 : index
    %7 = vector.load %arg3[%c0_3, %c0_4] : memref<2064x1xf32, #tpu.memory_space<vmem>>, vector<2064x1xf32>
    %8 = arith.addf %6, %7 : vector<2064x1xf32>
    %9 = arith.negf %8 : vector<2064x1xf32>
    %10 = math.exp %9 : vector<2064x1xf32>
    %cst_5 = arith.constant 1.000000e+00 : f32
    %11 = vector.broadcast %cst_5 : f32 to vector<2064x1xf32>
    %12 = arith.addf %11, %10 : vector<2064x1xf32>
    %13 = arith.divf %11, %12 : vector<2064x1xf32>
    %c0_6 = arith.constant 0 : index
    %c0_7 = arith.constant 0 : index
    %14 = vector.load %arg4[%c0_6, %c0_7] : memref<2064x49xf32, #tpu.memory_space<vmem>>, vector<2064x49xf32>
    %15 = vector.broadcast %13 : vector<2064x1xf32> to vector<2064x49xf32>
    %16 = arith.mulf %14, %15 : vector<2064x49xf32>
    %c0_8 = arith.constant 0 : index
    %c0_9 = arith.constant 0 : index
    %c0_10 = arith.constant 0 : index
    %17 = vector.load %arg5[%c0_8, %c0_9, %c0_10] : memref<1x172x2064xbf16, #tpu.memory_space<vmem>>, vector<1x172x2064xbf16>
    %18 = vector.shape_cast %17 : vector<1x172x2064xbf16> to vector<172x2064xbf16>
    %19 = arith.truncf %16 : vector<2064x49xf32> to vector<2064x49xbf16>
    %cst_11 = arith.constant dense<0.000000e+00> : vector<172x49xf32>
    %20 = tpu.matmul %18, %19, %cst_11 {dimension_numbers = #tpu.dot_dimension_numbers<[1], [0], [0], [1], [0, 0, 1, 1], [], []>} : vector<172x2064xbf16>, vector<2064x49xbf16>, vector<172x49xf32> -> vector<172x49xf32>
    %cst_12 = arith.constant dense<0.000000e+00> : vector<172xf32>
    %21 = vector.multi_reduction <add>, %20, %cst_12 [1] : vector<172x49xf32> to vector<172xf32>
    %22 = vector.shape_cast %21 : vector<172xf32> to vector<172x1xf32>
    %cst_13 = arith.constant 0.0204081628 : f32
    %23 = vector.broadcast %cst_13 : f32 to vector<172x1xf32>
    %24 = arith.mulf %22, %23 : vector<172x1xf32>
    %25 = vector.broadcast %24 : vector<172x1xf32> to vector<172x49xf32>
    %26 = arith.subf %20, %25 : vector<172x49xf32>
    %27 = arith.mulf %26, %26 : vector<172x49xf32>
    %cst_14 = arith.constant dense<0.000000e+00> : vector<172xf32>
    %28 = vector.multi_reduction <add>, %27, %cst_14 [1] : vector<172x49xf32> to vector<172xf32>
    %29 = vector.shape_cast %28 : vector<172xf32> to vector<172x1xf32>
    %cst_15 = arith.constant 0.0204081628 : f32
    %30 = vector.broadcast %cst_15 : f32 to vector<172x1xf32>
    %31 = arith.mulf %29, %30 : vector<172x1xf32>
    %cst_16 = arith.constant 1.000000e-03 : f32
    %32 = vector.broadcast %cst_16 : f32 to vector<172x1xf32>
    %33 = arith.addf %31, %32 : vector<172x1xf32>
    %34 = math.rsqrt %33 : vector<172x1xf32>
    %c0_17 = arith.constant 0 : index
    %c0_18 = arith.constant 0 : index
    %c0_19 = arith.constant 0 : index
    %35 = vector.load %arg6[%c0_17, %c0_18, %c0_19] : memref<1x172x1xf32, #tpu.memory_space<vmem>>, vector<1x172x1xf32>
    %36 = vector.shape_cast %35 : vector<1x172x1xf32> to vector<172x1xf32>
    %37 = arith.mulf %34, %36 : vector<172x1xf32>
    %38 = vector.broadcast %37 : vector<172x1xf32> to vector<172x49xf32>
    %39 = arith.mulf %26, %38 : vector<172x49xf32>
    %c0_20 = arith.constant 0 : index
    %c0_21 = arith.constant 0 : index
    %c0_22 = arith.constant 0 : index
    %40 = vector.load %arg7[%c0_20, %c0_21, %c0_22] : memref<1x172x1xf32, #tpu.memory_space<vmem>>, vector<1x172x1xf32>
    %41 = vector.shape_cast %40 : vector<1x172x1xf32> to vector<172x1xf32>
    %42 = vector.broadcast %41 : vector<172x1xf32> to vector<172x49xf32>
    %43 = arith.addf %39, %42 : vector<172x49xf32>
    %c0_23 = arith.constant 0 : index
    %c0_24 = arith.constant 0 : index
    %c0_25 = arith.constant 0 : index
    %44 = vector.load %arg8[%c0_23, %c0_24, %c0_25] : memref<1x172x49xf32, #tpu.memory_space<vmem>>, vector<1x172x49xf32>
    %45 = vector.shape_cast %44 : vector<1x172x49xf32> to vector<172x49xf32>
    %46 = vector.shape_cast %43 : vector<172x49xf32> to vector<1x172x49xf32>
    tpu.vector_store %arg8[%c0_23, %c0_24, %c0_25], %46 {strides = array<i32>} : memref<1x172x49xf32, #tpu.memory_space<vmem>>, vector<1x172x49xf32>,
    return
  }
  func.func @transform_0(%arg0: i32) -> (i32, i32) {
    %c0_i32 = arith.constant 0 : i32
    %c0_i32_0 = arith.constant 0 : i32
    %c0_i32_1 = arith.constant 0 : i32
    return %c0_i32, %c0_i32_0 : i32, i32
  }
  func.func @transform_1(%arg0: i32) -> (i32, i32) {
    %c0_i32 = arith.constant 0 : i32
    %c0_i32_0 = arith.constant 0 : i32
    %c0_i32_1 = arith.constant 0 : i32
    return %c0_i32, %c0_i32_0 : i32, i32
  }
  func.func @transform_2(%arg0: i32) -> (i32, i32) {
    %c0_i32 = arith.constant 0 : i32
    %c0_i32_0 = arith.constant 0 : i32
    %c0_i32_1 = arith.constant 0 : i32
    return %c0_i32, %c0_i32_0 : i32, i32
  }
  func.func @transform_3(%arg0: i32) -> (i32, i32) {
    %c0_i32 = arith.constant 0 : i32
    %c0_i32_0 = arith.constant 0 : i32
    %c0_i32_1 = arith.constant 0 : i32
    return %c0_i32, %c0_i32_0 : i32, i32
  }
  func.func @transform_4(%arg0: i32) -> (i32, i32, i32) {
    %c0_i32 = arith.constant 0 : i32
    %c0_i32_0 = arith.constant 0 : i32
    %c0_i32_1 = arith.constant 0 : i32
    return %arg0, %c0_i32, %c0_i32_0 : i32, i32, i32
  }
  func.func @transform_5(%arg0: i32) -> (i32, i32, i32) {
    %c0_i32 = arith.constant 0 : i32
    %c0_i32_0 = arith.constant 0 : i32
    %c0_i32_1 = arith.constant 0 : i32
    return %arg0, %c0_i32, %c0_i32_0 : i32, i32, i32
  }
  func.func @transform_6(%arg0: i32) -> (i32, i32, i32) {
    %c0_i32 = arith.constant 0 : i32
    %c0_i32_0 = arith.constant 0 : i32
    %c0_i32_1 = arith.constant 0 : i32
    return %arg0, %c0_i32, %c0_i32_0 : i32, i32, i32
  }
  func.func @transform_7(%arg0: i32) -> (i32, i32, i32) {
    %c0_i32 = arith.constant 0 : i32
    %c0_i32_0 = arith.constant 0 : i32
    %c0_i32_1 = arith.constant 0 : i32
    return %arg0, %c0_i32, %c0_i32_0 : i32, i32, i32
  }
}

</mosaic_0001>

<llo_original>
// kernel: tpu_custom_call.1
$region0: #{tpu_custom_call.1}
  #allocation0 [shape = 'u32[]', space=smem, size = 0x4, offset = 0x4, fixed_abs, tag = 'smem constant byte address 0x4 - core index']
  #allocation1 [shape = 'u32[144,128]{1,0:T(1,128)}', space=vmem, size = 0x12000, scoped, tag = 'internal scratch']
  %s0 = inlined_call_operand.vmem [shape: f32[1,86], index: 0, kind: input, shape index: {}]
  %s1 = inlined_call_operand.vmem [shape: bf16[2064,86], index: 1, kind: input, shape index: {}]
  %s2 = inlined_call_operand.vmem [shape: f32[2064,1], index: 2, kind: input, shape index: {}]
  %s3 = inlined_call_operand.vmem [shape: f32[2064,49], index: 3, kind: input, shape index: {}]
  %s4 = inlined_call_operand.vmem [shape: bf16[2,172,2064], index: 4, kind: input, shape index: {}]
  %s5 = inlined_call_operand.vmem [shape: f32[2,172,1], index: 5, kind: input, shape index: {}]
  %s6 = inlined_call_operand.vmem [shape: f32[2,172,1], index: 6, kind: input, shape index: {}]
  %s7 = inlined_call_operand.vmem [shape: f32[2,172,49], index: 7, kind: output, shape index: {}]
  %s8 = sld [smem:[#allocation0]]
  $region61: #{tpu_custom_call.1} parent=0
    _
  %s10 = ssub.s32 1, %s8
  %s11 = scalar_select 0, %s10, %s8
  loop: start=0, step=1, limit=4
  $region2: #{tpu_custom_call.1} parent=0 // loop_pre_header
    _
  $region3: #{tpu_custom_call.1} parent=0 // loop_header
    %s13 = sphi 0, %s17
    %p14 = scmp.ge.s32.totalorder %s13, 4
    %s21 = sphi 0, %s21
    %s23 = sphi 0, %s21
    %s24 = sphi 0, %s23
    %s38 = sphi 0, %s24
    %s42 = sphi 0, %s42
    %s44 = sphi 0, %s42
    %s45 = sphi 0, %s44
    %s59 = sphi 0, %s45
    %s63 = sphi 0, %s63
    %s65 = sphi 0, %s63
    %s66 = sphi 0, %s65
    %s80 = sphi 0, %s66
    %s84 = sphi 0, %s84
    %s86 = sphi 0, %s84
    %s87 = sphi 0, %s86
    %s101 = sphi 0, %s87
    %s107 = sphi 0, %s109
    %s110 = sphi 0, %s107
    %s111 = sphi 0, %s110
    %s127 = sphi 0, %s111
    %s133 = sphi 0, %s135
    %s136 = sphi 0, %s133
    %s137 = sphi 0, %s136
    %s153 = sphi 0, %s137
    %s159 = sphi 0, %s161
    %s162 = sphi 0, %s159
    %s163 = sphi 0, %s162
    %s179 = sphi 0, %s163
    %s185 = sphi 0, %s187
    %s188 = sphi 0, %s185
    %s189 = sphi 0, %s188
    %s205 = sphi 0, %s189
  $region4: #{tpu_custom_call.1} parent=0 // loop_header_branch
    %16 = sbr.rel (%p14) target = $region8
  $region5: #{tpu_custom_call.1} parent=0 // loop_body
    %s18 = ssub.s32 %s13, 1
    %s19 = ssub.s32 %s13, 2
    %s20 = sadd.s32 %s13, 1
    %s22 = sadd.s32 %s21, 1
    %p25 = scmp.eq.s32.totalorder %s13, 1
    %p26 = scmp.ne.s32.totalorder %s21, %s23
    %p27 = scmp.eq.s32.totalorder %s13, 0
    %p28 = por %p26, %p27
    %p29 = scmp.ne.s32.totalorder %s21, %s23
    %p30 = scmp.eq.s32.totalorder %s18, 1
    %p31 = por %p29, %p30
    %p32 = scmp.ne.s32.totalorder %s23, %s24
    %p33 = scmp.eq.s32.totalorder %s18, 0
    %p34 = por %p32, %p33
    %p35 = scmp.ne.s32.totalorder %s23, %s24
    %p36 = scmp.eq.s32.totalorder %s19, 1
    %p37 = por %p35, %p36
    %p39 = scmp.ne.s32.totalorder %s24, %s38
    %p40 = scmp.eq.s32.totalorder %s19, 0
    %p41 = por %p39, %p40
    %s43 = sadd.s32 %s42, 1
    %p46 = scmp.eq.s32.totalorder %s13, 1
    %p47 = scmp.ne.s32.totalorder %s42, %s44
    %p48 = scmp.eq.s32.totalorder %s13, 0
    %p49 = por %p47, %p48
    %p50 = scmp.ne.s32.totalorder %s42, %s44
    %p51 = scmp.eq.s32.totalorder %s18, 1
    %p52 = por %p50, %p51
    %p53 = scmp.ne.s32.totalorder %s44, %s45
    %p54 = scmp.eq.s32.totalorder %s18, 0
    %p55 = por %p53, %p54
    %p56 = scmp.ne.s32.totalorder %s44, %s45
    %p57 = scmp.eq.s32.totalorder %s19, 1
    %p58 = por %p56, %p57
    %p60 = scmp.ne.s32.totalorder %s45, %s59
    %p61 = scmp.eq.s32.totalorder %s19, 0
    %p62 = por %p60, %p61
    %s64 = sadd.s32 %s63, 1
    %p67 = scmp.eq.s32.totalorder %s13, 1
    %p68 = scmp.ne.s32.totalorder %s63, %s65
    %p69 = scmp.eq.s32.totalorder %s13, 0
    %p70 = por %p68, %p69
    %p71 = scmp.ne.s32.totalorder %s63, %s65
    %p72 = scmp.eq.s32.totalorder %s18, 1
    %p73 = por %p71, %p72
    %p74 = scmp.ne.s32.totalorder %s65, %s66
    %p75 = scmp.eq.s32.totalorder %s18, 0
    %p76 = por %p74, %p75
    %p77 = scmp.ne.s32.totalorder %s65, %s66
    %p78 = scmp.eq.s32.totalorder %s19, 1
    %p79 = por %p77, %p78
    %p81 = scmp.ne.s32.totalorder %s66, %s80
    %p82 = scmp.eq.s32.totalorder %s19, 0
    %p83 = por %p81, %p82
    %s85 = sadd.s32 %s84, 1
    %p88 = scmp.eq.s32.totalorder %s13, 1
    %p89 = scmp.ne.s32.totalorder %s84, %s86
    %p90 = scmp.eq.s32.totalorder %s13, 0
    %p91 = por %p89, %p90
    %p92 = scmp.ne.s32.totalorder %s84, %s86
    %p93 = scmp.eq.s32.totalorder %s18, 1
    %p94 = por %p92, %p93
    %p95 = scmp.ne.s32.totalorder %s86, %s87
    %p96 = scmp.eq.s32.totalorder %s18, 0
    %p97 = por %p95, %p96
    %p98 = scmp.ne.s32.totalorder %s86, %s87
    %p99 = scmp.eq.s32.totalorder %s19, 1
    %p100 = por %p98, %p99
    %p102 = scmp.ne.s32.totalorder %s87, %s101
    %p103 = scmp.eq.s32.totalorder %s19, 0
    %p104 = por %p102, %p103
    %s105 = ssub.s32 %s13, %s20
    %p106 = scmp.eq.s32.totalorder %s105, 0
    %s108 = sadd.s32 %s107, 1
    %s109 = scalar_select %p106, %s107, %s108
    %p112 = pneg %p106
    %p113 = scmp.eq.s32.totalorder %s13, 1
    %p114 = por %p112, %p113
    %p115 = scmp.ne.s32.totalorder %s107, %s110
    %p116 = scmp.eq.s32.totalorder %s13, 0
    %p117 = por %p115, %p116
    %p118 = scmp.ne.s32.totalorder %s107, %s110
    %p119 = scmp.eq.s32.totalorder %s18, 1
    %p120 = por %p118, %p119
    %p121 = scmp.ne.s32.totalorder %s110, %s111
    %p122 = scmp.eq.s32.totalorder %s18, 0
    %p123 = por %p121, %p122
    %p124 = scmp.ne.s32.totalorder %s110, %s111
    %p125 = scmp.eq.s32.totalorder %s19, 1
    %p126 = por %p124, %p125
    %p128 = scmp.ne.s32.totalorder %s111, %s127
    %p129 = scmp.eq.s32.totalorder %s19, 0
    %p130 = por %p128, %p129
    %s131 = ssub.s32 %s13, %s20
    %p132 = scmp.eq.s32.totalorder %s131, 0
    %s134 = sadd.s32 %s133, 1
    %s135 = scalar_select %p132, %s133, %s134
    %p138 = pneg %p132
    %p139 = scmp.eq.s32.totalorder %s13, 1
    %p140 = por %p138, %p139
    %p141 = scmp.ne.s32.totalorder %s133, %s136
    %p142 = scmp.eq.s32.totalorder %s13, 0
    %p143 = por %p141, %p142
    %p144 = scmp.ne.s32.totalorder %s133, %s136
    %p145 = scmp.eq.s32.totalorder %s18, 1
    %p146 = por %p144, %p145
    %p147 = scmp.ne.s32.totalorder %s136, %s137
    %p148 = scmp.eq.s32.totalorder %s18, 0
    %p149 = por %p147, %p148
    %p150 = scmp.ne.s32.totalorder %s136, %s137
    %p151 = scmp.eq.s32.totalorder %s19, 1
    %p152 = por %p150, %p151
    %p154 = scmp.ne.s32.totalorder %s137, %s153
    %p155 = scmp.eq.s32.totalorder %s19, 0
    %p156 = por %p154, %p155
    %s157 = ssub.s32 %s13, %s20
    %p158 = scmp.eq.s32.totalorder %s157, 0
    %s160 = sadd.s32 %s159, 1
    %s161 = scalar_select %p158, %s159, %s160
    %p164 = pneg %p158
    %p165 = scmp.eq.s32.totalorder %s13, 1
    %p166 = por %p164, %p165
    %p167 = scmp.ne.s32.totalorder %s159, %s162
    %p168 = scmp.eq.s32.totalorder %s13, 0
    %p169 = por %p167, %p168
    %p170 = scmp.ne.s32.totalorder %s159, %s162
    %p171 = scmp.eq.s32.totalorder %s18, 1
    %p172 = por %p170, %p171
    %p173 = scmp.ne.s32.totalorder %s162, %s163
    %p174 = scmp.eq.s32.totalorder %s18, 0
    %p175 = por %p173, %p174
    %p176 = scmp.ne.s32.totalorder %s162, %s163
    %p177 = scmp.eq.s32.totalorder %s19, 1
    %p178 = por %p176, %p177
    %p180 = scmp.ne.s32.totalorder %s163, %s179
    %p181 = scmp.eq.s32.totalorder %s19, 0
    %p182 = por %p180, %p181
    %s183 = ssub.s32 %s13, %s20
    %p184 = scmp.eq.s32.totalorder %s183, 0
    %s186 = sadd.s32 %s185, 1
    %s187 = scalar_select %p184, %s185, %s186
    %p190 = pneg %p184
    %p191 = scmp.eq.s32.totalorder %s13, 1
    %p192 = por %p190, %p191
    %p193 = scmp.ne.s32.totalorder %s185, %s188
    %p194 = scmp.eq.s32.totalorder %s13, 0
    %p195 = por %p193, %p194
    %p196 = scmp.ne.s32.totalorder %s185, %s188
    %p197 = scmp.eq.s32.totalorder %s18, 1
    %p198 = por %p196, %p197
    %p199 = scmp.ne.s32.totalorder %s188, %s189
    %p200 = scmp.eq.s32.totalorder %s18, 0
    %p201 = por %p199, %p200
    %p202 = scmp.ne.s32.totalorder %s188, %s189
    %p203 = scmp.eq.s32.totalorder %s19, 1
    %p204 = por %p202, %p203
    %p206 = scmp.ne.s32.totalorder %s189, %s205
    %p207 = scmp.eq.s32.totalorder %s19, 0
    %p208 = por %p206, %p207
    %p209 = scmp.le.s32.totalorder 1, %s13
    %p210 = scmp.lt.s32.totalorder %s13, 3
    %p211 = pnand %p209, %p210
    %p212 = pneg %p211
    // Predicated region
    $region9: #{tpu_custom_call.1} parent=5 // pred_check
      _
    $region10: #{tpu_custom_call.1} parent=5 // pred_check_branch
      %214 = sbr.rel (%p211) target = $region12
    $region11: #{tpu_custom_call.1} parent=5 // pred_region
      %s215 = ssub.s32 %s13, 1
      // Predicated region
      $region13: #{tpu_custom_call.1} parent=11 // pred_check
        %p216 = pneg %p34
      $region14: #{tpu_custom_call.1} parent=11 // pred_check_branch
        %218 = sbr.rel (%p216) target = $region16
      $region15: #{tpu_custom_call.1} parent=11 // pred_region
        _
      $region16: #{tpu_custom_call.1} parent=11 // pred_fallthru
        _
      // Predicated region
      $region17: #{tpu_custom_call.1} parent=11 // pred_check
        %p219 = pneg %p55
      $region18: #{tpu_custom_call.1} parent=11 // pred_check_branch
        %221 = sbr.rel (%p219) target = $region20
      $region19: #{tpu_custom_call.1} parent=11 // pred_region
        _
      $region20: #{tpu_custom_call.1} parent=11 // pred_fallthru
        _
      // Predicated region
      $region21: #{tpu_custom_call.1} parent=11 // pred_check
        %p222 = pneg %p76
      $region22: #{tpu_custom_call.1} parent=11 // pred_check_branch
        %224 = sbr.rel (%p222) target = $region24
      $region23: #{tpu_custom_call.1} parent=11 // pred_region
        _
      $region24: #{tpu_custom_call.1} parent=11 // pred_fallthru
        _
      // Predicated region
      $region25: #{tpu_custom_call.1} parent=11 // pred_check
        %p225 = pneg %p97
      $region26: #{tpu_custom_call.1} parent=11 // pred_check_branch
        %227 = sbr.rel (%p225) target = $region28
      $region27: #{tpu_custom_call.1} parent=11 // pred_region
        _
      $region28: #{tpu_custom_call.1} parent=11 // pred_fallthru
        _
    $region12: #{tpu_custom_call.1} parent=5 // pred_fallthru
      _
    %p228 = scmp.lt.s32.totalorder %s13, 2
    // Predicated region
    $region29: #{tpu_custom_call.1} parent=5 // pred_check
      %p229 = pneg %p228
    $region30: #{tpu_custom_call.1} parent=5 // pred_check_branch
      %231 = sbr.rel (%p229) target = $region32
    $region31: #{tpu_custom_call.1} parent=5 // pred_region
      // Predicated region
      $region33: #{tpu_custom_call.1} parent=31 // pred_check
        %p232 = pneg %p117
      $region34: #{tpu_custom_call.1} parent=31 // pred_check_branch
        %234 = sbr.rel (%p232) target = $region36
      $region35: #{tpu_custom_call.1} parent=31 // pred_region
        %p235 = scmp.lt.s32.totalorder %s13, 1
        %s236 = scalar_select %p235, %s13, 1
        %s237 = smul.addr %s236, 374
        %s238 = smul.addr %s237, 4
        %s239 = scalar_lea.vmem %s4, %s238
      $region36: #{tpu_custom_call.1} parent=31 // pred_fallthru
        _
      // Predicated region
      $region37: #{tpu_custom_call.1} parent=31 // pred_check
        %p240 = pneg %p143
      $region38: #{tpu_custom_call.1} parent=31 // pred_check_branch
        %242 = sbr.rel (%p240) target = $region40
      $region39: #{tpu_custom_call.1} parent=31 // pred_region
        %p243 = scmp.lt.s32.totalorder %s13, 1
        %s244 = scalar_select %p243, %s13, 1
        %s245 = smul.addr %s244, 22
        %s246 = smul.addr %s245, 8
        %s247 = scalar_lea.vmem %s5, %s246
      $region40: #{tpu_custom_call.1} parent=31 // pred_fallthru
        _
      // Predicated region
      $region41: #{tpu_custom_call.1} parent=31 // pred_check
        %p248 = pneg %p169
      $region42: #{tpu_custom_call.1} parent=31 // pred_check_branch
        %250 = sbr.rel (%p248) target = $region44
      $region43: #{tpu_custom_call.1} parent=31 // pred_region
        %p251 = scmp.lt.s32.totalorder %s13, 1
        %s252 = scalar_select %p251, %s13, 1
        %s253 = smul.addr %s252, 22
        %s254 = smul.addr %s253, 8
        %s255 = scalar_lea.vmem %s6, %s254
      $region44: #{tpu_custom_call.1} parent=31 // pred_fallthru
        _
    $region32: #{tpu_custom_call.1} parent=5 // pred_fallthru
      _
    %p256 = scmp.le.s32.totalorder 1, %s13
    %p257 = scmp.lt.s32.totalorder %s13, 3
    %p258 = pnand %p256, %p257
    %p259 = pneg %p258
    // Predicated region
    $region45: #{tpu_custom_call.1} parent=5 // pred_check
      _
    $region46: #{tpu_custom_call.1} parent=5 // pred_check_branch
      %261 = sbr.rel (%p258) target = $region48
    $region47: #{tpu_custom_call.1} parent=5 // pred_region
      %s262 = ssub.s32 %s13, 1
      %p263 = pneg %p34
      %p264 = pneg %p31
      %p265 = pneg %p55
      %p266 = pneg %p52
      %p267 = pneg %p76
      %p268 = pneg %p73
      %p269 = pneg %p97
      %p270 = pneg %p94
      %p271 = scmp.lt.s32.totalorder %s18, 1
      %s272 = scalar_select %p271, %s18, 1
      %s273 = smul.addr %s272, 374
      %s274 = smul.addr %s273, 4
      %s275 = scalar_lea.vmem %s4, %s274
      %p276 = pneg %p123
      %p277 = pneg %p120
      %p278 = scmp.lt.s32.totalorder %s18, 1
      %s279 = scalar_select %p278, %s18, 1
      %s280 = smul.addr %s279, 22
      %s281 = smul.addr %s280, 8
      %s282 = scalar_lea.vmem %s5, %s281
      %p283 = pneg %p149
      %p284 = pneg %p146
      %p285 = scmp.lt.s32.totalorder %s18, 1
      %s286 = scalar_select %p285, %s18, 1
      %s287 = smul.addr %s286, 22
      %s288 = smul.addr %s287, 8
      %s289 = scalar_lea.vmem %s6, %s288
      %p290 = pneg %p175
      %p291 = pneg %p172
      %p292 = pneg %p201
      %p293 = pneg %p198
      %p294 = scmp.lt.s32.totalorder %s18, 1
      %s295 = scalar_select %p294, %s18, 1
      %s296 = smul.addr %s295, 22
      %s297 = smul.addr %s296, 8
      %s298 = scalar_lea.vmem %s7, %s297
      %p299 = scmp.lt.s32.totalorder %s18, 1
      %s300 = scalar_select %p299, %s18, 1
      %s301 = smul.addr %s300, 374
      %s302 = smul.addr %s301, 4
      %s303 = scalar_lea.vmem %s4, %s302
      %p304 = scmp.lt.s32.totalorder %s18, 1
      %s305 = scalar_select %p304, %s18, 1
      %s306 = smul.addr %s305, 22
      %s307 = smul.addr %s306, 8
      %s308 = scalar_lea.vmem %s5, %s307
      %p309 = scmp.lt.s32.totalorder %s18, 1
      %s310 = scalar_select %p309, %s18, 1
      %s311 = smul.addr %s310, 22
      %s312 = smul.addr %s311, 8
      %s313 = scalar_lea.vmem %s6, %s312
      %p314 = scmp.lt.s32.totalorder %s18, 1
      %s315 = scalar_select %p314, %s18, 1
      %s316 = smul.addr %s315, 22
      %s317 = smul.addr %s316, 8
      %s318 = scalar_lea.vmem %s7, %s317
      %v320 = vld [vmem:[%s1] sm:$0xf]
      %v321 = vld [vmem:[%s1 + $0x4] sm:$0xf]
      %v322 = vld [vmem:[%s1 + $0x8] sm:$0xf]
      %v323 = vld [vmem:[%s1 + $0xc] sm:$0xf]
      %v324 = vld [vmem:[%s1 + $0x10] sm:$0xf]
      %v325 = vld [vmem:[%s1 + $0x14] sm:$0xf]
      %v326 = vld [vmem:[%s1 + $0x18] sm:$0xf]
      %v327 = vld [vmem:[%s1 + $0x1c] sm:$0xf]
      %v328 = vld [vmem:[%s1 + $0x20] sm:$0xf]
      %v329 = vld [vmem:[%s1 + $0x24] sm:$0xf]
      %v330 = vld [vmem:[%s1 + $0x28] sm:$0xf]
      %v331 = vld [vmem:[%s1 + $0x2c] sm:$0xf]
      %v332 = vld [vmem:[%s1 + $0x30] sm:$0xf]
      %v333 = vld [vmem:[%s1 + $0x34] sm:$0xf]
      %v334 = vld [vmem:[%s1 + $0x38] sm:$0xf]
      %v335 = vld [vmem:[%s1 + $0x3c] sm:$0xf]
      %v336 = vld [vmem:[%s1 + $0x40] sm:$0xf]
      %v337 = vld [vmem:[%s1 + $0x44] sm:$0xf]
      %v338 = vld [vmem:[%s1 + $0x48] sm:$0xf]
      %v339 = vld [vmem:[%s1 + $0x4c] sm:$0xf]
      %v340 = vld [vmem:[%s1 + $0x50] sm:$0xf]
      %v341 = vld [vmem:[%s1 + $0x54] sm:$0xf]
      %v342 = vld [vmem:[%s1 + $0x58] sm:$0xf]
      %v343 = vld [vmem:[%s1 + $0x5c] sm:$0xf]
      %v344 = vld [vmem:[%s1 + $0x60] sm:$0xf]
      %v345 = vld [vmem:[%s1 + $0x64] sm:$0xf]
      %v346 = vld [vmem:[%s1 + $0x68] sm:$0xf]
      %v347 = vld [vmem:[%s1 + $0x6c] sm:$0xf]
      %v348 = vld [vmem:[%s1 + $0x70] sm:$0xf]
      %v349 = vld [vmem:[%s1 + $0x74] sm:$0xf]
      %v350 = vld [vmem:[%s1 + $0x78] sm:$0xf]
      %v351 = vld [vmem:[%s1 + $0x7c] sm:$0xf]
      %v352 = vld [vmem:[%s1 + $0x80] sm:$0xf]
      %v353 = vld [vmem:[%s1 + $0x84] sm:$0xf]
      %v354 = vld [vmem:[%s1 + $0x88] sm:$0xf]
      %v355 = vld [vmem:[%s1 + $0x8c] sm:$0xf]
      %v356 = vld [vmem:[%s1 + $0x90] sm:$0xf]
      %v357 = vld [vmem:[%s1 + $0x94] sm:$0xf]
      %v358 = vld [vmem:[%s1 + $0x98] sm:$0xf]
      %v359 = vld [vmem:[%s1 + $0x9c] sm:$0xf]
      %v360 = vld [vmem:[%s1 + $0xa0] sm:$0xf]
      %v361 = vld [vmem:[%s1 + $0xa4] sm:$0xf]
      %v362 = vld [vmem:[%s1 + $0xa8] sm:$0xf]
      %v363 = vld [vmem:[%s1 + $0xac] sm:$0xf]
      %v364 = vld [vmem:[%s1 + $0xb0] sm:$0xf]
      %v365 = vld [vmem:[%s1 + $0xb4] sm:$0xf]
      %v366 = vld [vmem:[%s1 + $0xb8] sm:$0xf]
      %v367 = vld [vmem:[%s1 + $0xbc] sm:$0xf]
      %v368 = vld [vmem:[%s1 + $0xc0] sm:$0xf]
      %v369 = vld [vmem:[%s1 + $0xc4] sm:$0xf]
      %v370 = vld [vmem:[%s1 + $0xc8] sm:$0xf]
      %v371 = vld [vmem:[%s1 + $0xcc] sm:$0xf]
      %v372 = vld [vmem:[%s1 + $0xd0] sm:$0xf]
      %v373 = vld [vmem:[%s1 + $0xd4] sm:$0xf]
      %v374 = vld [vmem:[%s1 + $0xd8] sm:$0xf]
      %v375 = vld [vmem:[%s1 + $0xdc] sm:$0xf]
      %v376 = vld [vmem:[%s1 + $0xe0] sm:$0xf]
      %v377 = vld [vmem:[%s1 + $0xe4] sm:$0xf]
      %v378 = vld [vmem:[%s1 + $0xe8] sm:$0xf]
      %v379 = vld [vmem:[%s1 + $0xec] sm:$0xf]
      %v380 = vld [vmem:[%s1 + $0xf0] sm:$0xf]
      %v381 = vld [vmem:[%s1 + $0xf4] sm:$0xf]
      %v382 = vld [vmem:[%s1 + $0xf8] sm:$0xf]
      %v383 = vld [vmem:[%s1 + $0xfc] sm:$0xf]
      %v384 = vld [vmem:[%s1 + $0x100] sm:$0xf]
      %v385 = vld [vmem:[%s1 + $0x104] sm:$0xf]
      %v386 = vld [vmem:[%s1 + $0x108] sm:$0xf]
      %v387 = vld [vmem:[%s1 + $0x10c] sm:$0xf]
      %v388 = vld [vmem:[%s1 + $0x110] sm:$0xf]
      %v389 = vld [vmem:[%s1 + $0x114] sm:$0xf]
      %v390 = vld [vmem:[%s1 + $0x118] sm:$0xf]
      %v391 = vld [vmem:[%s1 + $0x11c] sm:$0xf]
      %v392 = vld [vmem:[%s1 + $0x120] sm:$0xf]
      %v393 = vld [vmem:[%s1 + $0x124] sm:$0xf]
      %v394 = vld [vmem:[%s1 + $0x128] sm:$0xf]
      %v395 = vld [vmem:[%s1 + $0x12c] sm:$0xf]
      %v396 = vld [vmem:[%s1 + $0x130] sm:$0xf]
      %v397 = vld [vmem:[%s1 + $0x134] sm:$0xf]
      %v398 = vld [vmem:[%s1 + $0x138] sm:$0xf]
      %v399 = vld [vmem:[%s1 + $0x13c] sm:$0xf]
      %v400 = vld [vmem:[%s1 + $0x140] sm:$0xf]
      %v401 = vld [vmem:[%s1 + $0x144] sm:$0xf]
      %v402 = vld [vmem:[%s1 + $0x148] sm:$0xf]
      %v403 = vld [vmem:[%s1 + $0x14c] sm:$0xf]
      %v404 = vld [vmem:[%s1 + $0x150] sm:$0xf]
      %v405 = vld [vmem:[%s1 + $0x154] sm:$0xf]
      %v406 = vld [vmem:[%s1 + $0x158] sm:$0xf]
      %v407 = vld [vmem:[%s1 + $0x15c] sm:$0xf]
      %v408 = vld [vmem:[%s1 + $0x160] sm:$0xf]
      %v409 = vld [vmem:[%s1 + $0x164] sm:$0xf]
      %v410 = vld [vmem:[%s1 + $0x168] sm:$0xf]
      %v411 = vld [vmem:[%s1 + $0x16c] sm:$0xf]
      %v412 = vld [vmem:[%s1 + $0x170] sm:$0xf]
      %v413 = vld [vmem:[%s1 + $0x174] sm:$0xf]
      %v414 = vld [vmem:[%s1 + $0x178] sm:$0xf]
      %v415 = vld [vmem:[%s1 + $0x17c] sm:$0xf]
      %v416 = vld [vmem:[%s1 + $0x180] sm:$0xf]
      %v417 = vld [vmem:[%s1 + $0x184] sm:$0xf]
      %v418 = vld [vmem:[%s1 + $0x188] sm:$0xf]
      %v419 = vld [vmem:[%s1 + $0x18c] sm:$0xf]
      %v420 = vld [vmem:[%s1 + $0x190] sm:$0xf]
      %v421 = vld [vmem:[%s1 + $0x194] sm:$0xf]
      %v422 = vld [vmem:[%s1 + $0x198] sm:$0xf]
      %v423 = vld [vmem:[%s1 + $0x19c] sm:$0xf]
      %v424 = vld [vmem:[%s1 + $0x1a0] sm:$0xf]
      %v425 = vld [vmem:[%s1 + $0x1a4] sm:$0xf]
      %v426 = vld [vmem:[%s1 + $0x1a8] sm:$0xf]
      %v427 = vld [vmem:[%s1 + $0x1ac] sm:$0xf]
      %v428 = vld [vmem:[%s1 + $0x1b0] sm:$0xf]
      %v429 = vld [vmem:[%s1 + $0x1b4] sm:$0xf]
      %v430 = vld [vmem:[%s1 + $0x1b8] sm:$0xf]
      %v431 = vld [vmem:[%s1 + $0x1bc] sm:$0xf]
      %v432 = vld [vmem:[%s1 + $0x1c0] sm:$0xf]
      %v433 = vld [vmem:[%s1 + $0x1c4] sm:$0xf]
      %v434 = vld [vmem:[%s1 + $0x1c8] sm:$0xf]
      %v435 = vld [vmem:[%s1 + $0x1cc] sm:$0xf]
      %v436 = vld [vmem:[%s1 + $0x1d0] sm:$0xf]
      %v437 = vld [vmem:[%s1 + $0x1d4] sm:$0xf]
      %v438 = vld [vmem:[%s1 + $0x1d8] sm:$0xf]
      %v439 = vld [vmem:[%s1 + $0x1dc] sm:$0xf]
      %v440 = vld [vmem:[%s1 + $0x1e0] sm:$0xf]
      %v441 = vld [vmem:[%s1 + $0x1e4] sm:$0xf]
      %v442 = vld [vmem:[%s1 + $0x1e8] sm:$0xf]
      %v443 = vld [vmem:[%s1 + $0x1ec] sm:$0xf]
      %v444 = vld [vmem:[%s1 + $0x1f0] sm:$0xf]
      %v445 = vld [vmem:[%s1 + $0x1f4] sm:$0xf]
      %v446 = vld [vmem:[%s1 + $0x1f8] sm:$0xf]
      %v447 = vld [vmem:[%s1 + $0x1fc] sm:$0xf]
      %v448 = vld [vmem:[%s1 + $0x200] sm:$0xf]
      %v449 = vld [vmem:[%s1 + $0x204] sm:$0xf]
      %v450 = vld [vmem:[%s1 + $0x208] sm:$0xf]
      %v451 = vld [vmem:[%s1 + $0x20c] sm:$0xf]
      %v452 = vld [vmem:[%s1 + $0x210] sm:$0xf]
      %v453 = vld [vmem:[%s1 + $0x214] sm:$0xf]
      %v454 = vld [vmem:[%s1 + $0x218] sm:$0xf]
      %v455 = vld [vmem:[%s1 + $0x21c] sm:$0xf]
      %v456 = vld [vmem:[%s1 + $0x220] sm:$0xf]
      %v457 = vld [vmem:[%s1 + $0x224] sm:$0xf]
      %v458 = vld [vmem:[%s1 + $0x228] sm:$0xf]
      %v459 = vld [vmem:[%s1 + $0x22c] sm:$0xf]
      %v460 = vld [vmem:[%s1 + $0x230] sm:$0xf]
      %v461 = vld [vmem:[%s1 + $0x234] sm:$0xf]
      %v462 = vld [vmem:[%s1 + $0x238] sm:$0xf]
      %v463 = vld [vmem:[%s1 + $0x23c] sm:$0xf]
      %v464 = vld [vmem:[%s1 + $0x240] sm:$0xf]
      %v465 = vld [vmem:[%s1 + $0x244] sm:$0xf]
      %v466 = vld [vmem:[%s1 + $0x248] sm:$0xf]
      %v467 = vld [vmem:[%s1 + $0x24c] sm:$0xf]
      %v468 = vld [vmem:[%s1 + $0x250] sm:$0xf]
      %v469 = vld [vmem:[%s1 + $0x254] sm:$0xf]
      %v470 = vld [vmem:[%s1 + $0x258] sm:$0xf]
      %v471 = vld [vmem:[%s1 + $0x25c] sm:$0xf]
      %v472 = vld [vmem:[%s1 + $0x260] sm:$0xf]
      %v473 = vld [vmem:[%s1 + $0x264] sm:$0xf]
      %v474 = vld [vmem:[%s1 + $0x268] sm:$0xf]
      %v475 = vld [vmem:[%s1 + $0x26c] sm:$0xf]
      %v476 = vld [vmem:[%s1 + $0x270] sm:$0xf]
      %v477 = vld [vmem:[%s1 + $0x274] sm:$0xf]
      %v478 = vld [vmem:[%s1 + $0x278] sm:$0xf]
      %v479 = vld [vmem:[%s1 + $0x27c] sm:$0xf]
      %v480 = vld [vmem:[%s1 + $0x280] sm:$0xf]
      %v481 = vld [vmem:[%s1 + $0x284] sm:$0xf]
      %v482 = vld [vmem:[%s1 + $0x288] sm:$0xf]
      %v483 = vld [vmem:[%s1 + $0x28c] sm:$0xf]
      %v484 = vld [vmem:[%s1 + $0x290] sm:$0xf]
      %v485 = vld [vmem:[%s1 + $0x294] sm:$0xf]
      %v486 = vld [vmem:[%s1 + $0x298] sm:$0xf]
      %v487 = vld [vmem:[%s1 + $0x29c] sm:$0xf]
      %v488 = vld [vmem:[%s1 + $0x2a0] sm:$0xf]
      %v489 = vld [vmem:[%s1 + $0x2a4] sm:$0xf]
      %v490 = vld [vmem:[%s1 + $0x2a8] sm:$0xf]
      %v491 = vld [vmem:[%s1 + $0x2ac] sm:$0xf]
      %v492 = vld [vmem:[%s1 + $0x2b0] sm:$0xf]
      %v493 = vld [vmem:[%s1 + $0x2b4] sm:$0xf]
      %v494 = vld [vmem:[%s1 + $0x2b8] sm:$0xf]
      %v495 = vld [vmem:[%s1 + $0x2bc] sm:$0xf]
      %v496 = vld [vmem:[%s1 + $0x2c0] sm:$0xf]
      %v497 = vld [vmem:[%s1 + $0x2c4] sm:$0xf]
      %v498 = vld [vmem:[%s1 + $0x2c8] sm:$0xf]
      %v499 = vld [vmem:[%s1 + $0x2cc] sm:$0xf]
      %v500 = vld [vmem:[%s1 + $0x2d0] sm:$0xf]
      %v501 = vld [vmem:[%s1 + $0x2d4] sm:$0xf]
      %v502 = vld [vmem:[%s1 + $0x2d8] sm:$0xf]
      %v503 = vld [vmem:[%s1 + $0x2dc] sm:$0xf]
      %v504 = vld [vmem:[%s1 + $0x2e0] sm:$0xf]
      %v505 = vld [vmem:[%s1 + $0x2e4] sm:$0xf]
      %v506 = vld [vmem:[%s1 + $0x2e8] sm:$0xf]
      %v507 = vld [vmem:[%s1 + $0x2ec] sm:$0xf]
      %v508 = vld [vmem:[%s1 + $0x2f0] sm:$0xf]
      %v509 = vld [vmem:[%s1 + $0x2f4] sm:$0xf]
      %v510 = vld [vmem:[%s1 + $0x2f8] sm:$0xf]
      %v511 = vld [vmem:[%s1 + $0x2fc] sm:$0xf]
      %v512 = vld [vmem:[%s1 + $0x300] sm:$0xf]
      %v513 = vld [vmem:[%s1 + $0x304] sm:$0xf]
      %v514 = vld [vmem:[%s1 + $0x308] sm:$0xf]
      %v515 = vld [vmem:[%s1 + $0x30c] sm:$0xf]
      %v516 = vld [vmem:[%s1 + $0x310] sm:$0xf]
      %v517 = vld [vmem:[%s1 + $0x314] sm:$0xf]
      %v518 = vld [vmem:[%s1 + $0x318] sm:$0xf]
      %v519 = vld [vmem:[%s1 + $0x31c] sm:$0xf]
      %v520 = vld [vmem:[%s1 + $0x320] sm:$0xf]
      %v521 = vld [vmem:[%s1 + $0x324] sm:$0xf]
      %v522 = vld [vmem:[%s1 + $0x328] sm:$0xf]
      %v523 = vld [vmem:[%s1 + $0x32c] sm:$0xf]
      %v524 = vld [vmem:[%s1 + $0x330] sm:$0xf]
      %v525 = vld [vmem:[%s1 + $0x334] sm:$0xf]
      %v526 = vld [vmem:[%s1 + $0x338] sm:$0xf]
      %v527 = vld [vmem:[%s1 + $0x33c] sm:$0xf]
      %v528 = vld [vmem:[%s1 + $0x340] sm:$0xf]
      %v529 = vld [vmem:[%s1 + $0x344] sm:$0xf]
      %v530 = vld [vmem:[%s1 + $0x348] sm:$0xf]
      %v531 = vld [vmem:[%s1 + $0x34c] sm:$0xf]
      %v532 = vld [vmem:[%s1 + $0x350] sm:$0xf]
      %v533 = vld [vmem:[%s1 + $0x354] sm:$0xf]
      %v534 = vld [vmem:[%s1 + $0x358] sm:$0xf]
      %v535 = vld [vmem:[%s1 + $0x35c] sm:$0xf]
      %v536 = vld [vmem:[%s1 + $0x360] sm:$0xf]
      %v537 = vld [vmem:[%s1 + $0x364] sm:$0xf]
      %v538 = vld [vmem:[%s1 + $0x368] sm:$0xf]
      %v539 = vld [vmem:[%s1 + $0x36c] sm:$0xf]
      %v540 = vld [vmem:[%s1 + $0x370] sm:$0xf]
      %v541 = vld [vmem:[%s1 + $0x374] sm:$0xf]
      %v542 = vld [vmem:[%s1 + $0x378] sm:$0xf]
      %v543 = vld [vmem:[%s1 + $0x37c] sm:$0xf]
      %v544 = vld [vmem:[%s1 + $0x380] sm:$0xf]
      %v545 = vld [vmem:[%s1 + $0x384] sm:$0xf]
      %v546 = vld [vmem:[%s1 + $0x388] sm:$0xf]
      %v547 = vld [vmem:[%s1 + $0x38c] sm:$0xf]
      %v548 = vld [vmem:[%s1 + $0x390] sm:$0xf]
      %v549 = vld [vmem:[%s1 + $0x394] sm:$0xf]
      %v550 = vld [vmem:[%s1 + $0x398] sm:$0xf]
      %v551 = vld [vmem:[%s1 + $0x39c] sm:$0xf]
      %v552 = vld [vmem:[%s1 + $0x3a0] sm:$0xf]
      %v553 = vld [vmem:[%s1 + $0x3a4] sm:$0xf]
      %v554 = vld [vmem:[%s1 + $0x3a8] sm:$0xf]
      %v555 = vld [vmem:[%s1 + $0x3ac] sm:$0xf]
      %v556 = vld [vmem:[%s1 + $0x3b0] sm:$0xf]
      %v557 = vld [vmem:[%s1 + $0x3b4] sm:$0xf]
      %v558 = vld [vmem:[%s1 + $0x3b8] sm:$0xf]
      %v559 = vld [vmem:[%s1 + $0x3bc] sm:$0xf]
      %v560 = vld [vmem:[%s1 + $0x3c0] sm:$0xf]
      %v561 = vld [vmem:[%s1 + $0x3c4] sm:$0xf]
      %v562 = vld [vmem:[%s1 + $0x3c8] sm:$0xf]
      %v563 = vld [vmem:[%s1 + $0x3cc] sm:$0xf]
      %v564 = vld [vmem:[%s1 + $0x3d0] sm:$0xf]
      %v565 = vld [vmem:[%s1 + $0x3d4] sm:$0xf]
      %v566 = vld [vmem:[%s1 + $0x3d8] sm:$0xf]
      %v567 = vld [vmem:[%s1 + $0x3dc] sm:$0xf]
      %v568 = vld [vmem:[%s1 + $0x3e0] sm:$0xf]
      %v569 = vld [vmem:[%s1 + $0x3e4] sm:$0xf]
      %v570 = vld [vmem:[%s1 + $0x3e8] sm:$0xf]
      %v571 = vld [vmem:[%s1 + $0x3ec] sm:$0xf]
      %v572 = vld [vmem:[%s1 + $0x3f0] sm:$0xf]
      %v573 = vld [vmem:[%s1 + $0x3f4] sm:$0xf]
      %v574 = vld [vmem:[%s1 + $0x3f8] sm:$0xf]
      %v575 = vld [vmem:[%s1 + $0x3fc] sm:$0xf]
      %v576 = vld [vmem:[%s1 + $0x400] sm:$0xf]
      %v577 = vld [vmem:[%s1 + $0x404] sm:$0xf]
      %v578 = vunpack.c.l.bf16 %v320
      %v579 = vunpack.c.l.bf16 %v321
      %v580 = vunpack.c.l.bf16 %v322
      %v581 = vunpack.c.l.bf16 %v323
      %v582 = vunpack.c.l.bf16 %v324
      %v583 = vunpack.c.l.bf16 %v325
      %v584 = vunpack.c.l.bf16 %v326
      %v585 = vunpack.c.l.bf16 %v327
      %v586 = vunpack.c.l.bf16 %v328
      %v587 = vunpack.c.l.bf16 %v329
      %v588 = vunpack.c.l.bf16 %v330
      %v589 = vunpack.c.l.bf16 %v331
      %v590 = vunpack.c.l.bf16 %v332
      %v591 = vunpack.c.l.bf16 %v333
      %v592 = vunpack.c.l.bf16 %v334
      %v593 = vunpack.c.l.bf16 %v335
      %v594 = vunpack.c.l.bf16 %v336
      %v595 = vunpack.c.l.bf16 %v337
      %v596 = vunpack.c.l.bf16 %v338
      %v597 = vunpack.c.l.bf16 %v339
      %v598 = vunpack.c.l.bf16 %v340
      %v599 = vunpack.c.l.bf16 %v341
      %v600 = vunpack.c.l.bf16 %v342
      %v601 = vunpack.c.l.bf16 %v343
      %v602 = vunpack.c.l.bf16 %v344
      %v603 = vunpack.c.l.bf16 %v345
      %v604 = vunpack.c.l.bf16 %v346
      %v605 = vunpack.c.l.bf16 %v347
      %v606 = vunpack.c.l.bf16 %v348
      %v607 = vunpack.c.l.bf16 %v349
      %v608 = vunpack.c.l.bf16 %v350
      %v609 = vunpack.c.l.bf16 %v351
      %v610 = vunpack.c.l.bf16 %v352
      %v611 = vunpack.c.l.bf16 %v353
      %v612 = vunpack.c.l.bf16 %v354
      %v613 = vunpack.c.l.bf16 %v355
      %v614 = vunpack.c.l.bf16 %v356
      %v615 = vunpack.c.l.bf16 %v357
      %v616 = vunpack.c.l.bf16 %v358
      %v617 = vunpack.c.l.bf16 %v359
      %v618 = vunpack.c.l.bf16 %v360
      %v619 = vunpack.c.l.bf16 %v361
      %v620 = vunpack.c.l.bf16 %v362
      %v621 = vunpack.c.l.bf16 %v363
      %v622 = vunpack.c.l.bf16 %v364
      %v623 = vunpack.c.l.bf16 %v365
      %v624 = vunpack.c.l.bf16 %v366
      %v625 = vunpack.c.l.bf16 %v367
      %v626 = vunpack.c.l.bf16 %v368
      %v627 = vunpack.c.l.bf16 %v369
      %v628 = vunpack.c.l.bf16 %v370
      %v629 = vunpack.c.l.bf16 %v371
      %v630 = vunpack.c.l.bf16 %v372
      %v631 = vunpack.c.l.bf16 %v373
      %v632 = vunpack.c.l.bf16 %v374
      %v633 = vunpack.c.l.bf16 %v375
      %v634 = vunpack.c.l.bf16 %v376
      %v635 = vunpack.c.l.bf16 %v377
      %v636 = vunpack.c.l.bf16 %v378
      %v637 = vunpack.c.l.bf16 %v379
      %v638 = vunpack.c.l.bf16 %v380
      %v639 = vunpack.c.l.bf16 %v381
      %v640 = vunpack.c.l.bf16 %v382
      %v641 = vunpack.c.l.bf16 %v383
      %v642 = vunpack.c.l.bf16 %v384
      %v643 = vunpack.c.l.bf16 %v385
      %v644 = vunpack.c.l.bf16 %v386
      %v645 = vunpack.c.l.bf16 %v387
      %v646 = vunpack.c.l.bf16 %v388
      %v647 = vunpack.c.l.bf16 %v389
      %v648 = vunpack.c.l.bf16 %v390
      %v649 = vunpack.c.l.bf16 %v391
      %v650 = vunpack.c.l.bf16 %v392
      %v651 = vunpack.c.l.bf16 %v393
      %v652 = vunpack.c.l.bf16 %v394
      %v653 = vunpack.c.l.bf16 %v395
      %v654 = vunpack.c.l.bf16 %v396
      %v655 = vunpack.c.l.bf16 %v397
      %v656 = vunpack.c.l.bf16 %v398
      %v657 = vunpack.c.l.bf16 %v399
      %v658 = vunpack.c.l.bf16 %v400
      %v659 = vunpack.c.l.bf16 %v401
      %v660 = vunpack.c.l.bf16 %v402
      %v661 = vunpack.c.l.bf16 %v403
      %v662 = vunpack.c.l.bf16 %v404
      %v663 = vunpack.c.l.bf16 %v405
      %v664 = vunpack.c.l.bf16 %v406
      %v665 = vunpack.c.l.bf16 %v407
      %v666 = vunpack.c.l.bf16 %v408
      %v667 = vunpack.c.l.bf16 %v409
      %v668 = vunpack.c.l.bf16 %v410
      %v669 = vunpack.c.l.bf16 %v411
      %v670 = vunpack.c.l.bf16 %v412
      %v671 = vunpack.c.l.bf16 %v413
      %v672 = vunpack.c.l.bf16 %v414
      %v673 = vunpack.c.l.bf16 %v415
      %v674 = vunpack.c.l.bf16 %v416
      %v675 = vunpack.c.l.bf16 %v417
      %v676 = vunpack.c.l.bf16 %v418
      %v677 = vunpack.c.l.bf16 %v419
      %v678 = vunpack.c.l.bf16 %v420
      %v679 = vunpack.c.l.bf16 %v421
      %v680 = vunpack.c.l.bf16 %v422
      %v681 = vunpack.c.l.bf16 %v423
      %v682 = vunpack.c.l.bf16 %v424
      %v683 = vunpack.c.l.bf16 %v425
      %v684 = vunpack.c.l.bf16 %v426
      %v685 = vunpack.c.l.bf16 %v427
      %v686 = vunpack.c.l.bf16 %v428
      %v687 = vunpack.c.l.bf16 %v429
      %v688 = vunpack.c.l.bf16 %v430
      %v689 = vunpack.c.l.bf16 %v431
      %v690 = vunpack.c.l.bf16 %v432
      %v691 = vunpack.c.l.bf16 %v433
      %v692 = vunpack.c.l.bf16 %v434
      %v693 = vunpack.c.l.bf16 %v435
      %v694 = vunpack.c.l.bf16 %v436
      %v695 = vunpack.c.l.bf16 %v437
      %v696 = vunpack.c.l.bf16 %v438
      %v697 = vunpack.c.l.bf16 %v439
      %v698 = vunpack.c.l.bf16 %v440
      %v699 = vunpack.c.l.bf16 %v441
      %v700 = vunpack.c.l.bf16 %v442
      %v701 = vunpack.c.l.bf16 %v443
      %v702 = vunpack.c.l.bf16 %v444
      %v703 = vunpack.c.l.bf16 %v445
      %v704 = vunpack.c.l.bf16 %v446
      %v705 = vunpack.c.l.bf16 %v447
      %v706 = vunpack.c.l.bf16 %v448
      %v707 = vunpack.c.l.bf16 %v449
      %v708 = vunpack.c.l.bf16 %v450
      %v709 = vunpack.c.l.bf16 %v451
      %v710 = vunpack.c.l.bf16 %v452
      %v711 = vunpack.c.l.bf16 %v453
      %v712 = vunpack.c.l.bf16 %v454
      %v713 = vunpack.c.l.bf16 %v455
      %v714 = vunpack.c.l.bf16 %v456
      %v715 = vunpack.c.l.bf16 %v457
      %v716 = vunpack.c.l.bf16 %v458
      %v717 = vunpack.c.l.bf16 %v459
      %v718 = vunpack.c.l.bf16 %v460
      %v719 = vunpack.c.l.bf16 %v461
      %v720 = vunpack.c.l.bf16 %v462
      %v721 = vunpack.c.l.bf16 %v463
      %v722 = vunpack.c.l.bf16 %v464
      %v723 = vunpack.c.l.bf16 %v465
      %v724 = vunpack.c.l.bf16 %v466
      %v725 = vunpack.c.l.bf16 %v467
      %v726 = vunpack.c.l.bf16 %v468
      %v727 = vunpack.c.l.bf16 %v469
      %v728 = vunpack.c.l.bf16 %v470
      %v729 = vunpack.c.l.bf16 %v471
      %v730 = vunpack.c.l.bf16 %v472
      %v731 = vunpack.c.l.bf16 %v473
      %v732 = vunpack.c.l.bf16 %v474
      %v733 = vunpack.c.l.bf16 %v475
      %v734 = vunpack.c.l.bf16 %v476
      %v735 = vunpack.c.l.bf16 %v477
      %v736 = vunpack.c.l.bf16 %v478
      %v737 = vunpack.c.l.bf16 %v479
      %v738 = vunpack.c.l.bf16 %v480
      %v739 = vunpack.c.l.bf16 %v481
      %v740 = vunpack.c.l.bf16 %v482
      %v741 = vunpack.c.l.bf16 %v483
      %v742 = vunpack.c.l.bf16 %v484
      %v743 = vunpack.c.l.bf16 %v485
      %v744 = vunpack.c.l.bf16 %v486
      %v745 = vunpack.c.l.bf16 %v487
      %v746 = vunpack.c.l.bf16 %v488
      %v747 = vunpack.c.l.bf16 %v489
      %v748 = vunpack.c.l.bf16 %v490
      %v749 = vunpack.c.l.bf16 %v491
      %v750 = vunpack.c.l.bf16 %v492
      %v751 = vunpack.c.l.bf16 %v493
      %v752 = vunpack.c.l.bf16 %v494
      %v753 = vunpack.c.l.bf16 %v495
      %v754 = vunpack.c.l.bf16 %v496
      %v755 = vunpack.c.l.bf16 %v497
      %v756 = vunpack.c.l.bf16 %v498
      %v757 = vunpack.c.l.bf16 %v499
      %v758 = vunpack.c.l.bf16 %v500
      %v759 = vunpack.c.l.bf16 %v501
      %v760 = vunpack.c.l.bf16 %v502
      %v761 = vunpack.c.l.bf16 %v503
      %v762 = vunpack.c.l.bf16 %v504
      %v763 = vunpack.c.l.bf16 %v505
      %v764 = vunpack.c.l.bf16 %v506
      %v765 = vunpack.c.l.bf16 %v507
      %v766 = vunpack.c.l.bf16 %v508
      %v767 = vunpack.c.l.bf16 %v509
      %v768 = vunpack.c.l.bf16 %v510
      %v769 = vunpack.c.l.bf16 %v511
      %v770 = vunpack.c.l.bf16 %v512
      %v771 = vunpack.c.l.bf16 %v513
      %v772 = vunpack.c.l.bf16 %v514
      %v773 = vunpack.c.l.bf16 %v515
      %v774 = vunpack.c.l.bf16 %v516
      %v775 = vunpack.c.l.bf16 %v517
      %v776 = vunpack.c.l.bf16 %v518
      %v777 = vunpack.c.l.bf16 %v519
      %v778 = vunpack.c.l.bf16 %v520
      %v779 = vunpack.c.l.bf16 %v521
      %v780 = vunpack.c.l.bf16 %v522
      %v781 = vunpack.c.l.bf16 %v523
      %v782 = vunpack.c.l.bf16 %v524
      %v783 = vunpack.c.l.bf16 %v525
      %v784 = vunpack.c.l.bf16 %v526
      %v785 = vunpack.c.l.bf16 %v527
      %v786 = vunpack.c.l.bf16 %v528
      %v787 = vunpack.c.l.bf16 %v529
      %v788 = vunpack.c.l.bf16 %v530
      %v789 = vunpack.c.l.bf16 %v531
      %v790 = vunpack.c.l.bf16 %v532
      %v791 = vunpack.c.l.bf16 %v533
      %v792 = vunpack.c.l.bf16 %v534
      %v793 = vunpack.c.l.bf16 %v535
      %v794 = vunpack.c.l.bf16 %v536
      %v795 = vunpack.c.l.bf16 %v537
      %v796 = vunpack.c.l.bf16 %v538
      %v797 = vunpack.c.l.bf16 %v539
      %v798 = vunpack.c.l.bf16 %v540
      %v799 = vunpack.c.l.bf16 %v541
      %v800 = vunpack.c.l.bf16 %v542
      %v801 = vunpack.c.l.bf16 %v543
      %v802 = vunpack.c.l.bf16 %v544
      %v803 = vunpack.c.l.bf16 %v545
      %v804 = vunpack.c.l.bf16 %v546
      %v805 = vunpack.c.l.bf16 %v547
      %v806 = vunpack.c.l.bf16 %v548
      %v807 = vunpack.c.l.bf16 %v549
      %v808 = vunpack.c.l.bf16 %v550
      %v809 = vunpack.c.l.bf16 %v551
      %v810 = vunpack.c.l.bf16 %v552
      %v811 = vunpack.c.l.bf16 %v553
      %v812 = vunpack.c.l.bf16 %v554
      %v813 = vunpack.c.l.bf16 %v555
      %v814 = vunpack.c.l.bf16 %v556
      %v815 = vunpack.c.l.bf16 %v557
      %v816 = vunpack.c.l.bf16 %v558
      %v817 = vunpack.c.l.bf16 %v559
      %v818 = vunpack.c.l.bf16 %v560
      %v819 = vunpack.c.l.bf16 %v561
      %v820 = vunpack.c.l.bf16 %v562
      %v821 = vunpack.c.l.bf16 %v563
      %v822 = vunpack.c.l.bf16 %v564
      %v823 = vunpack.c.l.bf16 %v565
      %v824 = vunpack.c.l.bf16 %v566
      %v825 = vunpack.c.l.bf16 %v567
      %v826 = vunpack.c.l.bf16 %v568
      %v827 = vunpack.c.l.bf16 %v569
      %v828 = vunpack.c.l.bf16 %v570
      %v829 = vunpack.c.l.bf16 %v571
      %v830 = vunpack.c.l.bf16 %v572
      %v831 = vunpack.c.l.bf16 %v573
      %v832 = vunpack.c.l.bf16 %v574
      %v833 = vunpack.c.l.bf16 %v575
      %v834 = vunpack.c.l.bf16 %v576
      %v835 = vunpack.c.l.bf16 %v577
      %v836 = vld [vmem:[%s0] sm:$0x1]
      %v838 = vlaneseq
      %v839 = vshrl.u32 %v838, 7
      %v840 = vsub.s32 0, %v839
      %v841 = vrot.slane %v836, %v840
      %v843 = vmul.f32 %v578, %v841
      %v844 = vmul.f32 %v579, %v841
      %v845 = vmul.f32 %v580, %v841
      %v846 = vmul.f32 %v581, %v841
      %v847 = vmul.f32 %v582, %v841
      %v848 = vmul.f32 %v583, %v841
      %v849 = vmul.f32 %v584, %v841
      %v850 = vmul.f32 %v585, %v841
      %v851 = vmul.f32 %v586, %v841
      %v852 = vmul.f32 %v587, %v841
      %v853 = vmul.f32 %v588, %v841
      %v854 = vmul.f32 %v589, %v841
      %v855 = vmul.f32 %v590, %v841
      %v856 = vmul.f32 %v591, %v841
      %v857 = vmul.f32 %v592, %v841
      %v858 = vmul.f32 %v593, %v841
      %v859 = vmul.f32 %v594, %v841
      %v860 = vmul.f32 %v595, %v841
      %v861 = vmul.f32 %v596, %v841
      %v862 = vmul.f32 %v597, %v841
      %v863 = vmul.f32 %v598, %v841
      %v864 = vmul.f32 %v599, %v841
      %v865 = vmul.f32 %v600, %v841
      %v866 = vmul.f32 %v601, %v841
      %v867 = vmul.f32 %v602, %v841
      %v868 = vmul.f32 %v603, %v841
      %v869 = vmul.f32 %v604, %v841
      %v870 = vmul.f32 %v605, %v841
      %v871 = vmul.f32 %v606, %v841
      %v872 = vmul.f32 %v607, %v841
      %v873 = vmul.f32 %v608, %v841
      %v874 = vmul.f32 %v609, %v841
      %v875 = vmul.f32 %v610, %v841
      %v876 = vmul.f32 %v611, %v841
      %v877 = vmul.f32 %v612, %v841
      %v878 = vmul.f32 %v613, %v841
      %v879 = vmul.f32 %v614, %v841
      %v880 = vmul.f32 %v615, %v841
      %v881 = vmul.f32 %v616, %v841
      %v882 = vmul.f32 %v617, %v841
      %v883 = vmul.f32 %v618, %v841
      %v884 = vmul.f32 %v619, %v841
      %v885 = vmul.f32 %v620, %v841
      %v886 = vmul.f32 %v621, %v841
      %v887 = vmul.f32 %v622, %v841
      %v888 = vmul.f32 %v623, %v841
      %v889 = vmul.f32 %v624, %v841
      %v890 = vmul.f32 %v625, %v841
      %v891 = vmul.f32 %v626, %v841
      %v892 = vmul.f32 %v627, %v841
      %v893 = vmul.f32 %v628, %v841
      %v894 = vmul.f32 %v629, %v841
      %v895 = vmul.f32 %v630, %v841
      %v896 = vmul.f32 %v631, %v841
      %v897 = vmul.f32 %v632, %v841
      %v898 = vmul.f32 %v633, %v841
      %v899 = vmul.f32 %v634, %v841
      %v900 = vmul.f32 %v635, %v841
      %v901 = vmul.f32 %v636, %v841
      %v902 = vmul.f32 %v637, %v841
      %v903 = vmul.f32 %v638, %v841
      %v904 = vmul.f32 %v639, %v841
      %v905 = vmul.f32 %v640, %v841
      %v906 = vmul.f32 %v641, %v841
      %v907 = vmul.f32 %v642, %v841
      %v908 = vmul.f32 %v643, %v841
      %v909 = vmul.f32 %v644, %v841
      %v910 = vmul.f32 %v645, %v841
      %v911 = vmul.f32 %v646, %v841
      %v912 = vmul.f32 %v647, %v841
      %v913 = vmul.f32 %v648, %v841
      %v914 = vmul.f32 %v649, %v841
      %v915 = vmul.f32 %v650, %v841
      %v916 = vmul.f32 %v651, %v841
      %v917 = vmul.f32 %v652, %v841
      %v918 = vmul.f32 %v653, %v841
      %v919 = vmul.f32 %v654, %v841
      %v920 = vmul.f32 %v655, %v841
      %v921 = vmul.f32 %v656, %v841
      %v922 = vmul.f32 %v657, %v841
      %v923 = vmul.f32 %v658, %v841
      %v924 = vmul.f32 %v659, %v841
      %v925 = vmul.f32 %v660, %v841
      %v926 = vmul.f32 %v661, %v841
      %v927 = vmul.f32 %v662, %v841
      %v928 = vmul.f32 %v663, %v841
      %v929 = vmul.f32 %v664, %v841
      %v930 = vmul.f32 %v665, %v841
      %v931 = vmul.f32 %v666, %v841
      %v932 = vmul.f32 %v667, %v841
      %v933 = vmul.f32 %v668, %v841
      %v934 = vmul.f32 %v669, %v841
      %v935 = vmul.f32 %v670, %v841
      %v936 = vmul.f32 %v671, %v841
      %v937 = vmul.f32 %v672, %v841
      %v938 = vmul.f32 %v673, %v841
      %v939 = vmul.f32 %v674, %v841
      %v940 = vmul.f32 %v675, %v841
      %v941 = vmul.f32 %v676, %v841
      %v942 = vmul.f32 %v677, %v841
      %v943 = vmul.f32 %v678, %v841
      %v944 = vmul.f32 %v679, %v841
      %v945 = vmul.f32 %v680, %v841
      %v946 = vmul.f32 %v681, %v841
      %v947 = vmul.f32 %v682, %v841
      %v948 = vmul.f32 %v683, %v841
      %v949 = vmul.f32 %v684, %v841
      %v950 = vmul.f32 %v685, %v841
      %v951 = vmul.f32 %v686, %v841
      %v952 = vmul.f32 %v687, %v841
      %v953 = vmul.f32 %v688, %v841
      %v954 = vmul.f32 %v689, %v841
      %v955 = vmul.f32 %v690, %v841
      %v956 = vmul.f32 %v691, %v841
      %v957 = vmul.f32 %v692, %v841
      %v958 = vmul.f32 %v693, %v841
      %v959 = vmul.f32 %v694, %v841
      %v960 = vmul.f32 %v695, %v841
      %v961 = vmul.f32 %v696, %v841
      %v962 = vmul.f32 %v697, %v841
      %v963 = vmul.f32 %v698, %v841
      %v964 = vmul.f32 %v699, %v841
      %v965 = vmul.f32 %v700, %v841
      %v966 = vmul.f32 %v701, %v841
      %v967 = vmul.f32 %v702, %v841
      %v968 = vmul.f32 %v703, %v841
      %v969 = vmul.f32 %v704, %v841
      %v970 = vmul.f32 %v705, %v841
      %v971 = vmul.f32 %v706, %v841
      %v972 = vmul.f32 %v707, %v841
      %v973 = vmul.f32 %v708, %v841
      %v974 = vmul.f32 %v709, %v841
      %v975 = vmul.f32 %v710, %v841
      %v976 = vmul.f32 %v711, %v841
      %v977 = vmul.f32 %v712, %v841
      %v978 = vmul.f32 %v713, %v841
      %v979 = vmul.f32 %v714, %v841
      %v980 = vmul.f32 %v715, %v841
      %v981 = vmul.f32 %v716, %v841
      %v982 = vmul.f32 %v717, %v841
      %v983 = vmul.f32 %v718, %v841
      %v984 = vmul.f32 %v719, %v841
      %v985 = vmul.f32 %v720, %v841
      %v986 = vmul.f32 %v721, %v841
      %v987 = vmul.f32 %v722, %v841
      %v988 = vmul.f32 %v723, %v841
      %v989 = vmul.f32 %v724, %v841
      %v990 = vmul.f32 %v725, %v841
      %v991 = vmul.f32 %v726, %v841
      %v992 = vmul.f32 %v727, %v841
      %v993 = vmul.f32 %v728, %v841
      %v994 = vmul.f32 %v729, %v841
      %v995 = vmul.f32 %v730, %v841
      %v996 = vmul.f32 %v731, %v841
      %v997 = vmul.f32 %v732, %v841
      %v998 = vmul.f32 %v733, %v841
      %v999 = vmul.f32 %v734, %v841
      %v1000 = vmul.f32 %v735, %v841
      %v1001 = vmul.f32 %v736, %v841
      %v1002 = vmul.f32 %v737, %v841
      %v1003 = vmul.f32 %v738, %v841
      %v1004 = vmul.f32 %v739, %v841
      %v1005 = vmul.f32 %v740, %v841
      %v1006 = vmul.f32 %v741, %v841
      %v1007 = vmul.f32 %v742, %v841
      %v1008 = vmul.f32 %v743, %v841
      %v1009 = vmul.f32 %v744, %v841
      %v1010 = vmul.f32 %v745, %v841
      %v1011 = vmul.f32 %v746, %v841
      %v1012 = vmul.f32 %v747, %v841
      %v1013 = vmul.f32 %v748, %v841
      %v1014 = vmul.f32 %v749, %v841
      %v1015 = vmul.f32 %v750, %v841
      %v1016 = vmul.f32 %v751, %v841
      %v1017 = vmul.f32 %v752, %v841
      %v1018 = vmul.f32 %v753, %v841
      %v1019 = vmul.f32 %v754, %v841
      %v1020 = vmul.f32 %v755, %v841
      %v1021 = vmul.f32 %v756, %v841
      %v1022 = vmul.f32 %v757, %v841
      %v1023 = vmul.f32 %v758, %v841
      %v1024 = vmul.f32 %v759, %v841
      %v1025 = vmul.f32 %v760, %v841
      %v1026 = vmul.f32 %v761, %v841
      %v1027 = vmul.f32 %v762, %v841
      %v1028 = vmul.f32 %v763, %v841
      %v1029 = vmul.f32 %v764, %v841
      %v1030 = vmul.f32 %v765, %v841
      %v1031 = vmul.f32 %v766, %v841
      %v1032 = vmul.f32 %v767, %v841
      %v1033 = vmul.f32 %v768, %v841
      %v1034 = vmul.f32 %v769, %v841
      %v1035 = vmul.f32 %v770, %v841
      %v1036 = vmul.f32 %v771, %v841
      %v1037 = vmul.f32 %v772, %v841
      %v1038 = vmul.f32 %v773, %v841
      %v1039 = vmul.f32 %v774, %v841
      %v1040 = vmul.f32 %v775, %v841
      %v1041 = vmul.f32 %v776, %v841
      %v1042 = vmul.f32 %v777, %v841
      %v1043 = vmul.f32 %v778, %v841
      %v1044 = vmul.f32 %v779, %v841
      %v1045 = vmul.f32 %v780, %v841
      %v1046 = vmul.f32 %v781, %v841
      %v1047 = vmul.f32 %v782, %v841
      %v1048 = vmul.f32 %v783, %v841
      %v1049 = vmul.f32 %v784, %v841
      %v1050 = vmul.f32 %v785, %v841
      %v1051 = vmul.f32 %v786, %v841
      %v1052 = vmul.f32 %v787, %v841
      %v1053 = vmul.f32 %v788, %v841
      %v1054 = vmul.f32 %v789, %v841
      %v1055 = vmul.f32 %v790, %v841
      %v1056 = vmul.f32 %v791, %v841
      %v1057 = vmul.f32 %v792, %v841
      %v1058 = vmul.f32 %v793, %v841
      %v1059 = vmul.f32 %v794, %v841
      %v1060 = vmul.f32 %v795, %v841
      %v1061 = vmul.f32 %v796, %v841
      %v1062 = vmul.f32 %v797, %v841
      %v1063 = vmul.f32 %v798, %v841
      %v1064 = vmul.f32 %v799, %v841
      %v1065 = vmul.f32 %v800, %v841
      %v1066 = vmul.f32 %v801, %v841
      %v1067 = vmul.f32 %v802, %v841
      %v1068 = vmul.f32 %v803, %v841
      %v1069 = vmul.f32 %v804, %v841
      %v1070 = vmul.f32 %v805, %v841
      %v1071 = vmul.f32 %v806, %v841
      %v1072 = vmul.f32 %v807, %v841
      %v1073 = vmul.f32 %v808, %v841
      %v1074 = vmul.f32 %v809, %v841
      %v1075 = vmul.f32 %v810, %v841
      %v1076 = vmul.f32 %v811, %v841
      %v1077 = vmul.f32 %v812, %v841
      %v1078 = vmul.f32 %v813, %v841
      %v1079 = vmul.f32 %v814, %v841
      %v1080 = vmul.f32 %v815, %v841
      %v1081 = vmul.f32 %v816, %v841
      %v1082 = vmul.f32 %v817, %v841
      %v1083 = vmul.f32 %v818, %v841
      %v1084 = vmul.f32 %v819, %v841
      %v1085 = vmul.f32 %v820, %v841
      %v1086 = vmul.f32 %v821, %v841
      %v1087 = vmul.f32 %v822, %v841
      %v1088 = vmul.f32 %v823, %v841
      %v1089 = vmul.f32 %v824, %v841
      %v1090 = vmul.f32 %v825, %v841
      %v1091 = vmul.f32 %v826, %v841
      %v1092 = vmul.f32 %v827, %v841
      %v1093 = vmul.f32 %v828, %v841
      %v1094 = vmul.f32 %v829, %v841
      %v1095 = vmul.f32 %v830, %v841
      %v1096 = vmul.f32 %v831, %v841
      %v1097 = vmul.f32 %v832, %v841
      %v1098 = vmul.f32 %v833, %v841
      %v1099 = vmul.f32 %v834, %v841
      %v1100 = vmul.f32 %v835, %v841
      %vm1101 = vcmask 703488
      %v1102 = vsel %vm1101, %v843, 0.0
      %1103 = vadd.xlane.f32.xlu0 %v1102
      %v1104 = vpop.xlane.xlu0 %1103
      %v1105 = vsel %vm1101, %v844, 0.0
      %1106 = vadd.xlane.f32.xlu0 %v1105
      %v1107 = vpop.xlane.xlu0 %1106
      %v1108 = vsel %vm1101, %v845, 0.0
      %1109 = vadd.xlane.f32.xlu0 %v1108
      %v1110 = vpop.xlane.xlu0 %1109
      %v1111 = vsel %vm1101, %v846, 0.0
      %1112 = vadd.xlane.f32.xlu0 %v1111
      %v1113 = vpop.xlane.xlu0 %1112
      %v1114 = vsel %vm1101, %v847, 0.0
      %1115 = vadd.xlane.f32.xlu0 %v1114
      %v1116 = vpop.xlane.xlu0 %1115
      %v1117 = vsel %vm1101, %v848, 0.0
      %1118 = vadd.xlane.f32.xlu0 %v1117
      %v1119 = vpop.xlane.xlu0 %1118
      %v1120 = vsel %vm1101, %v849, 0.0
      %1121 = vadd.xlane.f32.xlu0 %v1120
      %v1122 = vpop.xlane.xlu0 %1121
      %v1123 = vsel %vm1101, %v850, 0.0
      %1124 = vadd.xlane.f32.xlu0 %v1123
      %v1125 = vpop.xlane.xlu0 %1124
      %v1126 = vsel %vm1101, %v851, 0.0
      %1127 = vadd.xlane.f32.xlu0 %v1126
      %v1128 = vpop.xlane.xlu0 %1127
      %v1129 = vsel %vm1101, %v852, 0.0
      %1130 = vadd.xlane.f32.xlu0 %v1129
      %v1131 = vpop.xlane.xlu0 %1130
      %v1132 = vsel %vm1101, %v853, 0.0
      %1133 = vadd.xlane.f32.xlu0 %v1132
      %v1134 = vpop.xlane.xlu0 %1133
      %v1135 = vsel %vm1101, %v854, 0.0
      %1136 = vadd.xlane.f32.xlu0 %v1135
      %v1137 = vpop.xlane.xlu0 %1136
      %v1138 = vsel %vm1101, %v855, 0.0
      %1139 = vadd.xlane.f32.xlu0 %v1138
      %v1140 = vpop.xlane.xlu0 %1139
      %v1141 = vsel %vm1101, %v856, 0.0
      %1142 = vadd.xlane.f32.xlu0 %v1141
      %v1143 = vpop.xlane.xlu0 %1142
      %v1144 = vsel %vm1101, %v857, 0.0
      %1145 = vadd.xlane.f32.xlu0 %v1144
      %v1146 = vpop.xlane.xlu0 %1145
      %v1147 = vsel %vm1101, %v858, 0.0
      %1148 = vadd.xlane.f32.xlu0 %v1147
      %v1149 = vpop.xlane.xlu0 %1148
      %v1150 = vsel %vm1101, %v859, 0.0
      %1151 = vadd.xlane.f32.xlu0 %v1150
      %v1152 = vpop.xlane.xlu0 %1151
      %v1153 = vsel %vm1101, %v860, 0.0
      %1154 = vadd.xlane.f32.xlu0 %v1153
      %v1155 = vpop.xlane.xlu0 %1154
      %v1156 = vsel %vm1101, %v861, 0.0
      %1157 = vadd.xlane.f32.xlu0 %v1156
      %v1158 = vpop.xlane.xlu0 %1157
      %v1159 = vsel %vm1101, %v862, 0.0
      %1160 = vadd.xlane.f32.xlu0 %v1159
      %v1161 = vpop.xlane.xlu0 %1160
      %v1162 = vsel %vm1101, %v863, 0.0
      %1163 = vadd.xlane.f32.xlu0 %v1162
      %v1164 = vpop.xlane.xlu0 %1163
      %v1165 = vsel %vm1101, %v864, 0.0
      %1166 = vadd.xlane.f32.xlu0 %v1165
      %v1167 = vpop.xlane.xlu0 %1166
      %v1168 = vsel %vm1101, %v865, 0.0
      %1169 = vadd.xlane.f32.xlu0 %v1168
      %v1170 = vpop.xlane.xlu0 %1169
      %v1171 = vsel %vm1101, %v866, 0.0
      %1172 = vadd.xlane.f32.xlu0 %v1171
      %v1173 = vpop.xlane.xlu0 %1172
      %v1174 = vsel %vm1101, %v867, 0.0
      %1175 = vadd.xlane.f32.xlu0 %v1174
      %v1176 = vpop.xlane.xlu0 %1175
      %v1177 = vsel %vm1101, %v868, 0.0
      %1178 = vadd.xlane.f32.xlu0 %v1177
      %v1179 = vpop.xlane.xlu0 %1178
      %v1180 = vsel %vm1101, %v869, 0.0
      %1181 = vadd.xlane.f32.xlu0 %v1180
      %v1182 = vpop.xlane.xlu0 %1181
      %v1183 = vsel %vm1101, %v870, 0.0
      %1184 = vadd.xlane.f32.xlu0 %v1183
      %v1185 = vpop.xlane.xlu0 %1184
      %v1186 = vsel %vm1101, %v871, 0.0
      %1187 = vadd.xlane.f32.xlu0 %v1186
      %v1188 = vpop.xlane.xlu0 %1187
      %v1189 = vsel %vm1101, %v872, 0.0
      %1190 = vadd.xlane.f32.xlu0 %v1189
      %v1191 = vpop.xlane.xlu0 %1190
      %v1192 = vsel %vm1101, %v873, 0.0
      %1193 = vadd.xlane.f32.xlu0 %v1192
      %v1194 = vpop.xlane.xlu0 %1193
      %v1195 = vsel %vm1101, %v874, 0.0
      %1196 = vadd.xlane.f32.xlu0 %v1195
      %v1197 = vpop.xlane.xlu0 %1196
      %v1198 = vsel %vm1101, %v875, 0.0
      %1199 = vadd.xlane.f32.xlu0 %v1198
      %v1200 = vpop.xlane.xlu0 %1199
      %v1201 = vsel %vm1101, %v876, 0.0
      %1202 = vadd.xlane.f32.xlu0 %v1201
      %v1203 = vpop.xlane.xlu0 %1202
      %v1204 = vsel %vm1101, %v877, 0.0
      %1205 = vadd.xlane.f32.xlu0 %v1204
      %v1206 = vpop.xlane.xlu0 %1205
      %v1207 = vsel %vm1101, %v878, 0.0
      %1208 = vadd.xlane.f32.xlu0 %v1207
      %v1209 = vpop.xlane.xlu0 %1208
      %v1210 = vsel %vm1101, %v879, 0.0
      %1211 = vadd.xlane.f32.xlu0 %v1210
      %v1212 = vpop.xlane.xlu0 %1211
      %v1213 = vsel %vm1101, %v880, 0.0
      %1214 = vadd.xlane.f32.xlu0 %v1213
      %v1215 = vpop.xlane.xlu0 %1214
      %v1216 = vsel %vm1101, %v881, 0.0
      %1217 = vadd.xlane.f32.xlu0 %v1216
      %v1218 = vpop.xlane.xlu0 %1217
      %v1219 = vsel %vm1101, %v882, 0.0
      %1220 = vadd.xlane.f32.xlu0 %v1219
      %v1221 = vpop.xlane.xlu0 %1220
      %v1222 = vsel %vm1101, %v883, 0.0
      %1223 = vadd.xlane.f32.xlu0 %v1222
      %v1224 = vpop.xlane.xlu0 %1223
      %v1225 = vsel %vm1101, %v884, 0.0
      %1226 = vadd.xlane.f32.xlu0 %v1225
      %v1227 = vpop.xlane.xlu0 %1226
      %v1228 = vsel %vm1101, %v885, 0.0
      %1229 = vadd.xlane.f32.xlu0 %v1228
      %v1230 = vpop.xlane.xlu0 %1229
      %v1231 = vsel %vm1101, %v886, 0.0
      %1232 = vadd.xlane.f32.xlu0 %v1231
      %v1233 = vpop.xlane.xlu0 %1232
      %v1234 = vsel %vm1101, %v887, 0.0
      %1235 = vadd.xlane.f32.xlu0 %v1234
      %v1236 = vpop.xlane.xlu0 %1235
      %v1237 = vsel %vm1101, %v888, 0.0
      %1238 = vadd.xlane.f32.xlu0 %v1237
      %v1239 = vpop.xlane.xlu0 %1238
      %v1240 = vsel %vm1101, %v889, 0.0
      %1241 = vadd.xlane.f32.xlu0 %v1240
      %v1242 = vpop.xlane.xlu0 %1241
      %v1243 = vsel %vm1101, %v890, 0.0
      %1244 = vadd.xlane.f32.xlu0 %v1243
      %v1245 = vpop.xlane.xlu0 %1244
      %v1246 = vsel %vm1101, %v891, 0.0
      %1247 = vadd.xlane.f32.xlu0 %v1246
      %v1248 = vpop.xlane.xlu0 %1247
      %v1249 = vsel %vm1101, %v892, 0.0
      %1250 = vadd.xlane.f32.xlu0 %v1249
      %v1251 = vpop.xlane.xlu0 %1250
      %v1252 = vsel %vm1101, %v893, 0.0
      %1253 = vadd.xlane.f32.xlu0 %v1252
      %v1254 = vpop.xlane.xlu0 %1253
      %v1255 = vsel %vm1101, %v894, 0.0
      %1256 = vadd.xlane.f32.xlu0 %v1255
      %v1257 = vpop.xlane.xlu0 %1256
      %v1258 = vsel %vm1101, %v895, 0.0
      %1259 = vadd.xlane.f32.xlu0 %v1258
      %v1260 = vpop.xlane.xlu0 %1259
      %v1261 = vsel %vm1101, %v896, 0.0
      %1262 = vadd.xlane.f32.xlu0 %v1261
      %v1263 = vpop.xlane.xlu0 %1262
      %v1264 = vsel %vm1101, %v897, 0.0
      %1265 = vadd.xlane.f32.xlu0 %v1264
      %v1266 = vpop.xlane.xlu0 %1265
      %v1267 = vsel %vm1101, %v898, 0.0
      %1268 = vadd.xlane.f32.xlu0 %v1267
      %v1269 = vpop.xlane.xlu0 %1268
      %v1270 = vsel %vm1101, %v899, 0.0
      %1271 = vadd.xlane.f32.xlu0 %v1270
      %v1272 = vpop.xlane.xlu0 %1271
      %v1273 = vsel %vm1101, %v900, 0.0
      %1274 = vadd.xlane.f32.xlu0 %v1273
      %v1275 = vpop.xlane.xlu0 %1274
      %v1276 = vsel %vm1101, %v901, 0.0
      %1277 = vadd.xlane.f32.xlu0 %v1276
      %v1278 = vpop.xlane.xlu0 %1277
      %v1279 = vsel %vm1101, %v902, 0.0
      %1280 = vadd.xlane.f32.xlu0 %v1279
      %v1281 = vpop.xlane.xlu0 %1280
      %v1282 = vsel %vm1101, %v903, 0.0
      %1283 = vadd.xlane.f32.xlu0 %v1282
      %v1284 = vpop.xlane.xlu0 %1283
      %v1285 = vsel %vm1101, %v904, 0.0
      %1286 = vadd.xlane.f32.xlu0 %v1285
      %v1287 = vpop.xlane.xlu0 %1286
      %v1288 = vsel %vm1101, %v905, 0.0
      %1289 = vadd.xlane.f32.xlu0 %v1288
      %v1290 = vpop.xlane.xlu0 %1289
      %v1291 = vsel %vm1101, %v906, 0.0
      %1292 = vadd.xlane.f32.xlu0 %v1291
      %v1293 = vpop.xlane.xlu0 %1292
      %v1294 = vsel %vm1101, %v907, 0.0
      %1295 = vadd.xlane.f32.xlu0 %v1294
      %v1296 = vpop.xlane.xlu0 %1295
      %v1297 = vsel %vm1101, %v908, 0.0
      %1298 = vadd.xlane.f32.xlu0 %v1297
      %v1299 = vpop.xlane.xlu0 %1298
      %v1300 = vsel %vm1101, %v909, 0.0
      %1301 = vadd.xlane.f32.xlu0 %v1300
      %v1302 = vpop.xlane.xlu0 %1301
      %v1303 = vsel %vm1101, %v910, 0.0
      %1304 = vadd.xlane.f32.xlu0 %v1303
      %v1305 = vpop.xlane.xlu0 %1304
      %v1306 = vsel %vm1101, %v911, 0.0
      %1307 = vadd.xlane.f32.xlu0 %v1306
      %v1308 = vpop.xlane.xlu0 %1307
      %v1309 = vsel %vm1101, %v912, 0.0
      %1310 = vadd.xlane.f32.xlu0 %v1309
      %v1311 = vpop.xlane.xlu0 %1310
      %v1312 = vsel %vm1101, %v913, 0.0
      %1313 = vadd.xlane.f32.xlu0 %v1312
      %v1314 = vpop.xlane.xlu0 %1313
      %v1315 = vsel %vm1101, %v914, 0.0
      %1316 = vadd.xlane.f32.xlu0 %v1315
      %v1317 = vpop.xlane.xlu0 %1316
      %v1318 = vsel %vm1101, %v915, 0.0
      %1319 = vadd.xlane.f32.xlu0 %v1318
      %v1320 = vpop.xlane.xlu0 %1319
      %v1321 = vsel %vm1101, %v916, 0.0
      %1322 = vadd.xlane.f32.xlu0 %v1321
      %v1323 = vpop.xlane.xlu0 %1322
      %v1324 = vsel %vm1101, %v917, 0.0
      %1325 = vadd.xlane.f32.xlu0 %v1324
      %v1326 = vpop.xlane.xlu0 %1325
      %v1327 = vsel %vm1101, %v918, 0.0
      %1328 = vadd.xlane.f32.xlu0 %v1327
      %v1329 = vpop.xlane.xlu0 %1328
      %v1330 = vsel %vm1101, %v919, 0.0
      %1331 = vadd.xlane.f32.xlu0 %v1330
      %v1332 = vpop.xlane.xlu0 %1331
      %v1333 = vsel %vm1101, %v920, 0.0
      %1334 = vadd.xlane.f32.xlu0 %v1333
      %v1335 = vpop.xlane.xlu0 %1334
      %v1336 = vsel %vm1101, %v921, 0.0
      %1337 = vadd.xlane.f32.xlu0 %v1336
      %v1338 = vpop.xlane.xlu0 %1337
      %v1339 = vsel %vm1101, %v922, 0.0
      %1340 = vadd.xlane.f32.xlu0 %v1339
      %v1341 = vpop.xlane.xlu0 %1340
      %v1342 = vsel %vm1101, %v923, 0.0
      %1343 = vadd.xlane.f32.xlu0 %v1342
      %v1344 = vpop.xlane.xlu0 %1343
      %v1345 = vsel %vm1101, %v924, 0.0
      %1346 = vadd.xlane.f32.xlu0 %v1345
      %v1347 = vpop.xlane.xlu0 %1346
      %v1348 = vsel %vm1101, %v925, 0.0
      %1349 = vadd.xlane.f32.xlu0 %v1348
      %v1350 = vpop.xlane.xlu0 %1349
      %v1351 = vsel %vm1101, %v926, 0.0
      %1352 = vadd.xlane.f32.xlu0 %v1351
      %v1353 = vpop.xlane.xlu0 %1352
      %v1354 = vsel %vm1101, %v927, 0.0
      %1355 = vadd.xlane.f32.xlu0 %v1354
      %v1356 = vpop.xlane.xlu0 %1355
      %v1357 = vsel %vm1101, %v928, 0.0
      %1358 = vadd.xlane.f32.xlu0 %v1357
      %v1359 = vpop.xlane.xlu0 %1358
      %v1360 = vsel %vm1101, %v929, 0.0
      %1361 = vadd.xlane.f32.xlu0 %v1360
      %v1362 = vpop.xlane.xlu0 %1361
      %v1363 = vsel %vm1101, %v930, 0.0
      %1364 = vadd.xlane.f32.xlu0 %v1363
      %v1365 = vpop.xlane.xlu0 %1364
      %v1366 = vsel %vm1101, %v931, 0.0
      %1367 = vadd.xlane.f32.xlu0 %v1366
      %v1368 = vpop.xlane.xlu0 %1367
      %v1369 = vsel %vm1101, %v932, 0.0
      %1370 = vadd.xlane.f32.xlu0 %v1369
      %v1371 = vpop.xlane.xlu0 %1370
      %v1372 = vsel %vm1101, %v933, 0.0
      %1373 = vadd.xlane.f32.xlu0 %v1372
      %v1374 = vpop.xlane.xlu0 %1373
      %v1375 = vsel %vm1101, %v934, 0.0
      %1376 = vadd.xlane.f32.xlu0 %v1375
      %v1377 = vpop.xlane.xlu0 %1376
      %v1378 = vsel %vm1101, %v935, 0.0
      %1379 = vadd.xlane.f32.xlu0 %v1378
      %v1380 = vpop.xlane.xlu0 %1379
      %v1381 = vsel %vm1101, %v936, 0.0
      %1382 = vadd.xlane.f32.xlu0 %v1381
      %v1383 = vpop.xlane.xlu0 %1382
      %v1384 = vsel %vm1101, %v937, 0.0
      %1385 = vadd.xlane.f32.xlu0 %v1384
      %v1386 = vpop.xlane.xlu0 %1385
      %v1387 = vsel %vm1101, %v938, 0.0
      %1388 = vadd.xlane.f32.xlu0 %v1387
      %v1389 = vpop.xlane.xlu0 %1388
      %v1390 = vsel %vm1101, %v939, 0.0
      %1391 = vadd.xlane.f32.xlu0 %v1390
      %v1392 = vpop.xlane.xlu0 %1391
      %v1393 = vsel %vm1101, %v940, 0.0
      %1394 = vadd.xlane.f32.xlu0 %v1393
      %v1395 = vpop.xlane.xlu0 %1394
      %v1396 = vsel %vm1101, %v941, 0.0
      %1397 = vadd.xlane.f32.xlu0 %v1396
      %v1398 = vpop.xlane.xlu0 %1397
      %v1399 = vsel %vm1101, %v942, 0.0
      %1400 = vadd.xlane.f32.xlu0 %v1399
      %v1401 = vpop.xlane.xlu0 %1400
      %v1402 = vsel %vm1101, %v943, 0.0
      %1403 = vadd.xlane.f32.xlu0 %v1402
      %v1404 = vpop.xlane.xlu0 %1403
      %v1405 = vsel %vm1101, %v944, 0.0
      %1406 = vadd.xlane.f32.xlu0 %v1405
      %v1407 = vpop.xlane.xlu0 %1406
      %v1408 = vsel %vm1101, %v945, 0.0
      %1409 = vadd.xlane.f32.xlu0 %v1408
      %v1410 = vpop.xlane.xlu0 %1409
      %v1411 = vsel %vm1101, %v946, 0.0
      %1412 = vadd.xlane.f32.xlu0 %v1411
      %v1413 = vpop.xlane.xlu0 %1412
      %v1414 = vsel %vm1101, %v947, 0.0
      %1415 = vadd.xlane.f32.xlu0 %v1414
      %v1416 = vpop.xlane.xlu0 %1415
      %v1417 = vsel %vm1101, %v948, 0.0
      %1418 = vadd.xlane.f32.xlu0 %v1417
      %v1419 = vpop.xlane.xlu0 %1418
      %v1420 = vsel %vm1101, %v949, 0.0
      %1421 = vadd.xlane.f32.xlu0 %v1420
      %v1422 = vpop.xlane.xlu0 %1421
      %v1423 = vsel %vm1101, %v950, 0.0
      %1424 = vadd.xlane.f32.xlu0 %v1423
      %v1425 = vpop.xlane.xlu0 %1424
      %v1426 = vsel %vm1101, %v951, 0.0
      %1427 = vadd.xlane.f32.xlu0 %v1426
      %v1428 = vpop.xlane.xlu0 %1427
      %v1429 = vsel %vm1101, %v952, 0.0
      %1430 = vadd.xlane.f32.xlu0 %v1429
      %v1431 = vpop.xlane.xlu0 %1430
      %v1432 = vsel %vm1101, %v953, 0.0
      %1433 = vadd.xlane.f32.xlu0 %v1432
      %v1434 = vpop.xlane.xlu0 %1433
      %v1435 = vsel %vm1101, %v954, 0.0
      %1436 = vadd.xlane.f32.xlu0 %v1435
      %v1437 = vpop.xlane.xlu0 %1436
      %v1438 = vsel %vm1101, %v955, 0.0
      %1439 = vadd.xlane.f32.xlu0 %v1438
      %v1440 = vpop.xlane.xlu0 %1439
      %v1441 = vsel %vm1101, %v956, 0.0
      %1442 = vadd.xlane.f32.xlu0 %v1441
      %v1443 = vpop.xlane.xlu0 %1442
      %v1444 = vsel %vm1101, %v957, 0.0
      %1445 = vadd.xlane.f32.xlu0 %v1444
      %v1446 = vpop.xlane.xlu0 %1445
      %v1447 = vsel %vm1101, %v958, 0.0
      %1448 = vadd.xlane.f32.xlu0 %v1447
      %v1449 = vpop.xlane.xlu0 %1448
      %v1450 = vsel %vm1101, %v959, 0.0
      %1451 = vadd.xlane.f32.xlu0 %v1450
      %v1452 = vpop.xlane.xlu0 %1451
      %v1453 = vsel %vm1101, %v960, 0.0
      %1454 = vadd.xlane.f32.xlu0 %v1453
      %v1455 = vpop.xlane.xlu0 %1454
      %v1456 = vsel %vm1101, %v961, 0.0
      %1457 = vadd.xlane.f32.xlu0 %v1456
      %v1458 = vpop.xlane.xlu0 %1457
      %v1459 = vsel %vm1101, %v962, 0.0
      %1460 = vadd.xlane.f32.xlu0 %v1459
      %v1461 = vpop.xlane.xlu0 %1460
      %v1462 = vsel %vm1101, %v963, 0.0
      %1463 = vadd.xlane.f32.xlu0 %v1462
      %v1464 = vpop.xlane.xlu0 %1463
      %v1465 = vsel %vm1101, %v964, 0.0
      %1466 = vadd.xlane.f32.xlu0 %v1465
      %v1467 = vpop.xlane.xlu0 %1466
      %v1468 = vsel %vm1101, %v965, 0.0
      %1469 = vadd.xlane.f32.xlu0 %v1468
      %v1470 = vpop.xlane.xlu0 %1469
      %v1471 = vsel %vm1101, %v966, 0.0
      %1472 = vadd.xlane.f32.xlu0 %v1471
      %v1473 = vpop.xlane.xlu0 %1472
      %v1474 = vsel %vm1101, %v967, 0.0
      %1475 = vadd.xlane.f32.xlu0 %v1474
      %v1476 = vpop.xlane.xlu0 %1475
      %v1477 = vsel %vm1101, %v968, 0.0
      %1478 = vadd.xlane.f32.xlu0 %v1477
      %v1479 = vpop.xlane.xlu0 %1478
      %v1480 = vsel %vm1101, %v969, 0.0
      %1481 = vadd.xlane.f32.xlu0 %v1480
      %v1482 = vpop.xlane.xlu0 %1481
      %v1483 = vsel %vm1101, %v970, 0.0
      %1484 = vadd.xlane.f32.xlu0 %v1483
      %v1485 = vpop.xlane.xlu0 %1484
      %v1486 = vsel %vm1101, %v971, 0.0
      %1487 = vadd.xlane.f32.xlu0 %v1486
      %v1488 = vpop.xlane.xlu0 %1487
      %v1489 = vsel %vm1101, %v972, 0.0
      %1490 = vadd.xlane.f32.xlu0 %v1489
      %v1491 = vpop.xlane.xlu0 %1490
      %v1492 = vsel %vm1101, %v973, 0.0
      %1493 = vadd.xlane.f32.xlu0 %v1492
      %v1494 = vpop.xlane.xlu0 %1493
      %v1495 = vsel %vm1101, %v974, 0.0
      %1496 = vadd.xlane.f32.xlu0 %v1495
      %v1497 = vpop.xlane.xlu0 %1496
      %v1498 = vsel %vm1101, %v975, 0.0
      %1499 = vadd.xlane.f32.xlu0 %v1498
      %v1500 = vpop.xlane.xlu0 %1499
      %v1501 = vsel %vm1101, %v976, 0.0
      %1502 = vadd.xlane.f32.xlu0 %v1501
      %v1503 = vpop.xlane.xlu0 %1502
      %v1504 = vsel %vm1101, %v977, 0.0
      %1505 = vadd.xlane.f32.xlu0 %v1504
      %v1506 = vpop.xlane.xlu0 %1505
      %v1507 = vsel %vm1101, %v978, 0.0
      %1508 = vadd.xlane.f32.xlu0 %v1507
      %v1509 = vpop.xlane.xlu0 %1508
      %v1510 = vsel %vm1101, %v979, 0.0
      %1511 = vadd.xlane.f32.xlu0 %v1510
      %v1512 = vpop.xlane.xlu0 %1511
      %v1513 = vsel %vm1101, %v980, 0.0
      %1514 = vadd.xlane.f32.xlu0 %v1513
      %v1515 = vpop.xlane.xlu0 %1514
      %v1516 = vsel %vm1101, %v981, 0.0
      %1517 = vadd.xlane.f32.xlu0 %v1516
      %v1518 = vpop.xlane.xlu0 %1517
      %v1519 = vsel %vm1101, %v982, 0.0
      %1520 = vadd.xlane.f32.xlu0 %v1519
      %v1521 = vpop.xlane.xlu0 %1520
      %v1522 = vsel %vm1101, %v983, 0.0
      %1523 = vadd.xlane.f32.xlu0 %v1522
      %v1524 = vpop.xlane.xlu0 %1523
      %v1525 = vsel %vm1101, %v984, 0.0
      %1526 = vadd.xlane.f32.xlu0 %v1525
      %v1527 = vpop.xlane.xlu0 %1526
      %v1528 = vsel %vm1101, %v985, 0.0
      %1529 = vadd.xlane.f32.xlu0 %v1528
      %v1530 = vpop.xlane.xlu0 %1529
      %v1531 = vsel %vm1101, %v986, 0.0
      %1532 = vadd.xlane.f32.xlu0 %v1531
      %v1533 = vpop.xlane.xlu0 %1532
      %v1534 = vsel %vm1101, %v987, 0.0
      %1535 = vadd.xlane.f32.xlu0 %v1534
      %v1536 = vpop.xlane.xlu0 %1535
      %v1537 = vsel %vm1101, %v988, 0.0
      %1538 = vadd.xlane.f32.xlu0 %v1537
      %v1539 = vpop.xlane.xlu0 %1538
      %v1540 = vsel %vm1101, %v989, 0.0
      %1541 = vadd.xlane.f32.xlu0 %v1540
      %v1542 = vpop.xlane.xlu0 %1541
      %v1543 = vsel %vm1101, %v990, 0.0
      %1544 = vadd.xlane.f32.xlu0 %v1543
      %v1545 = vpop.xlane.xlu0 %1544
      %v1546 = vsel %vm1101, %v991, 0.0
      %1547 = vadd.xlane.f32.xlu0 %v1546
      %v1548 = vpop.xlane.xlu0 %1547
      %v1549 = vsel %vm1101, %v992, 0.0
      %1550 = vadd.xlane.f32.xlu0 %v1549
      %v1551 = vpop.xlane.xlu0 %1550
      %v1552 = vsel %vm1101, %v993, 0.0
      %1553 = vadd.xlane.f32.xlu0 %v1552
      %v1554 = vpop.xlane.xlu0 %1553
      %v1555 = vsel %vm1101, %v994, 0.0
      %1556 = vadd.xlane.f32.xlu0 %v1555
      %v1557 = vpop.xlane.xlu0 %1556
      %v1558 = vsel %vm1101, %v995, 0.0
      %1559 = vadd.xlane.f32.xlu0 %v1558
      %v1560 = vpop.xlane.xlu0 %1559
      %v1561 = vsel %vm1101, %v996, 0.0
      %1562 = vadd.xlane.f32.xlu0 %v1561
      %v1563 = vpop.xlane.xlu0 %1562
      %v1564 = vsel %vm1101, %v997, 0.0
      %1565 = vadd.xlane.f32.xlu0 %v1564
      %v1566 = vpop.xlane.xlu0 %1565
      %v1567 = vsel %vm1101, %v998, 0.0
      %1568 = vadd.xlane.f32.xlu0 %v1567
      %v1569 = vpop.xlane.xlu0 %1568
      %v1570 = vsel %vm1101, %v999, 0.0
      %1571 = vadd.xlane.f32.xlu0 %v1570
      %v1572 = vpop.xlane.xlu0 %1571
      %v1573 = vsel %vm1101, %v1000, 0.0
      %1574 = vadd.xlane.f32.xlu0 %v1573
      %v1575 = vpop.xlane.xlu0 %1574
      %v1576 = vsel %vm1101, %v1001, 0.0
      %1577 = vadd.xlane.f32.xlu0 %v1576
      %v1578 = vpop.xlane.xlu0 %1577
      %v1579 = vsel %vm1101, %v1002, 0.0
      %1580 = vadd.xlane.f32.xlu0 %v1579
      %v1581 = vpop.xlane.xlu0 %1580
      %v1582 = vsel %vm1101, %v1003, 0.0
      %1583 = vadd.xlane.f32.xlu0 %v1582
      %v1584 = vpop.xlane.xlu0 %1583
      %v1585 = vsel %vm1101, %v1004, 0.0
      %1586 = vadd.xlane.f32.xlu0 %v1585
      %v1587 = vpop.xlane.xlu0 %1586
      %v1588 = vsel %vm1101, %v1005, 0.0
      %1589 = vadd.xlane.f32.xlu0 %v1588
      %v1590 = vpop.xlane.xlu0 %1589
      %v1591 = vsel %vm1101, %v1006, 0.0
      %1592 = vadd.xlane.f32.xlu0 %v1591
      %v1593 = vpop.xlane.xlu0 %1592
      %v1594 = vsel %vm1101, %v1007, 0.0
      %1595 = vadd.xlane.f32.xlu0 %v1594
      %v1596 = vpop.xlane.xlu0 %1595
      %v1597 = vsel %vm1101, %v1008, 0.0
      %1598 = vadd.xlane.f32.xlu0 %v1597
      %v1599 = vpop.xlane.xlu0 %1598
      %v1600 = vsel %vm1101, %v1009, 0.0
      %1601 = vadd.xlane.f32.xlu0 %v1600
      %v1602 = vpop.xlane.xlu0 %1601
      %v1603 = vsel %vm1101, %v1010, 0.0
      %1604 = vadd.xlane.f32.xlu0 %v1603
      %v1605 = vpop.xlane.xlu0 %1604
      %v1606 = vsel %vm1101, %v1011, 0.0
      %1607 = vadd.xlane.f32.xlu0 %v1606
      %v1608 = vpop.xlane.xlu0 %1607
      %v1609 = vsel %vm1101, %v1012, 0.0
      %1610 = vadd.xlane.f32.xlu0 %v1609
      %v1611 = vpop.xlane.xlu0 %1610
      %v1612 = vsel %vm1101, %v1013, 0.0
      %1613 = vadd.xlane.f32.xlu0 %v1612
      %v1614 = vpop.xlane.xlu0 %1613
      %v1615 = vsel %vm1101, %v1014, 0.0
      %1616 = vadd.xlane.f32.xlu0 %v1615
      %v1617 = vpop.xlane.xlu0 %1616
      %v1618 = vsel %vm1101, %v1015, 0.0
      %1619 = vadd.xlane.f32.xlu0 %v1618
      %v1620 = vpop.xlane.xlu0 %1619
      %v1621 = vsel %vm1101, %v1016, 0.0
      %1622 = vadd.xlane.f32.xlu0 %v1621
      %v1623 = vpop.xlane.xlu0 %1622
      %v1624 = vsel %vm1101, %v1017, 0.0
      %1625 = vadd.xlane.f32.xlu0 %v1624
      %v1626 = vpop.xlane.xlu0 %1625
      %v1627 = vsel %vm1101, %v1018, 0.0
      %1628 = vadd.xlane.f32.xlu0 %v1627
      %v1629 = vpop.xlane.xlu0 %1628
      %v1630 = vsel %vm1101, %v1019, 0.0
      %1631 = vadd.xlane.f32.xlu0 %v1630
      %v1632 = vpop.xlane.xlu0 %1631
      %v1633 = vsel %vm1101, %v1020, 0.0
      %1634 = vadd.xlane.f32.xlu0 %v1633
      %v1635 = vpop.xlane.xlu0 %1634
      %v1636 = vsel %vm1101, %v1021, 0.0
      %1637 = vadd.xlane.f32.xlu0 %v1636
      %v1638 = vpop.xlane.xlu0 %1637
      %v1639 = vsel %vm1101, %v1022, 0.0
      %1640 = vadd.xlane.f32.xlu0 %v1639
      %v1641 = vpop.xlane.xlu0 %1640
      %v1642 = vsel %vm1101, %v1023, 0.0
      %1643 = vadd.xlane.f32.xlu0 %v1642
      %v1644 = vpop.xlane.xlu0 %1643
      %v1645 = vsel %vm1101, %v1024, 0.0
      %1646 = vadd.xlane.f32.xlu0 %v1645
      %v1647 = vpop.xlane.xlu0 %1646
      %v1648 = vsel %vm1101, %v1025, 0.0
      %1649 = vadd.xlane.f32.xlu0 %v1648
      %v1650 = vpop.xlane.xlu0 %1649
      %v1651 = vsel %vm1101, %v1026, 0.0
      %1652 = vadd.xlane.f32.xlu0 %v1651
      %v1653 = vpop.xlane.xlu0 %1652
      %v1654 = vsel %vm1101, %v1027, 0.0
      %1655 = vadd.xlane.f32.xlu0 %v1654
      %v1656 = vpop.xlane.xlu0 %1655
      %v1657 = vsel %vm1101, %v1028, 0.0
      %1658 = vadd.xlane.f32.xlu0 %v1657
      %v1659 = vpop.xlane.xlu0 %1658
      %v1660 = vsel %vm1101, %v1029, 0.0
      %1661 = vadd.xlane.f32.xlu0 %v1660
      %v1662 = vpop.xlane.xlu0 %1661
      %v1663 = vsel %vm1101, %v1030, 0.0
      %1664 = vadd.xlane.f32.xlu0 %v1663
      %v1665 = vpop.xlane.xlu0 %1664
      %v1666 = vsel %vm1101, %v1031, 0.0
      %1667 = vadd.xlane.f32.xlu0 %v1666
      %v1668 = vpop.xlane.xlu0 %1667
      %v1669 = vsel %vm1101, %v1032, 0.0
      %1670 = vadd.xlane.f32.xlu0 %v1669
      %v1671 = vpop.xlane.xlu0 %1670
      %v1672 = vsel %vm1101, %v1033, 0.0
      %1673 = vadd.xlane.f32.xlu0 %v1672
      %v1674 = vpop.xlane.xlu0 %1673
      %v1675 = vsel %vm1101, %v1034, 0.0
      %1676 = vadd.xlane.f32.xlu0 %v1675
      %v1677 = vpop.xlane.xlu0 %1676
      %v1678 = vsel %vm1101, %v1035, 0.0
      %1679 = vadd.xlane.f32.xlu0 %v1678
      %v1680 = vpop.xlane.xlu0 %1679
      %v1681 = vsel %vm1101, %v1036, 0.0
      %1682 = vadd.xlane.f32.xlu0 %v1681
      %v1683 = vpop.xlane.xlu0 %1682
      %v1684 = vsel %vm1101, %v1037, 0.0
      %1685 = vadd.xlane.f32.xlu0 %v1684
      %v1686 = vpop.xlane.xlu0 %1685
      %v1687 = vsel %vm1101, %v1038, 0.0
      %1688 = vadd.xlane.f32.xlu0 %v1687
      %v1689 = vpop.xlane.xlu0 %1688
      %v1690 = vsel %vm1101, %v1039, 0.0
      %1691 = vadd.xlane.f32.xlu0 %v1690
      %v1692 = vpop.xlane.xlu0 %1691
      %v1693 = vsel %vm1101, %v1040, 0.0
      %1694 = vadd.xlane.f32.xlu0 %v1693
      %v1695 = vpop.xlane.xlu0 %1694
      %v1696 = vsel %vm1101, %v1041, 0.0
      %1697 = vadd.xlane.f32.xlu0 %v1696
      %v1698 = vpop.xlane.xlu0 %1697
      %v1699 = vsel %vm1101, %v1042, 0.0
      %1700 = vadd.xlane.f32.xlu0 %v1699
      %v1701 = vpop.xlane.xlu0 %1700
      %v1702 = vsel %vm1101, %v1043, 0.0
      %1703 = vadd.xlane.f32.xlu0 %v1702
      %v1704 = vpop.xlane.xlu0 %1703
      %v1705 = vsel %vm1101, %v1044, 0.0
      %1706 = vadd.xlane.f32.xlu0 %v1705
      %v1707 = vpop.xlane.xlu0 %1706
      %v1708 = vsel %vm1101, %v1045, 0.0
      %1709 = vadd.xlane.f32.xlu0 %v1708
      %v1710 = vpop.xlane.xlu0 %1709
      %v1711 = vsel %vm1101, %v1046, 0.0
      %1712 = vadd.xlane.f32.xlu0 %v1711
      %v1713 = vpop.xlane.xlu0 %1712
      %v1714 = vsel %vm1101, %v1047, 0.0
      %1715 = vadd.xlane.f32.xlu0 %v1714
      %v1716 = vpop.xlane.xlu0 %1715
      %v1717 = vsel %vm1101, %v1048, 0.0
      %1718 = vadd.xlane.f32.xlu0 %v1717
      %v1719 = vpop.xlane.xlu0 %1718
      %v1720 = vsel %vm1101, %v1049, 0.0
      %1721 = vadd.xlane.f32.xlu0 %v1720
      %v1722 = vpop.xlane.xlu0 %1721
      %v1723 = vsel %vm1101, %v1050, 0.0
      %1724 = vadd.xlane.f32.xlu0 %v1723
      %v1725 = vpop.xlane.xlu0 %1724
      %v1726 = vsel %vm1101, %v1051, 0.0
      %1727 = vadd.xlane.f32.xlu0 %v1726
      %v1728 = vpop.xlane.xlu0 %1727
      %v1729 = vsel %vm1101, %v1052, 0.0
      %1730 = vadd.xlane.f32.xlu0 %v1729
      %v1731 = vpop.xlane.xlu0 %1730
      %v1732 = vsel %vm1101, %v1053, 0.0
      %1733 = vadd.xlane.f32.xlu0 %v1732
      %v1734 = vpop.xlane.xlu0 %1733
      %v1735 = vsel %vm1101, %v1054, 0.0
      %1736 = vadd.xlane.f32.xlu0 %v1735
      %v1737 = vpop.xlane.xlu0 %1736
      %v1738 = vsel %vm1101, %v1055, 0.0
      %1739 = vadd.xlane.f32.xlu0 %v1738
      %v1740 = vpop.xlane.xlu0 %1739
      %v1741 = vsel %vm1101, %v1056, 0.0
      %1742 = vadd.xlane.f32.xlu0 %v1741
      %v1743 = vpop.xlane.xlu0 %1742
      %v1744 = vsel %vm1101, %v1057, 0.0
      %1745 = vadd.xlane.f32.xlu0 %v1744
      %v1746 = vpop.xlane.xlu0 %1745
      %v1747 = vsel %vm1101, %v1058, 0.0
      %1748 = vadd.xlane.f32.xlu0 %v1747
      %v1749 = vpop.xlane.xlu0 %1748
      %v1750 = vsel %vm1101, %v1059, 0.0
      %1751 = vadd.xlane.f32.xlu0 %v1750
      %v1752 = vpop.xlane.xlu0 %1751
      %v1753 = vsel %vm1101, %v1060, 0.0
      %1754 = vadd.xlane.f32.xlu0 %v1753
      %v1755 = vpop.xlane.xlu0 %1754
      %v1756 = vsel %vm1101, %v1061, 0.0
      %1757 = vadd.xlane.f32.xlu0 %v1756
      %v1758 = vpop.xlane.xlu0 %1757
      %v1759 = vsel %vm1101, %v1062, 0.0
      %1760 = vadd.xlane.f32.xlu0 %v1759
      %v1761 = vpop.xlane.xlu0 %1760
      %v1762 = vsel %vm1101, %v1063, 0.0
      %1763 = vadd.xlane.f32.xlu0 %v1762
      %v1764 = vpop.xlane.xlu0 %1763
      %v1765 = vsel %vm1101, %v1064, 0.0
      %1766 = vadd.xlane.f32.xlu0 %v1765
      %v1767 = vpop.xlane.xlu0 %1766
      %v1768 = vsel %vm1101, %v1065, 0.0
      %1769 = vadd.xlane.f32.xlu0 %v1768
      %v1770 = vpop.xlane.xlu0 %1769
      %v1771 = vsel %vm1101, %v1066, 0.0
      %1772 = vadd.xlane.f32.xlu0 %v1771
      %v1773 = vpop.xlane.xlu0 %1772
      %v1774 = vsel %vm1101, %v1067, 0.0
      %1775 = vadd.xlane.f32.xlu0 %v1774
      %v1776 = vpop.xlane.xlu0 %1775
      %v1777 = vsel %vm1101, %v1068, 0.0
      %1778 = vadd.xlane.f32.xlu0 %v1777
      %v1779 = vpop.xlane.xlu0 %1778
      %v1780 = vsel %vm1101, %v1069, 0.0
      %1781 = vadd.xlane.f32.xlu0 %v1780
      %v1782 = vpop.xlane.xlu0 %1781
      %v1783 = vsel %vm1101, %v1070, 0.0
      %1784 = vadd.xlane.f32.xlu0 %v1783
      %v1785 = vpop.xlane.xlu0 %1784
      %v1786 = vsel %vm1101, %v1071, 0.0
      %1787 = vadd.xlane.f32.xlu0 %v1786
      %v1788 = vpop.xlane.xlu0 %1787
      %v1789 = vsel %vm1101, %v1072, 0.0
      %1790 = vadd.xlane.f32.xlu0 %v1789
      %v1791 = vpop.xlane.xlu0 %1790
      %v1792 = vsel %vm1101, %v1073, 0.0
      %1793 = vadd.xlane.f32.xlu0 %v1792
      %v1794 = vpop.xlane.xlu0 %1793
      %v1795 = vsel %vm1101, %v1074, 0.0
      %1796 = vadd.xlane.f32.xlu0 %v1795
      %v1797 = vpop.xlane.xlu0 %1796
      %v1798 = vsel %vm1101, %v1075, 0.0
      %1799 = vadd.xlane.f32.xlu0 %v1798
      %v1800 = vpop.xlane.xlu0 %1799
      %v1801 = vsel %vm1101, %v1076, 0.0
      %1802 = vadd.xlane.f32.xlu0 %v1801
      %v1803 = vpop.xlane.xlu0 %1802
      %v1804 = vsel %vm1101, %v1077, 0.0
      %1805 = vadd.xlane.f32.xlu0 %v1804
      %v1806 = vpop.xlane.xlu0 %1805
      %v1807 = vsel %vm1101, %v1078, 0.0
      %1808 = vadd.xlane.f32.xlu0 %v1807
      %v1809 = vpop.xlane.xlu0 %1808
      %v1810 = vsel %vm1101, %v1079, 0.0
      %1811 = vadd.xlane.f32.xlu0 %v1810
      %v1812 = vpop.xlane.xlu0 %1811
      %v1813 = vsel %vm1101, %v1080, 0.0
      %1814 = vadd.xlane.f32.xlu0 %v1813
      %v1815 = vpop.xlane.xlu0 %1814
      %v1816 = vsel %vm1101, %v1081, 0.0
      %1817 = vadd.xlane.f32.xlu0 %v1816
      %v1818 = vpop.xlane.xlu0 %1817
      %v1819 = vsel %vm1101, %v1082, 0.0
      %1820 = vadd.xlane.f32.xlu0 %v1819
      %v1821 = vpop.xlane.xlu0 %1820
      %v1822 = vsel %vm1101, %v1083, 0.0
      %1823 = vadd.xlane.f32.xlu0 %v1822
      %v1824 = vpop.xlane.xlu0 %1823
      %v1825 = vsel %vm1101, %v1084, 0.0
      %1826 = vadd.xlane.f32.xlu0 %v1825
      %v1827 = vpop.xlane.xlu0 %1826
      %v1828 = vsel %vm1101, %v1085, 0.0
      %1829 = vadd.xlane.f32.xlu0 %v1828
      %v1830 = vpop.xlane.xlu0 %1829
      %v1831 = vsel %vm1101, %v1086, 0.0
      %1832 = vadd.xlane.f32.xlu0 %v1831
      %v1833 = vpop.xlane.xlu0 %1832
      %v1834 = vsel %vm1101, %v1087, 0.0
      %1835 = vadd.xlane.f32.xlu0 %v1834
      %v1836 = vpop.xlane.xlu0 %1835
      %v1837 = vsel %vm1101, %v1088, 0.0
      %1838 = vadd.xlane.f32.xlu0 %v1837
      %v1839 = vpop.xlane.xlu0 %1838
      %v1840 = vsel %vm1101, %v1089, 0.0
      %1841 = vadd.xlane.f32.xlu0 %v1840
      %v1842 = vpop.xlane.xlu0 %1841
      %v1843 = vsel %vm1101, %v1090, 0.0
      %1844 = vadd.xlane.f32.xlu0 %v1843
      %v1845 = vpop.xlane.xlu0 %1844
      %v1846 = vsel %vm1101, %v1091, 0.0
      %1847 = vadd.xlane.f32.xlu0 %v1846
      %v1848 = vpop.xlane.xlu0 %1847
      %v1849 = vsel %vm1101, %v1092, 0.0
      %1850 = vadd.xlane.f32.xlu0 %v1849
      %v1851 = vpop.xlane.xlu0 %1850
      %v1852 = vsel %vm1101, %v1093, 0.0
      %1853 = vadd.xlane.f32.xlu0 %v1852
      %v1854 = vpop.xlane.xlu0 %1853
      %v1855 = vsel %vm1101, %v1094, 0.0
      %1856 = vadd.xlane.f32.xlu0 %v1855
      %v1857 = vpop.xlane.xlu0 %1856
      %v1858 = vsel %vm1101, %v1095, 0.0
      %1859 = vadd.xlane.f32.xlu0 %v1858
      %v1860 = vpop.xlane.xlu0 %1859
      %v1861 = vsel %vm1101, %v1096, 0.0
      %1862 = vadd.xlane.f32.xlu0 %v1861
      %v1863 = vpop.xlane.xlu0 %1862
      %v1864 = vsel %vm1101, %v1097, 0.0
      %1865 = vadd.xlane.f32.xlu0 %v1864
      %v1866 = vpop.xlane.xlu0 %1865
      %v1867 = vsel %vm1101, %v1098, 0.0
      %1868 = vadd.xlane.f32.xlu0 %v1867
      %v1869 = vpop.xlane.xlu0 %1868
      %v1870 = vsel %vm1101, %v1099, 0.0
      %1871 = vadd.xlane.f32.xlu0 %v1870
      %v1872 = vpop.xlane.xlu0 %1871
      %v1873 = vsel %vm1101, %v1100, 0.0
      %1874 = vadd.xlane.f32.xlu0 %v1873
      %v1875 = vpop.xlane.xlu0 %1874
      %v1876 = vld [vmem:[%s2] sm:$0xff]
      %v1877 = vld [vmem:[%s2 + $0x8] sm:$0xff]
      %v1878 = vld [vmem:[%s2 + $0x10] sm:$0xff]
      %v1879 = vld [vmem:[%s2 + $0x18] sm:$0xff]
      %v1880 = vld [vmem:[%s2 + $0x20] sm:$0xff]
      %v1881 = vld [vmem:[%s2 + $0x28] sm:$0xff]
      %v1882 = vld [vmem:[%s2 + $0x30] sm:$0xff]
      %v1883 = vld [vmem:[%s2 + $0x38] sm:$0xff]
      %v1884 = vld [vmem:[%s2 + $0x40] sm:$0xff]
      %v1885 = vld [vmem:[%s2 + $0x48] sm:$0xff]
      %v1886 = vld [vmem:[%s2 + $0x50] sm:$0xff]
      %v1887 = vld [vmem:[%s2 + $0x58] sm:$0xff]
      %v1888 = vld [vmem:[%s2 + $0x60] sm:$0xff]
      %v1889 = vld [vmem:[%s2 + $0x68] sm:$0xff]
      %v1890 = vld [vmem:[%s2 + $0x70] sm:$0xff]
      %v1891 = vld [vmem:[%s2 + $0x78] sm:$0xff]
      %v1892 = vld [vmem:[%s2 + $0x80] sm:$0xff]
      %v1893 = vld [vmem:[%s2 + $0x88] sm:$0xff]
      %v1894 = vld [vmem:[%s2 + $0x90] sm:$0xff]
      %v1895 = vld [vmem:[%s2 + $0x98] sm:$0xff]
      %v1896 = vld [vmem:[%s2 + $0xa0] sm:$0xff]
      %v1897 = vld [vmem:[%s2 + $0xa8] sm:$0xff]
      %v1898 = vld [vmem:[%s2 + $0xb0] sm:$0xff]
      %v1899 = vld [vmem:[%s2 + $0xb8] sm:$0xff]
      %v1900 = vld [vmem:[%s2 + $0xc0] sm:$0xff]
      %v1901 = vld [vmem:[%s2 + $0xc8] sm:$0xff]
      %v1902 = vld [vmem:[%s2 + $0xd0] sm:$0xff]
      %v1903 = vld [vmem:[%s2 + $0xd8] sm:$0xff]
      %v1904 = vld [vmem:[%s2 + $0xe0] sm:$0xff]
      %v1905 = vld [vmem:[%s2 + $0xe8] sm:$0xff]
      %v1906 = vld [vmem:[%s2 + $0xf0] sm:$0xff]
      %v1907 = vld [vmem:[%s2 + $0xf8] sm:$0xff]
      %v1908 = vld [vmem:[%s2 + $0x100] sm:$0xff]
      %v1909 = vld [vmem:[%s2 + $0x108] sm:$0xff]
      %v1910 = vld [vmem:[%s2 + $0x110] sm:$0xff]
      %v1911 = vld [vmem:[%s2 + $0x118] sm:$0xff]
      %v1912 = vld [vmem:[%s2 + $0x120] sm:$0xff]
      %v1913 = vld [vmem:[%s2 + $0x128] sm:$0xff]
      %v1914 = vld [vmem:[%s2 + $0x130] sm:$0xff]
      %v1915 = vld [vmem:[%s2 + $0x138] sm:$0xff]
      %v1916 = vld [vmem:[%s2 + $0x140] sm:$0xff]
      %v1917 = vld [vmem:[%s2 + $0x148] sm:$0xff]
      %v1918 = vld [vmem:[%s2 + $0x150] sm:$0xff]
      %v1919 = vld [vmem:[%s2 + $0x158] sm:$0xff]
      %v1920 = vld [vmem:[%s2 + $0x160] sm:$0xff]
      %v1921 = vld [vmem:[%s2 + $0x168] sm:$0xff]
      %v1922 = vld [vmem:[%s2 + $0x170] sm:$0xff]
      %v1923 = vld [vmem:[%s2 + $0x178] sm:$0xff]
      %v1924 = vld [vmem:[%s2 + $0x180] sm:$0xff]
      %v1925 = vld [vmem:[%s2 + $0x188] sm:$0xff]
      %v1926 = vld [vmem:[%s2 + $0x190] sm:$0xff]
      %v1927 = vld [vmem:[%s2 + $0x198] sm:$0xff]
      %v1928 = vld [vmem:[%s2 + $0x1a0] sm:$0xff]
      %v1929 = vld [vmem:[%s2 + $0x1a8] sm:$0xff]
      %v1930 = vld [vmem:[%s2 + $0x1b0] sm:$0xff]
      %v1931 = vld [vmem:[%s2 + $0x1b8] sm:$0xff]
      %v1932 = vld [vmem:[%s2 + $0x1c0] sm:$0xff]
      %v1933 = vld [vmem:[%s2 + $0x1c8] sm:$0xff]
      %v1934 = vld [vmem:[%s2 + $0x1d0] sm:$0xff]
      %v1935 = vld [vmem:[%s2 + $0x1d8] sm:$0xff]
      %v1936 = vld [vmem:[%s2 + $0x1e0] sm:$0xff]
      %v1937 = vld [vmem:[%s2 + $0x1e8] sm:$0xff]
      %v1938 = vld [vmem:[%s2 + $0x1f0] sm:$0xff]
      %v1939 = vld [vmem:[%s2 + $0x1f8] sm:$0xff]
      %v1940 = vld [vmem:[%s2 + $0x200] sm:$0xff]
      %v1941 = vld [vmem:[%s2 + $0x208] sm:$0xff]
      %v1942 = vld [vmem:[%s2 + $0x210] sm:$0xff]
      %v1943 = vld [vmem:[%s2 + $0x218] sm:$0xff]
      %v1944 = vld [vmem:[%s2 + $0x220] sm:$0xff]
      %v1945 = vld [vmem:[%s2 + $0x228] sm:$0xff]
      %v1946 = vld [vmem:[%s2 + $0x230] sm:$0xff]
      %v1947 = vld [vmem:[%s2 + $0x238] sm:$0xff]
      %v1948 = vld [vmem:[%s2 + $0x240] sm:$0xff]
      %v1949 = vld [vmem:[%s2 + $0x248] sm:$0xff]
      %v1950 = vld [vmem:[%s2 + $0x250] sm:$0xff]
      %v1951 = vld [vmem:[%s2 + $0x258] sm:$0xff]
      %v1952 = vld [vmem:[%s2 + $0x260] sm:$0xff]
      %v1953 = vld [vmem:[%s2 + $0x268] sm:$0xff]
      %v1954 = vld [vmem:[%s2 + $0x270] sm:$0xff]
      %v1955 = vld [vmem:[%s2 + $0x278] sm:$0xff]
      %v1956 = vld [vmem:[%s2 + $0x280] sm:$0xff]
      %v1957 = vld [vmem:[%s2 + $0x288] sm:$0xff]
      %v1958 = vld [vmem:[%s2 + $0x290] sm:$0xff]
      %v1959 = vld [vmem:[%s2 + $0x298] sm:$0xff]
      %v1960 = vld [vmem:[%s2 + $0x2a0] sm:$0xff]
      %v1961 = vld [vmem:[%s2 + $0x2a8] sm:$0xff]
      %v1962 = vld [vmem:[%s2 + $0x2b0] sm:$0xff]
      %v1963 = vld [vmem:[%s2 + $0x2b8] sm:$0xff]
      %v1964 = vld [vmem:[%s2 + $0x2c0] sm:$0xff]
      %v1965 = vld [vmem:[%s2 + $0x2c8] sm:$0xff]
      %v1966 = vld [vmem:[%s2 + $0x2d0] sm:$0xff]
      %v1967 = vld [vmem:[%s2 + $0x2d8] sm:$0xff]
      %v1968 = vld [vmem:[%s2 + $0x2e0] sm:$0xff]
      %v1969 = vld [vmem:[%s2 + $0x2e8] sm:$0xff]
      %v1970 = vld [vmem:[%s2 + $0x2f0] sm:$0xff]
      %v1971 = vld [vmem:[%s2 + $0x2f8] sm:$0xff]
      %v1972 = vld [vmem:[%s2 + $0x300] sm:$0xff]
      %v1973 = vld [vmem:[%s2 + $0x308] sm:$0xff]
      %v1974 = vld [vmem:[%s2 + $0x310] sm:$0xff]
      %v1975 = vld [vmem:[%s2 + $0x318] sm:$0xff]
      %v1976 = vld [vmem:[%s2 + $0x320] sm:$0xff]
      %v1977 = vld [vmem:[%s2 + $0x328] sm:$0xff]
      %v1978 = vld [vmem:[%s2 + $0x330] sm:$0xff]
      %v1979 = vld [vmem:[%s2 + $0x338] sm:$0xff]
      %v1980 = vld [vmem:[%s2 + $0x340] sm:$0xff]
      %v1981 = vld [vmem:[%s2 + $0x348] sm:$0xff]
      %v1982 = vld [vmem:[%s2 + $0x350] sm:$0xff]
      %v1983 = vld [vmem:[%s2 + $0x358] sm:$0xff]
      %v1984 = vld [vmem:[%s2 + $0x360] sm:$0xff]
      %v1985 = vld [vmem:[%s2 + $0x368] sm:$0xff]
      %v1986 = vld [vmem:[%s2 + $0x370] sm:$0xff]
      %v1987 = vld [vmem:[%s2 + $0x378] sm:$0xff]
      %v1988 = vld [vmem:[%s2 + $0x380] sm:$0xff]
      %v1989 = vld [vmem:[%s2 + $0x388] sm:$0xff]
      %v1990 = vld [vmem:[%s2 + $0x390] sm:$0xff]
      %v1991 = vld [vmem:[%s2 + $0x398] sm:$0xff]
      %v1992 = vld [vmem:[%s2 + $0x3a0] sm:$0xff]
      %v1993 = vld [vmem:[%s2 + $0x3a8] sm:$0xff]
      %v1994 = vld [vmem:[%s2 + $0x3b0] sm:$0xff]
      %v1995 = vld [vmem:[%s2 + $0x3b8] sm:$0xff]
      %v1996 = vld [vmem:[%s2 + $0x3c0] sm:$0xff]
      %v1997 = vld [vmem:[%s2 + $0x3c8] sm:$0xff]
      %v1998 = vld [vmem:[%s2 + $0x3d0] sm:$0xff]
      %v1999 = vld [vmem:[%s2 + $0x3d8] sm:$0xff]
      %v2000 = vld [vmem:[%s2 + $0x3e0] sm:$0xff]
      %v2001 = vld [vmem:[%s2 + $0x3e8] sm:$0xff]
      %v2002 = vld [vmem:[%s2 + $0x3f0] sm:$0xff]
      %v2003 = vld [vmem:[%s2 + $0x3f8] sm:$0xff]
      %v2004 = vld [vmem:[%s2 + $0x400] sm:$0xff]
      %v2005 = vld [vmem:[%s2 + $0x408] sm:$0xff]
      %v2006 = vld [vmem:[%s2 + $0x410] sm:$0xff]
      %v2007 = vld [vmem:[%s2 + $0x418] sm:$0xff]
      %v2008 = vld [vmem:[%s2 + $0x420] sm:$0xff]
      %v2009 = vld [vmem:[%s2 + $0x428] sm:$0xff]
      %v2010 = vld [vmem:[%s2 + $0x430] sm:$0xff]
      %v2011 = vld [vmem:[%s2 + $0x438] sm:$0xff]
      %v2012 = vld [vmem:[%s2 + $0x440] sm:$0xff]
      %v2013 = vld [vmem:[%s2 + $0x448] sm:$0xff]
      %v2014 = vld [vmem:[%s2 + $0x450] sm:$0xff]
      %v2015 = vld [vmem:[%s2 + $0x458] sm:$0xff]
      %v2016 = vld [vmem:[%s2 + $0x460] sm:$0xff]
      %v2017 = vld [vmem:[%s2 + $0x468] sm:$0xff]
      %v2018 = vld [vmem:[%s2 + $0x470] sm:$0xff]
      %v2019 = vld [vmem:[%s2 + $0x478] sm:$0xff]
      %v2020 = vld [vmem:[%s2 + $0x480] sm:$0xff]
      %v2021 = vld [vmem:[%s2 + $0x488] sm:$0xff]
      %v2022 = vld [vmem:[%s2 + $0x490] sm:$0xff]
      %v2023 = vld [vmem:[%s2 + $0x498] sm:$0xff]
      %v2024 = vld [vmem:[%s2 + $0x4a0] sm:$0xff]
      %v2025 = vld [vmem:[%s2 + $0x4a8] sm:$0xff]
      %v2026 = vld [vmem:[%s2 + $0x4b0] sm:$0xff]
      %v2027 = vld [vmem:[%s2 + $0x4b8] sm:$0xff]
      %v2028 = vld [vmem:[%s2 + $0x4c0] sm:$0xff]
      %v2029 = vld [vmem:[%s2 + $0x4c8] sm:$0xff]
      %v2030 = vld [vmem:[%s2 + $0x4d0] sm:$0xff]
      %v2031 = vld [vmem:[%s2 + $0x4d8] sm:$0xff]
      %v2032 = vld [vmem:[%s2 + $0x4e0] sm:$0xff]
      %v2033 = vld [vmem:[%s2 + $0x4e8] sm:$0xff]
      %v2034 = vld [vmem:[%s2 + $0x4f0] sm:$0xff]
      %v2035 = vld [vmem:[%s2 + $0x4f8] sm:$0xff]
      %v2036 = vld [vmem:[%s2 + $0x500] sm:$0xff]
      %v2037 = vld [vmem:[%s2 + $0x508] sm:$0xff]
      %v2038 = vld [vmem:[%s2 + $0x510] sm:$0xff]
      %v2039 = vld [vmem:[%s2 + $0x518] sm:$0xff]
      %v2040 = vld [vmem:[%s2 + $0x520] sm:$0xff]
      %v2041 = vld [vmem:[%s2 + $0x528] sm:$0xff]
      %v2042 = vld [vmem:[%s2 + $0x530] sm:$0xff]
      %v2043 = vld [vmem:[%s2 + $0x538] sm:$0xff]
      %v2044 = vld [vmem:[%s2 + $0x540] sm:$0xff]
      %v2045 = vld [vmem:[%s2 + $0x548] sm:$0xff]
      %v2046 = vld [vmem:[%s2 + $0x550] sm:$0xff]
      %v2047 = vld [vmem:[%s2 + $0x558] sm:$0xff]
      %v2048 = vld [vmem:[%s2 + $0x560] sm:$0xff]
      %v2049 = vld [vmem:[%s2 + $0x568] sm:$0xff]
      %v2050 = vld [vmem:[%s2 + $0x570] sm:$0xff]
      %v2051 = vld [vmem:[%s2 + $0x578] sm:$0xff]
      %v2052 = vld [vmem:[%s2 + $0x580] sm:$0xff]
      %v2053 = vld [vmem:[%s2 + $0x588] sm:$0xff]
      %v2054 = vld [vmem:[%s2 + $0x590] sm:$0xff]
      %v2055 = vld [vmem:[%s2 + $0x598] sm:$0xff]
      %v2056 = vld [vmem:[%s2 + $0x5a0] sm:$0xff]
      %v2057 = vld [vmem:[%s2 + $0x5a8] sm:$0xff]
      %v2058 = vld [vmem:[%s2 + $0x5b0] sm:$0xff]
      %v2059 = vld [vmem:[%s2 + $0x5b8] sm:$0xff]
      %v2060 = vld [vmem:[%s2 + $0x5c0] sm:$0xff]
      %v2061 = vld [vmem:[%s2 + $0x5c8] sm:$0xff]
      %v2062 = vld [vmem:[%s2 + $0x5d0] sm:$0xff]
      %v2063 = vld [vmem:[%s2 + $0x5d8] sm:$0xff]
      %v2064 = vld [vmem:[%s2 + $0x5e0] sm:$0xff]
      %v2065 = vld [vmem:[%s2 + $0x5e8] sm:$0xff]
      %v2066 = vld [vmem:[%s2 + $0x5f0] sm:$0xff]
      %v2067 = vld [vmem:[%s2 + $0x5f8] sm:$0xff]
      %v2068 = vld [vmem:[%s2 + $0x600] sm:$0xff]
      %v2069 = vld [vmem:[%s2 + $0x608] sm:$0xff]
      %v2070 = vld [vmem:[%s2 + $0x610] sm:$0xff]
      %v2071 = vld [vmem:[%s2 + $0x618] sm:$0xff]
      %v2072 = vld [vmem:[%s2 + $0x620] sm:$0xff]
      %v2073 = vld [vmem:[%s2 + $0x628] sm:$0xff]
      %v2074 = vld [vmem:[%s2 + $0x630] sm:$0xff]
      %v2075 = vld [vmem:[%s2 + $0x638] sm:$0xff]
      %v2076 = vld [vmem:[%s2 + $0x640] sm:$0xff]
      %v2077 = vld [vmem:[%s2 + $0x648] sm:$0xff]
      %v2078 = vld [vmem:[%s2 + $0x650] sm:$0xff]
      %v2079 = vld [vmem:[%s2 + $0x658] sm:$0xff]
      %v2080 = vld [vmem:[%s2 + $0x660] sm:$0xff]
      %v2081 = vld [vmem:[%s2 + $0x668] sm:$0xff]
      %v2082 = vld [vmem:[%s2 + $0x670] sm:$0xff]
      %v2083 = vld [vmem:[%s2 + $0x678] sm:$0xff]
      %v2084 = vld [vmem:[%s2 + $0x680] sm:$0xff]
      %v2085 = vld [vmem:[%s2 + $0x688] sm:$0xff]
      %v2086 = vld [vmem:[%s2 + $0x690] sm:$0xff]
      %v2087 = vld [vmem:[%s2 + $0x698] sm:$0xff]
      %v2088 = vld [vmem:[%s2 + $0x6a0] sm:$0xff]
      %v2089 = vld [vmem:[%s2 + $0x6a8] sm:$0xff]
      %v2090 = vld [vmem:[%s2 + $0x6b0] sm:$0xff]
      %v2091 = vld [vmem:[%s2 + $0x6b8] sm:$0xff]
      %v2092 = vld [vmem:[%s2 + $0x6c0] sm:$0xff]
      %v2093 = vld [vmem:[%s2 + $0x6c8] sm:$0xff]
      %v2094 = vld [vmem:[%s2 + $0x6d0] sm:$0xff]
      %v2095 = vld [vmem:[%s2 + $0x6d8] sm:$0xff]
      %v2096 = vld [vmem:[%s2 + $0x6e0] sm:$0xff]
      %v2097 = vld [vmem:[%s2 + $0x6e8] sm:$0xff]
      %v2098 = vld [vmem:[%s2 + $0x6f0] sm:$0xff]
      %v2099 = vld [vmem:[%s2 + $0x6f8] sm:$0xff]
      %v2100 = vld [vmem:[%s2 + $0x700] sm:$0xff]
      %v2101 = vld [vmem:[%s2 + $0x708] sm:$0xff]
      %v2102 = vld [vmem:[%s2 + $0x710] sm:$0xff]
      %v2103 = vld [vmem:[%s2 + $0x718] sm:$0xff]
      %v2104 = vld [vmem:[%s2 + $0x720] sm:$0xff]
      %v2105 = vld [vmem:[%s2 + $0x728] sm:$0xff]
      %v2106 = vld [vmem:[%s2 + $0x730] sm:$0xff]
      %v2107 = vld [vmem:[%s2 + $0x738] sm:$0xff]
      %v2108 = vld [vmem:[%s2 + $0x740] sm:$0xff]
      %v2109 = vld [vmem:[%s2 + $0x748] sm:$0xff]
      %v2110 = vld [vmem:[%s2 + $0x750] sm:$0xff]
      %v2111 = vld [vmem:[%s2 + $0x758] sm:$0xff]
      %v2112 = vld [vmem:[%s2 + $0x760] sm:$0xff]
      %v2113 = vld [vmem:[%s2 + $0x768] sm:$0xff]
      %v2114 = vld [vmem:[%s2 + $0x770] sm:$0xff]
      %v2115 = vld [vmem:[%s2 + $0x778] sm:$0xff]
      %v2116 = vld [vmem:[%s2 + $0x780] sm:$0xff]
      %v2117 = vld [vmem:[%s2 + $0x788] sm:$0xff]
      %v2118 = vld [vmem:[%s2 + $0x790] sm:$0xff]
      %v2119 = vld [vmem:[%s2 + $0x798] sm:$0xff]
      %v2120 = vld [vmem:[%s2 + $0x7a0] sm:$0xff]
      %v2121 = vld [vmem:[%s2 + $0x7a8] sm:$0xff]
      %v2122 = vld [vmem:[%s2 + $0x7b0] sm:$0xff]
      %v2123 = vld [vmem:[%s2 + $0x7b8] sm:$0xff]
      %v2124 = vld [vmem:[%s2 + $0x7c0] sm:$0xff]
      %v2125 = vld [vmem:[%s2 + $0x7c8] sm:$0xff]
      %v2126 = vld [vmem:[%s2 + $0x7d0] sm:$0xff]
      %v2127 = vld [vmem:[%s2 + $0x7d8] sm:$0xff]
      %v2128 = vld [vmem:[%s2 + $0x7e0] sm:$0xff]
      %v2129 = vld [vmem:[%s2 + $0x7e8] sm:$0xff]
      %v2130 = vld [vmem:[%s2 + $0x7f0] sm:$0xff]
      %v2131 = vld [vmem:[%s2 + $0x7f8] sm:$0xff]
      %v2132 = vld [vmem:[%s2 + $0x800] sm:$0xff]
      %v2133 = vld [vmem:[%s2 + $0x808] sm:$0xff]
      %v2134 = vadd.f32 %v1104, %v1876
      %v2135 = vadd.f32 %v1107, %v1877
      %v2136 = vadd.f32 %v1110, %v1878
      %v2137 = vadd.f32 %v1113, %v1879
      %v2138 = vadd.f32 %v1116, %v1880
      %v2139 = vadd.f32 %v1119, %v1881
      %v2140 = vadd.f32 %v1122, %v1882
      %v2141 = vadd.f32 %v1125, %v1883
      %v2142 = vadd.f32 %v1128, %v1884
      %v2143 = vadd.f32 %v1131, %v1885
      %v2144 = vadd.f32 %v1134, %v1886
      %v2145 = vadd.f32 %v1137, %v1887
      %v2146 = vadd.f32 %v1140, %v1888
      %v2147 = vadd.f32 %v1143, %v1889
      %v2148 = vadd.f32 %v1146, %v1890
      %v2149 = vadd.f32 %v1149, %v1891
      %v2150 = vadd.f32 %v1152, %v1892
      %v2151 = vadd.f32 %v1155, %v1893
      %v2152 = vadd.f32 %v1158, %v1894
      %v2153 = vadd.f32 %v1161, %v1895
      %v2154 = vadd.f32 %v1164, %v1896
      %v2155 = vadd.f32 %v1167, %v1897
      %v2156 = vadd.f32 %v1170, %v1898
      %v2157 = vadd.f32 %v1173, %v1899
      %v2158 = vadd.f32 %v1176, %v1900
      %v2159 = vadd.f32 %v1179, %v1901
      %v2160 = vadd.f32 %v1182, %v1902
      %v2161 = vadd.f32 %v1185, %v1903
      %v2162 = vadd.f32 %v1188, %v1904
      %v2163 = vadd.f32 %v1191, %v1905
      %v2164 = vadd.f32 %v1194, %v1906
      %v2165 = vadd.f32 %v1197, %v1907
      %v2166 = vadd.f32 %v1200, %v1908
      %v2167 = vadd.f32 %v1203, %v1909
      %v2168 = vadd.f32 %v1206, %v1910
      %v2169 = vadd.f32 %v1209, %v1911
      %v2170 = vadd.f32 %v1212, %v1912
      %v2171 = vadd.f32 %v1215, %v1913
      %v2172 = vadd.f32 %v1218, %v1914
      %v2173 = vadd.f32 %v1221, %v1915
      %v2174 = vadd.f32 %v1224, %v1916
      %v2175 = vadd.f32 %v1227, %v1917
      %v2176 = vadd.f32 %v1230, %v1918
      %v2177 = vadd.f32 %v1233, %v1919
      %v2178 = vadd.f32 %v1236, %v1920
      %v2179 = vadd.f32 %v1239, %v1921
      %v2180 = vadd.f32 %v1242, %v1922
      %v2181 = vadd.f32 %v1245, %v1923
      %v2182 = vadd.f32 %v1248, %v1924
      %v2183 = vadd.f32 %v1251, %v1925
      %v2184 = vadd.f32 %v1254, %v1926
      %v2185 = vadd.f32 %v1257, %v1927
      %v2186 = vadd.f32 %v1260, %v1928
      %v2187 = vadd.f32 %v1263, %v1929
      %v2188 = vadd.f32 %v1266, %v1930
      %v2189 = vadd.f32 %v1269, %v1931
      %v2190 = vadd.f32 %v1272, %v1932
      %v2191 = vadd.f32 %v1275, %v1933
      %v2192 = vadd.f32 %v1278, %v1934
      %v2193 = vadd.f32 %v1281, %v1935
      %v2194 = vadd.f32 %v1284, %v1936
      %v2195 = vadd.f32 %v1287, %v1937
      %v2196 = vadd.f32 %v1290, %v1938
      %v2197 = vadd.f32 %v1293, %v1939
      %v2198 = vadd.f32 %v1296, %v1940
      %v2199 = vadd.f32 %v1299, %v1941
      %v2200 = vadd.f32 %v1302, %v1942
      %v2201 = vadd.f32 %v1305, %v1943
      %v2202 = vadd.f32 %v1308, %v1944
      %v2203 = vadd.f32 %v1311, %v1945
      %v2204 = vadd.f32 %v1314, %v1946
      %v2205 = vadd.f32 %v1317, %v1947
      %v2206 = vadd.f32 %v1320, %v1948
      %v2207 = vadd.f32 %v1323, %v1949
      %v2208 = vadd.f32 %v1326, %v1950
      %v2209 = vadd.f32 %v1329, %v1951
      %v2210 = vadd.f32 %v1332, %v1952
      %v2211 = vadd.f32 %v1335, %v1953
      %v2212 = vadd.f32 %v1338, %v1954
      %v2213 = vadd.f32 %v1341, %v1955
      %v2214 = vadd.f32 %v1344, %v1956
      %v2215 = vadd.f32 %v1347, %v1957
      %v2216 = vadd.f32 %v1350, %v1958
      %v2217 = vadd.f32 %v1353, %v1959
      %v2218 = vadd.f32 %v1356, %v1960
      %v2219 = vadd.f32 %v1359, %v1961
      %v2220 = vadd.f32 %v1362, %v1962
      %v2221 = vadd.f32 %v1365, %v1963
      %v2222 = vadd.f32 %v1368, %v1964
      %v2223 = vadd.f32 %v1371, %v1965
      %v2224 = vadd.f32 %v1374, %v1966
      %v2225 = vadd.f32 %v1377, %v1967
      %v2226 = vadd.f32 %v1380, %v1968
      %v2227 = vadd.f32 %v1383, %v1969
      %v2228 = vadd.f32 %v1386, %v1970
      %v2229 = vadd.f32 %v1389, %v1971
      %v2230 = vadd.f32 %v1392, %v1972
      %v2231 = vadd.f32 %v1395, %v1973
      %v2232 = vadd.f32 %v1398, %v1974
      %v2233 = vadd.f32 %v1401, %v1975
      %v2234 = vadd.f32 %v1404, %v1976
      %v2235 = vadd.f32 %v1407, %v1977
      %v2236 = vadd.f32 %v1410, %v1978
      %v2237 = vadd.f32 %v1413, %v1979
      %v2238 = vadd.f32 %v1416, %v1980
      %v2239 = vadd.f32 %v1419, %v1981
      %v2240 = vadd.f32 %v1422, %v1982
      %v2241 = vadd.f32 %v1425, %v1983
      %v2242 = vadd.f32 %v1428, %v1984
      %v2243 = vadd.f32 %v1431, %v1985
      %v2244 = vadd.f32 %v1434, %v1986
      %v2245 = vadd.f32 %v1437, %v1987
      %v2246 = vadd.f32 %v1440, %v1988
      %v2247 = vadd.f32 %v1443, %v1989
      %v2248 = vadd.f32 %v1446, %v1990
      %v2249 = vadd.f32 %v1449, %v1991
      %v2250 = vadd.f32 %v1452, %v1992
      %v2251 = vadd.f32 %v1455, %v1993
      %v2252 = vadd.f32 %v1458, %v1994
      %v2253 = vadd.f32 %v1461, %v1995
      %v2254 = vadd.f32 %v1464, %v1996
      %v2255 = vadd.f32 %v1467, %v1997
      %v2256 = vadd.f32 %v1470, %v1998
      %v2257 = vadd.f32 %v1473, %v1999
      %v2258 = vadd.f32 %v1476, %v2000
      %v2259 = vadd.f32 %v1479, %v2001
      %v2260 = vadd.f32 %v1482, %v2002
      %v2261 = vadd.f32 %v1485, %v2003
      %v2262 = vadd.f32 %v1488, %v2004
      %v2263 = vadd.f32 %v1491, %v2005
      %v2264 = vadd.f32 %v1494, %v2006
      %v2265 = vadd.f32 %v1497, %v2007
      %v2266 = vadd.f32 %v1500, %v2008
      %v2267 = vadd.f32 %v1503, %v2009
      %v2268 = vadd.f32 %v1506, %v2010
      %v2269 = vadd.f32 %v1509, %v2011
      %v2270 = vadd.f32 %v1512, %v2012
      %v2271 = vadd.f32 %v1515, %v2013
      %v2272 = vadd.f32 %v1518, %v2014
      %v2273 = vadd.f32 %v1521, %v2015
      %v2274 = vadd.f32 %v1524, %v2016
      %v2275 = vadd.f32 %v1527, %v2017
      %v2276 = vadd.f32 %v1530, %v2018
      %v2277 = vadd.f32 %v1533, %v2019
      %v2278 = vadd.f32 %v1536, %v2020
      %v2279 = vadd.f32 %v1539, %v2021
      %v2280 = vadd.f32 %v1542, %v2022
      %v2281 = vadd.f32 %v1545, %v2023
      %v2282 = vadd.f32 %v1548, %v2024
      %v2283 = vadd.f32 %v1551, %v2025
      %v2284 = vadd.f32 %v1554, %v2026
      %v2285 = vadd.f32 %v1557, %v2027
      %v2286 = vadd.f32 %v1560, %v2028
      %v2287 = vadd.f32 %v1563, %v2029
      %v2288 = vadd.f32 %v1566, %v2030
      %v2289 = vadd.f32 %v1569, %v2031
      %v2290 = vadd.f32 %v1572, %v2032
      %v2291 = vadd.f32 %v1575, %v2033
      %v2292 = vadd.f32 %v1578, %v2034
      %v2293 = vadd.f32 %v1581, %v2035
      %v2294 = vadd.f32 %v1584, %v2036
      %v2295 = vadd.f32 %v1587, %v2037
      %v2296 = vadd.f32 %v1590, %v2038
      %v2297 = vadd.f32 %v1593, %v2039
      %v2298 = vadd.f32 %v1596, %v2040
      %v2299 = vadd.f32 %v1599, %v2041
      %v2300 = vadd.f32 %v1602, %v2042
      %v2301 = vadd.f32 %v1605, %v2043
      %v2302 = vadd.f32 %v1608, %v2044
      %v2303 = vadd.f32 %v1611, %v2045
      %v2304 = vadd.f32 %v1614, %v2046
      %v2305 = vadd.f32 %v1617, %v2047
      %v2306 = vadd.f32 %v1620, %v2048
      %v2307 = vadd.f32 %v1623, %v2049
      %v2308 = vadd.f32 %v1626, %v2050
      %v2309 = vadd.f32 %v1629, %v2051
      %v2310 = vadd.f32 %v1632, %v2052
      %v2311 = vadd.f32 %v1635, %v2053
      %v2312 = vadd.f32 %v1638, %v2054
      %v2313 = vadd.f32 %v1641, %v2055
      %v2314 = vadd.f32 %v1644, %v2056
      %v2315 = vadd.f32 %v1647, %v2057
      %v2316 = vadd.f32 %v1650, %v2058
      %v2317 = vadd.f32 %v1653, %v2059
      %v2318 = vadd.f32 %v1656, %v2060
      %v2319 = vadd.f32 %v1659, %v2061
      %v2320 = vadd.f32 %v1662, %v2062
      %v2321 = vadd.f32 %v1665, %v2063
      %v2322 = vadd.f32 %v1668, %v2064
      %v2323 = vadd.f32 %v1671, %v2065
      %v2324 = vadd.f32 %v1674, %v2066
      %v2325 = vadd.f32 %v1677, %v2067
      %v2326 = vadd.f32 %v1680, %v2068
      %v2327 = vadd.f32 %v1683, %v2069
      %v2328 = vadd.f32 %v1686, %v2070
      %v2329 = vadd.f32 %v1689, %v2071
      %v2330 = vadd.f32 %v1692, %v2072
      %v2331 = vadd.f32 %v1695, %v2073
      %v2332 = vadd.f32 %v1698, %v2074
      %v2333 = vadd.f32 %v1701, %v2075
      %v2334 = vadd.f32 %v1704, %v2076
      %v2335 = vadd.f32 %v1707, %v2077
      %v2336 = vadd.f32 %v1710, %v2078
      %v2337 = vadd.f32 %v1713, %v2079
      %v2338 = vadd.f32 %v1716, %v2080
      %v2339 = vadd.f32 %v1719, %v2081
      %v2340 = vadd.f32 %v1722, %v2082
      %v2341 = vadd.f32 %v1725, %v2083
      %v2342 = vadd.f32 %v1728, %v2084
      %v2343 = vadd.f32 %v1731, %v2085
      %v2344 = vadd.f32 %v1734, %v2086
      %v2345 = vadd.f32 %v1737, %v2087
      %v2346 = vadd.f32 %v1740, %v2088
      %v2347 = vadd.f32 %v1743, %v2089
      %v2348 = vadd.f32 %v1746, %v2090
      %v2349 = vadd.f32 %v1749, %v2091
      %v2350 = vadd.f32 %v1752, %v2092
      %v2351 = vadd.f32 %v1755, %v2093
      %v2352 = vadd.f32 %v1758, %v2094
      %v2353 = vadd.f32 %v1761, %v2095
      %v2354 = vadd.f32 %v1764, %v2096
      %v2355 = vadd.f32 %v1767, %v2097
      %v2356 = vadd.f32 %v1770, %v2098
      %v2357 = vadd.f32 %v1773, %v2099
      %v2358 = vadd.f32 %v1776, %v2100
      %v2359 = vadd.f32 %v1779, %v2101
      %v2360 = vadd.f32 %v1782, %v2102
      %v2361 = vadd.f32 %v1785, %v2103
      %v2362 = vadd.f32 %v1788, %v2104
      %v2363 = vadd.f32 %v1791, %v2105
      %v2364 = vadd.f32 %v1794, %v2106
      %v2365 = vadd.f32 %v1797, %v2107
      %v2366 = vadd.f32 %v1800, %v2108
      %v2367 = vadd.f32 %v1803, %v2109
      %v2368 = vadd.f32 %v1806, %v2110
      %v2369 = vadd.f32 %v1809, %v2111
      %v2370 = vadd.f32 %v1812, %v2112
      %v2371 = vadd.f32 %v1815, %v2113
      %v2372 = vadd.f32 %v1818, %v2114
      %v2373 = vadd.f32 %v1821, %v2115
      %v2374 = vadd.f32 %v1824, %v2116
      %v2375 = vadd.f32 %v1827, %v2117
      %v2376 = vadd.f32 %v1830, %v2118
      %v2377 = vadd.f32 %v1833, %v2119
      %v2378 = vadd.f32 %v1836, %v2120
      %v2379 = vadd.f32 %v1839, %v2121
      %v2380 = vadd.f32 %v1842, %v2122
      %v2381 = vadd.f32 %v1845, %v2123
      %v2382 = vadd.f32 %v1848, %v2124
      %v2383 = vadd.f32 %v1851, %v2125
      %v2384 = vadd.f32 %v1854, %v2126
      %v2385 = vadd.f32 %v1857, %v2127
      %v2386 = vadd.f32 %v1860, %v2128
      %v2387 = vadd.f32 %v1863, %v2129
      %v2388 = vadd.f32 %v1866, %v2130
      %v2389 = vadd.f32 %v1869, %v2131
      %v2390 = vadd.f32 %v1872, %v2132
      %v2391 = vadd.f32 %v1875, %v2133
      %v2392 = vxor.u32 %v2134, 2147483648
      %v2393 = vxor.u32 %v2135, 2147483648
      %v2394 = vxor.u32 %v2136, 2147483648
      %v2395 = vxor.u32 %v2137, 2147483648
      %v2396 = vxor.u32 %v2138, 2147483648
      %v2397 = vxor.u32 %v2139, 2147483648
      %v2398 = vxor.u32 %v2140, 2147483648
      %v2399 = vxor.u32 %v2141, 2147483648
      %v2400 = vxor.u32 %v2142, 2147483648
      %v2401 = vxor.u32 %v2143, 2147483648
      %v2402 = vxor.u32 %v2144, 2147483648
      %v2403 = vxor.u32 %v2145, 2147483648
      %v2404 = vxor.u32 %v2146, 2147483648
      %v2405 = vxor.u32 %v2147, 2147483648
      %v2406 = vxor.u32 %v2148, 2147483648
      %v2407 = vxor.u32 %v2149, 2147483648
      %v2408 = vxor.u32 %v2150, 2147483648
      %v2409 = vxor.u32 %v2151, 2147483648
      %v2410 = vxor.u32 %v2152, 2147483648
      %v2411 = vxor.u32 %v2153, 2147483648
      %v2412 = vxor.u32 %v2154, 2147483648
      %v2413 = vxor.u32 %v2155, 2147483648
      %v2414 = vxor.u32 %v2156, 2147483648
      %v2415 = vxor.u32 %v2157, 2147483648
      %v2416 = vxor.u32 %v2158, 2147483648
      %v2417 = vxor.u32 %v2159, 2147483648
      %v2418 = vxor.u32 %v2160, 2147483648
      %v2419 = vxor.u32 %v2161, 2147483648
      %v2420 = vxor.u32 %v2162, 2147483648
      %v2421 = vxor.u32 %v2163, 2147483648
      %v2422 = vxor.u32 %v2164, 2147483648
      %v2423 = vxor.u32 %v2165, 2147483648
      %v2424 = vxor.u32 %v2166, 2147483648
      %v2425 = vxor.u32 %v2167, 2147483648
      %v2426 = vxor.u32 %v2168, 2147483648
      %v2427 = vxor.u32 %v2169, 2147483648
      %v2428 = vxor.u32 %v2170, 2147483648
      %v2429 = vxor.u32 %v2171, 2147483648
      %v2430 = vxor.u32 %v2172, 2147483648
      %v2431 = vxor.u32 %v2173, 2147483648
      %v2432 = vxor.u32 %v2174, 2147483648
      %v2433 = vxor.u32 %v2175, 2147483648
      %v2434 = vxor.u32 %v2176, 2147483648
      %v2435 = vxor.u32 %v2177, 2147483648
      %v2436 = vxor.u32 %v2178, 2147483648
      %v2437 = vxor.u32 %v2179, 2147483648
      %v2438 = vxor.u32 %v2180, 2147483648
      %v2439 = vxor.u32 %v2181, 2147483648
      %v2440 = vxor.u32 %v2182, 2147483648
      %v2441 = vxor.u32 %v2183, 2147483648
      %v2442 = vxor.u32 %v2184, 2147483648
      %v2443 = vxor.u32 %v2185, 2147483648
      %v2444 = vxor.u32 %v2186, 2147483648
      %v2445 = vxor.u32 %v2187, 2147483648
      %v2446 = vxor.u32 %v2188, 2147483648
      %v2447 = vxor.u32 %v2189, 2147483648
      %v2448 = vxor.u32 %v2190, 2147483648
      %v2449 = vxor.u32 %v2191, 2147483648
      %v2450 = vxor.u32 %v2192, 2147483648
      %v2451 = vxor.u32 %v2193, 2147483648
      %v2452 = vxor.u32 %v2194, 2147483648
      %v2453 = vxor.u32 %v2195, 2147483648
      %v2454 = vxor.u32 %v2196, 2147483648
      %v2455 = vxor.u32 %v2197, 2147483648
      %v2456 = vxor.u32 %v2198, 2147483648
      %v2457 = vxor.u32 %v2199, 2147483648
      %v2458 = vxor.u32 %v2200, 2147483648
      %v2459 = vxor.u32 %v2201, 2147483648
      %v2460 = vxor.u32 %v2202, 2147483648
      %v2461 = vxor.u32 %v2203, 2147483648
      %v2462 = vxor.u32 %v2204, 2147483648
      %v2463 = vxor.u32 %v2205, 2147483648
      %v2464 = vxor.u32 %v2206, 2147483648
      %v2465 = vxor.u32 %v2207, 2147483648
      %v2466 = vxor.u32 %v2208, 2147483648
      %v2467 = vxor.u32 %v2209, 2147483648
      %v2468 = vxor.u32 %v2210, 2147483648
      %v2469 = vxor.u32 %v2211, 2147483648
      %v2470 = vxor.u32 %v2212, 2147483648
      %v2471 = vxor.u32 %v2213, 2147483648
      %v2472 = vxor.u32 %v2214, 2147483648
      %v2473 = vxor.u32 %v2215, 2147483648
      %v2474 = vxor.u32 %v2216, 2147483648
      %v2475 = vxor.u32 %v2217, 2147483648
      %v2476 = vxor.u32 %v2218, 2147483648
      %v2477 = vxor.u32 %v2219, 2147483648
      %v2478 = vxor.u32 %v2220, 2147483648
      %v2479 = vxor.u32 %v2221, 2147483648
      %v2480 = vxor.u32 %v2222, 2147483648
      %v2481 = vxor.u32 %v2223, 2147483648
      %v2482 = vxor.u32 %v2224, 2147483648
      %v2483 = vxor.u32 %v2225, 2147483648
      %v2484 = vxor.u32 %v2226, 2147483648
      %v2485 = vxor.u32 %v2227, 2147483648
      %v2486 = vxor.u32 %v2228, 2147483648
      %v2487 = vxor.u32 %v2229, 2147483648
      %v2488 = vxor.u32 %v2230, 2147483648
      %v2489 = vxor.u32 %v2231, 2147483648
      %v2490 = vxor.u32 %v2232, 2147483648
      %v2491 = vxor.u32 %v2233, 2147483648
      %v2492 = vxor.u32 %v2234, 2147483648
      %v2493 = vxor.u32 %v2235, 2147483648
      %v2494 = vxor.u32 %v2236, 2147483648
      %v2495 = vxor.u32 %v2237, 2147483648
      %v2496 = vxor.u32 %v2238, 2147483648
      %v2497 = vxor.u32 %v2239, 2147483648
      %v2498 = vxor.u32 %v2240, 2147483648
      %v2499 = vxor.u32 %v2241, 2147483648
      %v2500 = vxor.u32 %v2242, 2147483648
      %v2501 = vxor.u32 %v2243, 2147483648
      %v2502 = vxor.u32 %v2244, 2147483648
      %v2503 = vxor.u32 %v2245, 2147483648
      %v2504 = vxor.u32 %v2246, 2147483648
      %v2505 = vxor.u32 %v2247, 2147483648
      %v2506 = vxor.u32 %v2248, 2147483648
      %v2507 = vxor.u32 %v2249, 2147483648
      %v2508 = vxor.u32 %v2250, 2147483648
      %v2509 = vxor.u32 %v2251, 2147483648
      %v2510 = vxor.u32 %v2252, 2147483648
      %v2511 = vxor.u32 %v2253, 2147483648
      %v2512 = vxor.u32 %v2254, 2147483648
      %v2513 = vxor.u32 %v2255, 2147483648
      %v2514 = vxor.u32 %v2256, 2147483648
      %v2515 = vxor.u32 %v2257, 2147483648
      %v2516 = vxor.u32 %v2258, 2147483648
      %v2517 = vxor.u32 %v2259, 2147483648
      %v2518 = vxor.u32 %v2260, 2147483648
      %v2519 = vxor.u32 %v2261, 2147483648
      %v2520 = vxor.u32 %v2262, 2147483648
      %v2521 = vxor.u32 %v2263, 2147483648
      %v2522 = vxor.u32 %v2264, 2147483648
      %v2523 = vxor.u32 %v2265, 2147483648
      %v2524 = vxor.u32 %v2266, 2147483648
      %v2525 = vxor.u32 %v2267, 2147483648
      %v2526 = vxor.u32 %v2268, 2147483648
      %v2527 = vxor.u32 %v2269, 2147483648
      %v2528 = vxor.u32 %v2270, 2147483648
      %v2529 = vxor.u32 %v2271, 2147483648
      %v2530 = vxor.u32 %v2272, 2147483648
      %v2531 = vxor.u32 %v2273, 2147483648
      %v2532 = vxor.u32 %v2274, 2147483648
      %v2533 = vxor.u32 %v2275, 2147483648
      %v2534 = vxor.u32 %v2276, 2147483648
      %v2535 = vxor.u32 %v2277, 2147483648
      %v2536 = vxor.u32 %v2278, 2147483648
      %v2537 = vxor.u32 %v2279, 2147483648
      %v2538 = vxor.u32 %v2280, 2147483648
      %v2539 = vxor.u32 %v2281, 2147483648
      %v2540 = vxor.u32 %v2282, 2147483648
      %v2541 = vxor.u32 %v2283, 2147483648
      %v2542 = vxor.u32 %v2284, 2147483648
      %v2543 = vxor.u32 %v2285, 2147483648
      %v2544 = vxor.u32 %v2286, 2147483648
      %v2545 = vxor.u32 %v2287, 2147483648
      %v2546 = vxor.u32 %v2288, 2147483648
      %v2547 = vxor.u32 %v2289, 2147483648
      %v2548 = vxor.u32 %v2290, 2147483648
      %v2549 = vxor.u32 %v2291, 2147483648
      %v2550 = vxor.u32 %v2292, 2147483648
      %v2551 = vxor.u32 %v2293, 2147483648
      %v2552 = vxor.u32 %v2294, 2147483648
      %v2553 = vxor.u32 %v2295, 2147483648
      %v2554 = vxor.u32 %v2296, 2147483648
      %v2555 = vxor.u32 %v2297, 2147483648
      %v2556 = vxor.u32 %v2298, 2147483648
      %v2557 = vxor.u32 %v2299, 2147483648
      %v2558 = vxor.u32 %v2300, 2147483648
      %v2559 = vxor.u32 %v2301, 2147483648
      %v2560 = vxor.u32 %v2302, 2147483648
      %v2561 = vxor.u32 %v2303, 2147483648
      %v2562 = vxor.u32 %v2304, 2147483648
      %v2563 = vxor.u32 %v2305, 2147483648
      %v2564 = vxor.u32 %v2306, 2147483648
      %v2565 = vxor.u32 %v2307, 2147483648
      %v2566 = vxor.u32 %v2308, 2147483648
      %v2567 = vxor.u32 %v2309, 2147483648
      %v2568 = vxor.u32 %v2310, 2147483648
      %v2569 = vxor.u32 %v2311, 2147483648
      %v2570 = vxor.u32 %v2312, 2147483648
      %v2571 = vxor.u32 %v2313, 2147483648
      %v2572 = vxor.u32 %v2314, 2147483648
      %v2573 = vxor.u32 %v2315, 2147483648
      %v2574 = vxor.u32 %v2316, 2147483648
      %v2575 = vxor.u32 %v2317, 2147483648
      %v2576 = vxor.u32 %v2318, 2147483648
      %v2577 = vxor.u32 %v2319, 2147483648
      %v2578 = vxor.u32 %v2320, 2147483648
      %v2579 = vxor.u32 %v2321, 2147483648
      %v2580 = vxor.u32 %v2322, 2147483648
      %v2581 = vxor.u32 %v2323, 2147483648
      %v2582 = vxor.u32 %v2324, 2147483648
      %v2583 = vxor.u32 %v2325, 2147483648
      %v2584 = vxor.u32 %v2326, 2147483648
      %v2585 = vxor.u32 %v2327, 2147483648
      %v2586 = vxor.u32 %v2328, 2147483648
      %v2587 = vxor.u32 %v2329, 2147483648
      %v2588 = vxor.u32 %v2330, 2147483648
      %v2589 = vxor.u32 %v2331, 2147483648
      %v2590 = vxor.u32 %v2332, 2147483648
      %v2591 = vxor.u32 %v2333, 2147483648
      %v2592 = vxor.u32 %v2334, 2147483648
      %v2593 = vxor.u32 %v2335, 2147483648
      %v2594 = vxor.u32 %v2336, 2147483648
      %v2595 = vxor.u32 %v2337, 2147483648
      %v2596 = vxor.u32 %v2338, 2147483648
      %v2597 = vxor.u32 %v2339, 2147483648
      %v2598 = vxor.u32 %v2340, 2147483648
      %v2599 = vxor.u32 %v2341, 2147483648
      %v2600 = vxor.u32 %v2342, 2147483648
      %v2601 = vxor.u32 %v2343, 2147483648
      %v2602 = vxor.u32 %v2344, 2147483648
      %v2603 = vxor.u32 %v2345, 2147483648
      %v2604 = vxor.u32 %v2346, 2147483648
      %v2605 = vxor.u32 %v2347, 2147483648
      %v2606 = vxor.u32 %v2348, 2147483648
      %v2607 = vxor.u32 %v2349, 2147483648
      %v2608 = vxor.u32 %v2350, 2147483648
      %v2609 = vxor.u32 %v2351, 2147483648
      %v2610 = vxor.u32 %v2352, 2147483648
      %v2611 = vxor.u32 %v2353, 2147483648
      %v2612 = vxor.u32 %v2354, 2147483648
      %v2613 = vxor.u32 %v2355, 2147483648
      %v2614 = vxor.u32 %v2356, 2147483648
      %v2615 = vxor.u32 %v2357, 2147483648
      %v2616 = vxor.u32 %v2358, 2147483648
      %v2617 = vxor.u32 %v2359, 2147483648
      %v2618 = vxor.u32 %v2360, 2147483648
      %v2619 = vxor.u32 %v2361, 2147483648
      %v2620 = vxor.u32 %v2362, 2147483648
      %v2621 = vxor.u32 %v2363, 2147483648
      %v2622 = vxor.u32 %v2364, 2147483648
      %v2623 = vxor.u32 %v2365, 2147483648
      %v2624 = vxor.u32 %v2366, 2147483648
      %v2625 = vxor.u32 %v2367, 2147483648
      %v2626 = vxor.u32 %v2368, 2147483648
      %v2627 = vxor.u32 %v2369, 2147483648
      %v2628 = vxor.u32 %v2370, 2147483648
      %v2629 = vxor.u32 %v2371, 2147483648
      %v2630 = vxor.u32 %v2372, 2147483648
      %v2631 = vxor.u32 %v2373, 2147483648
      %v2632 = vxor.u32 %v2374, 2147483648
      %v2633 = vxor.u32 %v2375, 2147483648
      %v2634 = vxor.u32 %v2376, 2147483648
      %v2635 = vxor.u32 %v2377, 2147483648
      %v2636 = vxor.u32 %v2378, 2147483648
      %v2637 = vxor.u32 %v2379, 2147483648
      %v2638 = vxor.u32 %v2380, 2147483648
      %v2639 = vxor.u32 %v2381, 2147483648
      %v2640 = vxor.u32 %v2382, 2147483648
      %v2641 = vxor.u32 %v2383, 2147483648
      %v2642 = vxor.u32 %v2384, 2147483648
      %v2643 = vxor.u32 %v2385, 2147483648
      %v2644 = vxor.u32 %v2386, 2147483648
      %v2645 = vxor.u32 %v2387, 2147483648
      %v2646 = vxor.u32 %v2388, 2147483648
      %v2647 = vxor.u32 %v2389, 2147483648
      %v2648 = vxor.u32 %v2390, 2147483648
      %v2649 = vxor.u32 %v2391, 2147483648
      %v2650 = vmul.f32 %v2392, 1.442695
      %v2651 = vpow.pop %v2650
      %v2652 = vmul.f32 %v2393, 1.442695
      %v2653 = vpow.pop %v2652
      %v2654 = vmul.f32 %v2394, 1.442695
      %v2655 = vpow.pop %v2654
      %v2656 = vmul.f32 %v2395, 1.442695
      %v2657 = vpow.pop %v2656
      %v2658 = vmul.f32 %v2396, 1.442695
      %v2659 = vpow.pop %v2658
      %v2660 = vmul.f32 %v2397, 1.442695
      %v2661 = vpow.pop %v2660
      %v2662 = vmul.f32 %v2398, 1.442695
      %v2663 = vpow.pop %v2662
      %v2664 = vmul.f32 %v2399, 1.442695
      %v2665 = vpow.pop %v2664
      %v2666 = vmul.f32 %v2400, 1.442695
      %v2667 = vpow.pop %v2666
      %v2668 = vmul.f32 %v2401, 1.442695
      %v2669 = vpow.pop %v2668
      %v2670 = vmul.f32 %v2402, 1.442695
      %v2671 = vpow.pop %v2670
      %v2672 = vmul.f32 %v2403, 1.442695
      %v2673 = vpow.pop %v2672
      %v2674 = vmul.f32 %v2404, 1.442695
      %v2675 = vpow.pop %v2674
      %v2676 = vmul.f32 %v2405, 1.442695
      %v2677 = vpow.pop %v2676
      %v2678 = vmul.f32 %v2406, 1.442695
      %v2679 = vpow.pop %v2678
      %v2680 = vmul.f32 %v2407, 1.442695
      %v2681 = vpow.pop %v2680
      %v2682 = vmul.f32 %v2408, 1.442695
      %v2683 = vpow.pop %v2682
      %v2684 = vmul.f32 %v2409, 1.442695
      %v2685 = vpow.pop %v2684
      %v2686 = vmul.f32 %v2410, 1.442695
      %v2687 = vpow.pop %v2686
      %v2688 = vmul.f32 %v2411, 1.442695
      %v2689 = vpow.pop %v2688
      %v2690 = vmul.f32 %v2412, 1.442695
      %v2691 = vpow.pop %v2690
      %v2692 = vmul.f32 %v2413, 1.442695
      %v2693 = vpow.pop %v2692
      %v2694 = vmul.f32 %v2414, 1.442695
      %v2695 = vpow.pop %v2694
      %v2696 = vmul.f32 %v2415, 1.442695
      %v2697 = vpow.pop %v2696
      %v2698 = vmul.f32 %v2416, 1.442695
      %v2699 = vpow.pop %v2698
      %v2700 = vmul.f32 %v2417, 1.442695
      %v2701 = vpow.pop %v2700
      %v2702 = vmul.f32 %v2418, 1.442695
      %v2703 = vpow.pop %v2702
      %v2704 = vmul.f32 %v2419, 1.442695
      %v2705 = vpow.pop %v2704
      %v2706 = vmul.f32 %v2420, 1.442695
      %v2707 = vpow.pop %v2706
      %v2708 = vmul.f32 %v2421, 1.442695
      %v2709 = vpow.pop %v2708
      %v2710 = vmul.f32 %v2422, 1.442695
      %v2711 = vpow.pop %v2710
      %v2712 = vmul.f32 %v2423, 1.442695
      %v2713 = vpow.pop %v2712
      %v2714 = vmul.f32 %v2424, 1.442695
      %v2715 = vpow.pop %v2714
      %v2716 = vmul.f32 %v2425, 1.442695
      %v2717 = vpow.pop %v2716
      %v2718 = vmul.f32 %v2426, 1.442695
      %v2719 = vpow.pop %v2718
      %v2720 = vmul.f32 %v2427, 1.442695
      %v2721 = vpow.pop %v2720
      %v2722 = vmul.f32 %v2428, 1.442695
      %v2723 = vpow.pop %v2722
      %v2724 = vmul.f32 %v2429, 1.442695
      %v2725 = vpow.pop %v2724
      %v2726 = vmul.f32 %v2430, 1.442695
      %v2727 = vpow.pop %v2726
      %v2728 = vmul.f32 %v2431, 1.442695
      %v2729 = vpow.pop %v2728
      %v2730 = vmul.f32 %v2432, 1.442695
      %v2731 = vpow.pop %v2730
      %v2732 = vmul.f32 %v2433, 1.442695
      %v2733 = vpow.pop %v2732
      %v2734 = vmul.f32 %v2434, 1.442695
      %v2735 = vpow.pop %v2734
      %v2736 = vmul.f32 %v2435, 1.442695
      %v2737 = vpow.pop %v2736
      %v2738 = vmul.f32 %v2436, 1.442695
      %v2739 = vpow.pop %v2738
      %v2740 = vmul.f32 %v2437, 1.442695
      %v2741 = vpow.pop %v2740
      %v2742 = vmul.f32 %v2438, 1.442695
      %v2743 = vpow.pop %v2742
      %v2744 = vmul.f32 %v2439, 1.442695
      %v2745 = vpow.pop %v2744
      %v2746 = vmul.f32 %v2440, 1.442695
      %v2747 = vpow.pop %v2746
      %v2748 = vmul.f32 %v2441, 1.442695
      %v2749 = vpow.pop %v2748
      %v2750 = vmul.f32 %v2442, 1.442695
      %v2751 = vpow.pop %v2750
      %v2752 = vmul.f32 %v2443, 1.442695
      %v2753 = vpow.pop %v2752
      %v2754 = vmul.f32 %v2444, 1.442695
      %v2755 = vpow.pop %v2754
      %v2756 = vmul.f32 %v2445, 1.442695
      %v2757 = vpow.pop %v2756
      %v2758 = vmul.f32 %v2446, 1.442695
      %v2759 = vpow.pop %v2758
      %v2760 = vmul.f32 %v2447, 1.442695
      %v2761 = vpow.pop %v2760
      %v2762 = vmul.f32 %v2448, 1.442695
      %v2763 = vpow.pop %v2762
      %v2764 = vmul.f32 %v2449, 1.442695
      %v2765 = vpow.pop %v2764
      %v2766 = vmul.f32 %v2450, 1.442695
      %v2767 = vpow.pop %v2766
      %v2768 = vmul.f32 %v2451, 1.442695
      %v2769 = vpow.pop %v2768
      %v2770 = vmul.f32 %v2452, 1.442695
      %v2771 = vpow.pop %v2770
      %v2772 = vmul.f32 %v2453, 1.442695
      %v2773 = vpow.pop %v2772
      %v2774 = vmul.f32 %v2454, 1.442695
      %v2775 = vpow.pop %v2774
      %v2776 = vmul.f32 %v2455, 1.442695
      %v2777 = vpow.pop %v2776
      %v2778 = vmul.f32 %v2456, 1.442695
      %v2779 = vpow.pop %v2778
      %v2780 = vmul.f32 %v2457, 1.442695
      %v2781 = vpow.pop %v2780
      %v2782 = vmul.f32 %v2458, 1.442695
      %v2783 = vpow.pop %v2782
      %v2784 = vmul.f32 %v2459, 1.442695
      %v2785 = vpow.pop %v2784
      %v2786 = vmul.f32 %v2460, 1.442695
      %v2787 = vpow.pop %v2786
      %v2788 = vmul.f32 %v2461, 1.442695
      %v2789 = vpow.pop %v2788
      %v2790 = vmul.f32 %v2462, 1.442695
      %v2791 = vpow.pop %v2790
      %v2792 = vmul.f32 %v2463, 1.442695
      %v2793 = vpow.pop %v2792
      %v2794 = vmul.f32 %v2464, 1.442695
      %v2795 = vpow.pop %v2794
      %v2796 = vmul.f32 %v2465, 1.442695
      %v2797 = vpow.pop %v2796
      %v2798 = vmul.f32 %v2466, 1.442695
      %v2799 = vpow.pop %v2798
      %v2800 = vmul.f32 %v2467, 1.442695
      %v2801 = vpow.pop %v2800
      %v2802 = vmul.f32 %v2468, 1.442695
      %v2803 = vpow.pop %v2802
      %v2804 = vmul.f32 %v2469, 1.442695
      %v2805 = vpow.pop %v2804
      %v2806 = vmul.f32 %v2470, 1.442695
      %v2807 = vpow.pop %v2806
      %v2808 = vmul.f32 %v2471, 1.442695
      %v2809 = vpow.pop %v2808
      %v2810 = vmul.f32 %v2472, 1.442695
      %v2811 = vpow.pop %v2810
      %v2812 = vmul.f32 %v2473, 1.442695
      %v2813 = vpow.pop %v2812
      %v2814 = vmul.f32 %v2474, 1.442695
      %v2815 = vpow.pop %v2814
      %v2816 = vmul.f32 %v2475, 1.442695
      %v2817 = vpow.pop %v2816
      %v2818 = vmul.f32 %v2476, 1.442695
      %v2819 = vpow.pop %v2818
      %v2820 = vmul.f32 %v2477, 1.442695
      %v2821 = vpow.pop %v2820
      %v2822 = vmul.f32 %v2478, 1.442695
      %v2823 = vpow.pop %v2822
      %v2824 = vmul.f32 %v2479, 1.442695
      %v2825 = vpow.pop %v2824
      %v2826 = vmul.f32 %v2480, 1.442695
      %v2827 = vpow.pop %v2826
      %v2828 = vmul.f32 %v2481, 1.442695
      %v2829 = vpow.pop %v2828
      %v2830 = vmul.f32 %v2482, 1.442695
      %v2831 = vpow.pop %v2830
      %v2832 = vmul.f32 %v2483, 1.442695
      %v2833 = vpow.pop %v2832
      %v2834 = vmul.f32 %v2484, 1.442695
      %v2835 = vpow.pop %v2834
      %v2836 = vmul.f32 %v2485, 1.442695
      %v2837 = vpow.pop %v2836
      %v2838 = vmul.f32 %v2486, 1.442695
      %v2839 = vpow.pop %v2838
      %v2840 = vmul.f32 %v2487, 1.442695
      %v2841 = vpow.pop %v2840
      %v2842 = vmul.f32 %v2488, 1.442695
      %v2843 = vpow.pop %v2842
      %v2844 = vmul.f32 %v2489, 1.442695
      %v2845 = vpow.pop %v2844
      %v2846 = vmul.f32 %v2490, 1.442695
      %v2847 = vpow.pop %v2846
      %v2848 = vmul.f32 %v2491, 1.442695
      %v2849 = vpow.pop %v2848
      %v2850 = vmul.f32 %v2492, 1.442695
      %v2851 = vpow.pop %v2850
      %v2852 = vmul.f32 %v2493, 1.442695
      %v2853 = vpow.pop %v2852
      %v2854 = vmul.f32 %v2494, 1.442695
      %v2855 = vpow.pop %v2854
      %v2856 = vmul.f32 %v2495, 1.442695
      %v2857 = vpow.pop %v2856
      %v2858 = vmul.f32 %v2496, 1.442695
      %v2859 = vpow.pop %v2858
      %v2860 = vmul.f32 %v2497, 1.442695
      %v2861 = vpow.pop %v2860
      %v2862 = vmul.f32 %v2498, 1.442695
      %v2863 = vpow.pop %v2862
      %v2864 = vmul.f32 %v2499, 1.442695
      %v2865 = vpow.pop %v2864
      %v2866 = vmul.f32 %v2500, 1.442695
      %v2867 = vpow.pop %v2866
      %v2868 = vmul.f32 %v2501, 1.442695
      %v2869 = vpow.pop %v2868
      %v2870 = vmul.f32 %v2502, 1.442695
      %v2871 = vpow.pop %v2870
      %v2872 = vmul.f32 %v2503, 1.442695
      %v2873 = vpow.pop %v2872
      %v2874 = vmul.f32 %v2504, 1.442695
      %v2875 = vpow.pop %v2874
      %v2876 = vmul.f32 %v2505, 1.442695
      %v2877 = vpow.pop %v2876
      %v2878 = vmul.f32 %v2506, 1.442695
      %v2879 = vpow.pop %v2878
      %v2880 = vmul.f32 %v2507, 1.442695
      %v2881 = vpow.pop %v2880
      %v2882 = vmul.f32 %v2508, 1.442695
      %v2883 = vpow.pop %v2882
      %v2884 = vmul.f32 %v2509, 1.442695
      %v2885 = vpow.pop %v2884
      %v2886 = vmul.f32 %v2510, 1.442695
      %v2887 = vpow.pop %v2886
      %v2888 = vmul.f32 %v2511, 1.442695
      %v2889 = vpow.pop %v2888
      %v2890 = vmul.f32 %v2512, 1.442695
      %v2891 = vpow.pop %v2890
      %v2892 = vmul.f32 %v2513, 1.442695
      %v2893 = vpow.pop %v2892
      %v2894 = vmul.f32 %v2514, 1.442695
      %v2895 = vpow.pop %v2894
      %v2896 = vmul.f32 %v2515, 1.442695
      %v2897 = vpow.pop %v2896
      %v2898 = vmul.f32 %v2516, 1.442695
      %v2899 = vpow.pop %v2898
      %v2900 = vmul.f32 %v2517, 1.442695
      %v2901 = vpow.pop %v2900
      %v2902 = vmul.f32 %v2518, 1.442695
      %v2903 = vpow.pop %v2902
      %v2904 = vmul.f32 %v2519, 1.442695
      %v2905 = vpow.pop %v2904
      %v2906 = vmul.f32 %v2520, 1.442695
      %v2907 = vpow.pop %v2906
      %v2908 = vmul.f32 %v2521, 1.442695
      %v2909 = vpow.pop %v2908
      %v2910 = vmul.f32 %v2522, 1.442695
      %v2911 = vpow.pop %v2910
      %v2912 = vmul.f32 %v2523, 1.442695
      %v2913 = vpow.pop %v2912
      %v2914 = vmul.f32 %v2524, 1.442695
      %v2915 = vpow.pop %v2914
      %v2916 = vmul.f32 %v2525, 1.442695
      %v2917 = vpow.pop %v2916
      %v2918 = vmul.f32 %v2526, 1.442695
      %v2919 = vpow.pop %v2918
      %v2920 = vmul.f32 %v2527, 1.442695
      %v2921 = vpow.pop %v2920
      %v2922 = vmul.f32 %v2528, 1.442695
      %v2923 = vpow.pop %v2922
      %v2924 = vmul.f32 %v2529, 1.442695
      %v2925 = vpow.pop %v2924
      %v2926 = vmul.f32 %v2530, 1.442695
      %v2927 = vpow.pop %v2926
      %v2928 = vmul.f32 %v2531, 1.442695
      %v2929 = vpow.pop %v2928
      %v2930 = vmul.f32 %v2532, 1.442695
      %v2931 = vpow.pop %v2930
      %v2932 = vmul.f32 %v2533, 1.442695
      %v2933 = vpow.pop %v2932
      %v2934 = vmul.f32 %v2534, 1.442695
      %v2935 = vpow.pop %v2934
      %v2936 = vmul.f32 %v2535, 1.442695
      %v2937 = vpow.pop %v2936
      %v2938 = vmul.f32 %v2536, 1.442695
      %v2939 = vpow.pop %v2938
      %v2940 = vmul.f32 %v2537, 1.442695
      %v2941 = vpow.pop %v2940
      %v2942 = vmul.f32 %v2538, 1.442695
      %v2943 = vpow.pop %v2942
      %v2944 = vmul.f32 %v2539, 1.442695
      %v2945 = vpow.pop %v2944
      %v2946 = vmul.f32 %v2540, 1.442695
      %v2947 = vpow.pop %v2946
      %v2948 = vmul.f32 %v2541, 1.442695
      %v2949 = vpow.pop %v2948
      %v2950 = vmul.f32 %v2542, 1.442695
      %v2951 = vpow.pop %v2950
      %v2952 = vmul.f32 %v2543, 1.442695
      %v2953 = vpow.pop %v2952
      %v2954 = vmul.f32 %v2544, 1.442695
      %v2955 = vpow.pop %v2954
      %v2956 = vmul.f32 %v2545, 1.442695
      %v2957 = vpow.pop %v2956
      %v2958 = vmul.f32 %v2546, 1.442695
      %v2959 = vpow.pop %v2958
      %v2960 = vmul.f32 %v2547, 1.442695
      %v2961 = vpow.pop %v2960
      %v2962 = vmul.f32 %v2548, 1.442695
      %v2963 = vpow.pop %v2962
      %v2964 = vmul.f32 %v2549, 1.442695
      %v2965 = vpow.pop %v2964
      %v2966 = vmul.f32 %v2550, 1.442695
      %v2967 = vpow.pop %v2966
      %v2968 = vmul.f32 %v2551, 1.442695
      %v2969 = vpow.pop %v2968
      %v2970 = vmul.f32 %v2552, 1.442695
      %v2971 = vpow.pop %v2970
      %v2972 = vmul.f32 %v2553, 1.442695
      %v2973 = vpow.pop %v2972
      %v2974 = vmul.f32 %v2554, 1.442695
      %v2975 = vpow.pop %v2974
      %v2976 = vmul.f32 %v2555, 1.442695
      %v2977 = vpow.pop %v2976
      %v2978 = vmul.f32 %v2556, 1.442695
      %v2979 = vpow.pop %v2978
      %v2980 = vmul.f32 %v2557, 1.442695
      %v2981 = vpow.pop %v2980
      %v2982 = vmul.f32 %v2558, 1.442695
      %v2983 = vpow.pop %v2982
      %v2984 = vmul.f32 %v2559, 1.442695
      %v2985 = vpow.pop %v2984
      %v2986 = vmul.f32 %v2560, 1.442695
      %v2987 = vpow.pop %v2986
      %v2988 = vmul.f32 %v2561, 1.442695
      %v2989 = vpow.pop %v2988
      %v2990 = vmul.f32 %v2562, 1.442695
      %v2991 = vpow.pop %v2990
      %v2992 = vmul.f32 %v2563, 1.442695
      %v2993 = vpow.pop %v2992
      %v2994 = vmul.f32 %v2564, 1.442695
      %v2995 = vpow.pop %v2994
      %v2996 = vmul.f32 %v2565, 1.442695
      %v2997 = vpow.pop %v2996
      %v2998 = vmul.f32 %v2566, 1.442695
      %v2999 = vpow.pop %v2998
      %v3000 = vmul.f32 %v2567, 1.442695
      %v3001 = vpow.pop %v3000
      %v3002 = vmul.f32 %v2568, 1.442695
      %v3003 = vpow.pop %v3002
      %v3004 = vmul.f32 %v2569, 1.442695
      %v3005 = vpow.pop %v3004
      %v3006 = vmul.f32 %v2570, 1.442695
      %v3007 = vpow.pop %v3006
      %v3008 = vmul.f32 %v2571, 1.442695
      %v3009 = vpow.pop %v3008
      %v3010 = vmul.f32 %v2572, 1.442695
      %v3011 = vpow.pop %v3010
      %v3012 = vmul.f32 %v2573, 1.442695
      %v3013 = vpow.pop %v3012
      %v3014 = vmul.f32 %v2574, 1.442695
      %v3015 = vpow.pop %v3014
      %v3016 = vmul.f32 %v2575, 1.442695
      %v3017 = vpow.pop %v3016
      %v3018 = vmul.f32 %v2576, 1.442695
      %v3019 = vpow.pop %v3018
      %v3020 = vmul.f32 %v2577, 1.442695
      %v3021 = vpow.pop %v3020
      %v3022 = vmul.f32 %v2578, 1.442695
      %v3023 = vpow.pop %v3022
      %v3024 = vmul.f32 %v2579, 1.442695
      %v3025 = vpow.pop %v3024
      %v3026 = vmul.f32 %v2580, 1.442695
      %v3027 = vpow.pop %v3026
      %v3028 = vmul.f32 %v2581, 1.442695
      %v3029 = vpow.pop %v3028
      %v3030 = vmul.f32 %v2582, 1.442695
      %v3031 = vpow.pop %v3030
      %v3032 = vmul.f32 %v2583, 1.442695
      %v3033 = vpow.pop %v3032
      %v3034 = vmul.f32 %v2584, 1.442695
      %v3035 = vpow.pop %v3034
      %v3036 = vmul.f32 %v2585, 1.442695
      %v3037 = vpow.pop %v3036
      %v3038 = vmul.f32 %v2586, 1.442695
      %v3039 = vpow.pop %v3038
      %v3040 = vmul.f32 %v2587, 1.442695
      %v3041 = vpow.pop %v3040
      %v3042 = vmul.f32 %v2588, 1.442695
      %v3043 = vpow.pop %v3042
      %v3044 = vmul.f32 %v2589, 1.442695
      %v3045 = vpow.pop %v3044
      %v3046 = vmul.f32 %v2590, 1.442695
      %v3047 = vpow.pop %v3046
      %v3048 = vmul.f32 %v2591, 1.442695
      %v3049 = vpow.pop %v3048
      %v3050 = vmul.f32 %v2592, 1.442695
      %v3051 = vpow.pop %v3050
      %v3052 = vmul.f32 %v2593, 1.442695
      %v3053 = vpow.pop %v3052
      %v3054 = vmul.f32 %v2594, 1.442695
      %v3055 = vpow.pop %v3054
      %v3056 = vmul.f32 %v2595, 1.442695
      %v3057 = vpow.pop %v3056
      %v3058 = vmul.f32 %v2596, 1.442695
      %v3059 = vpow.pop %v3058
      %v3060 = vmul.f32 %v2597, 1.442695
      %v3061 = vpow.pop %v3060
      %v3062 = vmul.f32 %v2598, 1.442695
      %v3063 = vpow.pop %v3062
      %v3064 = vmul.f32 %v2599, 1.442695
      %v3065 = vpow.pop %v3064
      %v3066 = vmul.f32 %v2600, 1.442695
      %v3067 = vpow.pop %v3066
      %v3068 = vmul.f32 %v2601, 1.442695
      %v3069 = vpow.pop %v3068
      %v3070 = vmul.f32 %v2602, 1.442695
      %v3071 = vpow.pop %v3070
      %v3072 = vmul.f32 %v2603, 1.442695
      %v3073 = vpow.pop %v3072
      %v3074 = vmul.f32 %v2604, 1.442695
      %v3075 = vpow.pop %v3074
      %v3076 = vmul.f32 %v2605, 1.442695
      %v3077 = vpow.pop %v3076
      %v3078 = vmul.f32 %v2606, 1.442695
      %v3079 = vpow.pop %v3078
      %v3080 = vmul.f32 %v2607, 1.442695
      %v3081 = vpow.pop %v3080
      %v3082 = vmul.f32 %v2608, 1.442695
      %v3083 = vpow.pop %v3082
      %v3084 = vmul.f32 %v2609, 1.442695
      %v3085 = vpow.pop %v3084
      %v3086 = vmul.f32 %v2610, 1.442695
      %v3087 = vpow.pop %v3086
      %v3088 = vmul.f32 %v2611, 1.442695
      %v3089 = vpow.pop %v3088
      %v3090 = vmul.f32 %v2612, 1.442695
      %v3091 = vpow.pop %v3090
      %v3092 = vmul.f32 %v2613, 1.442695
      %v3093 = vpow.pop %v3092
      %v3094 = vmul.f32 %v2614, 1.442695
      %v3095 = vpow.pop %v3094
      %v3096 = vmul.f32 %v2615, 1.442695
      %v3097 = vpow.pop %v3096
      %v3098 = vmul.f32 %v2616, 1.442695
      %v3099 = vpow.pop %v3098
      %v3100 = vmul.f32 %v2617, 1.442695
      %v3101 = vpow.pop %v3100
      %v3102 = vmul.f32 %v2618, 1.442695
      %v3103 = vpow.pop %v3102
      %v3104 = vmul.f32 %v2619, 1.442695
      %v3105 = vpow.pop %v3104
      %v3106 = vmul.f32 %v2620, 1.442695
      %v3107 = vpow.pop %v3106
      %v3108 = vmul.f32 %v2621, 1.442695
      %v3109 = vpow.pop %v3108
      %v3110 = vmul.f32 %v2622, 1.442695
      %v3111 = vpow.pop %v3110
      %v3112 = vmul.f32 %v2623, 1.442695
      %v3113 = vpow.pop %v3112
      %v3114 = vmul.f32 %v2624, 1.442695
      %v3115 = vpow.pop %v3114
      %v3116 = vmul.f32 %v2625, 1.442695
      %v3117 = vpow.pop %v3116
      %v3118 = vmul.f32 %v2626, 1.442695
      %v3119 = vpow.pop %v3118
      %v3120 = vmul.f32 %v2627, 1.442695
      %v3121 = vpow.pop %v3120
      %v3122 = vmul.f32 %v2628, 1.442695
      %v3123 = vpow.pop %v3122
      %v3124 = vmul.f32 %v2629, 1.442695
      %v3125 = vpow.pop %v3124
      %v3126 = vmul.f32 %v2630, 1.442695
      %v3127 = vpow.pop %v3126
      %v3128 = vmul.f32 %v2631, 1.442695
      %v3129 = vpow.pop %v3128
      %v3130 = vmul.f32 %v2632, 1.442695
      %v3131 = vpow.pop %v3130
      %v3132 = vmul.f32 %v2633, 1.442695
      %v3133 = vpow.pop %v3132
      %v3134 = vmul.f32 %v2634, 1.442695
      %v3135 = vpow.pop %v3134
      %v3136 = vmul.f32 %v2635, 1.442695
      %v3137 = vpow.pop %v3136
      %v3138 = vmul.f32 %v2636, 1.442695
      %v3139 = vpow.pop %v3138
      %v3140 = vmul.f32 %v2637, 1.442695
      %v3141 = vpow.pop %v3140
      %v3142 = vmul.f32 %v2638, 1.442695
      %v3143 = vpow.pop %v3142
      %v3144 = vmul.f32 %v2639, 1.442695
      %v3145 = vpow.pop %v3144
      %v3146 = vmul.f32 %v2640, 1.442695
      %v3147 = vpow.pop %v3146
      %v3148 = vmul.f32 %v2641, 1.442695
      %v3149 = vpow.pop %v3148
      %v3150 = vmul.f32 %v2642, 1.442695
      %v3151 = vpow.pop %v3150
      %v3152 = vmul.f32 %v2643, 1.442695
      %v3153 = vpow.pop %v3152
      %v3154 = vmul.f32 %v2644, 1.442695
      %v3155 = vpow.pop %v3154
      %v3156 = vmul.f32 %v2645, 1.442695
      %v3157 = vpow.pop %v3156
      %v3158 = vmul.f32 %v2646, 1.442695
      %v3159 = vpow.pop %v3158
      %v3160 = vmul.f32 %v2647, 1.442695
      %v3161 = vpow.pop %v3160
      %v3162 = vmul.f32 %v2648, 1.442695
      %v3163 = vpow.pop %v3162
      %v3164 = vmul.f32 %v2649, 1.442695
      %v3165 = vpow.pop %v3164
      %v3166 = vadd.f32 %v2651, 1.0
      %v3167 = vadd.f32 %v2653, 1.0
      %v3168 = vadd.f32 %v2655, 1.0
      %v3169 = vadd.f32 %v2657, 1.0
      %v3170 = vadd.f32 %v2659, 1.0
      %v3171 = vadd.f32 %v2661, 1.0
      %v3172 = vadd.f32 %v2663, 1.0
      %v3173 = vadd.f32 %v2665, 1.0
      %v3174 = vadd.f32 %v2667, 1.0
      %v3175 = vadd.f32 %v2669, 1.0
      %v3176 = vadd.f32 %v2671, 1.0
      %v3177 = vadd.f32 %v2673, 1.0
      %v3178 = vadd.f32 %v2675, 1.0
      %v3179 = vadd.f32 %v2677, 1.0
      %v3180 = vadd.f32 %v2679, 1.0
      %v3181 = vadd.f32 %v2681, 1.0
      %v3182 = vadd.f32 %v2683, 1.0
      %v3183 = vadd.f32 %v2685, 1.0
      %v3184 = vadd.f32 %v2687, 1.0
      %v3185 = vadd.f32 %v2689, 1.0
      %v3186 = vadd.f32 %v2691, 1.0
      %v3187 = vadd.f32 %v2693, 1.0
      %v3188 = vadd.f32 %v2695, 1.0
      %v3189 = vadd.f32 %v2697, 1.0
      %v3190 = vadd.f32 %v2699, 1.0
      %v3191 = vadd.f32 %v2701, 1.0
      %v3192 = vadd.f32 %v2703, 1.0
      %v3193 = vadd.f32 %v2705, 1.0
      %v3194 = vadd.f32 %v2707, 1.0
      %v3195 = vadd.f32 %v2709, 1.0
      %v3196 = vadd.f32 %v2711, 1.0
      %v3197 = vadd.f32 %v2713, 1.0
      %v3198 = vadd.f32 %v2715, 1.0
      %v3199 = vadd.f32 %v2717, 1.0
      %v3200 = vadd.f32 %v2719, 1.0
      %v3201 = vadd.f32 %v2721, 1.0
      %v3202 = vadd.f32 %v2723, 1.0
      %v3203 = vadd.f32 %v2725, 1.0
      %v3204 = vadd.f32 %v2727, 1.0
      %v3205 = vadd.f32 %v2729, 1.0
      %v3206 = vadd.f32 %v2731, 1.0
      %v3207 = vadd.f32 %v2733, 1.0
      %v3208 = vadd.f32 %v2735, 1.0
      %v3209 = vadd.f32 %v2737, 1.0
      %v3210 = vadd.f32 %v2739, 1.0
      %v3211 = vadd.f32 %v2741, 1.0
      %v3212 = vadd.f32 %v2743, 1.0
      %v3213 = vadd.f32 %v2745, 1.0
      %v3214 = vadd.f32 %v2747, 1.0
      %v3215 = vadd.f32 %v2749, 1.0
      %v3216 = vadd.f32 %v2751, 1.0
      %v3217 = vadd.f32 %v2753, 1.0
      %v3218 = vadd.f32 %v2755, 1.0
      %v3219 = vadd.f32 %v2757, 1.0
      %v3220 = vadd.f32 %v2759, 1.0
      %v3221 = vadd.f32 %v2761, 1.0
      %v3222 = vadd.f32 %v2763, 1.0
      %v3223 = vadd.f32 %v2765, 1.0
      %v3224 = vadd.f32 %v2767, 1.0
      %v3225 = vadd.f32 %v2769, 1.0
      %v3226 = vadd.f32 %v2771, 1.0
      %v3227 = vadd.f32 %v2773, 1.0
      %v3228 = vadd.f32 %v2775, 1.0
      %v3229 = vadd.f32 %v2777, 1.0
      %v3230 = vadd.f32 %v2779, 1.0
      %v3231 = vadd.f32 %v2781, 1.0
      %v3232 = vadd.f32 %v2783, 1.0
      %v3233 = vadd.f32 %v2785, 1.0
      %v3234 = vadd.f32 %v2787, 1.0
      %v3235 = vadd.f32 %v2789, 1.0
      %v3236 = vadd.f32 %v2791, 1.0
      %v3237 = vadd.f32 %v2793, 1.0
      %v3238 = vadd.f32 %v2795, 1.0
      %v3239 = vadd.f32 %v2797, 1.0
      %v3240 = vadd.f32 %v2799, 1.0
      %v3241 = vadd.f32 %v2801, 1.0
      %v3242 = vadd.f32 %v2803, 1.0
      %v3243 = vadd.f32 %v2805, 1.0
      %v3244 = vadd.f32 %v2807, 1.0
      %v3245 = vadd.f32 %v2809, 1.0
      %v3246 = vadd.f32 %v2811, 1.0
      %v3247 = vadd.f32 %v2813, 1.0
      %v3248 = vadd.f32 %v2815, 1.0
      %v3249 = vadd.f32 %v2817, 1.0
      %v3250 = vadd.f32 %v2819, 1.0
      %v3251 = vadd.f32 %v2821, 1.0
      %v3252 = vadd.f32 %v2823, 1.0
      %v3253 = vadd.f32 %v2825, 1.0
      %v3254 = vadd.f32 %v2827, 1.0
      %v3255 = vadd.f32 %v2829, 1.0
      %v3256 = vadd.f32 %v2831, 1.0
      %v3257 = vadd.f32 %v2833, 1.0
      %v3258 = vadd.f32 %v2835, 1.0
      %v3259 = vadd.f32 %v2837, 1.0
      %v3260 = vadd.f32 %v2839, 1.0
      %v3261 = vadd.f32 %v2841, 1.0
      %v3262 = vadd.f32 %v2843, 1.0
      %v3263 = vadd.f32 %v2845, 1.0
      %v3264 = vadd.f32 %v2847, 1.0
      %v3265 = vadd.f32 %v2849, 1.0
      %v3266 = vadd.f32 %v2851, 1.0
      %v3267 = vadd.f32 %v2853, 1.0
      %v3268 = vadd.f32 %v2855, 1.0
      %v3269 = vadd.f32 %v2857, 1.0
      %v3270 = vadd.f32 %v2859, 1.0
      %v3271 = vadd.f32 %v2861, 1.0
      %v3272 = vadd.f32 %v2863, 1.0
      %v3273 = vadd.f32 %v2865, 1.0
      %v3274 = vadd.f32 %v2867, 1.0
      %v3275 = vadd.f32 %v2869, 1.0
      %v3276 = vadd.f32 %v2871, 1.0
      %v3277 = vadd.f32 %v2873, 1.0
      %v3278 = vadd.f32 %v2875, 1.0
      %v3279 = vadd.f32 %v2877, 1.0
      %v3280 = vadd.f32 %v2879, 1.0
      %v3281 = vadd.f32 %v2881, 1.0
      %v3282 = vadd.f32 %v2883, 1.0
      %v3283 = vadd.f32 %v2885, 1.0
      %v3284 = vadd.f32 %v2887, 1.0
      %v3285 = vadd.f32 %v2889, 1.0
      %v3286 = vadd.f32 %v2891, 1.0
      %v3287 = vadd.f32 %v2893, 1.0
      %v3288 = vadd.f32 %v2895, 1.0
      %v3289 = vadd.f32 %v2897, 1.0
      %v3290 = vadd.f32 %v2899, 1.0
      %v3291 = vadd.f32 %v2901, 1.0
      %v3292 = vadd.f32 %v2903, 1.0
      %v3293 = vadd.f32 %v2905, 1.0
      %v3294 = vadd.f32 %v2907, 1.0
      %v3295 = vadd.f32 %v2909, 1.0
      %v3296 = vadd.f32 %v2911, 1.0
      %v3297 = vadd.f32 %v2913, 1.0
      %v3298 = vadd.f32 %v2915, 1.0
      %v3299 = vadd.f32 %v2917, 1.0
      %v3300 = vadd.f32 %v2919, 1.0
      %v3301 = vadd.f32 %v2921, 1.0
      %v3302 = vadd.f32 %v2923, 1.0
      %v3303 = vadd.f32 %v2925, 1.0
      %v3304 = vadd.f32 %v2927, 1.0
      %v3305 = vadd.f32 %v2929, 1.0
      %v3306 = vadd.f32 %v2931, 1.0
      %v3307 = vadd.f32 %v2933, 1.0
      %v3308 = vadd.f32 %v2935, 1.0
      %v3309 = vadd.f32 %v2937, 1.0
      %v3310 = vadd.f32 %v2939, 1.0
      %v3311 = vadd.f32 %v2941, 1.0
      %v3312 = vadd.f32 %v2943, 1.0
      %v3313 = vadd.f32 %v2945, 1.0
      %v3314 = vadd.f32 %v2947, 1.0
      %v3315 = vadd.f32 %v2949, 1.0
      %v3316 = vadd.f32 %v2951, 1.0
      %v3317 = vadd.f32 %v2953, 1.0
      %v3318 = vadd.f32 %v2955, 1.0
      %v3319 = vadd.f32 %v2957, 1.0
      %v3320 = vadd.f32 %v2959, 1.0
      %v3321 = vadd.f32 %v2961, 1.0
      %v3322 = vadd.f32 %v2963, 1.0
      %v3323 = vadd.f32 %v2965, 1.0
      %v3324 = vadd.f32 %v2967, 1.0
      %v3325 = vadd.f32 %v2969, 1.0
      %v3326 = vadd.f32 %v2971, 1.0
      %v3327 = vadd.f32 %v2973, 1.0
      %v3328 = vadd.f32 %v2975, 1.0
      %v3329 = vadd.f32 %v2977, 1.0
      %v3330 = vadd.f32 %v2979, 1.0
      %v3331 = vadd.f32 %v2981, 1.0
      %v3332 = vadd.f32 %v2983, 1.0
      %v3333 = vadd.f32 %v2985, 1.0
      %v3334 = vadd.f32 %v2987, 1.0
      %v3335 = vadd.f32 %v2989, 1.0
      %v3336 = vadd.f32 %v2991, 1.0
      %v3337 = vadd.f32 %v2993, 1.0
      %v3338 = vadd.f32 %v2995, 1.0
      %v3339 = vadd.f32 %v2997, 1.0
      %v3340 = vadd.f32 %v2999, 1.0
      %v3341 = vadd.f32 %v3001, 1.0
      %v3342 = vadd.f32 %v3003, 1.0
      %v3343 = vadd.f32 %v3005, 1.0
      %v3344 = vadd.f32 %v3007, 1.0
      %v3345 = vadd.f32 %v3009, 1.0
      %v3346 = vadd.f32 %v3011, 1.0
      %v3347 = vadd.f32 %v3013, 1.0
      %v3348 = vadd.f32 %v3015, 1.0
      %v3349 = vadd.f32 %v3017, 1.0
      %v3350 = vadd.f32 %v3019, 1.0
      %v3351 = vadd.f32 %v3021, 1.0
      %v3352 = vadd.f32 %v3023, 1.0
      %v3353 = vadd.f32 %v3025, 1.0
      %v3354 = vadd.f32 %v3027, 1.0
      %v3355 = vadd.f32 %v3029, 1.0
      %v3356 = vadd.f32 %v3031, 1.0
      %v3357 = vadd.f32 %v3033, 1.0
      %v3358 = vadd.f32 %v3035, 1.0
      %v3359 = vadd.f32 %v3037, 1.0
      %v3360 = vadd.f32 %v3039, 1.0
      %v3361 = vadd.f32 %v3041, 1.0
      %v3362 = vadd.f32 %v3043, 1.0
      %v3363 = vadd.f32 %v3045, 1.0
      %v3364 = vadd.f32 %v3047, 1.0
      %v3365 = vadd.f32 %v3049, 1.0
      %v3366 = vadd.f32 %v3051, 1.0
      %v3367 = vadd.f32 %v3053, 1.0
      %v3368 = vadd.f32 %v3055, 1.0
      %v3369 = vadd.f32 %v3057, 1.0
      %v3370 = vadd.f32 %v3059, 1.0
      %v3371 = vadd.f32 %v3061, 1.0
      %v3372 = vadd.f32 %v3063, 1.0
      %v3373 = vadd.f32 %v3065, 1.0
      %v3374 = vadd.f32 %v3067, 1.0
      %v3375 = vadd.f32 %v3069, 1.0
      %v3376 = vadd.f32 %v3071, 1.0
      %v3377 = vadd.f32 %v3073, 1.0
      %v3378 = vadd.f32 %v3075, 1.0
      %v3379 = vadd.f32 %v3077, 1.0
      %v3380 = vadd.f32 %v3079, 1.0
      %v3381 = vadd.f32 %v3081, 1.0
      %v3382 = vadd.f32 %v3083, 1.0
      %v3383 = vadd.f32 %v3085, 1.0
      %v3384 = vadd.f32 %v3087, 1.0
      %v3385 = vadd.f32 %v3089, 1.0
      %v3386 = vadd.f32 %v3091, 1.0
      %v3387 = vadd.f32 %v3093, 1.0
      %v3388 = vadd.f32 %v3095, 1.0
      %v3389 = vadd.f32 %v3097, 1.0
      %v3390 = vadd.f32 %v3099, 1.0
      %v3391 = vadd.f32 %v3101, 1.0
      %v3392 = vadd.f32 %v3103, 1.0
      %v3393 = vadd.f32 %v3105, 1.0
      %v3394 = vadd.f32 %v3107, 1.0
      %v3395 = vadd.f32 %v3109, 1.0
      %v3396 = vadd.f32 %v3111, 1.0
      %v3397 = vadd.f32 %v3113, 1.0
      %v3398 = vadd.f32 %v3115, 1.0
      %v3399 = vadd.f32 %v3117, 1.0
      %v3400 = vadd.f32 %v3119, 1.0
      %v3401 = vadd.f32 %v3121, 1.0
      %v3402 = vadd.f32 %v3123, 1.0
      %v3403 = vadd.f32 %v3125, 1.0
      %v3404 = vadd.f32 %v3127, 1.0
      %v3405 = vadd.f32 %v3129, 1.0
      %v3406 = vadd.f32 %v3131, 1.0
      %v3407 = vadd.f32 %v3133, 1.0
      %v3408 = vadd.f32 %v3135, 1.0
      %v3409 = vadd.f32 %v3137, 1.0
      %v3410 = vadd.f32 %v3139, 1.0
      %v3411 = vadd.f32 %v3141, 1.0
      %v3412 = vadd.f32 %v3143, 1.0
      %v3413 = vadd.f32 %v3145, 1.0
      %v3414 = vadd.f32 %v3147, 1.0
      %v3415 = vadd.f32 %v3149, 1.0
      %v3416 = vadd.f32 %v3151, 1.0
      %v3417 = vadd.f32 %v3153, 1.0
      %v3418 = vadd.f32 %v3155, 1.0
      %v3419 = vadd.f32 %v3157, 1.0
      %v3420 = vadd.f32 %v3159, 1.0
      %v3421 = vadd.f32 %v3161, 1.0
      %v3422 = vadd.f32 %v3163, 1.0
      %v3423 = vadd.f32 %v3165, 1.0
      %v3424 = vrcp.pop %v3166
      %v3425 = vmul.f32 1.0, %v3424
      %v3426 = vrcp.pop %v3167
      %v3427 = vmul.f32 1.0, %v3426
      %v3428 = vrcp.pop %v3168
      %v3429 = vmul.f32 1.0, %v3428
      %v3430 = vrcp.pop %v3169
      %v3431 = vmul.f32 1.0, %v3430
      %v3432 = vrcp.pop %v3170
      %v3433 = vmul.f32 1.0, %v3432
      %v3434 = vrcp.pop %v3171
      %v3435 = vmul.f32 1.0, %v3434
      %v3436 = vrcp.pop %v3172
      %v3437 = vmul.f32 1.0, %v3436
      %v3438 = vrcp.pop %v3173
      %v3439 = vmul.f32 1.0, %v3438
      %v3440 = vrcp.pop %v3174
      %v3441 = vmul.f32 1.0, %v3440
      %v3442 = vrcp.pop %v3175
      %v3443 = vmul.f32 1.0, %v3442
      %v3444 = vrcp.pop %v3176
      %v3445 = vmul.f32 1.0, %v3444
      %v3446 = vrcp.pop %v3177
      %v3447 = vmul.f32 1.0, %v3446
      %v3448 = vrcp.pop %v3178
      %v3449 = vmul.f32 1.0, %v3448
      %v3450 = vrcp.pop %v3179
      %v3451 = vmul.f32 1.0, %v3450
      %v3452 = vrcp.pop %v3180
      %v3453 = vmul.f32 1.0, %v3452
      %v3454 = vrcp.pop %v3181
      %v3455 = vmul.f32 1.0, %v3454
      %v3456 = vrcp.pop %v3182
      %v3457 = vmul.f32 1.0, %v3456
      %v3458 = vrcp.pop %v3183
      %v3459 = vmul.f32 1.0, %v3458
      %v3460 = vrcp.pop %v3184
      %v3461 = vmul.f32 1.0, %v3460
      %v3462 = vrcp.pop %v3185
      %v3463 = vmul.f32 1.0, %v3462
      %v3464 = vrcp.pop %v3186
      %v3465 = vmul.f32 1.0, %v3464
      %v3466 = vrcp.pop %v3187
      %v3467 = vmul.f32 1.0, %v3466
      %v3468 = vrcp.pop %v3188
      %v3469 = vmul.f32 1.0, %v3468
      %v3470 = vrcp.pop %v3189
      %v3471 = vmul.f32 1.0, %v3470
      %v3472 = vrcp.pop %v3190
      %v3473 = vmul.f32 1.0, %v3472
      %v3474 = vrcp.pop %v3191
      %v3475 = vmul.f32 1.0, %v3474
      %v3476 = vrcp.pop %v3192
      %v3477 = vmul.f32 1.0, %v3476
      %v3478 = vrcp.pop %v3193
      %v3479 = vmul.f32 1.0, %v3478
      %v3480 = vrcp.pop %v3194
      %v3481 = vmul.f32 1.0, %v3480
      %v3482 = vrcp.pop %v3195
      %v3483 = vmul.f32 1.0, %v3482
      %v3484 = vrcp.pop %v3196
      %v3485 = vmul.f32 1.0, %v3484
      %v3486 = vrcp.pop %v3197
      %v3487 = vmul.f32 1.0, %v3486
      %v3488 = vrcp.pop %v3198
      %v3489 = vmul.f32 1.0, %v3488
      %v3490 = vrcp.pop %v3199
      %v3491 = vmul.f32 1.0, %v3490
      %v3492 = vrcp.pop %v3200
      %v3493 = vmul.f32 1.0, %v3492
      %v3494 = vrcp.pop %v3201
      %v3495 = vmul.f32 1.0, %v3494
      %v3496 = vrcp.pop %v3202
      %v3497 = vmul.f32 1.0, %v3496
      %v3498 = vrcp.pop %v3203
      %v3499 = vmul.f32 1.0, %v3498
      %v3500 = vrcp.pop %v3204
      %v3501 = vmul.f32 1.0, %v3500
      %v3502 = vrcp.pop %v3205
      %v3503 = vmul.f32 1.0, %v3502
      %v3504 = vrcp.pop %v3206
      %v3505 = vmul.f32 1.0, %v3504
      %v3506 = vrcp.pop %v3207
      %v3507 = vmul.f32 1.0, %v3506
      %v3508 = vrcp.pop %v3208
      %v3509 = vmul.f32 1.0, %v3508
      %v3510 = vrcp.pop %v3209
      %v3511 = vmul.f32 1.0, %v3510
      %v3512 = vrcp.pop %v3210
      %v3513 = vmul.f32 1.0, %v3512
      %v3514 = vrcp.pop %v3211
      %v3515 = vmul.f32 1.0, %v3514
      %v3516 = vrcp.pop %v3212
      %v3517 = vmul.f32 1.0, %v3516
      %v3518 = vrcp.pop %v3213
      %v3519 = vmul.f32 1.0, %v3518
      %v3520 = vrcp.pop %v3214
      %v3521 = vmul.f32 1.0, %v3520
      %v3522 = vrcp.pop %v3215
      %v3523 = vmul.f32 1.0, %v3522
      %v3524 = vrcp.pop %v3216
      %v3525 = vmul.f32 1.0, %v3524
      %v3526 = vrcp.pop %v3217
      %v3527 = vmul.f32 1.0, %v3526
      %v3528 = vrcp.pop %v3218
      %v3529 = vmul.f32 1.0, %v3528
      %v3530 = vrcp.pop %v3219
      %v3531 = vmul.f32 1.0, %v3530
      %v3532 = vrcp.pop %v3220
      %v3533 = vmul.f32 1.0, %v3532
      %v3534 = vrcp.pop %v3221
      %v3535 = vmul.f32 1.0, %v3534
      %v3536 = vrcp.pop %v3222
      %v3537 = vmul.f32 1.0, %v3536
      %v3538 = vrcp.pop %v3223
      %v3539 = vmul.f32 1.0, %v3538
      %v3540 = vrcp.pop %v3224
      %v3541 = vmul.f32 1.0, %v3540
      %v3542 = vrcp.pop %v3225
      %v3543 = vmul.f32 1.0, %v3542
      %v3544 = vrcp.pop %v3226
      %v3545 = vmul.f32 1.0, %v3544
      %v3546 = vrcp.pop %v3227
      %v3547 = vmul.f32 1.0, %v3546
      %v3548 = vrcp.pop %v3228
      %v3549 = vmul.f32 1.0, %v3548
      %v3550 = vrcp.pop %v3229
      %v3551 = vmul.f32 1.0, %v3550
      %v3552 = vrcp.pop %v3230
      %v3553 = vmul.f32 1.0, %v3552
      %v3554 = vrcp.pop %v3231
      %v3555 = vmul.f32 1.0, %v3554
      %v3556 = vrcp.pop %v3232
      %v3557 = vmul.f32 1.0, %v3556
      %v3558 = vrcp.pop %v3233
      %v3559 = vmul.f32 1.0, %v3558
      %v3560 = vrcp.pop %v3234
      %v3561 = vmul.f32 1.0, %v3560
      %v3562 = vrcp.pop %v3235
      %v3563 = vmul.f32 1.0, %v3562
      %v3564 = vrcp.pop %v3236
      %v3565 = vmul.f32 1.0, %v3564
      %v3566 = vrcp.pop %v3237
      %v3567 = vmul.f32 1.0, %v3566
      %v3568 = vrcp.pop %v3238
      %v3569 = vmul.f32 1.0, %v3568
      %v3570 = vrcp.pop %v3239
      %v3571 = vmul.f32 1.0, %v3570
      %v3572 = vrcp.pop %v3240
      %v3573 = vmul.f32 1.0, %v3572
      %v3574 = vrcp.pop %v3241
      %v3575 = vmul.f32 1.0, %v3574
      %v3576 = vrcp.pop %v3242
      %v3577 = vmul.f32 1.0, %v3576
      %v3578 = vrcp.pop %v3243
      %v3579 = vmul.f32 1.0, %v3578
      %v3580 = vrcp.pop %v3244
      %v3581 = vmul.f32 1.0, %v3580
      %v3582 = vrcp.pop %v3245
      %v3583 = vmul.f32 1.0, %v3582
      %v3584 = vrcp.pop %v3246
      %v3585 = vmul.f32 1.0, %v3584
      %v3586 = vrcp.pop %v3247
      %v3587 = vmul.f32 1.0, %v3586
      %v3588 = vrcp.pop %v3248
      %v3589 = vmul.f32 1.0, %v3588
      %v3590 = vrcp.pop %v3249
      %v3591 = vmul.f32 1.0, %v3590
      %v3592 = vrcp.pop %v3250
      %v3593 = vmul.f32 1.0, %v3592
      %v3594 = vrcp.pop %v3251
      %v3595 = vmul.f32 1.0, %v3594
      %v3596 = vrcp.pop %v3252
      %v3597 = vmul.f32 1.0, %v3596
      %v3598 = vrcp.pop %v3253
      %v3599 = vmul.f32 1.0, %v3598
      %v3600 = vrcp.pop %v3254
      %v3601 = vmul.f32 1.0, %v3600
      %v3602 = vrcp.pop %v3255
      %v3603 = vmul.f32 1.0, %v3602
      %v3604 = vrcp.pop %v3256
      %v3605 = vmul.f32 1.0, %v3604
      %v3606 = vrcp.pop %v3257
      %v3607 = vmul.f32 1.0, %v3606
      %v3608 = vrcp.pop %v3258
      %v3609 = vmul.f32 1.0, %v3608
      %v3610 = vrcp.pop %v3259
      %v3611 = vmul.f32 1.0, %v3610
      %v3612 = vrcp.pop %v3260
      %v3613 = vmul.f32 1.0, %v3612
      %v3614 = vrcp.pop %v3261
      %v3615 = vmul.f32 1.0, %v3614
      %v3616 = vrcp.pop %v3262
      %v3617 = vmul.f32 1.0, %v3616
      %v3618 = vrcp.pop %v3263
      %v3619 = vmul.f32 1.0, %v3618
      %v3620 = vrcp.pop %v3264
      %v3621 = vmul.f32 1.0, %v3620
      %v3622 = vrcp.pop %v3265
      %v3623 = vmul.f32 1.0, %v3622
      %v3624 = vrcp.pop %v3266
      %v3625 = vmul.f32 1.0, %v3624
      %v3626 = vrcp.pop %v3267
      %v3627 = vmul.f32 1.0, %v3626
      %v3628 = vrcp.pop %v3268
      %v3629 = vmul.f32 1.0, %v3628
      %v3630 = vrcp.pop %v3269
      %v3631 = vmul.f32 1.0, %v3630
      %v3632 = vrcp.pop %v3270
      %v3633 = vmul.f32 1.0, %v3632
      %v3634 = vrcp.pop %v3271
      %v3635 = vmul.f32 1.0, %v3634
      %v3636 = vrcp.pop %v3272
      %v3637 = vmul.f32 1.0, %v3636
      %v3638 = vrcp.pop %v3273
      %v3639 = vmul.f32 1.0, %v3638
      %v3640 = vrcp.pop %v3274
      %v3641 = vmul.f32 1.0, %v3640
      %v3642 = vrcp.pop %v3275
      %v3643 = vmul.f32 1.0, %v3642
      %v3644 = vrcp.pop %v3276
      %v3645 = vmul.f32 1.0, %v3644
      %v3646 = vrcp.pop %v3277
      %v3647 = vmul.f32 1.0, %v3646
      %v3648 = vrcp.pop %v3278
      %v3649 = vmul.f32 1.0, %v3648
      %v3650 = vrcp.pop %v3279
      %v3651 = vmul.f32 1.0, %v3650
      %v3652 = vrcp.pop %v3280
      %v3653 = vmul.f32 1.0, %v3652
      %v3654 = vrcp.pop %v3281
      %v3655 = vmul.f32 1.0, %v3654
      %v3656 = vrcp.pop %v3282
      %v3657 = vmul.f32 1.0, %v3656
      %v3658 = vrcp.pop %v3283
      %v3659 = vmul.f32 1.0, %v3658
      %v3660 = vrcp.pop %v3284
      %v3661 = vmul.f32 1.0, %v3660
      %v3662 = vrcp.pop %v3285
      %v3663 = vmul.f32 1.0, %v3662
      %v3664 = vrcp.pop %v3286
      %v3665 = vmul.f32 1.0, %v3664
      %v3666 = vrcp.pop %v3287
      %v3667 = vmul.f32 1.0, %v3666
      %v3668 = vrcp.pop %v3288
      %v3669 = vmul.f32 1.0, %v3668
      %v3670 = vrcp.pop %v3289
      %v3671 = vmul.f32 1.0, %v3670
      %v3672 = vrcp.pop %v3290
      %v3673 = vmul.f32 1.0, %v3672
      %v3674 = vrcp.pop %v3291
      %v3675 = vmul.f32 1.0, %v3674
      %v3676 = vrcp.pop %v3292
      %v3677 = vmul.f32 1.0, %v3676
      %v3678 = vrcp.pop %v3293
      %v3679 = vmul.f32 1.0, %v3678
      %v3680 = vrcp.pop %v3294
      %v3681 = vmul.f32 1.0, %v3680
      %v3682 = vrcp.pop %v3295
      %v3683 = vmul.f32 1.0, %v3682
      %v3684 = vrcp.pop %v3296
      %v3685 = vmul.f32 1.0, %v3684
      %v3686 = vrcp.pop %v3297
      %v3687 = vmul.f32 1.0, %v3686
      %v3688 = vrcp.pop %v3298
      %v3689 = vmul.f32 1.0, %v3688
      %v3690 = vrcp.pop %v3299
      %v3691 = vmul.f32 1.0, %v3690
      %v3692 = vrcp.pop %v3300
      %v3693 = vmul.f32 1.0, %v3692
      %v3694 = vrcp.pop %v3301
      %v3695 = vmul.f32 1.0, %v3694
      %v3696 = vrcp.pop %v3302
      %v3697 = vmul.f32 1.0, %v3696
      %v3698 = vrcp.pop %v3303
      %v3699 = vmul.f32 1.0, %v3698
      %v3700 = vrcp.pop %v3304
      %v3701 = vmul.f32 1.0, %v3700
      %v3702 = vrcp.pop %v3305
      %v3703 = vmul.f32 1.0, %v3702
      %v3704 = vrcp.pop %v3306
      %v3705 = vmul.f32 1.0, %v3704
      %v3706 = vrcp.pop %v3307
      %v3707 = vmul.f32 1.0, %v3706
      %v3708 = vrcp.pop %v3308
      %v3709 = vmul.f32 1.0, %v3708
      %v3710 = vrcp.pop %v3309
      %v3711 = vmul.f32 1.0, %v3710
      %v3712 = vrcp.pop %v3310
      %v3713 = vmul.f32 1.0, %v3712
      %v3714 = vrcp.pop %v3311
      %v3715 = vmul.f32 1.0, %v3714
      %v3716 = vrcp.pop %v3312
      %v3717 = vmul.f32 1.0, %v3716
      %v3718 = vrcp.pop %v3313
      %v3719 = vmul.f32 1.0, %v3718
      %v3720 = vrcp.pop %v3314
      %v3721 = vmul.f32 1.0, %v3720
      %v3722 = vrcp.pop %v3315
      %v3723 = vmul.f32 1.0, %v3722
      %v3724 = vrcp.pop %v3316
      %v3725 = vmul.f32 1.0, %v3724
      %v3726 = vrcp.pop %v3317
      %v3727 = vmul.f32 1.0, %v3726
      %v3728 = vrcp.pop %v3318
      %v3729 = vmul.f32 1.0, %v3728
      %v3730 = vrcp.pop %v3319
      %v3731 = vmul.f32 1.0, %v3730
      %v3732 = vrcp.pop %v3320
      %v3733 = vmul.f32 1.0, %v3732
      %v3734 = vrcp.pop %v3321
      %v3735 = vmul.f32 1.0, %v3734
      %v3736 = vrcp.pop %v3322
      %v3737 = vmul.f32 1.0, %v3736
      %v3738 = vrcp.pop %v3323
      %v3739 = vmul.f32 1.0, %v3738
      %v3740 = vrcp.pop %v3324
      %v3741 = vmul.f32 1.0, %v3740
      %v3742 = vrcp.pop %v3325
      %v3743 = vmul.f32 1.0, %v3742
      %v3744 = vrcp.pop %v3326
      %v3745 = vmul.f32 1.0, %v3744
      %v3746 = vrcp.pop %v3327
      %v3747 = vmul.f32 1.0, %v3746
      %v3748 = vrcp.pop %v3328
      %v3749 = vmul.f32 1.0, %v3748
      %v3750 = vrcp.pop %v3329
      %v3751 = vmul.f32 1.0, %v3750
      %v3752 = vrcp.pop %v3330
      %v3753 = vmul.f32 1.0, %v3752
      %v3754 = vrcp.pop %v3331
      %v3755 = vmul.f32 1.0, %v3754
      %v3756 = vrcp.pop %v3332
      %v3757 = vmul.f32 1.0, %v3756
      %v3758 = vrcp.pop %v3333
      %v3759 = vmul.f32 1.0, %v3758
      %v3760 = vrcp.pop %v3334
      %v3761 = vmul.f32 1.0, %v3760
      %v3762 = vrcp.pop %v3335
      %v3763 = vmul.f32 1.0, %v3762
      %v3764 = vrcp.pop %v3336
      %v3765 = vmul.f32 1.0, %v3764
      %v3766 = vrcp.pop %v3337
      %v3767 = vmul.f32 1.0, %v3766
      %v3768 = vrcp.pop %v3338
      %v3769 = vmul.f32 1.0, %v3768
      %v3770 = vrcp.pop %v3339
      %v3771 = vmul.f32 1.0, %v3770
      %v3772 = vrcp.pop %v3340
      %v3773 = vmul.f32 1.0, %v3772
      %v3774 = vrcp.pop %v3341
      %v3775 = vmul.f32 1.0, %v3774
      %v3776 = vrcp.pop %v3342
      %v3777 = vmul.f32 1.0, %v3776
      %v3778 = vrcp.pop %v3343
      %v3779 = vmul.f32 1.0, %v3778
      %v3780 = vrcp.pop %v3344
      %v3781 = vmul.f32 1.0, %v3780
      %v3782 = vrcp.pop %v3345
      %v3783 = vmul.f32 1.0, %v3782
      %v3784 = vrcp.pop %v3346
      %v3785 = vmul.f32 1.0, %v3784
      %v3786 = vrcp.pop %v3347
      %v3787 = vmul.f32 1.0, %v3786
      %v3788 = vrcp.pop %v3348
      %v3789 = vmul.f32 1.0, %v3788
      %v3790 = vrcp.pop %v3349
      %v3791 = vmul.f32 1.0, %v3790
      %v3792 = vrcp.pop %v3350
      %v3793 = vmul.f32 1.0, %v3792
      %v3794 = vrcp.pop %v3351
      %v3795 = vmul.f32 1.0, %v3794
      %v3796 = vrcp.pop %v3352
      %v3797 = vmul.f32 1.0, %v3796
      %v3798 = vrcp.pop %v3353
      %v3799 = vmul.f32 1.0, %v3798
      %v3800 = vrcp.pop %v3354
      %v3801 = vmul.f32 1.0, %v3800
      %v3802 = vrcp.pop %v3355
      %v3803 = vmul.f32 1.0, %v3802
      %v3804 = vrcp.pop %v3356
      %v3805 = vmul.f32 1.0, %v3804
      %v3806 = vrcp.pop %v3357
      %v3807 = vmul.f32 1.0, %v3806
      %v3808 = vrcp.pop %v3358
      %v3809 = vmul.f32 1.0, %v3808
      %v3810 = vrcp.pop %v3359
      %v3811 = vmul.f32 1.0, %v3810
      %v3812 = vrcp.pop %v3360
      %v3813 = vmul.f32 1.0, %v3812
      %v3814 = vrcp.pop %v3361
      %v3815 = vmul.f32 1.0, %v3814
      %v3816 = vrcp.pop %v3362
      %v3817 = vmul.f32 1.0, %v3816
      %v3818 = vrcp.pop %v3363
      %v3819 = vmul.f32 1.0, %v3818
      %v3820 = vrcp.pop %v3364
      %v3821 = vmul.f32 1.0, %v3820
      %v3822 = vrcp.pop %v3365
      %v3823 = vmul.f32 1.0, %v3822
      %v3824 = vrcp.pop %v3366
      %v3825 = vmul.f32 1.0, %v3824
      %v3826 = vrcp.pop %v3367
      %v3827 = vmul.f32 1.0, %v3826
      %v3828 = vrcp.pop %v3368
      %v3829 = vmul.f32 1.0, %v3828
      %v3830 = vrcp.pop %v3369
      %v3831 = vmul.f32 1.0, %v3830
      %v3832 = vrcp.pop %v3370
      %v3833 = vmul.f32 1.0, %v3832
      %v3834 = vrcp.pop %v3371
      %v3835 = vmul.f32 1.0, %v3834
      %v3836 = vrcp.pop %v3372
      %v3837 = vmul.f32 1.0, %v3836
      %v3838 = vrcp.pop %v3373
      %v3839 = vmul.f32 1.0, %v3838
      %v3840 = vrcp.pop %v3374
      %v3841 = vmul.f32 1.0, %v3840
      %v3842 = vrcp.pop %v3375
      %v3843 = vmul.f32 1.0, %v3842
      %v3844 = vrcp.pop %v3376
      %v3845 = vmul.f32 1.0, %v3844
      %v3846 = vrcp.pop %v3377
      %v3847 = vmul.f32 1.0, %v3846
      %v3848 = vrcp.pop %v3378
      %v3849 = vmul.f32 1.0, %v3848
      %v3850 = vrcp.pop %v3379
      %v3851 = vmul.f32 1.0, %v3850
      %v3852 = vrcp.pop %v3380
      %v3853 = vmul.f32 1.0, %v3852
      %v3854 = vrcp.pop %v3381
      %v3855 = vmul.f32 1.0, %v3854
      %v3856 = vrcp.pop %v3382
      %v3857 = vmul.f32 1.0, %v3856
      %v3858 = vrcp.pop %v3383
      %v3859 = vmul.f32 1.0, %v3858
      %v3860 = vrcp.pop %v3384
      %v3861 = vmul.f32 1.0, %v3860
      %v3862 = vrcp.pop %v3385
      %v3863 = vmul.f32 1.0, %v3862
      %v3864 = vrcp.pop %v3386
      %v3865 = vmul.f32 1.0, %v3864
      %v3866 = vrcp.pop %v3387
      %v3867 = vmul.f32 1.0, %v3866
      %v3868 = vrcp.pop %v3388
      %v3869 = vmul.f32 1.0, %v3868
      %v3870 = vrcp.pop %v3389
      %v3871 = vmul.f32 1.0, %v3870
      %v3872 = vrcp.pop %v3390
      %v3873 = vmul.f32 1.0, %v3872
      %v3874 = vrcp.pop %v3391
      %v3875 = vmul.f32 1.0, %v3874
      %v3876 = vrcp.pop %v3392
      %v3877 = vmul.f32 1.0, %v3876
      %v3878 = vrcp.pop %v3393
      %v3879 = vmul.f32 1.0, %v3878
      %v3880 = vrcp.pop %v3394
      %v3881 = vmul.f32 1.0, %v3880
      %v3882 = vrcp.pop %v3395
      %v3883 = vmul.f32 1.0, %v3882
      %v3884 = vrcp.pop %v3396
      %v3885 = vmul.f32 1.0, %v3884
      %v3886 = vrcp.pop %v3397
      %v3887 = vmul.f32 1.0, %v3886
      %v3888 = vrcp.pop %v3398
      %v3889 = vmul.f32 1.0, %v3888
      %v3890 = vrcp.pop %v3399
      %v3891 = vmul.f32 1.0, %v3890
      %v3892 = vrcp.pop %v3400
      %v3893 = vmul.f32 1.0, %v3892
      %v3894 = vrcp.pop %v3401
      %v3895 = vmul.f32 1.0, %v3894
      %v3896 = vrcp.pop %v3402
      %v3897 = vmul.f32 1.0, %v3896
      %v3898 = vrcp.pop %v3403
      %v3899 = vmul.f32 1.0, %v3898
      %v3900 = vrcp.pop %v3404
      %v3901 = vmul.f32 1.0, %v3900
      %v3902 = vrcp.pop %v3405
      %v3903 = vmul.f32 1.0, %v3902
      %v3904 = vrcp.pop %v3406
      %v3905 = vmul.f32 1.0, %v3904
      %v3906 = vrcp.pop %v3407
      %v3907 = vmul.f32 1.0, %v3906
      %v3908 = vrcp.pop %v3408
      %v3909 = vmul.f32 1.0, %v3908
      %v3910 = vrcp.pop %v3409
      %v3911 = vmul.f32 1.0, %v3910
      %v3912 = vrcp.pop %v3410
      %v3913 = vmul.f32 1.0, %v3912
      %v3914 = vrcp.pop %v3411
      %v3915 = vmul.f32 1.0, %v3914
      %v3916 = vrcp.pop %v3412
      %v3917 = vmul.f32 1.0, %v3916
      %v3918 = vrcp.pop %v3413
      %v3919 = vmul.f32 1.0, %v3918
      %v3920 = vrcp.pop %v3414
      %v3921 = vmul.f32 1.0, %v3920
      %v3922 = vrcp.pop %v3415
      %v3923 = vmul.f32 1.0, %v3922
      %v3924 = vrcp.pop %v3416
      %v3925 = vmul.f32 1.0, %v3924
      %v3926 = vrcp.pop %v3417
      %v3927 = vmul.f32 1.0, %v3926
      %v3928 = vrcp.pop %v3418
      %v3929 = vmul.f32 1.0, %v3928
      %v3930 = vrcp.pop %v3419
      %v3931 = vmul.f32 1.0, %v3930
      %v3932 = vrcp.pop %v3420
      %v3933 = vmul.f32 1.0, %v3932
      %v3934 = vrcp.pop %v3421
      %v3935 = vmul.f32 1.0, %v3934
      %v3936 = vrcp.pop %v3422
      %v3937 = vmul.f32 1.0, %v3936
      %v3938 = vrcp.pop %v3423
      %v3939 = vmul.f32 1.0, %v3938
      %v3940 = vld [vmem:[%s3] sm:$0xff]
      %v3941 = vld [vmem:[%s3 + $0x8] sm:$0xff]
      %v3942 = vld [vmem:[%s3 + $0x10] sm:$0xff]
      %v3943 = vld [vmem:[%s3 + $0x18] sm:$0xff]
      %v3944 = vld [vmem:[%s3 + $0x20] sm:$0xff]
      %v3945 = vld [vmem:[%s3 + $0x28] sm:$0xff]
      %v3946 = vld [vmem:[%s3 + $0x30] sm:$0xff]
      %v3947 = vld [vmem:[%s3 + $0x38] sm:$0xff]
      %v3948 = vld [vmem:[%s3 + $0x40] sm:$0xff]
      %v3949 = vld [vmem:[%s3 + $0x48] sm:$0xff]
      %v3950 = vld [vmem:[%s3 + $0x50] sm:$0xff]
      %v3951 = vld [vmem:[%s3 + $0x58] sm:$0xff]
      %v3952 = vld [vmem:[%s3 + $0x60] sm:$0xff]
      %v3953 = vld [vmem:[%s3 + $0x68] sm:$0xff]
      %v3954 = vld [vmem:[%s3 + $0x70] sm:$0xff]
      %v3955 = vld [vmem:[%s3 + $0x78] sm:$0xff]
      %v3956 = vld [vmem:[%s3 + $0x80] sm:$0xff]
      %v3957 = vld [vmem:[%s3 + $0x88] sm:$0xff]
      %v3958 = vld [vmem:[%s3 + $0x90] sm:$0xff]
      %v3959 = vld [vmem:[%s3 + $0x98] sm:$0xff]
      %v3960 = vld [vmem:[%s3 + $0xa0] sm:$0xff]
      %v3961 = vld [vmem:[%s3 + $0xa8] sm:$0xff]
      %v3962 = vld [vmem:[%s3 + $0xb0] sm:$0xff]
      %v3963 = vld [vmem:[%s3 + $0xb8] sm:$0xff]
      %v3964 = vld [vmem:[%s3 + $0xc0] sm:$0xff]
      %v3965 = vld [vmem:[%s3 + $0xc8] sm:$0xff]
      %v3966 = vld [vmem:[%s3 + $0xd0] sm:$0xff]
      %v3967 = vld [vmem:[%s3 + $0xd8] sm:$0xff]
      %v3968 = vld [vmem:[%s3 + $0xe0] sm:$0xff]
      %v3969 = vld [vmem:[%s3 + $0xe8] sm:$0xff]
      %v3970 = vld [vmem:[%s3 + $0xf0] sm:$0xff]
      %v3971 = vld [vmem:[%s3 + $0xf8] sm:$0xff]
      %v3972 = vld [vmem:[%s3 + $0x100] sm:$0xff]
      %v3973 = vld [vmem:[%s3 + $0x108] sm:$0xff]
      %v3974 = vld [vmem:[%s3 + $0x110] sm:$0xff]
      %v3975 = vld [vmem:[%s3 + $0x118] sm:$0xff]
      %v3976 = vld [vmem:[%s3 + $0x120] sm:$0xff]
      %v3977 = vld [vmem:[%s3 + $0x128] sm:$0xff]
      %v3978 = vld [vmem:[%s3 + $0x130] sm:$0xff]
      %v3979 = vld [vmem:[%s3 + $0x138] sm:$0xff]
      %v3980 = vld [vmem:[%s3 + $0x140] sm:$0xff]
      %v3981 = vld [vmem:[%s3 + $0x148] sm:$0xff]
      %v3982 = vld [vmem:[%s3 + $0x150] sm:$0xff]
      %v3983 = vld [vmem:[%s3 + $0x158] sm:$0xff]
      %v3984 = vld [vmem:[%s3 + $0x160] sm:$0xff]
      %v3985 = vld [vmem:[%s3 + $0x168] sm:$0xff]
      %v3986 = vld [vmem:[%s3 + $0x170] sm:$0xff]
      %v3987 = vld [vmem:[%s3 + $0x178] sm:$0xff]
      %v3988 = vld [vmem:[%s3 + $0x180] sm:$0xff]
      %v3989 = vld [vmem:[%s3 + $0x188] sm:$0xff]
      %v3990 = vld [vmem:[%s3 + $0x190] sm:$0xff]
      %v3991 = vld [vmem:[%s3 + $0x198] sm:$0xff]
      %v3992 = vld [vmem:[%s3 + $0x1a0] sm:$0xff]
      %v3993 = vld [vmem:[%s3 + $0x1a8] sm:$0xff]
      %v3994 = vld [vmem:[%s3 + $0x1b0] sm:$0xff]
      %v3995 = vld [vmem:[%s3 + $0x1b8] sm:$0xff]
      %v3996 = vld [vmem:[%s3 + $0x1c0] sm:$0xff]
      %v3997 = vld [vmem:[%s3 + $0x1c8] sm:$0xff]
      %v3998 = vld [vmem:[%s3 + $0x1d0] sm:$0xff]
      %v3999 = vld [vmem:[%s3 + $0x1d8] sm:$0xff]
      %v4000 = vld [vmem:[%s3 + $0x1e0] sm:$0xff]
      %v4001 = vld [vmem:[%s3 + $0x1e8] sm:$0xff]
      %v4002 = vld [vmem:[%s3 + $0x1f0] sm:$0xff]
      %v4003 = vld [vmem:[%s3 + $0x1f8] sm:$0xff]
      %v4004 = vld [vmem:[%s3 + $0x200] sm:$0xff]
      %v4005 = vld [vmem:[%s3 + $0x208] sm:$0xff]
      %v4006 = vld [vmem:[%s3 + $0x210] sm:$0xff]
      %v4007 = vld [vmem:[%s3 + $0x218] sm:$0xff]
      %v4008 = vld [vmem:[%s3 + $0x220] sm:$0xff]
      %v4009 = vld [vmem:[%s3 + $0x228] sm:$0xff]
      %v4010 = vld [vmem:[%s3 + $0x230] sm:$0xff]
      %v4011 = vld [vmem:[%s3 + $0x238] sm:$0xff]
      %v4012 = vld [vmem:[%s3 + $0x240] sm:$0xff]
      %v4013 = vld [vmem:[%s3 + $0x248] sm:$0xff]
      %v4014 = vld [vmem:[%s3 + $0x250] sm:$0xff]
      %v4015 = vld [vmem:[%s3 + $0x258] sm:$0xff]
      %v4016 = vld [vmem:[%s3 + $0x260] sm:$0xff]
      %v4017 = vld [vmem:[%s3 + $0x268] sm:$0xff]
      %v4018 = vld [vmem:[%s3 + $0x270] sm:$0xff]
      %v4019 = vld [vmem:[%s3 + $0x278] sm:$0xff]
      %v4020 = vld [vmem:[%s3 + $0x280] sm:$0xff]
      %v4021 = vld [vmem:[%s3 + $0x288] sm:$0xff]
      %v4022 = vld [vmem:[%s3 + $0x290] sm:$0xff]
      %v4023 = vld [vmem:[%s3 + $0x298] sm:$0xff]
      %v4024 = vld [vmem:[%s3 + $0x2a0] sm:$0xff]
      %v4025 = vld [vmem:[%s3 + $0x2a8] sm:$0xff]
      %v4026 = vld [vmem:[%s3 + $0x2b0] sm:$0xff]
      %v4027 = vld [vmem:[%s3 + $0x2b8] sm:$0xff]
      %v4028 = vld [vmem:[%s3 + $0x2c0] sm:$0xff]
      %v4029 = vld [vmem:[%s3 + $0x2c8] sm:$0xff]
      %v4030 = vld [vmem:[%s3 + $0x2d0] sm:$0xff]
      %v4031 = vld [vmem:[%s3 + $0x2d8] sm:$0xff]
      %v4032 = vld [vmem:[%s3 + $0x2e0] sm:$0xff]
      %v4033 = vld [vmem:[%s3 + $0x2e8] sm:$0xff]
      %v4034 = vld [vmem:[%s3 + $0x2f0] sm:$0xff]
      %v4035 = vld [vmem:[%s3 + $0x2f8] sm:$0xff]
      %v4036 = vld [vmem:[%s3 + $0x300] sm:$0xff]
      %v4037 = vld [vmem:[%s3 + $0x308] sm:$0xff]
      %v4038 = vld [vmem:[%s3 + $0x310] sm:$0xff]
      %v4039 = vld [vmem:[%s3 + $0x318] sm:$0xff]
      %v4040 = vld [vmem:[%s3 + $0x320] sm:$0xff]
      %v4041 = vld [vmem:[%s3 + $0x328] sm:$0xff]
      %v4042 = vld [vmem:[%s3 + $0x330] sm:$0xff]
      %v4043 = vld [vmem:[%s3 + $0x338] sm:$0xff]
      %v4044 = vld [vmem:[%s3 + $0x340] sm:$0xff]
      %v4045 = vld [vmem:[%s3 + $0x348] sm:$0xff]
      %v4046 = vld [vmem:[%s3 + $0x350] sm:$0xff]
      %v4047 = vld [vmem:[%s3 + $0x358] sm:$0xff]
      %v4048 = vld [vmem:[%s3 + $0x360] sm:$0xff]
      %v4049 = vld [vmem:[%s3 + $0x368] sm:$0xff]
      %v4050 = vld [vmem:[%s3 + $0x370] sm:$0xff]
      %v4051 = vld [vmem:[%s3 + $0x378] sm:$0xff]
      %v4052 = vld [vmem:[%s3 + $0x380] sm:$0xff]
      %v4053 = vld [vmem:[%s3 + $0x388] sm:$0xff]
      %v4054 = vld [vmem:[%s3 + $0x390] sm:$0xff]
      %v4055 = vld [vmem:[%s3 + $0x398] sm:$0xff]
      %v4056 = vld [vmem:[%s3 + $0x3a0] sm:$0xff]
      %v4057 = vld [vmem:[%s3 + $0x3a8] sm:$0xff]
      %v4058 = vld [vmem:[%s3 + $0x3b0] sm:$0xff]
      %v4059 = vld [vmem:[%s3 + $0x3b8] sm:$0xff]
      %v4060 = vld [vmem:[%s3 + $0x3c0] sm:$0xff]
      %v4061 = vld [vmem:[%s3 + $0x3c8] sm:$0xff]
      %v4062 = vld [vmem:[%s3 + $0x3d0] sm:$0xff]
      %v4063 = vld [vmem:[%s3 + $0x3d8] sm:$0xff]
      %v4064 = vld [vmem:[%s3 + $0x3e0] sm:$0xff]
      %v4065 = vld [vmem:[%s3 + $0x3e8] sm:$0xff]
      %v4066 = vld [vmem:[%s3 + $0x3f0] sm:$0xff]
      %v4067 = vld [vmem:[%s3 + $0x3f8] sm:$0xff]
      %v4068 = vld [vmem:[%s3 + $0x400] sm:$0xff]
      %v4069 = vld [vmem:[%s3 + $0x408] sm:$0xff]
      %v4070 = vld [vmem:[%s3 + $0x410] sm:$0xff]
      %v4071 = vld [vmem:[%s3 + $0x418] sm:$0xff]
      %v4072 = vld [vmem:[%s3 + $0x420] sm:$0xff]
      %v4073 = vld [vmem:[%s3 + $0x428] sm:$0xff]
      %v4074 = vld [vmem:[%s3 + $0x430] sm:$0xff]
      %v4075 = vld [vmem:[%s3 + $0x438] sm:$0xff]
      %v4076 = vld [vmem:[%s3 + $0x440] sm:$0xff]
      %v4077 = vld [vmem:[%s3 + $0x448] sm:$0xff]
      %v4078 = vld [vmem:[%s3 + $0x450] sm:$0xff]
      %v4079 = vld [vmem:[%s3 + $0x458] sm:$0xff]
      %v4080 = vld [vmem:[%s3 + $0x460] sm:$0xff]
      %v4081 = vld [vmem:[%s3 + $0x468] sm:$0xff]
      %v4082 = vld [vmem:[%s3 + $0x470] sm:$0xff]
      %v4083 = vld [vmem:[%s3 + $0x478] sm:$0xff]
      %v4084 = vld [vmem:[%s3 + $0x480] sm:$0xff]
      %v4085 = vld [vmem:[%s3 + $0x488] sm:$0xff]
      %v4086 = vld [vmem:[%s3 + $0x490] sm:$0xff]
      %v4087 = vld [vmem:[%s3 + $0x498] sm:$0xff]
      %v4088 = vld [vmem:[%s3 + $0x4a0] sm:$0xff]
      %v4089 = vld [vmem:[%s3 + $0x4a8] sm:$0xff]
      %v4090 = vld [vmem:[%s3 + $0x4b0] sm:$0xff]
      %v4091 = vld [vmem:[%s3 + $0x4b8] sm:$0xff]
      %v4092 = vld [vmem:[%s3 + $0x4c0] sm:$0xff]
      %v4093 = vld [vmem:[%s3 + $0x4c8] sm:$0xff]
      %v4094 = vld [vmem:[%s3 + $0x4d0] sm:$0xff]
      %v4095 = vld [vmem:[%s3 + $0x4d8] sm:$0xff]
      %v4096 = vld [vmem:[%s3 + $0x4e0] sm:$0xff]
      %v4097 = vld [vmem:[%s3 + $0x4e8] sm:$0xff]
      %v4098 = vld [vmem:[%s3 + $0x4f0] sm:$0xff]
      %v4099 = vld [vmem:[%s3 + $0x4f8] sm:$0xff]
      %v4100 = vld [vmem:[%s3 + $0x500] sm:$0xff]
      %v4101 = vld [vmem:[%s3 + $0x508] sm:$0xff]
      %v4102 = vld [vmem:[%s3 + $0x510] sm:$0xff]
      %v4103 = vld [vmem:[%s3 + $0x518] sm:$0xff]
      %v4104 = vld [vmem:[%s3 + $0x520] sm:$0xff]
      %v4105 = vld [vmem:[%s3 + $0x528] sm:$0xff]
      %v4106 = vld [vmem:[%s3 + $0x530] sm:$0xff]
      %v4107 = vld [vmem:[%s3 + $0x538] sm:$0xff]
      %v4108 = vld [vmem:[%s3 + $0x540] sm:$0xff]
      %v4109 = vld [vmem:[%s3 + $0x548] sm:$0xff]
      %v4110 = vld [vmem:[%s3 + $0x550] sm:$0xff]
      %v4111 = vld [vmem:[%s3 + $0x558] sm:$0xff]
      %v4112 = vld [vmem:[%s3 + $0x560] sm:$0xff]
      %v4113 = vld [vmem:[%s3 + $0x568] sm:$0xff]
      %v4114 = vld [vmem:[%s3 + $0x570] sm:$0xff]
      %v4115 = vld [vmem:[%s3 + $0x578] sm:$0xff]
      %v4116 = vld [vmem:[%s3 + $0x580] sm:$0xff]
      %v4117 = vld [vmem:[%s3 + $0x588] sm:$0xff]
      %v4118 = vld [vmem:[%s3 + $0x590] sm:$0xff]
      %v4119 = vld [vmem:[%s3 + $0x598] sm:$0xff]
      %v4120 = vld [vmem:[%s3 + $0x5a0] sm:$0xff]
      %v4121 = vld [vmem:[%s3 + $0x5a8] sm:$0xff]
      %v4122 = vld [vmem:[%s3 + $0x5b0] sm:$0xff]
      %v4123 = vld [vmem:[%s3 + $0x5b8] sm:$0xff]
      %v4124 = vld [vmem:[%s3 + $0x5c0] sm:$0xff]
      %v4125 = vld [vmem:[%s3 + $0x5c8] sm:$0xff]
      %v4126 = vld [vmem:[%s3 + $0x5d0] sm:$0xff]
      %v4127 = vld [vmem:[%s3 + $0x5d8] sm:$0xff]
      %v4128 = vld [vmem:[%s3 + $0x5e0] sm:$0xff]
      %v4129 = vld [vmem:[%s3 + $0x5e8] sm:$0xff]
      %v4130 = vld [vmem:[%s3 + $0x5f0] sm:$0xff]
      %v4131 = vld [vmem:[%s3 + $0x5f8] sm:$0xff]
      %v4132 = vld [vmem:[%s3 + $0x600] sm:$0xff]
      %v4133 = vld [vmem:[%s3 + $0x608] sm:$0xff]
      %v4134 = vld [vmem:[%s3 + $0x610] sm:$0xff]
      %v4135 = vld [vmem:[%s3 + $0x618] sm:$0xff]
      %v4136 = vld [vmem:[%s3 + $0x620] sm:$0xff]
      %v4137 = vld [vmem:[%s3 + $0x628] sm:$0xff]
      %v4138 = vld [vmem:[%s3 + $0x630] sm:$0xff]
      %v4139 = vld [vmem:[%s3 + $0x638] sm:$0xff]
      %v4140 = vld [vmem:[%s3 + $0x640] sm:$0xff]
      %v4141 = vld [vmem:[%s3 + $0x648] sm:$0xff]
      %v4142 = vld [vmem:[%s3 + $0x650] sm:$0xff]
      %v4143 = vld [vmem:[%s3 + $0x658] sm:$0xff]
      %v4144 = vld [vmem:[%s3 + $0x660] sm:$0xff]
      %v4145 = vld [vmem:[%s3 + $0x668] sm:$0xff]
      %v4146 = vld [vmem:[%s3 + $0x670] sm:$0xff]
      %v4147 = vld [vmem:[%s3 + $0x678] sm:$0xff]
      %v4148 = vld [vmem:[%s3 + $0x680] sm:$0xff]
      %v4149 = vld [vmem:[%s3 + $0x688] sm:$0xff]
      %v4150 = vld [vmem:[%s3 + $0x690] sm:$0xff]
      %v4151 = vld [vmem:[%s3 + $0x698] sm:$0xff]
      %v4152 = vld [vmem:[%s3 + $0x6a0] sm:$0xff]
      %v4153 = vld [vmem:[%s3 + $0x6a8] sm:$0xff]
      %v4154 = vld [vmem:[%s3 + $0x6b0] sm:$0xff]
      %v4155 = vld [vmem:[%s3 + $0x6b8] sm:$0xff]
      %v4156 = vld [vmem:[%s3 + $0x6c0] sm:$0xff]
      %v4157 = vld [vmem:[%s3 + $0x6c8] sm:$0xff]
      %v4158 = vld [vmem:[%s3 + $0x6d0] sm:$0xff]
      %v4159 = vld [vmem:[%s3 + $0x6d8] sm:$0xff]
      %v4160 = vld [vmem:[%s3 + $0x6e0] sm:$0xff]
      %v4161 = vld [vmem:[%s3 + $0x6e8] sm:$0xff]
      %v4162 = vld [vmem:[%s3 + $0x6f0] sm:$0xff]
      %v4163 = vld [vmem:[%s3 + $0x6f8] sm:$0xff]
      %v4164 = vld [vmem:[%s3 + $0x700] sm:$0xff]
      %v4165 = vld [vmem:[%s3 + $0x708] sm:$0xff]
      %v4166 = vld [vmem:[%s3 + $0x710] sm:$0xff]
      %v4167 = vld [vmem:[%s3 + $0x718] sm:$0xff]
      %v4168 = vld [vmem:[%s3 + $0x720] sm:$0xff]
      %v4169 = vld [vmem:[%s3 + $0x728] sm:$0xff]
      %v4170 = vld [vmem:[%s3 + $0x730] sm:$0xff]
      %v4171 = vld [vmem:[%s3 + $0x738] sm:$0xff]
      %v4172 = vld [vmem:[%s3 + $0x740] sm:$0xff]
      %v4173 = vld [vmem:[%s3 + $0x748] sm:$0xff]
      %v4174 = vld [vmem:[%s3 + $0x750] sm:$0xff]
      %v4175 = vld [vmem:[%s3 + $0x758] sm:$0xff]
      %v4176 = vld [vmem:[%s3 + $0x760] sm:$0xff]
      %v4177 = vld [vmem:[%s3 + $0x768] sm:$0xff]
      %v4178 = vld [vmem:[%s3 + $0x770] sm:$0xff]
      %v4179 = vld [vmem:[%s3 + $0x778] sm:$0xff]
      %v4180 = vld [vmem:[%s3 + $0x780] sm:$0xff]
      %v4181 = vld [vmem:[%s3 + $0x788] sm:$0xff]
      %v4182 = vld [vmem:[%s3 + $0x790] sm:$0xff]
      %v4183 = vld [vmem:[%s3 + $0x798] sm:$0xff]
      %v4184 = vld [vmem:[%s3 + $0x7a0] sm:$0xff]
      %v4185 = vld [vmem:[%s3 + $0x7a8] sm:$0xff]
      %v4186 = vld [vmem:[%s3 + $0x7b0] sm:$0xff]
      %v4187 = vld [vmem:[%s3 + $0x7b8] sm:$0xff]
      %v4188 = vld [vmem:[%s3 + $0x7c0] sm:$0xff]
      %v4189 = vld [vmem:[%s3 + $0x7c8] sm:$0xff]
      %v4190 = vld [vmem:[%s3 + $0x7d0] sm:$0xff]
      %v4191 = vld [vmem:[%s3 + $0x7d8] sm:$0xff]
      %v4192 = vld [vmem:[%s3 + $0x7e0] sm:$0xff]
      %v4193 = vld [vmem:[%s3 + $0x7e8] sm:$0xff]
      %v4194 = vld [vmem:[%s3 + $0x7f0] sm:$0xff]
      %v4195 = vld [vmem:[%s3 + $0x7f8] sm:$0xff]
      %v4196 = vld [vmem:[%s3 + $0x800] sm:$0xff]
      %v4197 = vld [vmem:[%s3 + $0x808] sm:$0xff]
      %4199 = vset.pattern.permute.xlu0 0
      %4200 = vperm.xlu0 %4199, %v3425
      %v4201 = vpop.permute.xlu0 %4200
      %4204 = vset.pattern.permute.xlu0 0
      %4205 = vperm.xlu0 %4204, %v3427
      %v4206 = vpop.permute.xlu0 %4205
      %4209 = vset.pattern.permute.xlu0 0
      %4210 = vperm.xlu0 %4209, %v3429
      %v4211 = vpop.permute.xlu0 %4210
      %4214 = vset.pattern.permute.xlu0 0
      %4215 = vperm.xlu0 %4214, %v3431
      %v4216 = vpop.permute.xlu0 %4215
      %4219 = vset.pattern.permute.xlu0 0
      %4220 = vperm.xlu0 %4219, %v3433
      %v4221 = vpop.permute.xlu0 %4220
      %4224 = vset.pattern.permute.xlu0 0
      %4225 = vperm.xlu0 %4224, %v3435
      %v4226 = vpop.permute.xlu0 %4225
      %4229 = vset.pattern.permute.xlu0 0
      %4230 = vperm.xlu0 %4229, %v3437
      %v4231 = vpop.permute.xlu0 %4230
      %4234 = vset.pattern.permute.xlu0 0
      %4235 = vperm.xlu0 %4234, %v3439
      %v4236 = vpop.permute.xlu0 %4235
      %4239 = vset.pattern.permute.xlu0 0
      %4240 = vperm.xlu0 %4239, %v3441
      %v4241 = vpop.permute.xlu0 %4240
      %4244 = vset.pattern.permute.xlu0 0
      %4245 = vperm.xlu0 %4244, %v3443
      %v4246 = vpop.permute.xlu0 %4245
      %4249 = vset.pattern.permute.xlu0 0
      %4250 = vperm.xlu0 %4249, %v3445
      %v4251 = vpop.permute.xlu0 %4250
      %4254 = vset.pattern.permute.xlu0 0
      %4255 = vperm.xlu0 %4254, %v3447
      %v4256 = vpop.permute.xlu0 %4255
      %4259 = vset.pattern.permute.xlu0 0
      %4260 = vperm.xlu0 %4259, %v3449
      %v4261 = vpop.permute.xlu0 %4260
      %4264 = vset.pattern.permute.xlu0 0
      %4265 = vperm.xlu0 %4264, %v3451
      %v4266 = vpop.permute.xlu0 %4265
      %4269 = vset.pattern.permute.xlu0 0
      %4270 = vperm.xlu0 %4269, %v3453
      %v4271 = vpop.permute.xlu0 %4270
      %4274 = vset.pattern.permute.xlu0 0
      %4275 = vperm.xlu0 %4274, %v3455
      %v4276 = vpop.permute.xlu0 %4275
      %4279 = vset.pattern.permute.xlu0 0
      %4280 = vperm.xlu0 %4279, %v3457
      %v4281 = vpop.permute.xlu0 %4280
      %4284 = vset.pattern.permute.xlu0 0
      %4285 = vperm.xlu0 %4284, %v3459
      %v4286 = vpop.permute.xlu0 %4285
      %4289 = vset.pattern.permute.xlu0 0
      %4290 = vperm.xlu0 %4289, %v3461
      %v4291 = vpop.permute.xlu0 %4290
      %4294 = vset.pattern.permute.xlu0 0
      %4295 = vperm.xlu0 %4294, %v3463
      %v4296 = vpop.permute.xlu0 %4295
      %4299 = vset.pattern.permute.xlu0 0
      %4300 = vperm.xlu0 %4299, %v3465
      %v4301 = vpop.permute.xlu0 %4300
      %4304 = vset.pattern.permute.xlu0 0
      %4305 = vperm.xlu0 %4304, %v3467
      %v4306 = vpop.permute.xlu0 %4305
      %4309 = vset.pattern.permute.xlu0 0
      %4310 = vperm.xlu0 %4309, %v3469
      %v4311 = vpop.permute.xlu0 %4310
      %4314 = vset.pattern.permute.xlu0 0
      %4315 = vperm.xlu0 %4314, %v3471
      %v4316 = vpop.permute.xlu0 %4315
      %4319 = vset.pattern.permute.xlu0 0
      %4320 = vperm.xlu0 %4319, %v3473
      %v4321 = vpop.permute.xlu0 %4320
      %4324 = vset.pattern.permute.xlu0 0
      %4325 = vperm.xlu0 %4324, %v3475
      %v4326 = vpop.permute.xlu0 %4325
      %4329 = vset.pattern.permute.xlu0 0
      %4330 = vperm.xlu0 %4329, %v3477
      %v4331 = vpop.permute.xlu0 %4330
      %4334 = vset.pattern.permute.xlu0 0
      %4335 = vperm.xlu0 %4334, %v3479
      %v4336 = vpop.permute.xlu0 %4335
      %4339 = vset.pattern.permute.xlu0 0
      %4340 = vperm.xlu0 %4339, %v3481
      %v4341 = vpop.permute.xlu0 %4340
      %4344 = vset.pattern.permute.xlu0 0
      %4345 = vperm.xlu0 %4344, %v3483
      %v4346 = vpop.permute.xlu0 %4345
      %4349 = vset.pattern.permute.xlu0 0
      %4350 = vperm.xlu0 %4349, %v3485
      %v4351 = vpop.permute.xlu0 %4350
      %4354 = vset.pattern.permute.xlu0 0
      %4355 = vperm.xlu0 %4354, %v3487
      %v4356 = vpop.permute.xlu0 %4355
      %4359 = vset.pattern.permute.xlu0 0
      %4360 = vperm.xlu0 %4359, %v3489
      %v4361 = vpop.permute.xlu0 %4360
      %4364 = vset.pattern.permute.xlu0 0
      %4365 = vperm.xlu0 %4364, %v3491
      %v4366 = vpop.permute.xlu0 %4365
      %4369 = vset.pattern.permute.xlu0 0
      %4370 = vperm.xlu0 %4369, %v3493
      %v4371 = vpop.permute.xlu0 %4370
      %4374 = vset.pattern.permute.xlu0 0
      %4375 = vperm.xlu0 %4374, %v3495
      %v4376 = vpop.permute.xlu0 %4375
      %4379 = vset.pattern.permute.xlu0 0
      %4380 = vperm.xlu0 %4379, %v3497
      %v4381 = vpop.permute.xlu0 %4380
      %4384 = vset.pattern.permute.xlu0 0
      %4385 = vperm.xlu0 %4384, %v3499
      %v4386 = vpop.permute.xlu0 %4385
      %4389 = vset.pattern.permute.xlu0 0
      %4390 = vperm.xlu0 %4389, %v3501
      %v4391 = vpop.permute.xlu0 %4390
      %4394 = vset.pattern.permute.xlu0 0
      %4395 = vperm.xlu0 %4394, %v3503
      %v4396 = vpop.permute.xlu0 %4395
      %4399 = vset.pattern.permute.xlu0 0
      %4400 = vperm.xlu0 %4399, %v3505
      %v4401 = vpop.permute.xlu0 %4400
      %4404 = vset.pattern.permute.xlu0 0
      %4405 = vperm.xlu0 %4404, %v3507
      %v4406 = vpop.permute.xlu0 %4405
      %4409 = vset.pattern.permute.xlu0 0
      %4410 = vperm.xlu0 %4409, %v3509
      %v4411 = vpop.permute.xlu0 %4410
      %4414 = vset.pattern.permute.xlu0 0
      %4415 = vperm.xlu0 %4414, %v3511
      %v4416 = vpop.permute.xlu0 %4415
      %4419 = vset.pattern.permute.xlu0 0
      %4420 = vperm.xlu0 %4419, %v3513
      %v4421 = vpop.permute.xlu0 %4420
      %4424 = vset.pattern.permute.xlu0 0
      %4425 = vperm.xlu0 %4424, %v3515
      %v4426 = vpop.permute.xlu0 %4425
      %4429 = vset.pattern.permute.xlu0 0
      %4430 = vperm.xlu0 %4429, %v3517
      %v4431 = vpop.permute.xlu0 %4430
      %4434 = vset.pattern.permute.xlu0 0
      %4435 = vperm.xlu0 %4434, %v3519
      %v4436 = vpop.permute.xlu0 %4435
      %4439 = vset.pattern.permute.xlu0 0
      %4440 = vperm.xlu0 %4439, %v3521
      %v4441 = vpop.permute.xlu0 %4440
      %4444 = vset.pattern.permute.xlu0 0
      %4445 = vperm.xlu0 %4444, %v3523
      %v4446 = vpop.permute.xlu0 %4445
      %4449 = vset.pattern.permute.xlu0 0
      %4450 = vperm.xlu0 %4449, %v3525
      %v4451 = vpop.permute.xlu0 %4450
      %4454 = vset.pattern.permute.xlu0 0
      %4455 = vperm.xlu0 %4454, %v3527
      %v4456 = vpop.permute.xlu0 %4455
      %4459 = vset.pattern.permute.xlu0 0
      %4460 = vperm.xlu0 %4459, %v3529
      %v4461 = vpop.permute.xlu0 %4460
      %4464 = vset.pattern.permute.xlu0 0
      %4465 = vperm.xlu0 %4464, %v3531
      %v4466 = vpop.permute.xlu0 %4465
      %4469 = vset.pattern.permute.xlu0 0
      %4470 = vperm.xlu0 %4469, %v3533
      %v4471 = vpop.permute.xlu0 %4470
      %4474 = vset.pattern.permute.xlu0 0
      %4475 = vperm.xlu0 %4474, %v3535
      %v4476 = vpop.permute.xlu0 %4475
      %4479 = vset.pattern.permute.xlu0 0
      %4480 = vperm.xlu0 %4479, %v3537
      %v4481 = vpop.permute.xlu0 %4480
      %4484 = vset.pattern.permute.xlu0 0
      %4485 = vperm.xlu0 %4484, %v3539
      %v4486 = vpop.permute.xlu0 %4485
      %4489 = vset.pattern.permute.xlu0 0
      %4490 = vperm.xlu0 %4489, %v3541
      %v4491 = vpop.permute.xlu0 %4490
      %4494 = vset.pattern.permute.xlu0 0
      %4495 = vperm.xlu0 %4494, %v3543
      %v4496 = vpop.permute.xlu0 %4495
      %4499 = vset.pattern.permute.xlu0 0
      %4500 = vperm.xlu0 %4499, %v3545
      %v4501 = vpop.permute.xlu0 %4500
      %4504 = vset.pattern.permute.xlu0 0
      %4505 = vperm.xlu0 %4504, %v3547
      %v4506 = vpop.permute.xlu0 %4505
      %4509 = vset.pattern.permute.xlu0 0
      %4510 = vperm.xlu0 %4509, %v3549
      %v4511 = vpop.permute.xlu0 %4510
      %4514 = vset.pattern.permute.xlu0 0
      %4515 = vperm.xlu0 %4514, %v3551
      %v4516 = vpop.permute.xlu0 %4515
      %4519 = vset.pattern.permute.xlu0 0
      %4520 = vperm.xlu0 %4519, %v3553
      %v4521 = vpop.permute.xlu0 %4520
      %4524 = vset.pattern.permute.xlu0 0
      %4525 = vperm.xlu0 %4524, %v3555
      %v4526 = vpop.permute.xlu0 %4525
      %4529 = vset.pattern.permute.xlu0 0
      %4530 = vperm.xlu0 %4529, %v3557
      %v4531 = vpop.permute.xlu0 %4530
      %4534 = vset.pattern.permute.xlu0 0
      %4535 = vperm.xlu0 %4534, %v3559
      %v4536 = vpop.permute.xlu0 %4535
      %4539 = vset.pattern.permute.xlu0 0
      %4540 = vperm.xlu0 %4539, %v3561
      %v4541 = vpop.permute.xlu0 %4540
      %4544 = vset.pattern.permute.xlu0 0
      %4545 = vperm.xlu0 %4544, %v3563
      %v4546 = vpop.permute.xlu0 %4545
      %4549 = vset.pattern.permute.xlu0 0
      %4550 = vperm.xlu0 %4549, %v3565
      %v4551 = vpop.permute.xlu0 %4550
      %4554 = vset.pattern.permute.xlu0 0
      %4555 = vperm.xlu0 %4554, %v3567
      %v4556 = vpop.permute.xlu0 %4555
      %4559 = vset.pattern.permute.xlu0 0
      %4560 = vperm.xlu0 %4559, %v3569
      %v4561 = vpop.permute.xlu0 %4560
      %4564 = vset.pattern.permute.xlu0 0
      %4565 = vperm.xlu0 %4564, %v3571
      %v4566 = vpop.permute.xlu0 %4565
      %4569 = vset.pattern.permute.xlu0 0
      %4570 = vperm.xlu0 %4569, %v3573
      %v4571 = vpop.permute.xlu0 %4570
      %4574 = vset.pattern.permute.xlu0 0
      %4575 = vperm.xlu0 %4574, %v3575
      %v4576 = vpop.permute.xlu0 %4575
      %4579 = vset.pattern.permute.xlu0 0
      %4580 = vperm.xlu0 %4579, %v3577
      %v4581 = vpop.permute.xlu0 %4580
      %4584 = vset.pattern.permute.xlu0 0
      %4585 = vperm.xlu0 %4584, %v3579
      %v4586 = vpop.permute.xlu0 %4585
      %4589 = vset.pattern.permute.xlu0 0
      %4590 = vperm.xlu0 %4589, %v3581
      %v4591 = vpop.permute.xlu0 %4590
      %4594 = vset.pattern.permute.xlu0 0
      %4595 = vperm.xlu0 %4594, %v3583
      %v4596 = vpop.permute.xlu0 %4595
      %4599 = vset.pattern.permute.xlu0 0
      %4600 = vperm.xlu0 %4599, %v3585
      %v4601 = vpop.permute.xlu0 %4600
      %4604 = vset.pattern.permute.xlu0 0
      %4605 = vperm.xlu0 %4604, %v3587
      %v4606 = vpop.permute.xlu0 %4605
      %4609 = vset.pattern.permute.xlu0 0
      %4610 = vperm.xlu0 %4609, %v3589
      %v4611 = vpop.permute.xlu0 %4610
      %4614 = vset.pattern.permute.xlu0 0
      %4615 = vperm.xlu0 %4614, %v3591
      %v4616 = vpop.permute.xlu0 %4615
      %4619 = vset.pattern.permute.xlu0 0
      %4620 = vperm.xlu0 %4619, %v3593
      %v4621 = vpop.permute.xlu0 %4620
      %4624 = vset.pattern.permute.xlu0 0
      %4625 = vperm.xlu0 %4624, %v3595
      %v4626 = vpop.permute.xlu0 %4625
      %4629 = vset.pattern.permute.xlu0 0
      %4630 = vperm.xlu0 %4629, %v3597
      %v4631 = vpop.permute.xlu0 %4630
      %4634 = vset.pattern.permute.xlu0 0
      %4635 = vperm.xlu0 %4634, %v3599
      %v4636 = vpop.permute.xlu0 %4635
      %4639 = vset.pattern.permute.xlu0 0
      %4640 = vperm.xlu0 %4639, %v3601
      %v4641 = vpop.permute.xlu0 %4640
      %4644 = vset.pattern.permute.xlu0 0
      %4645 = vperm.xlu0 %4644, %v3603
      %v4646 = vpop.permute.xlu0 %4645
      %4649 = vset.pattern.permute.xlu0 0
      %4650 = vperm.xlu0 %4649, %v3605
      %v4651 = vpop.permute.xlu0 %4650
      %4654 = vset.pattern.permute.xlu0 0
      %4655 = vperm.xlu0 %4654, %v3607
      %v4656 = vpop.permute.xlu0 %4655
      %4659 = vset.pattern.permute.xlu0 0
      %4660 = vperm.xlu0 %4659, %v3609
      %v4661 = vpop.permute.xlu0 %4660
      %4664 = vset.pattern.permute.xlu0 0
      %4665 = vperm.xlu0 %4664, %v3611
      %v4666 = vpop.permute.xlu0 %4665
      %4669 = vset.pattern.permute.xlu0 0
      %4670 = vperm.xlu0 %4669, %v3613
      %v4671 = vpop.permute.xlu0 %4670
      %4674 = vset.pattern.permute.xlu0 0
      %4675 = vperm.xlu0 %4674, %v3615
      %v4676 = vpop.permute.xlu0 %4675
      %4679 = vset.pattern.permute.xlu0 0
      %4680 = vperm.xlu0 %4679, %v3617
      %v4681 = vpop.permute.xlu0 %4680
      %4684 = vset.pattern.permute.xlu0 0
      %4685 = vperm.xlu0 %4684, %v3619
      %v4686 = vpop.permute.xlu0 %4685
      %4689 = vset.pattern.permute.xlu0 0
      %4690 = vperm.xlu0 %4689, %v3621
      %v4691 = vpop.permute.xlu0 %4690
      %4694 = vset.pattern.permute.xlu0 0
      %4695 = vperm.xlu0 %4694, %v3623
      %v4696 = vpop.permute.xlu0 %4695
      %4699 = vset.pattern.permute.xlu0 0
      %4700 = vperm.xlu0 %4699, %v3625
      %v4701 = vpop.permute.xlu0 %4700
      %4704 = vset.pattern.permute.xlu0 0
      %4705 = vperm.xlu0 %4704, %v3627
      %v4706 = vpop.permute.xlu0 %4705
      %4709 = vset.pattern.permute.xlu0 0
      %4710 = vperm.xlu0 %4709, %v3629
      %v4711 = vpop.permute.xlu0 %4710
      %4714 = vset.pattern.permute.xlu0 0
      %4715 = vperm.xlu0 %4714, %v3631
      %v4716 = vpop.permute.xlu0 %4715
      %4719 = vset.pattern.permute.xlu0 0
      %4720 = vperm.xlu0 %4719, %v3633
      %v4721 = vpop.permute.xlu0 %4720
      %4724 = vset.pattern.permute.xlu0 0
      %4725 = vperm.xlu0 %4724, %v3635
      %v4726 = vpop.permute.xlu0 %4725
      %4729 = vset.pattern.permute.xlu0 0
      %4730 = vperm.xlu0 %4729, %v3637
      %v4731 = vpop.permute.xlu0 %4730
      %4734 = vset.pattern.permute.xlu0 0
      %4735 = vperm.xlu0 %4734, %v3639
      %v4736 = vpop.permute.xlu0 %4735
      %4739 = vset.pattern.permute.xlu0 0
      %4740 = vperm.xlu0 %4739, %v3641
      %v4741 = vpop.permute.xlu0 %4740
      %4744 = vset.pattern.permute.xlu0 0
      %4745 = vperm.xlu0 %4744, %v3643
      %v4746 = vpop.permute.xlu0 %4745
      %4749 = vset.pattern.permute.xlu0 0
      %4750 = vperm.xlu0 %4749, %v3645
      %v4751 = vpop.permute.xlu0 %4750
      %4754 = vset.pattern.permute.xlu0 0
      %4755 = vperm.xlu0 %4754, %v3647
      %v4756 = vpop.permute.xlu0 %4755
      %4759 = vset.pattern.permute.xlu0 0
      %4760 = vperm.xlu0 %4759, %v3649
      %v4761 = vpop.permute.xlu0 %4760
      %4764 = vset.pattern.permute.xlu0 0
      %4765 = vperm.xlu0 %4764, %v3651
      %v4766 = vpop.permute.xlu0 %4765
      %4769 = vset.pattern.permute.xlu0 0
      %4770 = vperm.xlu0 %4769, %v3653
      %v4771 = vpop.permute.xlu0 %4770
      %4774 = vset.pattern.permute.xlu0 0
      %4775 = vperm.xlu0 %4774, %v3655
      %v4776 = vpop.permute.xlu0 %4775
      %4779 = vset.pattern.permute.xlu0 0
      %4780 = vperm.xlu0 %4779, %v3657
      %v4781 = vpop.permute.xlu0 %4780
      %4784 = vset.pattern.permute.xlu0 0
      %4785 = vperm.xlu0 %4784, %v3659
      %v4786 = vpop.permute.xlu0 %4785
      %4789 = vset.pattern.permute.xlu0 0
      %4790 = vperm.xlu0 %4789, %v3661
      %v4791 = vpop.permute.xlu0 %4790
      %4794 = vset.pattern.permute.xlu0 0
      %4795 = vperm.xlu0 %4794, %v3663
      %v4796 = vpop.permute.xlu0 %4795
      %4799 = vset.pattern.permute.xlu0 0
      %4800 = vperm.xlu0 %4799, %v3665
      %v4801 = vpop.permute.xlu0 %4800
      %4804 = vset.pattern.permute.xlu0 0
      %4805 = vperm.xlu0 %4804, %v3667
      %v4806 = vpop.permute.xlu0 %4805
      %4809 = vset.pattern.permute.xlu0 0
      %4810 = vperm.xlu0 %4809, %v3669
      %v4811 = vpop.permute.xlu0 %4810
      %4814 = vset.pattern.permute.xlu0 0
      %4815 = vperm.xlu0 %4814, %v3671
      %v4816 = vpop.permute.xlu0 %4815
      %4819 = vset.pattern.permute.xlu0 0
      %4820 = vperm.xlu0 %4819, %v3673
      %v4821 = vpop.permute.xlu0 %4820
      %4824 = vset.pattern.permute.xlu0 0
      %4825 = vperm.xlu0 %4824, %v3675
      %v4826 = vpop.permute.xlu0 %4825
      %4829 = vset.pattern.permute.xlu0 0
      %4830 = vperm.xlu0 %4829, %v3677
      %v4831 = vpop.permute.xlu0 %4830
      %4834 = vset.pattern.permute.xlu0 0
      %4835 = vperm.xlu0 %4834, %v3679
      %v4836 = vpop.permute.xlu0 %4835
      %4839 = vset.pattern.permute.xlu0 0
      %4840 = vperm.xlu0 %4839, %v3681
      %v4841 = vpop.permute.xlu0 %4840
      %4844 = vset.pattern.permute.xlu0 0
      %4845 = vperm.xlu0 %4844, %v3683
      %v4846 = vpop.permute.xlu0 %4845
      %4849 = vset.pattern.permute.xlu0 0
      %4850 = vperm.xlu0 %4849, %v3685
      %v4851 = vpop.permute.xlu0 %4850
      %4854 = vset.pattern.permute.xlu0 0
      %4855 = vperm.xlu0 %4854, %v3687
      %v4856 = vpop.permute.xlu0 %4855
      %4859 = vset.pattern.permute.xlu0 0
      %4860 = vperm.xlu0 %4859, %v3689
      %v4861 = vpop.permute.xlu0 %4860
      %4864 = vset.pattern.permute.xlu0 0
      %4865 = vperm.xlu0 %4864, %v3691
      %v4866 = vpop.permute.xlu0 %4865
      %4869 = vset.pattern.permute.xlu0 0
      %4870 = vperm.xlu0 %4869, %v3693
      %v4871 = vpop.permute.xlu0 %4870
      %4874 = vset.pattern.permute.xlu0 0
      %4875 = vperm.xlu0 %4874, %v3695
      %v4876 = vpop.permute.xlu0 %4875
      %4879 = vset.pattern.permute.xlu0 0
      %4880 = vperm.xlu0 %4879, %v3697
      %v4881 = vpop.permute.xlu0 %4880
      %4884 = vset.pattern.permute.xlu0 0
      %4885 = vperm.xlu0 %4884, %v3699
      %v4886 = vpop.permute.xlu0 %4885
      %4889 = vset.pattern.permute.xlu0 0
      %4890 = vperm.xlu0 %4889, %v3701
      %v4891 = vpop.permute.xlu0 %4890
      %4894 = vset.pattern.permute.xlu0 0
      %4895 = vperm.xlu0 %4894, %v3703
      %v4896 = vpop.permute.xlu0 %4895
      %4899 = vset.pattern.permute.xlu0 0
      %4900 = vperm.xlu0 %4899, %v3705
      %v4901 = vpop.permute.xlu0 %4900
      %4904 = vset.pattern.permute.xlu0 0
      %4905 = vperm.xlu0 %4904, %v3707
      %v4906 = vpop.permute.xlu0 %4905
      %4909 = vset.pattern.permute.xlu0 0
      %4910 = vperm.xlu0 %4909, %v3709
      %v4911 = vpop.permute.xlu0 %4910
      %4914 = vset.pattern.permute.xlu0 0
      %4915 = vperm.xlu0 %4914, %v3711
      %v4916 = vpop.permute.xlu0 %4915
      %4919 = vset.pattern.permute.xlu0 0
      %4920 = vperm.xlu0 %4919, %v3713
      %v4921 = vpop.permute.xlu0 %4920
      %4924 = vset.pattern.permute.xlu0 0
      %4925 = vperm.xlu0 %4924, %v3715
      %v4926 = vpop.permute.xlu0 %4925
      %4929 = vset.pattern.permute.xlu0 0
      %4930 = vperm.xlu0 %4929, %v3717
      %v4931 = vpop.permute.xlu0 %4930
      %4934 = vset.pattern.permute.xlu0 0
      %4935 = vperm.xlu0 %4934, %v3719
      %v4936 = vpop.permute.xlu0 %4935
      %4939 = vset.pattern.permute.xlu0 0
      %4940 = vperm.xlu0 %4939, %v3721
      %v4941 = vpop.permute.xlu0 %4940
      %4944 = vset.pattern.permute.xlu0 0
      %4945 = vperm.xlu0 %4944, %v3723
      %v4946 = vpop.permute.xlu0 %4945
      %4949 = vset.pattern.permute.xlu0 0
      %4950 = vperm.xlu0 %4949, %v3725
      %v4951 = vpop.permute.xlu0 %4950
      %4954 = vset.pattern.permute.xlu0 0
      %4955 = vperm.xlu0 %4954, %v3727
      %v4956 = vpop.permute.xlu0 %4955
      %4959 = vset.pattern.permute.xlu0 0
      %4960 = vperm.xlu0 %4959, %v3729
      %v4961 = vpop.permute.xlu0 %4960
      %4964 = vset.pattern.permute.xlu0 0
      %4965 = vperm.xlu0 %4964, %v3731
      %v4966 = vpop.permute.xlu0 %4965
      %4969 = vset.pattern.permute.xlu0 0
      %4970 = vperm.xlu0 %4969, %v3733
      %v4971 = vpop.permute.xlu0 %4970
      %4974 = vset.pattern.permute.xlu0 0
      %4975 = vperm.xlu0 %4974, %v3735
      %v4976 = vpop.permute.xlu0 %4975
      %4979 = vset.pattern.permute.xlu0 0
      %4980 = vperm.xlu0 %4979, %v3737
      %v4981 = vpop.permute.xlu0 %4980
      %4984 = vset.pattern.permute.xlu0 0
      %4985 = vperm.xlu0 %4984, %v3739
      %v4986 = vpop.permute.xlu0 %4985
      %4989 = vset.pattern.permute.xlu0 0
      %4990 = vperm.xlu0 %4989, %v3741
      %v4991 = vpop.permute.xlu0 %4990
      %4994 = vset.pattern.permute.xlu0 0
      %4995 = vperm.xlu0 %4994, %v3743
      %v4996 = vpop.permute.xlu0 %4995
      %4999 = vset.pattern.permute.xlu0 0
      %5000 = vperm.xlu0 %4999, %v3745
      %v5001 = vpop.permute.xlu0 %5000
      %5004 = vset.pattern.permute.xlu0 0
      %5005 = vperm.xlu0 %5004, %v3747
      %v5006 = vpop.permute.xlu0 %5005
      %5009 = vset.pattern.permute.xlu0 0
      %5010 = vperm.xlu0 %5009, %v3749
      %v5011 = vpop.permute.xlu0 %5010
      %5014 = vset.pattern.permute.xlu0 0
      %5015 = vperm.xlu0 %5014, %v3751
      %v5016 = vpop.permute.xlu0 %5015
      %5019 = vset.pattern.permute.xlu0 0
      %5020 = vperm.xlu0 %5019, %v3753
      %v5021 = vpop.permute.xlu0 %5020
      %5024 = vset.pattern.permute.xlu0 0
      %5025 = vperm.xlu0 %5024, %v3755
      %v5026 = vpop.permute.xlu0 %5025
      %5029 = vset.pattern.permute.xlu0 0
      %5030 = vperm.xlu0 %5029, %v3757
      %v5031 = vpop.permute.xlu0 %5030
      %5034 = vset.pattern.permute.xlu0 0
      %5035 = vperm.xlu0 %5034, %v3759
      %v5036 = vpop.permute.xlu0 %5035
      %5039 = vset.pattern.permute.xlu0 0
      %5040 = vperm.xlu0 %5039, %v3761
      %v5041 = vpop.permute.xlu0 %5040
      %5044 = vset.pattern.permute.xlu0 0
      %5045 = vperm.xlu0 %5044, %v3763
      %v5046 = vpop.permute.xlu0 %5045
      %5049 = vset.pattern.permute.xlu0 0
      %5050 = vperm.xlu0 %5049, %v3765
      %v5051 = vpop.permute.xlu0 %5050
      %5054 = vset.pattern.permute.xlu0 0
      %5055 = vperm.xlu0 %5054, %v3767
      %v5056 = vpop.permute.xlu0 %5055
      %5059 = vset.pattern.permute.xlu0 0
      %5060 = vperm.xlu0 %5059, %v3769
      %v5061 = vpop.permute.xlu0 %5060
      %5064 = vset.pattern.permute.xlu0 0
      %5065 = vperm.xlu0 %5064, %v3771
      %v5066 = vpop.permute.xlu0 %5065
      %5069 = vset.pattern.permute.xlu0 0
      %5070 = vperm.xlu0 %5069, %v3773
      %v5071 = vpop.permute.xlu0 %5070
      %5074 = vset.pattern.permute.xlu0 0
      %5075 = vperm.xlu0 %5074, %v3775
      %v5076 = vpop.permute.xlu0 %5075
      %5079 = vset.pattern.permute.xlu0 0
      %5080 = vperm.xlu0 %5079, %v3777
      %v5081 = vpop.permute.xlu0 %5080
      %5084 = vset.pattern.permute.xlu0 0
      %5085 = vperm.xlu0 %5084, %v3779
      %v5086 = vpop.permute.xlu0 %5085
      %5089 = vset.pattern.permute.xlu0 0
      %5090 = vperm.xlu0 %5089, %v3781
      %v5091 = vpop.permute.xlu0 %5090
      %5094 = vset.pattern.permute.xlu0 0
      %5095 = vperm.xlu0 %5094, %v3783
      %v5096 = vpop.permute.xlu0 %5095
      %5099 = vset.pattern.permute.xlu0 0
      %5100 = vperm.xlu0 %5099, %v3785
      %v5101 = vpop.permute.xlu0 %5100
      %5104 = vset.pattern.permute.xlu0 0
      %5105 = vperm.xlu0 %5104, %v3787
      %v5106 = vpop.permute.xlu0 %5105
      %5109 = vset.pattern.permute.xlu0 0
      %5110 = vperm.xlu0 %5109, %v3789
      %v5111 = vpop.permute.xlu0 %5110
      %5114 = vset.pattern.permute.xlu0 0
      %5115 = vperm.xlu0 %5114, %v3791
      %v5116 = vpop.permute.xlu0 %5115
      %5119 = vset.pattern.permute.xlu0 0
      %5120 = vperm.xlu0 %5119, %v3793
      %v5121 = vpop.permute.xlu0 %5120
      %5124 = vset.pattern.permute.xlu0 0
      %5125 = vperm.xlu0 %5124, %v3795
      %v5126 = vpop.permute.xlu0 %5125
      %5129 = vset.pattern.permute.xlu0 0
      %5130 = vperm.xlu0 %5129, %v3797
      %v5131 = vpop.permute.xlu0 %5130
      %5134 = vset.pattern.permute.xlu0 0
      %5135 = vperm.xlu0 %5134, %v3799
      %v5136 = vpop.permute.xlu0 %5135
      %5139 = vset.pattern.permute.xlu0 0
      %5140 = vperm.xlu0 %5139, %v3801
      %v5141 = vpop.permute.xlu0 %5140
      %5144 = vset.pattern.permute.xlu0 0
      %5145 = vperm.xlu0 %5144, %v3803
      %v5146 = vpop.permute.xlu0 %5145
      %5149 = vset.pattern.permute.xlu0 0
      %5150 = vperm.xlu0 %5149, %v3805
      %v5151 = vpop.permute.xlu0 %5150
      %5154 = vset.pattern.permute.xlu0 0
      %5155 = vperm.xlu0 %5154, %v3807
      %v5156 = vpop.permute.xlu0 %5155
      %5159 = vset.pattern.permute.xlu0 0
      %5160 = vperm.xlu0 %5159, %v3809
      %v5161 = vpop.permute.xlu0 %5160
      %5164 = vset.pattern.permute.xlu0 0
      %5165 = vperm.xlu0 %5164, %v3811
      %v5166 = vpop.permute.xlu0 %5165
      %5169 = vset.pattern.permute.xlu0 0
      %5170 = vperm.xlu0 %5169, %v3813
      %v5171 = vpop.permute.xlu0 %5170
      %5174 = vset.pattern.permute.xlu0 0
      %5175 = vperm.xlu0 %5174, %v3815
      %v5176 = vpop.permute.xlu0 %5175
      %5179 = vset.pattern.permute.xlu0 0
      %5180 = vperm.xlu0 %5179, %v3817
      %v5181 = vpop.permute.xlu0 %5180
      %5184 = vset.pattern.permute.xlu0 0
      %5185 = vperm.xlu0 %5184, %v3819
      %v5186 = vpop.permute.xlu0 %5185
      %5189 = vset.pattern.permute.xlu0 0
      %5190 = vperm.xlu0 %5189, %v3821
      %v5191 = vpop.permute.xlu0 %5190
      %5194 = vset.pattern.permute.xlu0 0
      %5195 = vperm.xlu0 %5194, %v3823
      %v5196 = vpop.permute.xlu0 %5195
      %5199 = vset.pattern.permute.xlu0 0
      %5200 = vperm.xlu0 %5199, %v3825
      %v5201 = vpop.permute.xlu0 %5200
      %5204 = vset.pattern.permute.xlu0 0
      %5205 = vperm.xlu0 %5204, %v3827
      %v5206 = vpop.permute.xlu0 %5205
      %5209 = vset.pattern.permute.xlu0 0
      %5210 = vperm.xlu0 %5209, %v3829
      %v5211 = vpop.permute.xlu0 %5210
      %5214 = vset.pattern.permute.xlu0 0
      %5215 = vperm.xlu0 %5214, %v3831
      %v5216 = vpop.permute.xlu0 %5215
      %5219 = vset.pattern.permute.xlu0 0
      %5220 = vperm.xlu0 %5219, %v3833
      %v5221 = vpop.permute.xlu0 %5220
      %5224 = vset.pattern.permute.xlu0 0
      %5225 = vperm.xlu0 %5224, %v3835
      %v5226 = vpop.permute.xlu0 %5225
      %5229 = vset.pattern.permute.xlu0 0
      %5230 = vperm.xlu0 %5229, %v3837
      %v5231 = vpop.permute.xlu0 %5230
      %5234 = vset.pattern.permute.xlu0 0
      %5235 = vperm.xlu0 %5234, %v3839
      %v5236 = vpop.permute.xlu0 %5235
      %5239 = vset.pattern.permute.xlu0 0
      %5240 = vperm.xlu0 %5239, %v3841
      %v5241 = vpop.permute.xlu0 %5240
      %5244 = vset.pattern.permute.xlu0 0
      %5245 = vperm.xlu0 %5244, %v3843
      %v5246 = vpop.permute.xlu0 %5245
      %5249 = vset.pattern.permute.xlu0 0
      %5250 = vperm.xlu0 %5249, %v3845
      %v5251 = vpop.permute.xlu0 %5250
      %5254 = vset.pattern.permute.xlu0 0
      %5255 = vperm.xlu0 %5254, %v3847
      %v5256 = vpop.permute.xlu0 %5255
      %5259 = vset.pattern.permute.xlu0 0
      %5260 = vperm.xlu0 %5259, %v3849
      %v5261 = vpop.permute.xlu0 %5260
      %5264 = vset.pattern.permute.xlu0 0
      %5265 = vperm.xlu0 %5264, %v3851
      %v5266 = vpop.permute.xlu0 %5265
      %5269 = vset.pattern.permute.xlu0 0
      %5270 = vperm.xlu0 %5269, %v3853
      %v5271 = vpop.permute.xlu0 %5270
      %5274 = vset.pattern.permute.xlu0 0
      %5275 = vperm.xlu0 %5274, %v3855
      %v5276 = vpop.permute.xlu0 %5275
      %5279 = vset.pattern.permute.xlu0 0
      %5280 = vperm.xlu0 %5279, %v3857
      %v5281 = vpop.permute.xlu0 %5280
      %5284 = vset.pattern.permute.xlu0 0
      %5285 = vperm.xlu0 %5284, %v3859
      %v5286 = vpop.permute.xlu0 %5285
      %5289 = vset.pattern.permute.xlu0 0
      %5290 = vperm.xlu0 %5289, %v3861
      %v5291 = vpop.permute.xlu0 %5290
      %5294 = vset.pattern.permute.xlu0 0
      %5295 = vperm.xlu0 %5294, %v3863
      %v5296 = vpop.permute.xlu0 %5295
      %5299 = vset.pattern.permute.xlu0 0
      %5300 = vperm.xlu0 %5299, %v3865
      %v5301 = vpop.permute.xlu0 %5300
      %5304 = vset.pattern.permute.xlu0 0
      %5305 = vperm.xlu0 %5304, %v3867
      %v5306 = vpop.permute.xlu0 %5305
      %5309 = vset.pattern.permute.xlu0 0
      %5310 = vperm.xlu0 %5309, %v3869
      %v5311 = vpop.permute.xlu0 %5310
      %5314 = vset.pattern.permute.xlu0 0
      %5315 = vperm.xlu0 %5314, %v3871
      %v5316 = vpop.permute.xlu0 %5315
      %5319 = vset.pattern.permute.xlu0 0
      %5320 = vperm.xlu0 %5319, %v3873
      %v5321 = vpop.permute.xlu0 %5320
      %5324 = vset.pattern.permute.xlu0 0
      %5325 = vperm.xlu0 %5324, %v3875
      %v5326 = vpop.permute.xlu0 %5325
      %5329 = vset.pattern.permute.xlu0 0
      %5330 = vperm.xlu0 %5329, %v3877
      %v5331 = vpop.permute.xlu0 %5330
      %5334 = vset.pattern.permute.xlu0 0
      %5335 = vperm.xlu0 %5334, %v3879
      %v5336 = vpop.permute.xlu0 %5335
      %5339 = vset.pattern.permute.xlu0 0
      %5340 = vperm.xlu0 %5339, %v3881
      %v5341 = vpop.permute.xlu0 %5340
      %5344 = vset.pattern.permute.xlu0 0
      %5345 = vperm.xlu0 %5344, %v3883
      %v5346 = vpop.permute.xlu0 %5345
      %5349 = vset.pattern.permute.xlu0 0
      %5350 = vperm.xlu0 %5349, %v3885
      %v5351 = vpop.permute.xlu0 %5350
      %5354 = vset.pattern.permute.xlu0 0
      %5355 = vperm.xlu0 %5354, %v3887
      %v5356 = vpop.permute.xlu0 %5355
      %5359 = vset.pattern.permute.xlu0 0
      %5360 = vperm.xlu0 %5359, %v3889
      %v5361 = vpop.permute.xlu0 %5360
      %5364 = vset.pattern.permute.xlu0 0
      %5365 = vperm.xlu0 %5364, %v3891
      %v5366 = vpop.permute.xlu0 %5365
      %5369 = vset.pattern.permute.xlu0 0
      %5370 = vperm.xlu0 %5369, %v3893
      %v5371 = vpop.permute.xlu0 %5370
      %5374 = vset.pattern.permute.xlu0 0
      %5375 = vperm.xlu0 %5374, %v3895
      %v5376 = vpop.permute.xlu0 %5375
      %5379 = vset.pattern.permute.xlu0 0
      %5380 = vperm.xlu0 %5379, %v3897
      %v5381 = vpop.permute.xlu0 %5380
      %5384 = vset.pattern.permute.xlu0 0
      %5385 = vperm.xlu0 %5384, %v3899
      %v5386 = vpop.permute.xlu0 %5385
      %5389 = vset.pattern.permute.xlu0 0
      %5390 = vperm.xlu0 %5389, %v3901
      %v5391 = vpop.permute.xlu0 %5390
      %5394 = vset.pattern.permute.xlu0 0
      %5395 = vperm.xlu0 %5394, %v3903
      %v5396 = vpop.permute.xlu0 %5395
      %5399 = vset.pattern.permute.xlu0 0
      %5400 = vperm.xlu0 %5399, %v3905
      %v5401 = vpop.permute.xlu0 %5400
      %5404 = vset.pattern.permute.xlu0 0
      %5405 = vperm.xlu0 %5404, %v3907
      %v5406 = vpop.permute.xlu0 %5405
      %5409 = vset.pattern.permute.xlu0 0
      %5410 = vperm.xlu0 %5409, %v3909
      %v5411 = vpop.permute.xlu0 %5410
      %5414 = vset.pattern.permute.xlu0 0
      %5415 = vperm.xlu0 %5414, %v3911
      %v5416 = vpop.permute.xlu0 %5415
      %5419 = vset.pattern.permute.xlu0 0
      %5420 = vperm.xlu0 %5419, %v3913
      %v5421 = vpop.permute.xlu0 %5420
      %5424 = vset.pattern.permute.xlu0 0
      %5425 = vperm.xlu0 %5424, %v3915
      %v5426 = vpop.permute.xlu0 %5425
      %5429 = vset.pattern.permute.xlu0 0
      %5430 = vperm.xlu0 %5429, %v3917
      %v5431 = vpop.permute.xlu0 %5430
      %5434 = vset.pattern.permute.xlu0 0
      %5435 = vperm.xlu0 %5434, %v3919
      %v5436 = vpop.permute.xlu0 %5435
      %5439 = vset.pattern.permute.xlu0 0
      %5440 = vperm.xlu0 %5439, %v3921
      %v5441 = vpop.permute.xlu0 %5440
      %5444 = vset.pattern.permute.xlu0 0
      %5445 = vperm.xlu0 %5444, %v3923
      %v5446 = vpop.permute.xlu0 %5445
      %5449 = vset.pattern.permute.xlu0 0
      %5450 = vperm.xlu0 %5449, %v3925
      %v5451 = vpop.permute.xlu0 %5450
      %5454 = vset.pattern.permute.xlu0 0
      %5455 = vperm.xlu0 %5454, %v3927
      %v5456 = vpop.permute.xlu0 %5455
      %5459 = vset.pattern.permute.xlu0 0
      %5460 = vperm.xlu0 %5459, %v3929
      %v5461 = vpop.permute.xlu0 %5460
      %5464 = vset.pattern.permute.xlu0 0
      %5465 = vperm.xlu0 %5464, %v3931
      %v5466 = vpop.permute.xlu0 %5465
      %5469 = vset.pattern.permute.xlu0 0
      %5470 = vperm.xlu0 %5469, %v3933
      %v5471 = vpop.permute.xlu0 %5470
      %5474 = vset.pattern.permute.xlu0 0
      %5475 = vperm.xlu0 %5474, %v3935
      %v5476 = vpop.permute.xlu0 %5475
      %5479 = vset.pattern.permute.xlu0 0
      %5480 = vperm.xlu0 %5479, %v3937
      %v5481 = vpop.permute.xlu0 %5480
      %5484 = vset.pattern.permute.xlu0 0
      %5485 = vperm.xlu0 %5484, %v3939
      %v5486 = vpop.permute.xlu0 %5485
      %v5488 = vmul.f32 %v3940, %v4201
      %v5489 = vmul.f32 %v3941, %v4206
      %v5490 = vmul.f32 %v3942, %v4211
      %v5491 = vmul.f32 %v3943, %v4216
      %v5492 = vmul.f32 %v3944, %v4221
      %v5493 = vmul.f32 %v3945, %v4226
      %v5494 = vmul.f32 %v3946, %v4231
      %v5495 = vmul.f32 %v3947, %v4236
      %v5496 = vmul.f32 %v3948, %v4241
      %v5497 = vmul.f32 %v3949, %v4246
      %v5498 = vmul.f32 %v3950, %v4251
      %v5499 = vmul.f32 %v3951, %v4256
      %v5500 = vmul.f32 %v3952, %v4261
      %v5501 = vmul.f32 %v3953, %v4266
      %v5502 = vmul.f32 %v3954, %v4271
      %v5503 = vmul.f32 %v3955, %v4276
      %v5504 = vmul.f32 %v3956, %v4281
      %v5505 = vmul.f32 %v3957, %v4286
      %v5506 = vmul.f32 %v3958, %v4291
      %v5507 = vmul.f32 %v3959, %v4296
      %v5508 = vmul.f32 %v3960, %v4301
      %v5509 = vmul.f32 %v3961, %v4306
      %v5510 = vmul.f32 %v3962, %v4311
      %v5511 = vmul.f32 %v3963, %v4316
      %v5512 = vmul.f32 %v3964, %v4321
      %v5513 = vmul.f32 %v3965, %v4326
      %v5514 = vmul.f32 %v3966, %v4331
      %v5515 = vmul.f32 %v3967, %v4336
      %v5516 = vmul.f32 %v3968, %v4341
      %v5517 = vmul.f32 %v3969, %v4346
      %v5518 = vmul.f32 %v3970, %v4351
      %v5519 = vmul.f32 %v3971, %v4356
      %v5520 = vmul.f32 %v3972, %v4361
      %v5521 = vmul.f32 %v3973, %v4366
      %v5522 = vmul.f32 %v3974, %v4371
      %v5523 = vmul.f32 %v3975, %v4376
      %v5524 = vmul.f32 %v3976, %v4381
      %v5525 = vmul.f32 %v3977, %v4386
      %v5526 = vmul.f32 %v3978, %v4391
      %v5527 = vmul.f32 %v3979, %v4396
      %v5528 = vmul.f32 %v3980, %v4401
      %v5529 = vmul.f32 %v3981, %v4406
      %v5530 = vmul.f32 %v3982, %v4411
      %v5531 = vmul.f32 %v3983, %v4416
      %v5532 = vmul.f32 %v3984, %v4421
      %v5533 = vmul.f32 %v3985, %v4426
      %v5534 = vmul.f32 %v3986, %v4431
      %v5535 = vmul.f32 %v3987, %v4436
      %v5536 = vmul.f32 %v3988, %v4441
      %v5537 = vmul.f32 %v3989, %v4446
      %v5538 = vmul.f32 %v3990, %v4451
      %v5539 = vmul.f32 %v3991, %v4456
      %v5540 = vmul.f32 %v3992, %v4461
      %v5541 = vmul.f32 %v3993, %v4466
      %v5542 = vmul.f32 %v3994, %v4471
      %v5543 = vmul.f32 %v3995, %v4476
      %v5544 = vmul.f32 %v3996, %v4481
      %v5545 = vmul.f32 %v3997, %v4486
      %v5546 = vmul.f32 %v3998, %v4491
      %v5547 = vmul.f32 %v3999, %v4496
      %v5548 = vmul.f32 %v4000, %v4501
      %v5549 = vmul.f32 %v4001, %v4506
      %v5550 = vmul.f32 %v4002, %v4511
      %v5551 = vmul.f32 %v4003, %v4516
      %v5552 = vmul.f32 %v4004, %v4521
      %v5553 = vmul.f32 %v4005, %v4526
      %v5554 = vmul.f32 %v4006, %v4531
      %v5555 = vmul.f32 %v4007, %v4536
      %v5556 = vmul.f32 %v4008, %v4541
      %v5557 = vmul.f32 %v4009, %v4546
      %v5558 = vmul.f32 %v4010, %v4551
      %v5559 = vmul.f32 %v4011, %v4556
      %v5560 = vmul.f32 %v4012, %v4561
      %v5561 = vmul.f32 %v4013, %v4566
      %v5562 = vmul.f32 %v4014, %v4571
      %v5563 = vmul.f32 %v4015, %v4576
      %v5564 = vmul.f32 %v4016, %v4581
      %v5565 = vmul.f32 %v4017, %v4586
      %v5566 = vmul.f32 %v4018, %v4591
      %v5567 = vmul.f32 %v4019, %v4596
      %v5568 = vmul.f32 %v4020, %v4601
      %v5569 = vmul.f32 %v4021, %v4606
      %v5570 = vmul.f32 %v4022, %v4611
      %v5571 = vmul.f32 %v4023, %v4616
      %v5572 = vmul.f32 %v4024, %v4621
      %v5573 = vmul.f32 %v4025, %v4626
      %v5574 = vmul.f32 %v4026, %v4631
      %v5575 = vmul.f32 %v4027, %v4636
      %v5576 = vmul.f32 %v4028, %v4641
      %v5577 = vmul.f32 %v4029, %v4646
      %v5578 = vmul.f32 %v4030, %v4651
      %v5579 = vmul.f32 %v4031, %v4656
      %v5580 = vmul.f32 %v4032, %v4661
      %v5581 = vmul.f32 %v4033, %v4666
      %v5582 = vmul.f32 %v4034, %v4671
      %v5583 = vmul.f32 %v4035, %v4676
      %v5584 = vmul.f32 %v4036, %v4681
      %v5585 = vmul.f32 %v4037, %v4686
      %v5586 = vmul.f32 %v4038, %v4691
      %v5587 = vmul.f32 %v4039, %v4696
      %v5588 = vmul.f32 %v4040, %v4701
      %v5589 = vmul.f32 %v4041, %v4706
      %v5590 = vmul.f32 %v4042, %v4711
      %v5591 = vmul.f32 %v4043, %v4716
      %v5592 = vmul.f32 %v4044, %v4721
      %v5593 = vmul.f32 %v4045, %v4726
      %v5594 = vmul.f32 %v4046, %v4731
      %v5595 = vmul.f32 %v4047, %v4736
      %v5596 = vmul.f32 %v4048, %v4741
      %v5597 = vmul.f32 %v4049, %v4746
      %v5598 = vmul.f32 %v4050, %v4751
      %v5599 = vmul.f32 %v4051, %v4756
      %v5600 = vmul.f32 %v4052, %v4761
      %v5601 = vmul.f32 %v4053, %v4766
      %v5602 = vmul.f32 %v4054, %v4771
      %v5603 = vmul.f32 %v4055, %v4776
      %v5604 = vmul.f32 %v4056, %v4781
      %v5605 = vmul.f32 %v4057, %v4786
      %v5606 = vmul.f32 %v4058, %v4791
      %v5607 = vmul.f32 %v4059, %v4796
      %v5608 = vmul.f32 %v4060, %v4801
      %v5609 = vmul.f32 %v4061, %v4806
      %v5610 = vmul.f32 %v4062, %v4811
      %v5611 = vmul.f32 %v4063, %v4816
      %v5612 = vmul.f32 %v4064, %v4821
      %v5613 = vmul.f32 %v4065, %v4826
      %v5614 = vmul.f32 %v4066, %v4831
      %v5615 = vmul.f32 %v4067, %v4836
      %v5616 = vmul.f32 %v4068, %v4841
      %v5617 = vmul.f32 %v4069, %v4846
      %v5618 = vmul.f32 %v4070, %v4851
      %v5619 = vmul.f32 %v4071, %v4856
      %v5620 = vmul.f32 %v4072, %v4861
      %v5621 = vmul.f32 %v4073, %v4866
      %v5622 = vmul.f32 %v4074, %v4871
      %v5623 = vmul.f32 %v4075, %v4876
      %v5624 = vmul.f32 %v4076, %v4881
      %v5625 = vmul.f32 %v4077, %v4886
      %v5626 = vmul.f32 %v4078, %v4891
      %v5627 = vmul.f32 %v4079, %v4896
      %v5628 = vmul.f32 %v4080, %v4901
      %v5629 = vmul.f32 %v4081, %v4906
      %v5630 = vmul.f32 %v4082, %v4911
      %v5631 = vmul.f32 %v4083, %v4916
      %v5632 = vmul.f32 %v4084, %v4921
      %v5633 = vmul.f32 %v4085, %v4926
      %v5634 = vmul.f32 %v4086, %v4931
      %v5635 = vmul.f32 %v4087, %v4936
      %v5636 = vmul.f32 %v4088, %v4941
      %v5637 = vmul.f32 %v4089, %v4946
      %v5638 = vmul.f32 %v4090, %v4951
      %v5639 = vmul.f32 %v4091, %v4956
      %v5640 = vmul.f32 %v4092, %v4961
      %v5641 = vmul.f32 %v4093, %v4966
      %v5642 = vmul.f32 %v4094, %v4971
      %v5643 = vmul.f32 %v4095, %v4976
      %v5644 = vmul.f32 %v4096, %v4981
      %v5645 = vmul.f32 %v4097, %v4986
      %v5646 = vmul.f32 %v4098, %v4991
      %v5647 = vmul.f32 %v4099, %v4996
      %v5648 = vmul.f32 %v4100, %v5001
      %v5649 = vmul.f32 %v4101, %v5006
      %v5650 = vmul.f32 %v4102, %v5011
      %v5651 = vmul.f32 %v4103, %v5016
      %v5652 = vmul.f32 %v4104, %v5021
      %v5653 = vmul.f32 %v4105, %v5026
      %v5654 = vmul.f32 %v4106, %v5031
      %v5655 = vmul.f32 %v4107, %v5036
      %v5656 = vmul.f32 %v4108, %v5041
      %v5657 = vmul.f32 %v4109, %v5046
      %v5658 = vmul.f32 %v4110, %v5051
      %v5659 = vmul.f32 %v4111, %v5056
      %v5660 = vmul.f32 %v4112, %v5061
      %v5661 = vmul.f32 %v4113, %v5066
      %v5662 = vmul.f32 %v4114, %v5071
      %v5663 = vmul.f32 %v4115, %v5076
      %v5664 = vmul.f32 %v4116, %v5081
      %v5665 = vmul.f32 %v4117, %v5086
      %v5666 = vmul.f32 %v4118, %v5091
      %v5667 = vmul.f32 %v4119, %v5096
      %v5668 = vmul.f32 %v4120, %v5101
      %v5669 = vmul.f32 %v4121, %v5106
      %v5670 = vmul.f32 %v4122, %v5111
      %v5671 = vmul.f32 %v4123, %v5116
      %v5672 = vmul.f32 %v4124, %v5121
      %v5673 = vmul.f32 %v4125, %v5126
      %v5674 = vmul.f32 %v4126, %v5131
      %v5675 = vmul.f32 %v4127, %v5136
      %v5676 = vmul.f32 %v4128, %v5141
      %v5677 = vmul.f32 %v4129, %v5146
      %v5678 = vmul.f32 %v4130, %v5151
      %v5679 = vmul.f32 %v4131, %v5156
      %v5680 = vmul.f32 %v4132, %v5161
      %v5681 = vmul.f32 %v4133, %v5166
      %v5682 = vmul.f32 %v4134, %v5171
      %v5683 = vmul.f32 %v4135, %v5176
      %v5684 = vmul.f32 %v4136, %v5181
      %v5685 = vmul.f32 %v4137, %v5186
      %v5686 = vmul.f32 %v4138, %v5191
      %v5687 = vmul.f32 %v4139, %v5196
      %v5688 = vmul.f32 %v4140, %v5201
      %v5689 = vmul.f32 %v4141, %v5206
      %v5690 = vmul.f32 %v4142, %v5211
      %v5691 = vmul.f32 %v4143, %v5216
      %v5692 = vmul.f32 %v4144, %v5221
      %v5693 = vmul.f32 %v4145, %v5226
      %v5694 = vmul.f32 %v4146, %v5231
      %v5695 = vmul.f32 %v4147, %v5236
      %v5696 = vmul.f32 %v4148, %v5241
      %v5697 = vmul.f32 %v4149, %v5246
      %v5698 = vmul.f32 %v4150, %v5251
      %v5699 = vmul.f32 %v4151, %v5256
      %v5700 = vmul.f32 %v4152, %v5261
      %v5701 = vmul.f32 %v4153, %v5266
      %v5702 = vmul.f32 %v4154, %v5271
      %v5703 = vmul.f32 %v4155, %v5276
      %v5704 = vmul.f32 %v4156, %v5281
      %v5705 = vmul.f32 %v4157, %v5286
      %v5706 = vmul.f32 %v4158, %v5291
      %v5707 = vmul.f32 %v4159, %v5296
      %v5708 = vmul.f32 %v4160, %v5301
      %v5709 = vmul.f32 %v4161, %v5306
      %v5710 = vmul.f32 %v4162, %v5311
      %v5711 = vmul.f32 %v4163, %v5316
      %v5712 = vmul.f32 %v4164, %v5321
      %v5713 = vmul.f32 %v4165, %v5326
      %v5714 = vmul.f32 %v4166, %v5331
      %v5715 = vmul.f32 %v4167, %v5336
      %v5716 = vmul.f32 %v4168, %v5341
      %v5717 = vmul.f32 %v4169, %v5346
      %v5718 = vmul.f32 %v4170, %v5351
      %v5719 = vmul.f32 %v4171, %v5356
      %v5720 = vmul.f32 %v4172, %v5361
      %v5721 = vmul.f32 %v4173, %v5366
      %v5722 = vmul.f32 %v4174, %v5371
      %v5723 = vmul.f32 %v4175, %v5376
      %v5724 = vmul.f32 %v4176, %v5381
      %v5725 = vmul.f32 %v4177, %v5386
      %v5726 = vmul.f32 %v4178, %v5391
      %v5727 = vmul.f32 %v4179, %v5396
      %v5728 = vmul.f32 %v4180, %v5401
      %v5729 = vmul.f32 %v4181, %v5406
      %v5730 = vmul.f32 %v4182, %v5411
      %v5731 = vmul.f32 %v4183, %v5416
      %v5732 = vmul.f32 %v4184, %v5421
      %v5733 = vmul.f32 %v4185, %v5426
      %v5734 = vmul.f32 %v4186, %v5431
      %v5735 = vmul.f32 %v4187, %v5436
      %v5736 = vmul.f32 %v4188, %v5441
      %v5737 = vmul.f32 %v4189, %v5446
      %v5738 = vmul.f32 %v4190, %v5451
      %v5739 = vmul.f32 %v4191, %v5456
      %v5740 = vmul.f32 %v4192, %v5461
      %v5741 = vmul.f32 %v4193, %v5466
      %v5742 = vmul.f32 %v4194, %v5471
      %v5743 = vmul.f32 %v4195, %v5476
      %v5744 = vmul.f32 %v4196, %v5481
      %v5745 = vmul.f32 %v4197, %v5486
      %v5746 = vld [vmem:[%s303] sm:$0xff]
      %v5747 = vld [vmem:[%s303 + $0x8] sm:$0xff]
      %v5748 = vld [vmem:[%s303 + $0x10] sm:$0xff]
      %v5749 = vld [vmem:[%s303 + $0x18] sm:$0xff]
      %v5750 = vld [vmem:[%s303 + $0x20] sm:$0xff]
      %v5751 = vld [vmem:[%s303 + $0x28] sm:$0xff]
      %v5752 = vld [vmem:[%s303 + $0x30] sm:$0xff]
      %v5753 = vld [vmem:[%s303 + $0x38] sm:$0xff]
      %v5754 = vld [vmem:[%s303 + $0x40] sm:$0xf]
      %v5755 = vld [vmem:[%s303 + $0x44] sm:$0xff]
      %v5756 = vld [vmem:[%s303 + $0x4c] sm:$0xff]
      %v5757 = vld [vmem:[%s303 + $0x54] sm:$0xff]
      %v5758 = vld [vmem:[%s303 + $0x5c] sm:$0xff]
      %v5759 = vld [vmem:[%s303 + $0x64] sm:$0xff]
      %v5760 = vld [vmem:[%s303 + $0x6c] sm:$0xff]
      %v5761 = vld [vmem:[%s303 + $0x74] sm:$0xff]
      %v5762 = vld [vmem:[%s303 + $0x7c] sm:$0xff]
      %v5763 = vld [vmem:[%s303 + $0x84] sm:$0xf]
      %v5764 = vld [vmem:[%s303 + $0x88] sm:$0xff]
      %v5765 = vld [vmem:[%s303 + $0x90] sm:$0xff]
      %v5766 = vld [vmem:[%s303 + $0x98] sm:$0xff]
      %v5767 = vld [vmem:[%s303 + $0xa0] sm:$0xff]
      %v5768 = vld [vmem:[%s303 + $0xa8] sm:$0xff]
      %v5769 = vld [vmem:[%s303 + $0xb0] sm:$0xff]
      %v5770 = vld [vmem:[%s303 + $0xb8] sm:$0xff]
      %v5771 = vld [vmem:[%s303 + $0xc0] sm:$0xff]
      %v5772 = vld [vmem:[%s303 + $0xc8] sm:$0xf]
      %v5773 = vld [vmem:[%s303 + $0xcc] sm:$0xff]
      %v5774 = vld [vmem:[%s303 + $0xd4] sm:$0xff]
      %v5775 = vld [vmem:[%s303 + $0xdc] sm:$0xff]
      %v5776 = vld [vmem:[%s303 + $0xe4] sm:$0xff]
      %v5777 = vld [vmem:[%s303 + $0xec] sm:$0xff]
      %v5778 = vld [vmem:[%s303 + $0xf4] sm:$0xff]
      %v5779 = vld [vmem:[%s303 + $0xfc] sm:$0xff]
      %v5780 = vld [vmem:[%s303 + $0x104] sm:$0xff]
      %v5781 = vld [vmem:[%s303 + $0x10c] sm:$0xf]
      %v5782 = vld [vmem:[%s303 + $0x110] sm:$0xff]
      %v5783 = vld [vmem:[%s303 + $0x118] sm:$0xff]
      %v5784 = vld [vmem:[%s303 + $0x120] sm:$0xff]
      %v5785 = vld [vmem:[%s303 + $0x128] sm:$0xff]
      %v5786 = vld [vmem:[%s303 + $0x130] sm:$0xff]
      %v5787 = vld [vmem:[%s303 + $0x138] sm:$0xff]
      %v5788 = vld [vmem:[%s303 + $0x140] sm:$0xff]
      %v5789 = vld [vmem:[%s303 + $0x148] sm:$0xff]
      %v5790 = vld [vmem:[%s303 + $0x150] sm:$0xf]
      %v5791 = vld [vmem:[%s303 + $0x154] sm:$0xff]
      %v5792 = vld [vmem:[%s303 + $0x15c] sm:$0xff]
      %v5793 = vld [vmem:[%s303 + $0x164] sm:$0xff]
      %v5794 = vld [vmem:[%s303 + $0x16c] sm:$0xff]
      %v5795 = vld [vmem:[%s303 + $0x174] sm:$0xff]
      %v5796 = vld [vmem:[%s303 + $0x17c] sm:$0xff]
      %v5797 = vld [vmem:[%s303 + $0x184] sm:$0xff]
      %v5798 = vld [vmem:[%s303 + $0x18c] sm:$0xff]
      %v5799 = vld [vmem:[%s303 + $0x194] sm:$0xf]
      %v5800 = vld [vmem:[%s303 + $0x198] sm:$0xff]
      %v5801 = vld [vmem:[%s303 + $0x1a0] sm:$0xff]
      %v5802 = vld [vmem:[%s303 + $0x1a8] sm:$0xff]
      %v5803 = vld [vmem:[%s303 + $0x1b0] sm:$0xff]
      %v5804 = vld [vmem:[%s303 + $0x1b8] sm:$0xff]
      %v5805 = vld [vmem:[%s303 + $0x1c0] sm:$0xff]
      %v5806 = vld [vmem:[%s303 + $0x1c8] sm:$0xff]
      %v5807 = vld [vmem:[%s303 + $0x1d0] sm:$0xff]
      %v5808 = vld [vmem:[%s303 + $0x1d8] sm:$0xf]
      %v5809 = vld [vmem:[%s303 + $0x1dc] sm:$0xff]
      %v5810 = vld [vmem:[%s303 + $0x1e4] sm:$0xff]
      %v5811 = vld [vmem:[%s303 + $0x1ec] sm:$0xff]
      %v5812 = vld [vmem:[%s303 + $0x1f4] sm:$0xff]
      %v5813 = vld [vmem:[%s303 + $0x1fc] sm:$0xff]
      %v5814 = vld [vmem:[%s303 + $0x204] sm:$0xff]
      %v5815 = vld [vmem:[%s303 + $0x20c] sm:$0xff]
      %v5816 = vld [vmem:[%s303 + $0x214] sm:$0xff]
      %v5817 = vld [vmem:[%s303 + $0x21c] sm:$0xf]
      %v5818 = vld [vmem:[%s303 + $0x220] sm:$0xff]
      %v5819 = vld [vmem:[%s303 + $0x228] sm:$0xff]
      %v5820 = vld [vmem:[%s303 + $0x230] sm:$0xff]
      %v5821 = vld [vmem:[%s303 + $0x238] sm:$0xff]
      %v5822 = vld [vmem:[%s303 + $0x240] sm:$0xff]
      %v5823 = vld [vmem:[%s303 + $0x248] sm:$0xff]
      %v5824 = vld [vmem:[%s303 + $0x250] sm:$0xff]
      %v5825 = vld [vmem:[%s303 + $0x258] sm:$0xff]
      %v5826 = vld [vmem:[%s303 + $0x260] sm:$0xf]
      %v5827 = vld [vmem:[%s303 + $0x264] sm:$0xff]
      %v5828 = vld [vmem:[%s303 + $0x26c] sm:$0xff]
      %v5829 = vld [vmem:[%s303 + $0x274] sm:$0xff]
      %v5830 = vld [vmem:[%s303 + $0x27c] sm:$0xff]
      %v5831 = vld [vmem:[%s303 + $0x284] sm:$0xff]
      %v5832 = vld [vmem:[%s303 + $0x28c] sm:$0xff]
      %v5833 = vld [vmem:[%s303 + $0x294] sm:$0xff]
      %v5834 = vld [vmem:[%s303 + $0x29c] sm:$0xff]
      %v5835 = vld [vmem:[%s303 + $0x2a4] sm:$0xf]
      %v5836 = vld [vmem:[%s303 + $0x2a8] sm:$0xff]
      %v5837 = vld [vmem:[%s303 + $0x2b0] sm:$0xff]
      %v5838 = vld [vmem:[%s303 + $0x2b8] sm:$0xff]
      %v5839 = vld [vmem:[%s303 + $0x2c0] sm:$0xff]
      %v5840 = vld [vmem:[%s303 + $0x2c8] sm:$0xff]
      %v5841 = vld [vmem:[%s303 + $0x2d0] sm:$0xff]
      %v5842 = vld [vmem:[%s303 + $0x2d8] sm:$0xff]
      %v5843 = vld [vmem:[%s303 + $0x2e0] sm:$0xff]
      %v5844 = vld [vmem:[%s303 + $0x2e8] sm:$0xf]
      %v5845 = vld [vmem:[%s303 + $0x2ec] sm:$0xff]
      %v5846 = vld [vmem:[%s303 + $0x2f4] sm:$0xff]
      %v5847 = vld [vmem:[%s303 + $0x2fc] sm:$0xff]
      %v5848 = vld [vmem:[%s303 + $0x304] sm:$0xff]
      %v5849 = vld [vmem:[%s303 + $0x30c] sm:$0xff]
      %v5850 = vld [vmem:[%s303 + $0x314] sm:$0xff]
      %v5851 = vld [vmem:[%s303 + $0x31c] sm:$0xff]
      %v5852 = vld [vmem:[%s303 + $0x324] sm:$0xff]
      %v5853 = vld [vmem:[%s303 + $0x32c] sm:$0xf]
      %v5854 = vld [vmem:[%s303 + $0x330] sm:$0xff]
      %v5855 = vld [vmem:[%s303 + $0x338] sm:$0xff]
      %v5856 = vld [vmem:[%s303 + $0x340] sm:$0xff]
      %v5857 = vld [vmem:[%s303 + $0x348] sm:$0xff]
      %v5858 = vld [vmem:[%s303 + $0x350] sm:$0xff]
      %v5859 = vld [vmem:[%s303 + $0x358] sm:$0xff]
      %v5860 = vld [vmem:[%s303 + $0x360] sm:$0xff]
      %v5861 = vld [vmem:[%s303 + $0x368] sm:$0xff]
      %v5862 = vld [vmem:[%s303 + $0x370] sm:$0xf]
      %v5863 = vld [vmem:[%s303 + $0x374] sm:$0xff]
      %v5864 = vld [vmem:[%s303 + $0x37c] sm:$0xff]
      %v5865 = vld [vmem:[%s303 + $0x384] sm:$0xff]
      %v5866 = vld [vmem:[%s303 + $0x38c] sm:$0xff]
      %v5867 = vld [vmem:[%s303 + $0x394] sm:$0xff]
      %v5868 = vld [vmem:[%s303 + $0x39c] sm:$0xff]
      %v5869 = vld [vmem:[%s303 + $0x3a4] sm:$0xff]
      %v5870 = vld [vmem:[%s303 + $0x3ac] sm:$0xff]
      %v5871 = vld [vmem:[%s303 + $0x3b4] sm:$0xf]
      %v5872 = vld [vmem:[%s303 + $0x3b8] sm:$0xff]
      %v5873 = vld [vmem:[%s303 + $0x3c0] sm:$0xff]
      %v5874 = vld [vmem:[%s303 + $0x3c8] sm:$0xff]
      %v5875 = vld [vmem:[%s303 + $0x3d0] sm:$0xff]
      %v5876 = vld [vmem:[%s303 + $0x3d8] sm:$0xff]
      %v5877 = vld [vmem:[%s303 + $0x3e0] sm:$0xff]
      %v5878 = vld [vmem:[%s303 + $0x3e8] sm:$0xff]
      %v5879 = vld [vmem:[%s303 + $0x3f0] sm:$0xff]
      %v5880 = vld [vmem:[%s303 + $0x3f8] sm:$0xf]
      %v5881 = vld [vmem:[%s303 + $0x3fc] sm:$0xff]
      %v5882 = vld [vmem:[%s303 + $0x404] sm:$0xff]
      %v5883 = vld [vmem:[%s303 + $0x40c] sm:$0xff]
      %v5884 = vld [vmem:[%s303 + $0x414] sm:$0xff]
      %v5885 = vld [vmem:[%s303 + $0x41c] sm:$0xff]
      %v5886 = vld [vmem:[%s303 + $0x424] sm:$0xff]
      %v5887 = vld [vmem:[%s303 + $0x42c] sm:$0xff]
      %v5888 = vld [vmem:[%s303 + $0x434] sm:$0xff]
      %v5889 = vld [vmem:[%s303 + $0x43c] sm:$0xf]
      %v5890 = vld [vmem:[%s303 + $0x440] sm:$0xff]
      %v5891 = vld [vmem:[%s303 + $0x448] sm:$0xff]
      %v5892 = vld [vmem:[%s303 + $0x450] sm:$0xff]
      %v5893 = vld [vmem:[%s303 + $0x458] sm:$0xff]
      %v5894 = vld [vmem:[%s303 + $0x460] sm:$0xff]
      %v5895 = vld [vmem:[%s303 + $0x468] sm:$0xff]
      %v5896 = vld [vmem:[%s303 + $0x470] sm:$0xff]
      %v5897 = vld [vmem:[%s303 + $0x478] sm:$0xff]
      %v5898 = vld [vmem:[%s303 + $0x480] sm:$0xf]
      %v5899 = vld [vmem:[%s303 + $0x484] sm:$0xff]
      %v5900 = vld [vmem:[%s303 + $0x48c] sm:$0xff]
      %v5901 = vld [vmem:[%s303 + $0x494] sm:$0xff]
      %v5902 = vld [vmem:[%s303 + $0x49c] sm:$0xff]
      %v5903 = vld [vmem:[%s303 + $0x4a4] sm:$0xff]
      %v5904 = vld [vmem:[%s303 + $0x4ac] sm:$0xff]
      %v5905 = vld [vmem:[%s303 + $0x4b4] sm:$0xff]
      %v5906 = vld [vmem:[%s303 + $0x4bc] sm:$0xff]
      %v5907 = vld [vmem:[%s303 + $0x4c4] sm:$0xf]
      %v5908 = vld [vmem:[%s303 + $0x4c8] sm:$0xff]
      %v5909 = vld [vmem:[%s303 + $0x4d0] sm:$0xff]
      %v5910 = vld [vmem:[%s303 + $0x4d8] sm:$0xff]
      %v5911 = vld [vmem:[%s303 + $0x4e0] sm:$0xff]
      %v5912 = vld [vmem:[%s303 + $0x4e8] sm:$0xff]
      %v5913 = vld [vmem:[%s303 + $0x4f0] sm:$0xff]
      %v5914 = vld [vmem:[%s303 + $0x4f8] sm:$0xff]
      %v5915 = vld [vmem:[%s303 + $0x500] sm:$0xff]
      %v5916 = vld [vmem:[%s303 + $0x508] sm:$0xf]
      %v5917 = vld [vmem:[%s303 + $0x50c] sm:$0xff]
      %v5918 = vld [vmem:[%s303 + $0x514] sm:$0xff]
      %v5919 = vld [vmem:[%s303 + $0x51c] sm:$0xff]
      %v5920 = vld [vmem:[%s303 + $0x524] sm:$0xff]
      %v5921 = vld [vmem:[%s303 + $0x52c] sm:$0xff]
      %v5922 = vld [vmem:[%s303 + $0x534] sm:$0xff]
      %v5923 = vld [vmem:[%s303 + $0x53c] sm:$0xff]
      %v5924 = vld [vmem:[%s303 + $0x544] sm:$0xff]
      %v5925 = vld [vmem:[%s303 + $0x54c] sm:$0xf]
      %v5926 = vld [vmem:[%s303 + $0x550] sm:$0xff]
      %v5927 = vld [vmem:[%s303 + $0x558] sm:$0xff]
      %v5928 = vld [vmem:[%s303 + $0x560] sm:$0xff]
      %v5929 = vld [vmem:[%s303 + $0x568] sm:$0xff]
      %v5930 = vld [vmem:[%s303 + $0x570] sm:$0xff]
      %v5931 = vld [vmem:[%s303 + $0x578] sm:$0xff]
      %v5932 = vld [vmem:[%s303 + $0x580] sm:$0xff]
      %v5933 = vld [vmem:[%s303 + $0x588] sm:$0xff]
      %v5934 = vld [vmem:[%s303 + $0x590] sm:$0xf]
      %v5935 = vld [vmem:[%s303 + $0x594] sm:$0x33]
      %v5936 = vld [vmem:[%s303 + $0x59c] sm:$0x33]
      %v5937 = vld [vmem:[%s303 + $0x5a4] sm:$0x33]
      %v5938 = vld [vmem:[%s303 + $0x5ac] sm:$0x33]
      %v5939 = vld [vmem:[%s303 + $0x5b4] sm:$0x33]
      %v5940 = vld [vmem:[%s303 + $0x5bc] sm:$0x33]
      %v5941 = vld [vmem:[%s303 + $0x5c4] sm:$0x33]
      %v5942 = vld [vmem:[%s303 + $0x5cc] sm:$0x33]
      %v5943 = vld [vmem:[%s303 + $0x5d4] sm:$0x3]
      %v5944 = vpack.c.bf16 %v5489, %v5488
      %v5945 = vpack.c.bf16 %v5491, %v5490
      %v5946 = vpack.c.bf16 %v5493, %v5492
      %v5947 = vpack.c.bf16 %v5495, %v5494
      %v5948 = vpack.c.bf16 %v5497, %v5496
      %v5949 = vpack.c.bf16 %v5499, %v5498
      %v5950 = vpack.c.bf16 %v5501, %v5500
      %v5951 = vpack.c.bf16 %v5503, %v5502
      %v5952 = vpack.c.bf16 %v5505, %v5504
      %v5953 = vpack.c.bf16 %v5507, %v5506
      %v5954 = vpack.c.bf16 %v5509, %v5508
      %v5955 = vpack.c.bf16 %v5511, %v5510
      %v5956 = vpack.c.bf16 %v5513, %v5512
      %v5957 = vpack.c.bf16 %v5515, %v5514
      %v5958 = vpack.c.bf16 %v5517, %v5516
      %v5959 = vpack.c.bf16 %v5519, %v5518
      %v5960 = vpack.c.bf16 %v5521, %v5520
      %v5961 = vpack.c.bf16 %v5523, %v5522
      %v5962 = vpack.c.bf16 %v5525, %v5524
      %v5963 = vpack.c.bf16 %v5527, %v5526
      %v5964 = vpack.c.bf16 %v5529, %v5528
      %v5965 = vpack.c.bf16 %v5531, %v5530
      %v5966 = vpack.c.bf16 %v5533, %v5532
      %v5967 = vpack.c.bf16 %v5535, %v5534
      %v5968 = vpack.c.bf16 %v5537, %v5536
      %v5969 = vpack.c.bf16 %v5539, %v5538
      %v5970 = vpack.c.bf16 %v5541, %v5540
      %v5971 = vpack.c.bf16 %v5543, %v5542
      %v5972 = vpack.c.bf16 %v5545, %v5544
      %v5973 = vpack.c.bf16 %v5547, %v5546
      %v5974 = vpack.c.bf16 %v5549, %v5548
      %v5975 = vpack.c.bf16 %v5551, %v5550
      %v5976 = vpack.c.bf16 %v5553, %v5552
      %v5977 = vpack.c.bf16 %v5555, %v5554
      %v5978 = vpack.c.bf16 %v5557, %v5556
      %v5979 = vpack.c.bf16 %v5559, %v5558
      %v5980 = vpack.c.bf16 %v5561, %v5560
      %v5981 = vpack.c.bf16 %v5563, %v5562
      %v5982 = vpack.c.bf16 %v5565, %v5564
      %v5983 = vpack.c.bf16 %v5567, %v5566
      %v5984 = vpack.c.bf16 %v5569, %v5568
      %v5985 = vpack.c.bf16 %v5571, %v5570
      %v5986 = vpack.c.bf16 %v5573, %v5572
      %v5987 = vpack.c.bf16 %v5575, %v5574
      %v5988 = vpack.c.bf16 %v5577, %v5576
      %v5989 = vpack.c.bf16 %v5579, %v5578
      %v5990 = vpack.c.bf16 %v5581, %v5580
      %v5991 = vpack.c.bf16 %v5583, %v5582
      %v5992 = vpack.c.bf16 %v5585, %v5584
      %v5993 = vpack.c.bf16 %v5587, %v5586
      %v5994 = vpack.c.bf16 %v5589, %v5588
      %v5995 = vpack.c.bf16 %v5591, %v5590
      %v5996 = vpack.c.bf16 %v5593, %v5592
      %v5997 = vpack.c.bf16 %v5595, %v5594
      %v5998 = vpack.c.bf16 %v5597, %v5596
      %v5999 = vpack.c.bf16 %v5599, %v5598
      %v6000 = vpack.c.bf16 %v5601, %v5600
      %v6001 = vpack.c.bf16 %v5603, %v5602
      %v6002 = vpack.c.bf16 %v5605, %v5604
      %v6003 = vpack.c.bf16 %v5607, %v5606
      %v6004 = vpack.c.bf16 %v5609, %v5608
      %v6005 = vpack.c.bf16 %v5611, %v5610
      %v6006 = vpack.c.bf16 %v5613, %v5612
      %v6007 = vpack.c.bf16 %v5615, %v5614
      %v6008 = vpack.c.bf16 %v5617, %v5616
      %v6009 = vpack.c.bf16 %v5619, %v5618
      %v6010 = vpack.c.bf16 %v5621, %v5620
      %v6011 = vpack.c.bf16 %v5623, %v5622
      %v6012 = vpack.c.bf16 %v5625, %v5624
      %v6013 = vpack.c.bf16 %v5627, %v5626
      %v6014 = vpack.c.bf16 %v5629, %v5628
      %v6015 = vpack.c.bf16 %v5631, %v5630
      %v6016 = vpack.c.bf16 %v5633, %v5632
      %v6017 = vpack.c.bf16 %v5635, %v5634
      %v6018 = vpack.c.bf16 %v5637, %v5636
      %v6019 = vpack.c.bf16 %v5639, %v5638
      %v6020 = vpack.c.bf16 %v5641, %v5640
      %v6021 = vpack.c.bf16 %v5643, %v5642
      %v6022 = vpack.c.bf16 %v5645, %v5644
      %v6023 = vpack.c.bf16 %v5647, %v5646
      %v6024 = vpack.c.bf16 %v5649, %v5648
      %v6025 = vpack.c.bf16 %v5651, %v5650
      %v6026 = vpack.c.bf16 %v5653, %v5652
      %v6027 = vpack.c.bf16 %v5655, %v5654
      %v6028 = vpack.c.bf16 %v5657, %v5656
      %v6029 = vpack.c.bf16 %v5659, %v5658
      %v6030 = vpack.c.bf16 %v5661, %v5660
      %v6031 = vpack.c.bf16 %v5663, %v5662
      %v6032 = vpack.c.bf16 %v5665, %v5664
      %v6033 = vpack.c.bf16 %v5667, %v5666
      %v6034 = vpack.c.bf16 %v5669, %v5668
      %v6035 = vpack.c.bf16 %v5671, %v5670
      %v6036 = vpack.c.bf16 %v5673, %v5672
      %v6037 = vpack.c.bf16 %v5675, %v5674
      %v6038 = vpack.c.bf16 %v5677, %v5676
      %v6039 = vpack.c.bf16 %v5679, %v5678
      %v6040 = vpack.c.bf16 %v5681, %v5680
      %v6041 = vpack.c.bf16 %v5683, %v5682
      %v6042 = vpack.c.bf16 %v5685, %v5684
      %v6043 = vpack.c.bf16 %v5687, %v5686
      %v6044 = vpack.c.bf16 %v5689, %v5688
      %v6045 = vpack.c.bf16 %v5691, %v5690
      %v6046 = vpack.c.bf16 %v5693, %v5692
      %v6047 = vpack.c.bf16 %v5695, %v5694
      %v6048 = vpack.c.bf16 %v5697, %v5696
      %v6049 = vpack.c.bf16 %v5699, %v5698
      %v6050 = vpack.c.bf16 %v5701, %v5700
      %v6051 = vpack.c.bf16 %v5703, %v5702
      %v6052 = vpack.c.bf16 %v5705, %v5704
      %v6053 = vpack.c.bf16 %v5707, %v5706
      %v6054 = vpack.c.bf16 %v5709, %v5708
      %v6055 = vpack.c.bf16 %v5711, %v5710
      %v6056 = vpack.c.bf16 %v5713, %v5712
      %v6057 = vpack.c.bf16 %v5715, %v5714
      %v6058 = vpack.c.bf16 %v5717, %v5716
      %v6059 = vpack.c.bf16 %v5719, %v5718
      %v6060 = vpack.c.bf16 %v5721, %v5720
      %v6061 = vpack.c.bf16 %v5723, %v5722
      %v6062 = vpack.c.bf16 %v5725, %v5724
      %v6063 = vpack.c.bf16 %v5727, %v5726
      %v6064 = vpack.c.bf16 %v5729, %v5728
      %v6065 = vpack.c.bf16 %v5731, %v5730
      %v6066 = vpack.c.bf16 %v5733, %v5732
      %v6067 = vpack.c.bf16 %v5735, %v5734
      %v6068 = vpack.c.bf16 %v5737, %v5736
      %v6069 = vpack.c.bf16 %v5739, %v5738
      %v6070 = vpack.c.bf16 %v5741, %v5740
      %v6071 = vpack.c.bf16 %v5743, %v5742
      %v6072 = vpack.c.bf16 %v5745, %v5744
      %v6271 = vunpack.c.l.b16 %v5746
      %v6272 = vunpack.c.h.b16 %v5746
      %v6273 = vunpack.c.l.b16 %v5747
      %v6274 = vunpack.c.h.b16 %v5747
      %v6275 = vunpack.c.l.b16 %v5748
      %v6276 = vunpack.c.h.b16 %v5748
      %v6277 = vunpack.c.l.b16 %v5749
      %v6278 = vunpack.c.h.b16 %v5749
      %v6279 = vunpack.c.l.b16 %v5750
      %v6280 = vunpack.c.h.b16 %v5750
      %v6281 = vunpack.c.l.b16 %v5751
      %v6282 = vunpack.c.h.b16 %v5751
      %v6283 = vunpack.c.l.b16 %v5752
      %v6284 = vunpack.c.h.b16 %v5752
      %v6285 = vunpack.c.l.b16 %v5753
      %v6286 = vunpack.c.h.b16 %v5753
      %v6287 = vunpack.c.l.b16 %v5754
      %v6288 = vunpack.c.l.b16 %v5755
      %v6289 = vunpack.c.h.b16 %v5755
      %v6290 = vunpack.c.l.b16 %v5756
      %v6291 = vunpack.c.h.b16 %v5756
      %v6292 = vunpack.c.l.b16 %v5757
      %v6293 = vunpack.c.h.b16 %v5757
      %v6294 = vunpack.c.l.b16 %v5758
      %v6295 = vunpack.c.h.b16 %v5758
      %v6296 = vunpack.c.l.b16 %v5759
      %v6297 = vunpack.c.h.b16 %v5759
      %v6298 = vunpack.c.l.b16 %v5760
      %v6299 = vunpack.c.h.b16 %v5760
      %v6300 = vunpack.c.l.b16 %v5761
      %v6301 = vunpack.c.h.b16 %v5761
      %v6302 = vunpack.c.l.b16 %v5762
      %v6303 = vunpack.c.h.b16 %v5762
      %v6304 = vunpack.c.l.b16 %v5763
      %v6305 = vunpack.c.l.b16 %v5764
      %v6306 = vunpack.c.h.b16 %v5764
      %v6307 = vunpack.c.l.b16 %v5765
      %v6308 = vunpack.c.h.b16 %v5765
      %v6309 = vunpack.c.l.b16 %v5766
      %v6310 = vunpack.c.h.b16 %v5766
      %v6311 = vunpack.c.l.b16 %v5767
      %v6312 = vunpack.c.h.b16 %v5767
      %v6313 = vunpack.c.l.b16 %v5768
      %v6314 = vunpack.c.h.b16 %v5768
      %v6315 = vunpack.c.l.b16 %v5769
      %v6316 = vunpack.c.h.b16 %v5769
      %v6317 = vunpack.c.l.b16 %v5770
      %v6318 = vunpack.c.h.b16 %v5770
      %v6319 = vunpack.c.l.b16 %v5771
      %v6320 = vunpack.c.h.b16 %v5771
      %v6321 = vunpack.c.l.b16 %v5772
      %v6322 = vunpack.c.l.b16 %v5773
      %v6323 = vunpack.c.h.b16 %v5773
      %v6324 = vunpack.c.l.b16 %v5774
      %v6325 = vunpack.c.h.b16 %v5774
      %v6326 = vunpack.c.l.b16 %v5775
      %v6327 = vunpack.c.h.b16 %v5775
      %v6328 = vunpack.c.l.b16 %v5776
      %v6329 = vunpack.c.h.b16 %v5776
      %v6330 = vunpack.c.l.b16 %v5777
      %v6331 = vunpack.c.h.b16 %v5777
      %v6332 = vunpack.c.l.b16 %v5778
      %v6333 = vunpack.c.h.b16 %v5778
      %v6334 = vunpack.c.l.b16 %v5779
      %v6335 = vunpack.c.h.b16 %v5779
      %v6336 = vunpack.c.l.b16 %v5780
      %v6337 = vunpack.c.h.b16 %v5780
      %v6338 = vunpack.c.l.b16 %v5781
      %v6339 = vunpack.c.l.b16 %v5782
      %v6340 = vunpack.c.h.b16 %v5782
      %v6341 = vunpack.c.l.b16 %v5783
      %v6342 = vunpack.c.h.b16 %v5783
      %v6343 = vunpack.c.l.b16 %v5784
      %v6344 = vunpack.c.h.b16 %v5784
      %v6345 = vunpack.c.l.b16 %v5785
      %v6346 = vunpack.c.h.b16 %v5785
      %v6347 = vunpack.c.l.b16 %v5786
      %v6348 = vunpack.c.h.b16 %v5786
      %v6349 = vunpack.c.l.b16 %v5787
      %v6350 = vunpack.c.h.b16 %v5787
      %v6351 = vunpack.c.l.b16 %v5788
      %v6352 = vunpack.c.h.b16 %v5788
      %v6353 = vunpack.c.l.b16 %v5789
      %v6354 = vunpack.c.h.b16 %v5789
      %v6355 = vunpack.c.l.b16 %v5790
      %v6356 = vunpack.c.l.b16 %v5791
      %v6357 = vunpack.c.h.b16 %v5791
      %v6358 = vunpack.c.l.b16 %v5792
      %v6359 = vunpack.c.h.b16 %v5792
      %v6360 = vunpack.c.l.b16 %v5793
      %v6361 = vunpack.c.h.b16 %v5793
      %v6362 = vunpack.c.l.b16 %v5794
      %v6363 = vunpack.c.h.b16 %v5794
      %v6364 = vunpack.c.l.b16 %v5795
      %v6365 = vunpack.c.h.b16 %v5795
      %v6366 = vunpack.c.l.b16 %v5796
      %v6367 = vunpack.c.h.b16 %v5796
      %v6368 = vunpack.c.l.b16 %v5797
      %v6369 = vunpack.c.h.b16 %v5797
      %v6370 = vunpack.c.l.b16 %v5798
      %v6371 = vunpack.c.h.b16 %v5798
      %v6372 = vunpack.c.l.b16 %v5799
      %v6373 = vunpack.c.l.b16 %v5800
      %v6374 = vunpack.c.h.b16 %v5800
      %v6375 = vunpack.c.l.b16 %v5801
      %v6376 = vunpack.c.h.b16 %v5801
      %v6377 = vunpack.c.l.b16 %v5802
      %v6378 = vunpack.c.h.b16 %v5802
      %v6379 = vunpack.c.l.b16 %v5803
      %v6380 = vunpack.c.h.b16 %v5803
      %v6381 = vunpack.c.l.b16 %v5804
      %v6382 = vunpack.c.h.b16 %v5804
      %v6383 = vunpack.c.l.b16 %v5805
      %v6384 = vunpack.c.h.b16 %v5805
      %v6385 = vunpack.c.l.b16 %v5806
      %v6386 = vunpack.c.h.b16 %v5806
      %v6387 = vunpack.c.l.b16 %v5807
      %v6388 = vunpack.c.h.b16 %v5807
      %v6389 = vunpack.c.l.b16 %v5808
      %v6390 = vunpack.c.l.b16 %v5809
      %v6391 = vunpack.c.h.b16 %v5809
      %v6392 = vunpack.c.l.b16 %v5810
      %v6393 = vunpack.c.h.b16 %v5810
      %v6394 = vunpack.c.l.b16 %v5811
      %v6395 = vunpack.c.h.b16 %v5811
      %v6396 = vunpack.c.l.b16 %v5812
      %v6397 = vunpack.c.h.b16 %v5812
      %v6398 = vunpack.c.l.b16 %v5813
      %v6399 = vunpack.c.h.b16 %v5813
      %v6400 = vunpack.c.l.b16 %v5814
      %v6401 = vunpack.c.h.b16 %v5814
      %v6402 = vunpack.c.l.b16 %v5815
      %v6403 = vunpack.c.h.b16 %v5815
      %v6404 = vunpack.c.l.b16 %v5816
      %v6405 = vunpack.c.h.b16 %v5816
      %v6406 = vunpack.c.l.b16 %v5817
      %v6407 = vunpack.c.l.b16 %v5818
      %v6408 = vunpack.c.h.b16 %v5818
      %v6409 = vunpack.c.l.b16 %v5819
      %v6410 = vunpack.c.h.b16 %v5819
      %v6411 = vunpack.c.l.b16 %v5820
      %v6412 = vunpack.c.h.b16 %v5820
      %v6413 = vunpack.c.l.b16 %v5821
      %v6414 = vunpack.c.h.b16 %v5821
      %v6415 = vunpack.c.l.b16 %v5822
      %v6416 = vunpack.c.h.b16 %v5822
      %v6417 = vunpack.c.l.b16 %v5823
      %v6418 = vunpack.c.h.b16 %v5823
      %v6419 = vunpack.c.l.b16 %v5824
      %v6420 = vunpack.c.h.b16 %v5824
      %v6421 = vunpack.c.l.b16 %v5825
      %v6422 = vunpack.c.h.b16 %v5825
      %v6423 = vunpack.c.l.b16 %v5826
      %v6424 = vunpack.c.l.b16 %v5827
      %v6425 = vunpack.c.h.b16 %v5827
      %v6426 = vunpack.c.l.b16 %v5828
      %v6427 = vunpack.c.h.b16 %v5828
      %v6428 = vunpack.c.l.b16 %v5829
      %v6429 = vunpack.c.h.b16 %v5829
      %v6430 = vunpack.c.l.b16 %v5830
      %v6431 = vunpack.c.h.b16 %v5830
      %v6432 = vunpack.c.l.b16 %v5831
      %v6433 = vunpack.c.h.b16 %v5831
      %v6434 = vunpack.c.l.b16 %v5832
      %v6435 = vunpack.c.h.b16 %v5832
      %v6436 = vunpack.c.l.b16 %v5833
      %v6437 = vunpack.c.h.b16 %v5833
      %v6438 = vunpack.c.l.b16 %v5834
      %v6439 = vunpack.c.h.b16 %v5834
      %v6440 = vunpack.c.l.b16 %v5835
      %v6441 = vunpack.c.l.b16 %v5836
      %v6442 = vunpack.c.h.b16 %v5836
      %v6443 = vunpack.c.l.b16 %v5837
      %v6444 = vunpack.c.h.b16 %v5837
      %v6445 = vunpack.c.l.b16 %v5838
      %v6446 = vunpack.c.h.b16 %v5838
      %v6447 = vunpack.c.l.b16 %v5839
      %v6448 = vunpack.c.h.b16 %v5839
      %v6449 = vunpack.c.l.b16 %v5840
      %v6450 = vunpack.c.h.b16 %v5840
      %v6451 = vunpack.c.l.b16 %v5841
      %v6452 = vunpack.c.h.b16 %v5841
      %v6453 = vunpack.c.l.b16 %v5842
      %v6454 = vunpack.c.h.b16 %v5842
      %v6455 = vunpack.c.l.b16 %v5843
      %v6456 = vunpack.c.h.b16 %v5843
      %v6457 = vunpack.c.l.b16 %v5844
      %v6458 = vunpack.c.l.b16 %v5845
      %v6459 = vunpack.c.h.b16 %v5845
      %v6460 = vunpack.c.l.b16 %v5846
      %v6461 = vunpack.c.h.b16 %v5846
      %v6462 = vunpack.c.l.b16 %v5847
      %v6463 = vunpack.c.h.b16 %v5847
      %v6464 = vunpack.c.l.b16 %v5848
      %v6465 = vunpack.c.h.b16 %v5848
      %v6466 = vunpack.c.l.b16 %v5849
      %v6467 = vunpack.c.h.b16 %v5849
      %v6468 = vunpack.c.l.b16 %v5850
      %v6469 = vunpack.c.h.b16 %v5850
      %v6470 = vunpack.c.l.b16 %v5851
      %v6471 = vunpack.c.h.b16 %v5851
      %v6472 = vunpack.c.l.b16 %v5852
      %v6473 = vunpack.c.h.b16 %v5852
      %v6474 = vunpack.c.l.b16 %v5853
      %v6475 = vunpack.c.l.b16 %v5854
      %v6476 = vunpack.c.h.b16 %v5854
      %v6477 = vunpack.c.l.b16 %v5855
      %v6478 = vunpack.c.h.b16 %v5855
      %v6479 = vunpack.c.l.b16 %v5856
      %v6480 = vunpack.c.h.b16 %v5856
      %v6481 = vunpack.c.l.b16 %v5857
      %v6482 = vunpack.c.h.b16 %v5857
      %v6483 = vunpack.c.l.b16 %v5858
      %v6484 = vunpack.c.h.b16 %v5858
      %v6485 = vunpack.c.l.b16 %v5859
      %v6486 = vunpack.c.h.b16 %v5859
      %v6487 = vunpack.c.l.b16 %v5860
      %v6488 = vunpack.c.h.b16 %v5860
      %v6489 = vunpack.c.l.b16 %v5861
      %v6490 = vunpack.c.h.b16 %v5861
      %v6491 = vunpack.c.l.b16 %v5862
      %v6492 = vunpack.c.l.b16 %v5863
      %v6493 = vunpack.c.h.b16 %v5863
      %v6494 = vunpack.c.l.b16 %v5864
      %v6495 = vunpack.c.h.b16 %v5864
      %v6496 = vunpack.c.l.b16 %v5865
      %v6497 = vunpack.c.h.b16 %v5865
      %v6498 = vunpack.c.l.b16 %v5866
      %v6499 = vunpack.c.h.b16 %v5866
      %v6500 = vunpack.c.l.b16 %v5867
      %v6501 = vunpack.c.h.b16 %v5867
      %v6502 = vunpack.c.l.b16 %v5868
      %v6503 = vunpack.c.h.b16 %v5868
      %v6504 = vunpack.c.l.b16 %v5869
      %v6505 = vunpack.c.h.b16 %v5869
      %v6506 = vunpack.c.l.b16 %v5870
      %v6507 = vunpack.c.h.b16 %v5870
      %v6508 = vunpack.c.l.b16 %v5871
      %v6509 = vunpack.c.l.b16 %v5872
      %v6510 = vunpack.c.h.b16 %v5872
      %v6511 = vunpack.c.l.b16 %v5873
      %v6512 = vunpack.c.h.b16 %v5873
      %v6513 = vunpack.c.l.b16 %v5874
      %v6514 = vunpack.c.h.b16 %v5874
      %v6515 = vunpack.c.l.b16 %v5875
      %v6516 = vunpack.c.h.b16 %v5875
      %v6517 = vunpack.c.l.b16 %v5876
      %v6518 = vunpack.c.h.b16 %v5876
      %v6519 = vunpack.c.l.b16 %v5877
      %v6520 = vunpack.c.h.b16 %v5877
      %v6521 = vunpack.c.l.b16 %v5878
      %v6522 = vunpack.c.h.b16 %v5878
      %v6523 = vunpack.c.l.b16 %v5879
      %v6524 = vunpack.c.h.b16 %v5879
      %v6525 = vunpack.c.l.b16 %v5880
      %v6526 = vunpack.c.l.b16 %v5881
      %v6527 = vunpack.c.h.b16 %v5881
      %v6528 = vunpack.c.l.b16 %v5882
      %v6529 = vunpack.c.h.b16 %v5882
      %v6530 = vunpack.c.l.b16 %v5883
      %v6531 = vunpack.c.h.b16 %v5883
      %v6532 = vunpack.c.l.b16 %v5884
      %v6533 = vunpack.c.h.b16 %v5884
      %v6534 = vunpack.c.l.b16 %v5885
      %v6535 = vunpack.c.h.b16 %v5885
      %v6536 = vunpack.c.l.b16 %v5886
      %v6537 = vunpack.c.h.b16 %v5886
      %v6538 = vunpack.c.l.b16 %v5887
      %v6539 = vunpack.c.h.b16 %v5887
      %v6540 = vunpack.c.l.b16 %v5888
      %v6541 = vunpack.c.h.b16 %v5888
      %v6542 = vunpack.c.l.b16 %v5889
      %v6543 = vunpack.c.l.b16 %v5890
      %v6544 = vunpack.c.h.b16 %v5890
      %v6545 = vunpack.c.l.b16 %v5891
      %v6546 = vunpack.c.h.b16 %v5891
      %v6547 = vunpack.c.l.b16 %v5892
      %v6548 = vunpack.c.h.b16 %v5892
      %v6549 = vunpack.c.l.b16 %v5893
      %v6550 = vunpack.c.h.b16 %v5893
      %v6551 = vunpack.c.l.b16 %v5894
      %v6552 = vunpack.c.h.b16 %v5894
      %v6553 = vunpack.c.l.b16 %v5895
      %v6554 = vunpack.c.h.b16 %v5895
      %v6555 = vunpack.c.l.b16 %v5896
      %v6556 = vunpack.c.h.b16 %v5896
      %v6557 = vunpack.c.l.b16 %v5897
      %v6558 = vunpack.c.h.b16 %v5897
      %v6559 = vunpack.c.l.b16 %v5898
      %v6560 = vunpack.c.l.b16 %v5899
      %v6561 = vunpack.c.h.b16 %v5899
      %v6562 = vunpack.c.l.b16 %v5900
      %v6563 = vunpack.c.h.b16 %v5900
      %v6564 = vunpack.c.l.b16 %v5901
      %v6565 = vunpack.c.h.b16 %v5901
      %v6566 = vunpack.c.l.b16 %v5902
      %v6567 = vunpack.c.h.b16 %v5902
      %v6568 = vunpack.c.l.b16 %v5903
      %v6569 = vunpack.c.h.b16 %v5903
      %v6570 = vunpack.c.l.b16 %v5904
      %v6571 = vunpack.c.h.b16 %v5904
      %v6572 = vunpack.c.l.b16 %v5905
      %v6573 = vunpack.c.h.b16 %v5905
      %v6574 = vunpack.c.l.b16 %v5906
      %v6575 = vunpack.c.h.b16 %v5906
      %v6576 = vunpack.c.l.b16 %v5907
      %v6577 = vunpack.c.l.b16 %v5908
      %v6578 = vunpack.c.h.b16 %v5908
      %v6579 = vunpack.c.l.b16 %v5909
      %v6580 = vunpack.c.h.b16 %v5909
      %v6581 = vunpack.c.l.b16 %v5910
      %v6582 = vunpack.c.h.b16 %v5910
      %v6583 = vunpack.c.l.b16 %v5911
      %v6584 = vunpack.c.h.b16 %v5911
      %v6585 = vunpack.c.l.b16 %v5912
      %v6586 = vunpack.c.h.b16 %v5912
      %v6587 = vunpack.c.l.b16 %v5913
      %v6588 = vunpack.c.h.b16 %v5913
      %v6589 = vunpack.c.l.b16 %v5914
      %v6590 = vunpack.c.h.b16 %v5914
      %v6591 = vunpack.c.l.b16 %v5915
      %v6592 = vunpack.c.h.b16 %v5915
      %v6593 = vunpack.c.l.b16 %v5916
      %v6594 = vunpack.c.l.b16 %v5917
      %v6595 = vunpack.c.h.b16 %v5917
      %v6596 = vunpack.c.l.b16 %v5918
      %v6597 = vunpack.c.h.b16 %v5918
      %v6598 = vunpack.c.l.b16 %v5919
      %v6599 = vunpack.c.h.b16 %v5919
      %v6600 = vunpack.c.l.b16 %v5920
      %v6601 = vunpack.c.h.b16 %v5920
      %v6602 = vunpack.c.l.b16 %v5921
      %v6603 = vunpack.c.h.b16 %v5921
      %v6604 = vunpack.c.l.b16 %v5922
      %v6605 = vunpack.c.h.b16 %v5922
      %v6606 = vunpack.c.l.b16 %v5923
      %v6607 = vunpack.c.h.b16 %v5923
      %v6608 = vunpack.c.l.b16 %v5924
      %v6609 = vunpack.c.h.b16 %v5924
      %v6610 = vunpack.c.l.b16 %v5925
      %v6611 = vunpack.c.l.b16 %v5926
      %v6612 = vunpack.c.h.b16 %v5926
      %v6613 = vunpack.c.l.b16 %v5927
      %v6614 = vunpack.c.h.b16 %v5927
      %v6615 = vunpack.c.l.b16 %v5928
      %v6616 = vunpack.c.h.b16 %v5928
      %v6617 = vunpack.c.l.b16 %v5929
      %v6618 = vunpack.c.h.b16 %v5929
      %v6619 = vunpack.c.l.b16 %v5930
      %v6620 = vunpack.c.h.b16 %v5930
      %v6621 = vunpack.c.l.b16 %v5931
      %v6622 = vunpack.c.h.b16 %v5931
      %v6623 = vunpack.c.l.b16 %v5932
      %v6624 = vunpack.c.h.b16 %v5932
      %v6625 = vunpack.c.l.b16 %v5933
      %v6626 = vunpack.c.h.b16 %v5933
      %v6627 = vunpack.c.l.b16 %v5934
      %v6628 = vunpack.c.l.b16 %v5935
      %v6629 = vunpack.c.h.b16 %v5935
      %v6630 = vunpack.c.l.b16 %v5936
      %v6631 = vunpack.c.h.b16 %v5936
      %v6632 = vunpack.c.l.b16 %v5937
      %v6633 = vunpack.c.h.b16 %v5937
      %v6634 = vunpack.c.l.b16 %v5938
      %v6635 = vunpack.c.h.b16 %v5938
      %v6636 = vunpack.c.l.b16 %v5939
      %v6637 = vunpack.c.h.b16 %v5939
      %v6638 = vunpack.c.l.b16 %v5940
      %v6639 = vunpack.c.h.b16 %v5940
      %v6640 = vunpack.c.l.b16 %v5941
      %v6641 = vunpack.c.h.b16 %v5941
      %v6642 = vunpack.c.l.b16 %v5942
      %v6643 = vunpack.c.h.b16 %v5942
      %v6644 = vunpack.c.l.b16 %v5943
      %v6645 = vpack.c.b16 %v6288, %v6271
      %v6646 = vpack.c.b16 %v6289, %v6272
      %v6647 = vpack.c.b16 %v6290, %v6273
      %v6648 = vpack.c.b16 %v6291, %v6274
      %v6649 = vpack.c.b16 %v6292, %v6275
      %v6650 = vpack.c.b16 %v6293, %v6276
      %v6651 = vpack.c.b16 %v6294, %v6277
      %v6652 = vpack.c.b16 %v6295, %v6278
      %v6653 = vpack.c.b16 %v6296, %v6279
      %v6654 = vpack.c.b16 %v6297, %v6280
      %v6655 = vpack.c.b16 %v6298, %v6281
      %v6656 = vpack.c.b16 %v6299, %v6282
      %v6657 = vpack.c.b16 %v6300, %v6283
      %v6658 = vpack.c.b16 %v6301, %v6284
      %v6659 = vpack.c.b16 %v6302, %v6285
      %v6660 = vpack.c.b16 %v6303, %v6286
      %v6661 = vpack.c.b16 %v6304, %v6287
      %v6662 = vpack.c.b16 %v6322, %v6305
      %v6663 = vpack.c.b16 %v6323, %v6306
      %v6664 = vpack.c.b16 %v6324, %v6307
      %v6665 = vpack.c.b16 %v6325, %v6308
      %v6666 = vpack.c.b16 %v6326, %v6309
      %v6667 = vpack.c.b16 %v6327, %v6310
      %v6668 = vpack.c.b16 %v6328, %v6311
      %v6669 = vpack.c.b16 %v6329, %v6312
      %v6670 = vpack.c.b16 %v6330, %v6313
      %v6671 = vpack.c.b16 %v6331, %v6314
      %v6672 = vpack.c.b16 %v6332, %v6315
      %v6673 = vpack.c.b16 %v6333, %v6316
      %v6674 = vpack.c.b16 %v6334, %v6317
      %v6675 = vpack.c.b16 %v6335, %v6318
      %v6676 = vpack.c.b16 %v6336, %v6319
      %v6677 = vpack.c.b16 %v6337, %v6320
      %v6678 = vpack.c.b16 %v6338, %v6321
      %v6679 = vpack.c.b16 %v6356, %v6339
      %v6680 = vpack.c.b16 %v6357, %v6340
      %v6681 = vpack.c.b16 %v6358, %v6341
      %v6682 = vpack.c.b16 %v6359, %v6342
      %v6683 = vpack.c.b16 %v6360, %v6343
      %v6684 = vpack.c.b16 %v6361, %v6344
      %v6685 = vpack.c.b16 %v6362, %v6345
      %v6686 = vpack.c.b16 %v6363, %v6346
      %v6687 = vpack.c.b16 %v6364, %v6347
      %v6688 = vpack.c.b16 %v6365, %v6348
      %v6689 = vpack.c.b16 %v6366, %v6349
      %v6690 = vpack.c.b16 %v6367, %v6350
      %v6691 = vpack.c.b16 %v6368, %v6351
      %v6692 = vpack.c.b16 %v6369, %v6352
      %v6693 = vpack.c.b16 %v6370, %v6353
      %v6694 = vpack.c.b16 %v6371, %v6354
      %v6695 = vpack.c.b16 %v6372, %v6355
      %v6696 = vpack.c.b16 %v6390, %v6373
      %v6697 = vpack.c.b16 %v6391, %v6374
      %v6698 = vpack.c.b16 %v6392, %v6375
      %v6699 = vpack.c.b16 %v6393, %v6376
      %v6700 = vpack.c.b16 %v6394, %v6377
      %v6701 = vpack.c.b16 %v6395, %v6378
      %v6702 = vpack.c.b16 %v6396, %v6379
      %v6703 = vpack.c.b16 %v6397, %v6380
      %v6704 = vpack.c.b16 %v6398, %v6381
      %v6705 = vpack.c.b16 %v6399, %v6382
      %v6706 = vpack.c.b16 %v6400, %v6383
      %v6707 = vpack.c.b16 %v6401, %v6384
      %v6708 = vpack.c.b16 %v6402, %v6385
      %v6709 = vpack.c.b16 %v6403, %v6386
      %v6710 = vpack.c.b16 %v6404, %v6387
      %v6711 = vpack.c.b16 %v6405, %v6388
      %v6712 = vpack.c.b16 %v6406, %v6389
      %v6713 = vpack.c.b16 %v6424, %v6407
      %v6714 = vpack.c.b16 %v6425, %v6408
      %v6715 = vpack.c.b16 %v6426, %v6409
      %v6716 = vpack.c.b16 %v6427, %v6410
      %v6717 = vpack.c.b16 %v6428, %v6411
      %v6718 = vpack.c.b16 %v6429, %v6412
      %v6719 = vpack.c.b16 %v6430, %v6413
      %v6720 = vpack.c.b16 %v6431, %v6414
      %v6721 = vpack.c.b16 %v6432, %v6415
      %v6722 = vpack.c.b16 %v6433, %v6416
      %v6723 = vpack.c.b16 %v6434, %v6417
      %v6724 = vpack.c.b16 %v6435, %v6418
      %v6725 = vpack.c.b16 %v6436, %v6419
      %v6726 = vpack.c.b16 %v6437, %v6420
      %v6727 = vpack.c.b16 %v6438, %v6421
      %v6728 = vpack.c.b16 %v6439, %v6422
      %v6729 = vpack.c.b16 %v6440, %v6423
      %v6730 = vpack.c.b16 %v6458, %v6441
      %v6731 = vpack.c.b16 %v6459, %v6442
      %v6732 = vpack.c.b16 %v6460, %v6443
      %v6733 = vpack.c.b16 %v6461, %v6444
      %v6734 = vpack.c.b16 %v6462, %v6445
      %v6735 = vpack.c.b16 %v6463, %v6446
      %v6736 = vpack.c.b16 %v6464, %v6447
      %v6737 = vpack.c.b16 %v6465, %v6448
      %v6738 = vpack.c.b16 %v6466, %v6449
      %v6739 = vpack.c.b16 %v6467, %v6450
      %v6740 = vpack.c.b16 %v6468, %v6451
      %v6741 = vpack.c.b16 %v6469, %v6452
      %v6742 = vpack.c.b16 %v6470, %v6453
      %v6743 = vpack.c.b16 %v6471, %v6454
      %v6744 = vpack.c.b16 %v6472, %v6455
      %v6745 = vpack.c.b16 %v6473, %v6456
      %v6746 = vpack.c.b16 %v6474, %v6457
      %v6747 = vpack.c.b16 %v6492, %v6475
      %v6748 = vpack.c.b16 %v6493, %v6476
      %v6749 = vpack.c.b16 %v6494, %v6477
      %v6750 = vpack.c.b16 %v6495, %v6478
      %v6751 = vpack.c.b16 %v6496, %v6479
      %v6752 = vpack.c.b16 %v6497, %v6480
      %v6753 = vpack.c.b16 %v6498, %v6481
      %v6754 = vpack.c.b16 %v6499, %v6482
      %v6755 = vpack.c.b16 %v6500, %v6483
      %v6756 = vpack.c.b16 %v6501, %v6484
      %v6757 = vpack.c.b16 %v6502, %v6485
      %v6758 = vpack.c.b16 %v6503, %v6486
      %v6759 = vpack.c.b16 %v6504, %v6487
      %v6760 = vpack.c.b16 %v6505, %v6488
      %v6761 = vpack.c.b16 %v6506, %v6489
      %v6762 = vpack.c.b16 %v6507, %v6490
      %v6763 = vpack.c.b16 %v6508, %v6491
      %v6764 = vpack.c.b16 %v6526, %v6509
      %v6765 = vpack.c.b16 %v6527, %v6510
      %v6766 = vpack.c.b16 %v6528, %v6511
      %v6767 = vpack.c.b16 %v6529, %v6512
      %v6768 = vpack.c.b16 %v6530, %v6513
      %v6769 = vpack.c.b16 %v6531, %v6514
      %v6770 = vpack.c.b16 %v6532, %v6515
      %v6771 = vpack.c.b16 %v6533, %v6516
      %v6772 = vpack.c.b16 %v6534, %v6517
      %v6773 = vpack.c.b16 %v6535, %v6518
      %v6774 = vpack.c.b16 %v6536, %v6519
      %v6775 = vpack.c.b16 %v6537, %v6520
      %v6776 = vpack.c.b16 %v6538, %v6521
      %v6777 = vpack.c.b16 %v6539, %v6522
      %v6778 = vpack.c.b16 %v6540, %v6523
      %v6779 = vpack.c.b16 %v6541, %v6524
      %v6780 = vpack.c.b16 %v6542, %v6525
      %v6781 = vpack.c.b16 %v6560, %v6543
      %v6782 = vpack.c.b16 %v6561, %v6544
      %v6783 = vpack.c.b16 %v6562, %v6545
      %v6784 = vpack.c.b16 %v6563, %v6546
      %v6785 = vpack.c.b16 %v6564, %v6547
      %v6786 = vpack.c.b16 %v6565, %v6548
      %v6787 = vpack.c.b16 %v6566, %v6549
      %v6788 = vpack.c.b16 %v6567, %v6550
      %v6789 = vpack.c.b16 %v6568, %v6551
      %v6790 = vpack.c.b16 %v6569, %v6552
      %v6791 = vpack.c.b16 %v6570, %v6553
      %v6792 = vpack.c.b16 %v6571, %v6554
      %v6793 = vpack.c.b16 %v6572, %v6555
      %v6794 = vpack.c.b16 %v6573, %v6556
      %v6795 = vpack.c.b16 %v6574, %v6557
      %v6796 = vpack.c.b16 %v6575, %v6558
      %v6797 = vpack.c.b16 %v6576, %v6559
      %v6798 = vpack.c.b16 %v6594, %v6577
      %v6799 = vpack.c.b16 %v6595, %v6578
      %v6800 = vpack.c.b16 %v6596, %v6579
      %v6801 = vpack.c.b16 %v6597, %v6580
      %v6802 = vpack.c.b16 %v6598, %v6581
      %v6803 = vpack.c.b16 %v6599, %v6582
      %v6804 = vpack.c.b16 %v6600, %v6583
      %v6805 = vpack.c.b16 %v6601, %v6584
      %v6806 = vpack.c.b16 %v6602, %v6585
      %v6807 = vpack.c.b16 %v6603, %v6586
      %v6808 = vpack.c.b16 %v6604, %v6587
      %v6809 = vpack.c.b16 %v6605, %v6588
      %v6810 = vpack.c.b16 %v6606, %v6589
      %v6811 = vpack.c.b16 %v6607, %v6590
      %v6812 = vpack.c.b16 %v6608, %v6591
      %v6813 = vpack.c.b16 %v6609, %v6592
      %v6814 = vpack.c.b16 %v6610, %v6593
      %v6815 = vpack.c.b16 %v6628, %v6611
      %v6816 = vpack.c.b16 %v6629, %v6612
      %v6817 = vpack.c.b16 %v6630, %v6613
      %v6818 = vpack.c.b16 %v6631, %v6614
      %v6819 = vpack.c.b16 %v6632, %v6615
      %v6820 = vpack.c.b16 %v6633, %v6616
      %v6821 = vpack.c.b16 %v6634, %v6617
      %v6822 = vpack.c.b16 %v6635, %v6618
      %v6823 = vpack.c.b16 %v6636, %v6619
      %v6824 = vpack.c.b16 %v6637, %v6620
      %v6825 = vpack.c.b16 %v6638, %v6621
      %v6826 = vpack.c.b16 %v6639, %v6622
      %v6827 = vpack.c.b16 %v6640, %v6623
      %v6828 = vpack.c.b16 %v6641, %v6624
      %v6829 = vpack.c.b16 %v6642, %v6625
      %v6830 = vpack.c.b16 %v6643, %v6626
      %v6831 = vpack.c.b16 %v6644, %v6627
      %vm7008 = vcmask 130048
      %v7010 = vsel %vm7008, %v6661, 0
      %v7013 = vsel %vm7008, %v6678, 0
      %v7016 = vsel %vm7008, %v6695, 0
      %v7019 = vsel %vm7008, %v6712, 0
      %v7022 = vsel %vm7008, %v6729, 0
      %v7025 = vsel %vm7008, %v6746, 0
      %v7028 = vsel %vm7008, %v6763, 0
      %v7031 = vsel %vm7008, %v6780, 0
      %v7034 = vsel %vm7008, %v6797, 0
      %v7037 = vsel %vm7008, %v6814, 0
      %v7040 = vsel %vm7008, %v6831, 0
      %7042 = vmatprep.subr.bf16.mxu0 0
      %7043 = vmatpush1.bf16.msra.mxu0 %v5951
      %7044 = vmatprep.subr.bf16.mxu0 0
      %7045 = vmatpush1.bf16.msra.mxu0 %v5950
      %7046 = vmatprep.subr.bf16.mxu0 0
      %7047 = vmatpush1.bf16.msra.mxu0 %v5949
      %7048 = vmatprep.subr.bf16.mxu0 0
      %7049 = vmatpush1.bf16.msra.mxu0 %v5948
      %7050 = vmatprep.subr.bf16.mxu0 0
      %7051 = vmatpush1.bf16.msra.mxu0 %v5947
      %7052 = vmatprep.subr.bf16.mxu0 0
      %7053 = vmatpush1.bf16.msra.mxu0 %v5946
      %7054 = vmatprep.subr.bf16.mxu0 0
      %7055 = vmatpush1.bf16.msra.mxu0 %v5945
      %7056 = vmatprep.subr.bf16.mxu0 0
      %7057 = vmatpush1.bf16.msra.mxu0 %v5944
      %7058 = vmatprep.subr.bf16.mxu0 0
      %7059 = vmatpush2.bf16.msra.mxu0 %v5959
      %7060 = vmatprep.subr.bf16.mxu0 0
      %7061 = vmatpush2.bf16.msra.mxu0 %v5958
      %7062 = vmatprep.subr.bf16.mxu0 0
      %7063 = vmatpush2.bf16.msra.mxu0 %v5957
      %7064 = vmatprep.subr.bf16.mxu0 0
      %7065 = vmatpush2.bf16.msra.mxu0 %v5956
      %7066 = vmatprep.subr.bf16.mxu0 0
      %7067 = vmatpush2.bf16.msra.mxu0 %v5955
      %7068 = vmatprep.subr.bf16.mxu0 0
      %7069 = vmatpush2.bf16.msra.mxu0 %v5954
      %7070 = vmatprep.subr.bf16.mxu0 0
      %7071 = vmatpush2.bf16.msra.mxu0 %v5953
      %7072 = vmatprep.subr.bf16.mxu0 0
      %7073 = vmatpush2.bf16.msra.mxu0 %v5952
      %7074 = vmatprep.mubr.bf16.mxu0 %v6646
      %7075 = vmatmul.mubr.bf16.gmra.mxu0 %v6645
      %v7076 = vpop.f32.mrf.mxu0
      %v7077 = vadd.f32 0.0, %v7076
      %v7078 = vpop.f32.mrf.mxu0
      %v7079 = vpop.f32.mrf.mxu0
      %v7080 = vadd.f32 0.0, %v7079
      %v7081 = vpop.f32.mrf.mxu0
      %7082 = vmatprep.mubr.bf16.mxu0 %v6663
      %7083 = vmatmul.mubr.bf16.gmra.mxu0 %v6662
      %v7084 = vpop.f32.mrf.mxu0
      %v7085 = vadd.f32 0.0, %v7084
      %v7086 = vpop.f32.mrf.mxu0
      %v7087 = vpop.f32.mrf.mxu0
      %v7088 = vadd.f32 0.0, %v7087
      %v7089 = vpop.f32.mrf.mxu0
      %7090 = vmatprep.mubr.bf16.mxu0 %v6680
      %7091 = vmatmul.mubr.bf16.gmra.mxu0 %v6679
      %v7092 = vpop.f32.mrf.mxu0
      %v7093 = vadd.f32 0.0, %v7092
      %v7094 = vpop.f32.mrf.mxu0
      %v7095 = vpop.f32.mrf.mxu0
      %v7096 = vadd.f32 0.0, %v7095
      %v7097 = vpop.f32.mrf.mxu0
      %7098 = vmatprep.mubr.bf16.mxu0 %v6697
      %7099 = vmatmul.mubr.bf16.gmra.mxu0 %v6696
      %v7100 = vpop.f32.mrf.mxu0
      %v7101 = vadd.f32 0.0, %v7100
      %v7102 = vpop.f32.mrf.mxu0
      %v7103 = vpop.f32.mrf.mxu0
      %v7104 = vadd.f32 0.0, %v7103
      %v7105 = vpop.f32.mrf.mxu0
      %7106 = vmatprep.mubr.bf16.mxu0 %v6714
      %7107 = vmatmul.mubr.bf16.gmra.mxu0 %v6713
      %v7108 = vpop.f32.mrf.mxu0
      %v7109 = vadd.f32 0.0, %v7108
      %v7110 = vpop.f32.mrf.mxu0
      %v7111 = vpop.f32.mrf.mxu0
      %v7112 = vadd.f32 0.0, %v7111
      %v7113 = vpop.f32.mrf.mxu0
      %7114 = vmatprep.mubr.bf16.mxu0 %v6731
      %7115 = vmatmul.mubr.bf16.gmra.mxu0 %v6730
      %v7116 = vpop.f32.mrf.mxu0
      %v7117 = vadd.f32 0.0, %v7116
      %v7118 = vpop.f32.mrf.mxu0
      %v7119 = vpop.f32.mrf.mxu0
      %v7120 = vadd.f32 0.0, %v7119
      %v7121 = vpop.f32.mrf.mxu0
      %7122 = vmatprep.mubr.bf16.mxu0 %v6748
      %7123 = vmatmul.mubr.bf16.gmra.mxu0 %v6747
      %v7124 = vpop.f32.mrf.mxu0
      %v7125 = vadd.f32 0.0, %v7124
      %v7126 = vpop.f32.mrf.mxu0
      %v7127 = vpop.f32.mrf.mxu0
      %v7128 = vadd.f32 0.0, %v7127
      %v7129 = vpop.f32.mrf.mxu0
      %7130 = vmatprep.mubr.bf16.mxu0 %v6765
      %7131 = vmatmul.mubr.bf16.gmra.mxu0 %v6764
      %v7132 = vpop.f32.mrf.mxu0
      %v7133 = vadd.f32 0.0, %v7132
      %v7134 = vpop.f32.mrf.mxu0
      %v7135 = vpop.f32.mrf.mxu0
      %v7136 = vadd.f32 0.0, %v7135
      %v7137 = vpop.f32.mrf.mxu0
      %7138 = vmatprep.mubr.bf16.mxu0 %v6782
      %7139 = vmatmul.mubr.bf16.gmra.mxu0 %v6781
      %v7140 = vpop.f32.mrf.mxu0
      %v7141 = vadd.f32 0.0, %v7140
      %v7142 = vpop.f32.mrf.mxu0
      %v7143 = vpop.f32.mrf.mxu0
      %v7144 = vadd.f32 0.0, %v7143
      %v7145 = vpop.f32.mrf.mxu0
      %7146 = vmatprep.mubr.bf16.mxu0 %v6799
      %7147 = vmatmul.mubr.bf16.gmra.mxu0 %v6798
      %v7148 = vpop.f32.mrf.mxu0
      %v7149 = vadd.f32 0.0, %v7148
      %v7150 = vpop.f32.mrf.mxu0
      %v7151 = vpop.f32.mrf.mxu0
      %v7152 = vadd.f32 0.0, %v7151
      %v7153 = vpop.f32.mrf.mxu0
      %7154 = vmatprep.mubr.bf16.mxu0 %v6816
      %7155 = vmatmul.mubr.bf16.gmra.mxu0 %v6815
      %v7156 = vpop.f32.mrf.mxu0
      %v7157 = vadd.f32 0.0, %v7156
      %v7158 = vpop.f32.mrf.mxu0
      %v7159 = vpop.f32.mrf.mxu0
      %v7160 = vadd.f32 0.0, %v7159
      %v7161 = vpop.f32.mrf.mxu0
      %7162 = vdwg.mxu0
      %7163 = vmatprep.subr.bf16.mxu0 0
      %7164 = vmatpush1.bf16.msra.mxu0 %v5967
      %7165 = vmatprep.subr.bf16.mxu0 0
      %7166 = vmatpush1.bf16.msra.mxu0 %v5966
      %7167 = vmatprep.subr.bf16.mxu0 0
      %7168 = vmatpush1.bf16.msra.mxu0 %v5965
      %7169 = vmatprep.subr.bf16.mxu0 0
      %7170 = vmatpush1.bf16.msra.mxu0 %v5964
      %7171 = vmatprep.subr.bf16.mxu0 0
      %7172 = vmatpush1.bf16.msra.mxu0 %v5963
      %7173 = vmatprep.subr.bf16.mxu0 0
      %7174 = vmatpush1.bf16.msra.mxu0 %v5962
      %7175 = vmatprep.subr.bf16.mxu0 0
      %7176 = vmatpush1.bf16.msra.mxu0 %v5961
      %7177 = vmatprep.subr.bf16.mxu0 0
      %7178 = vmatpush1.bf16.msra.mxu0 %v5960
      %7179 = vmatprep.subr.bf16.mxu0 0
      %7180 = vmatpush2.bf16.msra.mxu0 %v5975
      %7181 = vmatprep.subr.bf16.mxu0 0
      %7182 = vmatpush2.bf16.msra.mxu0 %v5974
      %7183 = vmatprep.subr.bf16.mxu0 0
      %7184 = vmatpush2.bf16.msra.mxu0 %v5973
      %7185 = vmatprep.subr.bf16.mxu0 0
      %7186 = vmatpush2.bf16.msra.mxu0 %v5972
      %7187 = vmatprep.subr.bf16.mxu0 0
      %7188 = vmatpush2.bf16.msra.mxu0 %v5971
      %7189 = vmatprep.subr.bf16.mxu0 0
      %7190 = vmatpush2.bf16.msra.mxu0 %v5970
      %7191 = vmatprep.subr.bf16.mxu0 0
      %7192 = vmatpush2.bf16.msra.mxu0 %v5969
      %7193 = vmatprep.subr.bf16.mxu0 0
      %7194 = vmatpush2.bf16.msra.mxu0 %v5968
      %7195 = vmatprep.mubr.bf16.mxu0 %v6648
      %7196 = vmatmul.mubr.bf16.gmra.mxu0 %v6647
      %v7197 = vpop.f32.mrf.mxu0
      %v7198 = vadd.f32 %v7077, %v7197
      %v7199 = vpop.f32.mrf.mxu0
      %v7200 = vpop.f32.mrf.mxu0
      %v7201 = vadd.f32 %v7080, %v7200
      %v7202 = vpop.f32.mrf.mxu0
      %7203 = vmatprep.mubr.bf16.mxu0 %v6665
      %7204 = vmatmul.mubr.bf16.gmra.mxu0 %v6664
      %v7205 = vpop.f32.mrf.mxu0
      %v7206 = vadd.f32 %v7085, %v7205
      %v7207 = vpop.f32.mrf.mxu0
      %v7208 = vpop.f32.mrf.mxu0
      %v7209 = vadd.f32 %v7088, %v7208
      %v7210 = vpop.f32.mrf.mxu0
      %7211 = vmatprep.mubr.bf16.mxu0 %v6682
      %7212 = vmatmul.mubr.bf16.gmra.mxu0 %v6681
      %v7213 = vpop.f32.mrf.mxu0
      %v7214 = vadd.f32 %v7093, %v7213
      %v7215 = vpop.f32.mrf.mxu0
      %v7216 = vpop.f32.mrf.mxu0
      %v7217 = vadd.f32 %v7096, %v7216
      %v7218 = vpop.f32.mrf.mxu0
      %7219 = vmatprep.mubr.bf16.mxu0 %v6699
      %7220 = vmatmul.mubr.bf16.gmra.mxu0 %v6698
      %v7221 = vpop.f32.mrf.mxu0
      %v7222 = vadd.f32 %v7101, %v7221
      %v7223 = vpop.f32.mrf.mxu0
      %v7224 = vpop.f32.mrf.mxu0
      %v7225 = vadd.f32 %v7104, %v7224
      %v7226 = vpop.f32.mrf.mxu0
      %7227 = vmatprep.mubr.bf16.mxu0 %v6716
      %7228 = vmatmul.mubr.bf16.gmra.mxu0 %v6715
      %v7229 = vpop.f32.mrf.mxu0
      %v7230 = vadd.f32 %v7109, %v7229
      %v7231 = vpop.f32.mrf.mxu0
      %v7232 = vpop.f32.mrf.mxu0
      %v7233 = vadd.f32 %v7112, %v7232
      %v7234 = vpop.f32.mrf.mxu0
      %7235 = vmatprep.mubr.bf16.mxu0 %v6733
      %7236 = vmatmul.mubr.bf16.gmra.mxu0 %v6732
      %v7237 = vpop.f32.mrf.mxu0
      %v7238 = vadd.f32 %v7117, %v7237
      %v7239 = vpop.f32.mrf.mxu0
      %v7240 = vpop.f32.mrf.mxu0
      %v7241 = vadd.f32 %v7120, %v7240
      %v7242 = vpop.f32.mrf.mxu0
      %7243 = vmatprep.mubr.bf16.mxu0 %v6750
      %7244 = vmatmul.mubr.bf16.gmra.mxu0 %v6749
      %v7245 = vpop.f32.mrf.mxu0
      %v7246 = vadd.f32 %v7125, %v7245
      %v7247 = vpop.f32.mrf.mxu0
      %v7248 = vpop.f32.mrf.mxu0
      %v7249 = vadd.f32 %v7128, %v7248
      %v7250 = vpop.f32.mrf.mxu0
      %7251 = vmatprep.mubr.bf16.mxu0 %v6767
      %7252 = vmatmul.mubr.bf16.gmra.mxu0 %v6766
      %v7253 = vpop.f32.mrf.mxu0
      %v7254 = vadd.f32 %v7133, %v7253
      %v7255 = vpop.f32.mrf.mxu0
      %v7256 = vpop.f32.mrf.mxu0
      %v7257 = vadd.f32 %v7136, %v7256
      %v7258 = vpop.f32.mrf.mxu0
      %7259 = vmatprep.mubr.bf16.mxu0 %v6784
      %7260 = vmatmul.mubr.bf16.gmra.mxu0 %v6783
      %v7261 = vpop.f32.mrf.mxu0
      %v7262 = vadd.f32 %v7141, %v7261
      %v7263 = vpop.f32.mrf.mxu0
      %v7264 = vpop.f32.mrf.mxu0
      %v7265 = vadd.f32 %v7144, %v7264
      %v7266 = vpop.f32.mrf.mxu0
      %7267 = vmatprep.mubr.bf16.mxu0 %v6801
      %7268 = vmatmul.mubr.bf16.gmra.mxu0 %v6800
      %v7269 = vpop.f32.mrf.mxu0
      %v7270 = vadd.f32 %v7149, %v7269
      %v7271 = vpop.f32.mrf.mxu0
      %v7272 = vpop.f32.mrf.mxu0
      %v7273 = vadd.f32 %v7152, %v7272
      %v7274 = vpop.f32.mrf.mxu0
      %7275 = vmatprep.mubr.bf16.mxu0 %v6818
      %7276 = vmatmul.mubr.bf16.gmra.mxu0 %v6817
      %v7277 = vpop.f32.mrf.mxu0
      %v7278 = vadd.f32 %v7157, %v7277
      %v7279 = vpop.f32.mrf.mxu0
      %v7280 = vpop.f32.mrf.mxu0
      %v7281 = vadd.f32 %v7160, %v7280
      %v7282 = vpop.f32.mrf.mxu0
      %7283 = vdwg.mxu0
      %7284 = vmatprep.subr.bf16.mxu0 0
      %7285 = vmatpush1.bf16.msra.mxu0 %v5983
      %7286 = vmatprep.subr.bf16.mxu0 0
      %7287 = vmatpush1.bf16.msra.mxu0 %v5982
      %7288 = vmatprep.subr.bf16.mxu0 0
      %7289 = vmatpush1.bf16.msra.mxu0 %v5981
      %7290 = vmatprep.subr.bf16.mxu0 0
      %7291 = vmatpush1.bf16.msra.mxu0 %v5980
      %7292 = vmatprep.subr.bf16.mxu0 0
      %7293 = vmatpush1.bf16.msra.mxu0 %v5979
      %7294 = vmatprep.subr.bf16.mxu0 0
      %7295 = vmatpush1.bf16.msra.mxu0 %v5978
      %7296 = vmatprep.subr.bf16.mxu0 0
      %7297 = vmatpush1.bf16.msra.mxu0 %v5977
      %7298 = vmatprep.subr.bf16.mxu0 0
      %7299 = vmatpush1.bf16.msra.mxu0 %v5976
      %7300 = vmatprep.subr.bf16.mxu0 0
      %7301 = vmatpush2.bf16.msra.mxu0 %v5991
      %7302 = vmatprep.subr.bf16.mxu0 0
      %7303 = vmatpush2.bf16.msra.mxu0 %v5990
      %7304 = vmatprep.subr.bf16.mxu0 0
      %7305 = vmatpush2.bf16.msra.mxu0 %v5989
      %7306 = vmatprep.subr.bf16.mxu0 0
      %7307 = vmatpush2.bf16.msra.mxu0 %v5988
      %7308 = vmatprep.subr.bf16.mxu0 0
      %7309 = vmatpush2.bf16.msra.mxu0 %v5987
      %7310 = vmatprep.subr.bf16.mxu0 0
      %7311 = vmatpush2.bf16.msra.mxu0 %v5986
      %7312 = vmatprep.subr.bf16.mxu0 0
      %7313 = vmatpush2.bf16.msra.mxu0 %v5985
      %7314 = vmatprep.subr.bf16.mxu0 0
      %7315 = vmatpush2.bf16.msra.mxu0 %v5984
      %7316 = vmatprep.mubr.bf16.mxu0 %v6650
      %7317 = vmatmul.mubr.bf16.gmra.mxu0 %v6649
      %v7318 = vpop.f32.mrf.mxu0
      %v7319 = vadd.f32 %v7198, %v7318
      %v7320 = vpop.f32.mrf.mxu0
      %v7321 = vpop.f32.mrf.mxu0
      %v7322 = vadd.f32 %v7201, %v7321
      %v7323 = vpop.f32.mrf.mxu0
      %7324 = vmatprep.mubr.bf16.mxu0 %v6667
      %7325 = vmatmul.mubr.bf16.gmra.mxu0 %v6666
      %v7326 = vpop.f32.mrf.mxu0
      %v7327 = vadd.f32 %v7206, %v7326
      %v7328 = vpop.f32.mrf.mxu0
      %v7329 = vpop.f32.mrf.mxu0
      %v7330 = vadd.f32 %v7209, %v7329
      %v7331 = vpop.f32.mrf.mxu0
      %7332 = vmatprep.mubr.bf16.mxu0 %v6684
      %7333 = vmatmul.mubr.bf16.gmra.mxu0 %v6683
      %v7334 = vpop.f32.mrf.mxu0
      %v7335 = vadd.f32 %v7214, %v7334
      %v7336 = vpop.f32.mrf.mxu0
      %v7337 = vpop.f32.mrf.mxu0
      %v7338 = vadd.f32 %v7217, %v7337
      %v7339 = vpop.f32.mrf.mxu0
      %7340 = vmatprep.mubr.bf16.mxu0 %v6701
      %7341 = vmatmul.mubr.bf16.gmra.mxu0 %v6700
      %v7342 = vpop.f32.mrf.mxu0
      %v7343 = vadd.f32 %v7222, %v7342
      %v7344 = vpop.f32.mrf.mxu0
      %v7345 = vpop.f32.mrf.mxu0
      %v7346 = vadd.f32 %v7225, %v7345
      %v7347 = vpop.f32.mrf.mxu0
      %7348 = vmatprep.mubr.bf16.mxu0 %v6718
      %7349 = vmatmul.mubr.bf16.gmra.mxu0 %v6717
      %v7350 = vpop.f32.mrf.mxu0
      %v7351 = vadd.f32 %v7230, %v7350
      %v7352 = vpop.f32.mrf.mxu0
      %v7353 = vpop.f32.mrf.mxu0
      %v7354 = vadd.f32 %v7233, %v7353
      %v7355 = vpop.f32.mrf.mxu0
      %7356 = vmatprep.mubr.bf16.mxu0 %v6735
      %7357 = vmatmul.mubr.bf16.gmra.mxu0 %v6734
      %v7358 = vpop.f32.mrf.mxu0
      %v7359 = vadd.f32 %v7238, %v7358
      %v7360 = vpop.f32.mrf.mxu0
      %v7361 = vpop.f32.mrf.mxu0
      %v7362 = vadd.f32 %v7241, %v7361
      %v7363 = vpop.f32.mrf.mxu0
      %7364 = vmatprep.mubr.bf16.mxu0 %v6752
      %7365 = vmatmul.mubr.bf16.gmra.mxu0 %v6751
      %v7366 = vpop.f32.mrf.mxu0
      %v7367 = vadd.f32 %v7246, %v7366
      %v7368 = vpop.f32.mrf.mxu0
      %v7369 = vpop.f32.mrf.mxu0
      %v7370 = vadd.f32 %v7249, %v7369
      %v7371 = vpop.f32.mrf.mxu0
      %7372 = vmatprep.mubr.bf16.mxu0 %v6769
      %7373 = vmatmul.mubr.bf16.gmra.mxu0 %v6768
      %v7374 = vpop.f32.mrf.mxu0
      %v7375 = vadd.f32 %v7254, %v7374
      %v7376 = vpop.f32.mrf.mxu0
      %v7377 = vpop.f32.mrf.mxu0
      %v7378 = vadd.f32 %v7257, %v7377
      %v7379 = vpop.f32.mrf.mxu0
      %7380 = vmatprep.mubr.bf16.mxu0 %v6786
      %7381 = vmatmul.mubr.bf16.gmra.mxu0 %v6785
      %v7382 = vpop.f32.mrf.mxu0
      %v7383 = vadd.f32 %v7262, %v7382
      %v7384 = vpop.f32.mrf.mxu0
      %v7385 = vpop.f32.mrf.mxu0
      %v7386 = vadd.f32 %v7265, %v7385
      %v7387 = vpop.f32.mrf.mxu0
      %7388 = vmatprep.mubr.bf16.mxu0 %v6803
      %7389 = vmatmul.mubr.bf16.gmra.mxu0 %v6802
      %v7390 = vpop.f32.mrf.mxu0
      %v7391 = vadd.f32 %v7270, %v7390
      %v7392 = vpop.f32.mrf.mxu0
      %v7393 = vpop.f32.mrf.mxu0
      %v7394 = vadd.f32 %v7273, %v7393
      %v7395 = vpop.f32.mrf.mxu0
      %7396 = vmatprep.mubr.bf16.mxu0 %v6820
      %7397 = vmatmul.mubr.bf16.gmra.mxu0 %v6819
      %v7398 = vpop.f32.mrf.mxu0
      %v7399 = vadd.f32 %v7278, %v7398
      %v7400 = vpop.f32.mrf.mxu0
      %v7401 = vpop.f32.mrf.mxu0
      %v7402 = vadd.f32 %v7281, %v7401
      %v7403 = vpop.f32.mrf.mxu0
      %7404 = vdwg.mxu0
      %7405 = vmatprep.subr.bf16.mxu0 0
      %7406 = vmatpush1.bf16.msra.mxu0 %v5999
      %7407 = vmatprep.subr.bf16.mxu0 0
      %7408 = vmatpush1.bf16.msra.mxu0 %v5998
      %7409 = vmatprep.subr.bf16.mxu0 0
      %7410 = vmatpush1.bf16.msra.mxu0 %v5997
      %7411 = vmatprep.subr.bf16.mxu0 0
      %7412 = vmatpush1.bf16.msra.mxu0 %v5996
      %7413 = vmatprep.subr.bf16.mxu0 0
      %7414 = vmatpush1.bf16.msra.mxu0 %v5995
      %7415 = vmatprep.subr.bf16.mxu0 0
      %7416 = vmatpush1.bf16.msra.mxu0 %v5994
      %7417 = vmatprep.subr.bf16.mxu0 0
      %7418 = vmatpush1.bf16.msra.mxu0 %v5993
      %7419 = vmatprep.subr.bf16.mxu0 0
      %7420 = vmatpush1.bf16.msra.mxu0 %v5992
      %7421 = vmatprep.subr.bf16.mxu0 0
      %7422 = vmatpush2.bf16.msra.mxu0 %v6007
      %7423 = vmatprep.subr.bf16.mxu0 0
      %7424 = vmatpush2.bf16.msra.mxu0 %v6006
      %7425 = vmatprep.subr.bf16.mxu0 0
      %7426 = vmatpush2.bf16.msra.mxu0 %v6005
      %7427 = vmatprep.subr.bf16.mxu0 0
      %7428 = vmatpush2.bf16.msra.mxu0 %v6004
      %7429 = vmatprep.subr.bf16.mxu0 0
      %7430 = vmatpush2.bf16.msra.mxu0 %v6003
      %7431 = vmatprep.subr.bf16.mxu0 0
      %7432 = vmatpush2.bf16.msra.mxu0 %v6002
      %7433 = vmatprep.subr.bf16.mxu0 0
      %7434 = vmatpush2.bf16.msra.mxu0 %v6001
      %7435 = vmatprep.subr.bf16.mxu0 0
      %7436 = vmatpush2.bf16.msra.mxu0 %v6000
      %7437 = vmatprep.mubr.bf16.mxu0 %v6652
      %7438 = vmatmul.mubr.bf16.gmra.mxu0 %v6651
      %v7439 = vpop.f32.mrf.mxu0
      %v7440 = vadd.f32 %v7319, %v7439
      %v7441 = vpop.f32.mrf.mxu0
      %v7442 = vpop.f32.mrf.mxu0
      %v7443 = vadd.f32 %v7322, %v7442
      %v7444 = vpop.f32.mrf.mxu0
      %7445 = vmatprep.mubr.bf16.mxu0 %v6669
      %7446 = vmatmul.mubr.bf16.gmra.mxu0 %v6668
      %v7447 = vpop.f32.mrf.mxu0
      %v7448 = vadd.f32 %v7327, %v7447
      %v7449 = vpop.f32.mrf.mxu0
      %v7450 = vpop.f32.mrf.mxu0
      %v7451 = vadd.f32 %v7330, %v7450
      %v7452 = vpop.f32.mrf.mxu0
      %7453 = vmatprep.mubr.bf16.mxu0 %v6686
      %7454 = vmatmul.mubr.bf16.gmra.mxu0 %v6685
      %v7455 = vpop.f32.mrf.mxu0
      %v7456 = vadd.f32 %v7335, %v7455
      %v7457 = vpop.f32.mrf.mxu0
      %v7458 = vpop.f32.mrf.mxu0
      %v7459 = vadd.f32 %v7338, %v7458
      %v7460 = vpop.f32.mrf.mxu0
      %7461 = vmatprep.mubr.bf16.mxu0 %v6703
      %7462 = vmatmul.mubr.bf16.gmra.mxu0 %v6702
      %v7463 = vpop.f32.mrf.mxu0
      %v7464 = vadd.f32 %v7343, %v7463
      %v7465 = vpop.f32.mrf.mxu0
      %v7466 = vpop.f32.mrf.mxu0
      %v7467 = vadd.f32 %v7346, %v7466
      %v7468 = vpop.f32.mrf.mxu0
      %7469 = vmatprep.mubr.bf16.mxu0 %v6720
      %7470 = vmatmul.mubr.bf16.gmra.mxu0 %v6719
      %v7471 = vpop.f32.mrf.mxu0
      %v7472 = vadd.f32 %v7351, %v7471
      %v7473 = vpop.f32.mrf.mxu0
      %v7474 = vpop.f32.mrf.mxu0
      %v7475 = vadd.f32 %v7354, %v7474
      %v7476 = vpop.f32.mrf.mxu0
      %7477 = vmatprep.mubr.bf16.mxu0 %v6737
      %7478 = vmatmul.mubr.bf16.gmra.mxu0 %v6736
      %v7479 = vpop.f32.mrf.mxu0
      %v7480 = vadd.f32 %v7359, %v7479
      %v7481 = vpop.f32.mrf.mxu0
      %v7482 = vpop.f32.mrf.mxu0
      %v7483 = vadd.f32 %v7362, %v7482
      %v7484 = vpop.f32.mrf.mxu0
      %7485 = vmatprep.mubr.bf16.mxu0 %v6754
      %7486 = vmatmul.mubr.bf16.gmra.mxu0 %v6753
      %v7487 = vpop.f32.mrf.mxu0
      %v7488 = vadd.f32 %v7367, %v7487
      %v7489 = vpop.f32.mrf.mxu0
      %v7490 = vpop.f32.mrf.mxu0
      %v7491 = vadd.f32 %v7370, %v7490
      %v7492 = vpop.f32.mrf.mxu0
      %7493 = vmatprep.mubr.bf16.mxu0 %v6771
      %7494 = vmatmul.mubr.bf16.gmra.mxu0 %v6770
      %v7495 = vpop.f32.mrf.mxu0
      %v7496 = vadd.f32 %v7375, %v7495
      %v7497 = vpop.f32.mrf.mxu0
      %v7498 = vpop.f32.mrf.mxu0
      %v7499 = vadd.f32 %v7378, %v7498
      %v7500 = vpop.f32.mrf.mxu0
      %7501 = vmatprep.mubr.bf16.mxu0 %v6788
      %7502 = vmatmul.mubr.bf16.gmra.mxu0 %v6787
      %v7503 = vpop.f32.mrf.mxu0
      %v7504 = vadd.f32 %v7383, %v7503
      %v7505 = vpop.f32.mrf.mxu0
      %v7506 = vpop.f32.mrf.mxu0
      %v7507 = vadd.f32 %v7386, %v7506
      %v7508 = vpop.f32.mrf.mxu0
      %7509 = vmatprep.mubr.bf16.mxu0 %v6805
      %7510 = vmatmul.mubr.bf16.gmra.mxu0 %v6804
      %v7511 = vpop.f32.mrf.mxu0
      %v7512 = vadd.f32 %v7391, %v7511
      %v7513 = vpop.f32.mrf.mxu0
      %v7514 = vpop.f32.mrf.mxu0
      %v7515 = vadd.f32 %v7394, %v7514
      %v7516 = vpop.f32.mrf.mxu0
      %7517 = vmatprep.mubr.bf16.mxu0 %v6822
      %7518 = vmatmul.mubr.bf16.gmra.mxu0 %v6821
      %v7519 = vpop.f32.mrf.mxu0
      %v7520 = vadd.f32 %v7399, %v7519
      %v7521 = vpop.f32.mrf.mxu0
      %v7522 = vpop.f32.mrf.mxu0
      %v7523 = vadd.f32 %v7402, %v7522
      %v7524 = vpop.f32.mrf.mxu0
      %7525 = vdwg.mxu0
      %7526 = vmatprep.subr.bf16.mxu0 0
      %7527 = vmatpush1.bf16.msra.mxu0 %v6015
      %7528 = vmatprep.subr.bf16.mxu0 0
      %7529 = vmatpush1.bf16.msra.mxu0 %v6014
      %7530 = vmatprep.subr.bf16.mxu0 0
      %7531 = vmatpush1.bf16.msra.mxu0 %v6013
      %7532 = vmatprep.subr.bf16.mxu0 0
      %7533 = vmatpush1.bf16.msra.mxu0 %v6012
      %7534 = vmatprep.subr.bf16.mxu0 0
      %7535 = vmatpush1.bf16.msra.mxu0 %v6011
      %7536 = vmatprep.subr.bf16.mxu0 0
      %7537 = vmatpush1.bf16.msra.mxu0 %v6010
      %7538 = vmatprep.subr.bf16.mxu0 0
      %7539 = vmatpush1.bf16.msra.mxu0 %v6009
      %7540 = vmatprep.subr.bf16.mxu0 0
      %7541 = vmatpush1.bf16.msra.mxu0 %v6008
      %7542 = vmatprep.subr.bf16.mxu0 0
      %7543 = vmatpush2.bf16.msra.mxu0 %v6023
      %7544 = vmatprep.subr.bf16.mxu0 0
      %7545 = vmatpush2.bf16.msra.mxu0 %v6022
      %7546 = vmatprep.subr.bf16.mxu0 0
      %7547 = vmatpush2.bf16.msra.mxu0 %v6021
      %7548 = vmatprep.subr.bf16.mxu0 0
      %7549 = vmatpush2.bf16.msra.mxu0 %v6020
      %7550 = vmatprep.subr.bf16.mxu0 0
      %7551 = vmatpush2.bf16.msra.mxu0 %v6019
      %7552 = vmatprep.subr.bf16.mxu0 0
      %7553 = vmatpush2.bf16.msra.mxu0 %v6018
      %7554 = vmatprep.subr.bf16.mxu0 0
      %7555 = vmatpush2.bf16.msra.mxu0 %v6017
      %7556 = vmatprep.subr.bf16.mxu0 0
      %7557 = vmatpush2.bf16.msra.mxu0 %v6016
      %7558 = vmatprep.mubr.bf16.mxu0 %v6654
      %7559 = vmatmul.mubr.bf16.gmra.mxu0 %v6653
      %v7560 = vpop.f32.mrf.mxu0
      %v7561 = vadd.f32 %v7440, %v7560
      %v7562 = vpop.f32.mrf.mxu0
      %v7563 = vpop.f32.mrf.mxu0
      %v7564 = vadd.f32 %v7443, %v7563
      %v7565 = vpop.f32.mrf.mxu0
      %7566 = vmatprep.mubr.bf16.mxu0 %v6671
      %7567 = vmatmul.mubr.bf16.gmra.mxu0 %v6670
      %v7568 = vpop.f32.mrf.mxu0
      %v7569 = vadd.f32 %v7448, %v7568
      %v7570 = vpop.f32.mrf.mxu0
      %v7571 = vpop.f32.mrf.mxu0
      %v7572 = vadd.f32 %v7451, %v7571
      %v7573 = vpop.f32.mrf.mxu0
      %7574 = vmatprep.mubr.bf16.mxu0 %v6688
      %7575 = vmatmul.mubr.bf16.gmra.mxu0 %v6687
      %v7576 = vpop.f32.mrf.mxu0
      %v7577 = vadd.f32 %v7456, %v7576
      %v7578 = vpop.f32.mrf.mxu0
      %v7579 = vpop.f32.mrf.mxu0
      %v7580 = vadd.f32 %v7459, %v7579
      %v7581 = vpop.f32.mrf.mxu0
      %7582 = vmatprep.mubr.bf16.mxu0 %v6705
      %7583 = vmatmul.mubr.bf16.gmra.mxu0 %v6704
      %v7584 = vpop.f32.mrf.mxu0
      %v7585 = vadd.f32 %v7464, %v7584
      %v7586 = vpop.f32.mrf.mxu0
      %v7587 = vpop.f32.mrf.mxu0
      %v7588 = vadd.f32 %v7467, %v7587
      %v7589 = vpop.f32.mrf.mxu0
      %7590 = vmatprep.mubr.bf16.mxu0 %v6722
      %7591 = vmatmul.mubr.bf16.gmra.mxu0 %v6721
      %v7592 = vpop.f32.mrf.mxu0
      %v7593 = vadd.f32 %v7472, %v7592
      %v7594 = vpop.f32.mrf.mxu0
      %v7595 = vpop.f32.mrf.mxu0
      %v7596 = vadd.f32 %v7475, %v7595
      %v7597 = vpop.f32.mrf.mxu0
      %7598 = vmatprep.mubr.bf16.mxu0 %v6739
      %7599 = vmatmul.mubr.bf16.gmra.mxu0 %v6738
      %v7600 = vpop.f32.mrf.mxu0
      %v7601 = vadd.f32 %v7480, %v7600
      %v7602 = vpop.f32.mrf.mxu0
      %v7603 = vpop.f32.mrf.mxu0
      %v7604 = vadd.f32 %v7483, %v7603
      %v7605 = vpop.f32.mrf.mxu0
      %7606 = vmatprep.mubr.bf16.mxu0 %v6756
      %7607 = vmatmul.mubr.bf16.gmra.mxu0 %v6755
      %v7608 = vpop.f32.mrf.mxu0
      %v7609 = vadd.f32 %v7488, %v7608
      %v7610 = vpop.f32.mrf.mxu0
      %v7611 = vpop.f32.mrf.mxu0
      %v7612 = vadd.f32 %v7491, %v7611
      %v7613 = vpop.f32.mrf.mxu0
      %7614 = vmatprep.mubr.bf16.mxu0 %v6773
      %7615 = vmatmul.mubr.bf16.gmra.mxu0 %v6772
      %v7616 = vpop.f32.mrf.mxu0
      %v7617 = vadd.f32 %v7496, %v7616
      %v7618 = vpop.f32.mrf.mxu0
      %v7619 = vpop.f32.mrf.mxu0
      %v7620 = vadd.f32 %v7499, %v7619
      %v7621 = vpop.f32.mrf.mxu0
      %7622 = vmatprep.mubr.bf16.mxu0 %v6790
      %7623 = vmatmul.mubr.bf16.gmra.mxu0 %v6789
      %v7624 = vpop.f32.mrf.mxu0
      %v7625 = vadd.f32 %v7504, %v7624
      %v7626 = vpop.f32.mrf.mxu0
      %v7627 = vpop.f32.mrf.mxu0
      %v7628 = vadd.f32 %v7507, %v7627
      %v7629 = vpop.f32.mrf.mxu0
      %7630 = vmatprep.mubr.bf16.mxu0 %v6807
      %7631 = vmatmul.mubr.bf16.gmra.mxu0 %v6806
      %v7632 = vpop.f32.mrf.mxu0
      %v7633 = vadd.f32 %v7512, %v7632
      %v7634 = vpop.f32.mrf.mxu0
      %v7635 = vpop.f32.mrf.mxu0
      %v7636 = vadd.f32 %v7515, %v7635
      %v7637 = vpop.f32.mrf.mxu0
      %7638 = vmatprep.mubr.bf16.mxu0 %v6824
      %7639 = vmatmul.mubr.bf16.gmra.mxu0 %v6823
      %v7640 = vpop.f32.mrf.mxu0
      %v7641 = vadd.f32 %v7520, %v7640
      %v7642 = vpop.f32.mrf.mxu0
      %v7643 = vpop.f32.mrf.mxu0
      %v7644 = vadd.f32 %v7523, %v7643
      %v7645 = vpop.f32.mrf.mxu0
      %7646 = vdwg.mxu0
      %7647 = vmatprep.subr.bf16.mxu0 0
      %7648 = vmatpush1.bf16.msra.mxu0 %v6031
      %7649 = vmatprep.subr.bf16.mxu0 0
      %7650 = vmatpush1.bf16.msra.mxu0 %v6030
      %7651 = vmatprep.subr.bf16.mxu0 0
      %7652 = vmatpush1.bf16.msra.mxu0 %v6029
      %7653 = vmatprep.subr.bf16.mxu0 0
      %7654 = vmatpush1.bf16.msra.mxu0 %v6028
      %7655 = vmatprep.subr.bf16.mxu0 0
      %7656 = vmatpush1.bf16.msra.mxu0 %v6027
      %7657 = vmatprep.subr.bf16.mxu0 0
      %7658 = vmatpush1.bf16.msra.mxu0 %v6026
      %7659 = vmatprep.subr.bf16.mxu0 0
      %7660 = vmatpush1.bf16.msra.mxu0 %v6025
      %7661 = vmatprep.subr.bf16.mxu0 0
      %7662 = vmatpush1.bf16.msra.mxu0 %v6024
      %7663 = vmatprep.subr.bf16.mxu0 0
      %7664 = vmatpush2.bf16.msra.mxu0 %v6039
      %7665 = vmatprep.subr.bf16.mxu0 0
      %7666 = vmatpush2.bf16.msra.mxu0 %v6038
      %7667 = vmatprep.subr.bf16.mxu0 0
      %7668 = vmatpush2.bf16.msra.mxu0 %v6037
      %7669 = vmatprep.subr.bf16.mxu0 0
      %7670 = vmatpush2.bf16.msra.mxu0 %v6036
      %7671 = vmatprep.subr.bf16.mxu0 0
      %7672 = vmatpush2.bf16.msra.mxu0 %v6035
      %7673 = vmatprep.subr.bf16.mxu0 0
      %7674 = vmatpush2.bf16.msra.mxu0 %v6034
      %7675 = vmatprep.subr.bf16.mxu0 0
      %7676 = vmatpush2.bf16.msra.mxu0 %v6033
      %7677 = vmatprep.subr.bf16.mxu0 0
      %7678 = vmatpush2.bf16.msra.mxu0 %v6032
      %7679 = vmatprep.mubr.bf16.mxu0 %v6656
      %7680 = vmatmul.mubr.bf16.gmra.mxu0 %v6655
      %v7681 = vpop.f32.mrf.mxu0
      %v7682 = vadd.f32 %v7561, %v7681
      %v7683 = vpop.f32.mrf.mxu0
      %v7684 = vpop.f32.mrf.mxu0
      %v7685 = vadd.f32 %v7564, %v7684
      %v7686 = vpop.f32.mrf.mxu0
      %7687 = vmatprep.mubr.bf16.mxu0 %v6673
      %7688 = vmatmul.mubr.bf16.gmra.mxu0 %v6672
      %v7689 = vpop.f32.mrf.mxu0
      %v7690 = vadd.f32 %v7569, %v7689
      %v7691 = vpop.f32.mrf.mxu0
      %v7692 = vpop.f32.mrf.mxu0
      %v7693 = vadd.f32 %v7572, %v7692
      %v7694 = vpop.f32.mrf.mxu0
      %7695 = vmatprep.mubr.bf16.mxu0 %v6690
      %7696 = vmatmul.mubr.bf16.gmra.mxu0 %v6689
      %v7697 = vpop.f32.mrf.mxu0
      %v7698 = vadd.f32 %v7577, %v7697
      %v7699 = vpop.f32.mrf.mxu0
      %v7700 = vpop.f32.mrf.mxu0
      %v7701 = vadd.f32 %v7580, %v7700
      %v7702 = vpop.f32.mrf.mxu0
      %7703 = vmatprep.mubr.bf16.mxu0 %v6707
      %7704 = vmatmul.mubr.bf16.gmra.mxu0 %v6706
      %v7705 = vpop.f32.mrf.mxu0
      %v7706 = vadd.f32 %v7585, %v7705
      %v7707 = vpop.f32.mrf.mxu0
      %v7708 = vpop.f32.mrf.mxu0
      %v7709 = vadd.f32 %v7588, %v7708
      %v7710 = vpop.f32.mrf.mxu0
      %7711 = vmatprep.mubr.bf16.mxu0 %v6724
      %7712 = vmatmul.mubr.bf16.gmra.mxu0 %v6723
      %v7713 = vpop.f32.mrf.mxu0
      %v7714 = vadd.f32 %v7593, %v7713
      %v7715 = vpop.f32.mrf.mxu0
      %v7716 = vpop.f32.mrf.mxu0
      %v7717 = vadd.f32 %v7596, %v7716
      %v7718 = vpop.f32.mrf.mxu0
      %7719 = vmatprep.mubr.bf16.mxu0 %v6741
      %7720 = vmatmul.mubr.bf16.gmra.mxu0 %v6740
      %v7721 = vpop.f32.mrf.mxu0
      %v7722 = vadd.f32 %v7601, %v7721
      %v7723 = vpop.f32.mrf.mxu0
      %v7724 = vpop.f32.mrf.mxu0
      %v7725 = vadd.f32 %v7604, %v7724
      %v7726 = vpop.f32.mrf.mxu0
      %7727 = vmatprep.mubr.bf16.mxu0 %v6758
      %7728 = vmatmul.mubr.bf16.gmra.mxu0 %v6757
      %v7729 = vpop.f32.mrf.mxu0
      %v7730 = vadd.f32 %v7609, %v7729
      %v7731 = vpop.f32.mrf.mxu0
      %v7732 = vpop.f32.mrf.mxu0
      %v7733 = vadd.f32 %v7612, %v7732
      %v7734 = vpop.f32.mrf.mxu0
      %7735 = vmatprep.mubr.bf16.mxu0 %v6775
      %7736 = vmatmul.mubr.bf16.gmra.mxu0 %v6774
      %v7737 = vpop.f32.mrf.mxu0
      %v7738 = vadd.f32 %v7617, %v7737
      %v7739 = vpop.f32.mrf.mxu0
      %v7740 = vpop.f32.mrf.mxu0
      %v7741 = vadd.f32 %v7620, %v7740
      %v7742 = vpop.f32.mrf.mxu0
      %7743 = vmatprep.mubr.bf16.mxu0 %v6792
      %7744 = vmatmul.mubr.bf16.gmra.mxu0 %v6791
      %v7745 = vpop.f32.mrf.mxu0
      %v7746 = vadd.f32 %v7625, %v7745
      %v7747 = vpop.f32.mrf.mxu0
      %v7748 = vpop.f32.mrf.mxu0
      %v7749 = vadd.f32 %v7628, %v7748
      %v7750 = vpop.f32.mrf.mxu0
      %7751 = vmatprep.mubr.bf16.mxu0 %v6809
      %7752 = vmatmul.mubr.bf16.gmra.mxu0 %v6808
      %v7753 = vpop.f32.mrf.mxu0
      %v7754 = vadd.f32 %v7633, %v7753
      %v7755 = vpop.f32.mrf.mxu0
      %v7756 = vpop.f32.mrf.mxu0
      %v7757 = vadd.f32 %v7636, %v7756
      %v7758 = vpop.f32.mrf.mxu0
      %7759 = vmatprep.mubr.bf16.mxu0 %v6826
      %7760 = vmatmul.mubr.bf16.gmra.mxu0 %v6825
      %v7761 = vpop.f32.mrf.mxu0
      %v7762 = vadd.f32 %v7641, %v7761
      %v7763 = vpop.f32.mrf.mxu0
      %v7764 = vpop.f32.mrf.mxu0
      %v7765 = vadd.f32 %v7644, %v7764
      %v7766 = vpop.f32.mrf.mxu0
      %7767 = vdwg.mxu0
      %7768 = vmatprep.subr.bf16.mxu0 0
      %7769 = vmatpush1.bf16.msra.mxu0 %v6047
      %7770 = vmatprep.subr.bf16.mxu0 0
      %7771 = vmatpush1.bf16.msra.mxu0 %v6046
      %7772 = vmatprep.subr.bf16.mxu0 0
      %7773 = vmatpush1.bf16.msra.mxu0 %v6045
      %7774 = vmatprep.subr.bf16.mxu0 0
      %7775 = vmatpush1.bf16.msra.mxu0 %v6044
      %7776 = vmatprep.subr.bf16.mxu0 0
      %7777 = vmatpush1.bf16.msra.mxu0 %v6043
      %7778 = vmatprep.subr.bf16.mxu0 0
      %7779 = vmatpush1.bf16.msra.mxu0 %v6042
      %7780 = vmatprep.subr.bf16.mxu0 0
      %7781 = vmatpush1.bf16.msra.mxu0 %v6041
      %7782 = vmatprep.subr.bf16.mxu0 0
      %7783 = vmatpush1.bf16.msra.mxu0 %v6040
      %7784 = vmatprep.subr.bf16.mxu0 0
      %7785 = vmatpush2.bf16.msra.mxu0 %v6055
      %7786 = vmatprep.subr.bf16.mxu0 0
      %7787 = vmatpush2.bf16.msra.mxu0 %v6054
      %7788 = vmatprep.subr.bf16.mxu0 0
      %7789 = vmatpush2.bf16.msra.mxu0 %v6053
      %7790 = vmatprep.subr.bf16.mxu0 0
      %7791 = vmatpush2.bf16.msra.mxu0 %v6052
      %7792 = vmatprep.subr.bf16.mxu0 0
      %7793 = vmatpush2.bf16.msra.mxu0 %v6051
      %7794 = vmatprep.subr.bf16.mxu0 0
      %7795 = vmatpush2.bf16.msra.mxu0 %v6050
      %7796 = vmatprep.subr.bf16.mxu0 0
      %7797 = vmatpush2.bf16.msra.mxu0 %v6049
      %7798 = vmatprep.subr.bf16.mxu0 0
      %7799 = vmatpush2.bf16.msra.mxu0 %v6048
      %7800 = vmatprep.mubr.bf16.mxu0 %v6658
      %7801 = vmatmul.mubr.bf16.gmra.mxu0 %v6657
      %v7802 = vpop.f32.mrf.mxu0
      %v7803 = vadd.f32 %v7682, %v7802
      %v7804 = vpop.f32.mrf.mxu0
      %v7805 = vpop.f32.mrf.mxu0
      %v7806 = vadd.f32 %v7685, %v7805
      %v7807 = vpop.f32.mrf.mxu0
      %7808 = vmatprep.mubr.bf16.mxu0 %v6675
      %7809 = vmatmul.mubr.bf16.gmra.mxu0 %v6674
      %v7810 = vpop.f32.mrf.mxu0
      %v7811 = vadd.f32 %v7690, %v7810
      %v7812 = vpop.f32.mrf.mxu0
      %v7813 = vpop.f32.mrf.mxu0
      %v7814 = vadd.f32 %v7693, %v7813
      %v7815 = vpop.f32.mrf.mxu0
      %7816 = vmatprep.mubr.bf16.mxu0 %v6692
      %7817 = vmatmul.mubr.bf16.gmra.mxu0 %v6691
      %v7818 = vpop.f32.mrf.mxu0
      %v7819 = vadd.f32 %v7698, %v7818
      %v7820 = vpop.f32.mrf.mxu0
      %v7821 = vpop.f32.mrf.mxu0
      %v7822 = vadd.f32 %v7701, %v7821
      %v7823 = vpop.f32.mrf.mxu0
      %7824 = vmatprep.mubr.bf16.mxu0 %v6709
      %7825 = vmatmul.mubr.bf16.gmra.mxu0 %v6708
      %v7826 = vpop.f32.mrf.mxu0
      %v7827 = vadd.f32 %v7706, %v7826
      %v7828 = vpop.f32.mrf.mxu0
      %v7829 = vpop.f32.mrf.mxu0
      %v7830 = vadd.f32 %v7709, %v7829
      %v7831 = vpop.f32.mrf.mxu0
      %7832 = vmatprep.mubr.bf16.mxu0 %v6726
      %7833 = vmatmul.mubr.bf16.gmra.mxu0 %v6725
      %v7834 = vpop.f32.mrf.mxu0
      %v7835 = vadd.f32 %v7714, %v7834
      %v7836 = vpop.f32.mrf.mxu0
      %v7837 = vpop.f32.mrf.mxu0
      %v7838 = vadd.f32 %v7717, %v7837
      %v7839 = vpop.f32.mrf.mxu0
      %7840 = vmatprep.mubr.bf16.mxu0 %v6743
      %7841 = vmatmul.mubr.bf16.gmra.mxu0 %v6742
      %v7842 = vpop.f32.mrf.mxu0
      %v7843 = vadd.f32 %v7722, %v7842
      %v7844 = vpop.f32.mrf.mxu0
      %v7845 = vpop.f32.mrf.mxu0
      %v7846 = vadd.f32 %v7725, %v7845
      %v7847 = vpop.f32.mrf.mxu0
      %7848 = vmatprep.mubr.bf16.mxu0 %v6760
      %7849 = vmatmul.mubr.bf16.gmra.mxu0 %v6759
      %v7850 = vpop.f32.mrf.mxu0
      %v7851 = vadd.f32 %v7730, %v7850
      %v7852 = vpop.f32.mrf.mxu0
      %v7853 = vpop.f32.mrf.mxu0
      %v7854 = vadd.f32 %v7733, %v7853
      %v7855 = vpop.f32.mrf.mxu0
      %7856 = vmatprep.mubr.bf16.mxu0 %v6777
      %7857 = vmatmul.mubr.bf16.gmra.mxu0 %v6776
      %v7858 = vpop.f32.mrf.mxu0
      %v7859 = vadd.f32 %v7738, %v7858
      %v7860 = vpop.f32.mrf.mxu0
      %v7861 = vpop.f32.mrf.mxu0
      %v7862 = vadd.f32 %v7741, %v7861
      %v7863 = vpop.f32.mrf.mxu0
      %7864 = vmatprep.mubr.bf16.mxu0 %v6794
      %7865 = vmatmul.mubr.bf16.gmra.mxu0 %v6793
      %v7866 = vpop.f32.mrf.mxu0
      %v7867 = vadd.f32 %v7746, %v7866
      %v7868 = vpop.f32.mrf.mxu0
      %v7869 = vpop.f32.mrf.mxu0
      %v7870 = vadd.f32 %v7749, %v7869
      %v7871 = vpop.f32.mrf.mxu0
      %7872 = vmatprep.mubr.bf16.mxu0 %v6811
      %7873 = vmatmul.mubr.bf16.gmra.mxu0 %v6810
      %v7874 = vpop.f32.mrf.mxu0
      %v7875 = vadd.f32 %v7754, %v7874
      %v7876 = vpop.f32.mrf.mxu0
      %v7877 = vpop.f32.mrf.mxu0
      %v7878 = vadd.f32 %v7757, %v7877
      %v7879 = vpop.f32.mrf.mxu0
      %7880 = vmatprep.mubr.bf16.mxu0 %v6828
      %7881 = vmatmul.mubr.bf16.gmra.mxu0 %v6827
      %v7882 = vpop.f32.mrf.mxu0
      %v7883 = vadd.f32 %v7762, %v7882
      %v7884 = vpop.f32.mrf.mxu0
      %v7885 = vpop.f32.mrf.mxu0
      %v7886 = vadd.f32 %v7765, %v7885
      %v7887 = vpop.f32.mrf.mxu0
      %7888 = vdwg.mxu0
      %7889 = vmatprep.subr.bf16.mxu0 0
      %7890 = vmatpush1.bf16.msra.mxu0 %v6063
      %7891 = vmatprep.subr.bf16.mxu0 0
      %7892 = vmatpush1.bf16.msra.mxu0 %v6062
      %7893 = vmatprep.subr.bf16.mxu0 0
      %7894 = vmatpush1.bf16.msra.mxu0 %v6061
      %7895 = vmatprep.subr.bf16.mxu0 0
      %7896 = vmatpush1.bf16.msra.mxu0 %v6060
      %7897 = vmatprep.subr.bf16.mxu0 0
      %7898 = vmatpush1.bf16.msra.mxu0 %v6059
      %7899 = vmatprep.subr.bf16.mxu0 0
      %7900 = vmatpush1.bf16.msra.mxu0 %v6058
      %7901 = vmatprep.subr.bf16.mxu0 0
      %7902 = vmatpush1.bf16.msra.mxu0 %v6057
      %7903 = vmatprep.subr.bf16.mxu0 0
      %7904 = vmatpush1.bf16.msra.mxu0 %v6056
      %7905 = vmatprep.subr.bf16.mxu0 0
      %7906 = vmatpush2.bf16.msra.mxu0 %v6071
      %7907 = vmatprep.subr.bf16.mxu0 0
      %7908 = vmatpush2.bf16.msra.mxu0 %v6070
      %7909 = vmatprep.subr.bf16.mxu0 0
      %7910 = vmatpush2.bf16.msra.mxu0 %v6069
      %7911 = vmatprep.subr.bf16.mxu0 0
      %7912 = vmatpush2.bf16.msra.mxu0 %v6068
      %7913 = vmatprep.subr.bf16.mxu0 0
      %7914 = vmatpush2.bf16.msra.mxu0 %v6067
      %7915 = vmatprep.subr.bf16.mxu0 0
      %7916 = vmatpush2.bf16.msra.mxu0 %v6066
      %7917 = vmatprep.subr.bf16.mxu0 0
      %7918 = vmatpush2.bf16.msra.mxu0 %v6065
      %7919 = vmatprep.subr.bf16.mxu0 0
      %7920 = vmatpush2.bf16.msra.mxu0 %v6064
      %7921 = vmatprep.mubr.bf16.mxu0 %v6660
      %7922 = vmatmul.mubr.bf16.gmra.mxu0 %v6659
      %v7923 = vpop.f32.mrf.mxu0
      %v7924 = vadd.f32 %v7803, %v7923
      %v7925 = vpop.f32.mrf.mxu0
      %v7926 = vpop.f32.mrf.mxu0
      %v7927 = vadd.f32 %v7806, %v7926
      %v7928 = vpop.f32.mrf.mxu0
      %7929 = vmatprep.mubr.bf16.mxu0 %v6677
      %7930 = vmatmul.mubr.bf16.gmra.mxu0 %v6676
      %v7931 = vpop.f32.mrf.mxu0
      %v7932 = vadd.f32 %v7811, %v7931
      %v7933 = vpop.f32.mrf.mxu0
      %v7934 = vpop.f32.mrf.mxu0
      %v7935 = vadd.f32 %v7814, %v7934
      %v7936 = vpop.f32.mrf.mxu0
      %7937 = vmatprep.mubr.bf16.mxu0 %v6694
      %7938 = vmatmul.mubr.bf16.gmra.mxu0 %v6693
      %v7939 = vpop.f32.mrf.mxu0
      %v7940 = vadd.f32 %v7819, %v7939
      %v7941 = vpop.f32.mrf.mxu0
      %v7942 = vpop.f32.mrf.mxu0
      %v7943 = vadd.f32 %v7822, %v7942
      %v7944 = vpop.f32.mrf.mxu0
      %7945 = vmatprep.mubr.bf16.mxu0 %v6711
      %7946 = vmatmul.mubr.bf16.gmra.mxu0 %v6710
      %v7947 = vpop.f32.mrf.mxu0
      %v7948 = vadd.f32 %v7827, %v7947
      %v7949 = vpop.f32.mrf.mxu0
      %v7950 = vpop.f32.mrf.mxu0
      %v7951 = vadd.f32 %v7830, %v7950
      %v7952 = vpop.f32.mrf.mxu0
      %7953 = vmatprep.mubr.bf16.mxu0 %v6728
      %7954 = vmatmul.mubr.bf16.gmra.mxu0 %v6727
      %v7955 = vpop.f32.mrf.mxu0
      %v7956 = vadd.f32 %v7835, %v7955
      %v7957 = vpop.f32.mrf.mxu0
      %v7958 = vpop.f32.mrf.mxu0
      %v7959 = vadd.f32 %v7838, %v7958
      %v7960 = vpop.f32.mrf.mxu0
      %7961 = vmatprep.mubr.bf16.mxu0 %v6745
      %7962 = vmatmul.mubr.bf16.gmra.mxu0 %v6744
      %v7963 = vpop.f32.mrf.mxu0
      %v7964 = vadd.f32 %v7843, %v7963
      %v7965 = vpop.f32.mrf.mxu0
      %v7966 = vpop.f32.mrf.mxu0
      %v7967 = vadd.f32 %v7846, %v7966
      %v7968 = vpop.f32.mrf.mxu0
      %7969 = vmatprep.mubr.bf16.mxu0 %v6762
      %7970 = vmatmul.mubr.bf16.gmra.mxu0 %v6761
      %v7971 = vpop.f32.mrf.mxu0
      %v7972 = vadd.f32 %v7851, %v7971
      %v7973 = vpop.f32.mrf.mxu0
      %v7974 = vpop.f32.mrf.mxu0
      %v7975 = vadd.f32 %v7854, %v7974
      %v7976 = vpop.f32.mrf.mxu0
      %7977 = vmatprep.mubr.bf16.mxu0 %v6779
      %7978 = vmatmul.mubr.bf16.gmra.mxu0 %v6778
      %v7979 = vpop.f32.mrf.mxu0
      %v7980 = vadd.f32 %v7859, %v7979
      %v7981 = vpop.f32.mrf.mxu0
      %v7982 = vpop.f32.mrf.mxu0
      %v7983 = vadd.f32 %v7862, %v7982
      %v7984 = vpop.f32.mrf.mxu0
      %7985 = vmatprep.mubr.bf16.mxu0 %v6796
      %7986 = vmatmul.mubr.bf16.gmra.mxu0 %v6795
      %v7987 = vpop.f32.mrf.mxu0
      %v7988 = vadd.f32 %v7867, %v7987
      %v7989 = vpop.f32.mrf.mxu0
      %v7990 = vpop.f32.mrf.mxu0
      %v7991 = vadd.f32 %v7870, %v7990
      %v7992 = vpop.f32.mrf.mxu0
      %7993 = vmatprep.mubr.bf16.mxu0 %v6813
      %7994 = vmatmul.mubr.bf16.gmra.mxu0 %v6812
      %v7995 = vpop.f32.mrf.mxu0
      %v7996 = vadd.f32 %v7875, %v7995
      %v7997 = vpop.f32.mrf.mxu0
      %v7998 = vpop.f32.mrf.mxu0
      %v7999 = vadd.f32 %v7878, %v7998
      %v8000 = vpop.f32.mrf.mxu0
      %8001 = vmatprep.mubr.bf16.mxu0 %v6830
      %8002 = vmatmul.mubr.bf16.gmra.mxu0 %v6829
      %v8003 = vpop.f32.mrf.mxu0
      %v8004 = vadd.f32 %v7883, %v8003
      %v8005 = vpop.f32.mrf.mxu0
      %v8006 = vpop.f32.mrf.mxu0
      %v8007 = vadd.f32 %v7886, %v8006
      %v8008 = vpop.f32.mrf.mxu0
      %8009 = vdwg.mxu0
      %8010 = vmatprep.subr.bf16.mxu0 0
      %8011 = vmatpush1.bf16.msra.mxu0 0
      %8012 = vmatprep.subr.bf16.mxu0 0
      %8013 = vmatpush1.bf16.msra.mxu0 0
      %8014 = vmatprep.subr.bf16.mxu0 0
      %8015 = vmatpush1.bf16.msra.mxu0 0
      %8016 = vmatprep.subr.bf16.mxu0 0
      %8017 = vmatpush1.bf16.msra.mxu0 0
      %8018 = vmatprep.subr.bf16.mxu0 0
      %8019 = vmatpush1.bf16.msra.mxu0 0
      %8020 = vmatprep.subr.bf16.mxu0 0
      %8021 = vmatpush1.bf16.msra.mxu0 0
      %8022 = vmatprep.subr.bf16.mxu0 0
      %8023 = vmatpush1.bf16.msra.mxu0 0
      %8024 = vmatprep.subr.bf16.mxu0 0
      %8025 = vmatpush1.bf16.msra.mxu0 %v6072
      %8026 = vmatprep.subr.bf16.mxu0 0
      %8027 = vmatpush2.bf16.msra.mxu0 0
      %8028 = vmatprep.subr.bf16.mxu0 0
      %8029 = vmatpush2.bf16.msra.mxu0 0
      %8030 = vmatprep.subr.bf16.mxu0 0
      %8031 = vmatpush2.bf16.msra.mxu0 0
      %8032 = vmatprep.subr.bf16.mxu0 0
      %8033 = vmatpush2.bf16.msra.mxu0 0
      %8034 = vmatprep.subr.bf16.mxu0 0
      %8035 = vmatpush2.bf16.msra.mxu0 0
      %8036 = vmatprep.subr.bf16.mxu0 0
      %8037 = vmatpush2.bf16.msra.mxu0 0
      %8038 = vmatprep.subr.bf16.mxu0 0
      %8039 = vmatpush2.bf16.msra.mxu0 0
      %8040 = vmatprep.subr.bf16.mxu0 0
      %8041 = vmatpush2.bf16.msra.mxu0 0
      %8042 = vmatprep.mubr.bf16.mxu0 0
      %8043 = vmatmul.mubr.bf16.gmra.mxu0 %v7010
      %v8044 = vpop.f32.mrf.mxu0
      %v8045 = vadd.f32 %v7924, %v8044
      %v8046 = vpop.f32.mrf.mxu0
      %v8047 = vpop.f32.mrf.mxu0
      %v8048 = vadd.f32 %v7927, %v8047
      %v8049 = vpop.f32.mrf.mxu0
      %8050 = vmatprep.mubr.bf16.mxu0 0
      %8051 = vmatmul.mubr.bf16.gmra.mxu0 %v7013
      %v8052 = vpop.f32.mrf.mxu0
      %v8053 = vadd.f32 %v7932, %v8052
      %v8054 = vpop.f32.mrf.mxu0
      %v8055 = vpop.f32.mrf.mxu0
      %v8056 = vadd.f32 %v7935, %v8055
      %v8057 = vpop.f32.mrf.mxu0
      %8058 = vmatprep.mubr.bf16.mxu0 0
      %8059 = vmatmul.mubr.bf16.gmra.mxu0 %v7016
      %v8060 = vpop.f32.mrf.mxu0
      %v8061 = vadd.f32 %v7940, %v8060
      %v8062 = vpop.f32.mrf.mxu0
      %v8063 = vpop.f32.mrf.mxu0
      %v8064 = vadd.f32 %v7943, %v8063
      %v8065 = vpop.f32.mrf.mxu0
      %8066 = vmatprep.mubr.bf16.mxu0 0
      %8067 = vmatmul.mubr.bf16.gmra.mxu0 %v7019
      %v8068 = vpop.f32.mrf.mxu0
      %v8069 = vadd.f32 %v7948, %v8068
      %v8070 = vpop.f32.mrf.mxu0
      %v8071 = vpop.f32.mrf.mxu0
      %v8072 = vadd.f32 %v7951, %v8071
      %v8073 = vpop.f32.mrf.mxu0
      %8074 = vmatprep.mubr.bf16.mxu0 0
      %8075 = vmatmul.mubr.bf16.gmra.mxu0 %v7022
      %v8076 = vpop.f32.mrf.mxu0
      %v8077 = vadd.f32 %v7956, %v8076
      %v8078 = vpop.f32.mrf.mxu0
      %v8079 = vpop.f32.mrf.mxu0
      %v8080 = vadd.f32 %v7959, %v8079
      %v8081 = vpop.f32.mrf.mxu0
      %8082 = vmatprep.mubr.bf16.mxu0 0
      %8083 = vmatmul.mubr.bf16.gmra.mxu0 %v7025
      %v8084 = vpop.f32.mrf.mxu0
      %v8085 = vadd.f32 %v7964, %v8084
      %v8086 = vpop.f32.mrf.mxu0
      %v8087 = vpop.f32.mrf.mxu0
      %v8088 = vadd.f32 %v7967, %v8087
      %v8089 = vpop.f32.mrf.mxu0
      %8090 = vmatprep.mubr.bf16.mxu0 0
      %8091 = vmatmul.mubr.bf16.gmra.mxu0 %v7028
      %v8092 = vpop.f32.mrf.mxu0
      %v8093 = vadd.f32 %v7972, %v8092
      %v8094 = vpop.f32.mrf.mxu0
      %v8095 = vpop.f32.mrf.mxu0
      %v8096 = vadd.f32 %v7975, %v8095
      %v8097 = vpop.f32.mrf.mxu0
      %8098 = vmatprep.mubr.bf16.mxu0 0
      %8099 = vmatmul.mubr.bf16.gmra.mxu0 %v7031
      %v8100 = vpop.f32.mrf.mxu0
      %v8101 = vadd.f32 %v7980, %v8100
      %v8102 = vpop.f32.mrf.mxu0
      %v8103 = vpop.f32.mrf.mxu0
      %v8104 = vadd.f32 %v7983, %v8103
      %v8105 = vpop.f32.mrf.mxu0
      %8106 = vmatprep.mubr.bf16.mxu0 0
      %8107 = vmatmul.mubr.bf16.gmra.mxu0 %v7034
      %v8108 = vpop.f32.mrf.mxu0
      %v8109 = vadd.f32 %v7988, %v8108
      %v8110 = vpop.f32.mrf.mxu0
      %v8111 = vpop.f32.mrf.mxu0
      %v8112 = vadd.f32 %v7991, %v8111
      %v8113 = vpop.f32.mrf.mxu0
      %8114 = vmatprep.mubr.bf16.mxu0 0
      %8115 = vmatmul.mubr.bf16.gmra.mxu0 %v7037
      %v8116 = vpop.f32.mrf.mxu0
      %v8117 = vadd.f32 %v7996, %v8116
      %v8118 = vpop.f32.mrf.mxu0
      %v8119 = vpop.f32.mrf.mxu0
      %v8120 = vadd.f32 %v7999, %v8119
      %v8121 = vpop.f32.mrf.mxu0
      %8122 = vmatprep.mubr.bf16.mxu0 0
      %8123 = vmatmul.mubr.bf16.gmra.mxu0 %v7040
      %v8124 = vpop.f32.mrf.mxu0
      %v8125 = vadd.f32 %v8004, %v8124
      %v8126 = vpop.f32.mrf.mxu0
      %v8127 = vpop.f32.mrf.mxu0
      %v8128 = vadd.f32 %v8007, %v8127
      %v8129 = vpop.f32.mrf.mxu0
      %8130 = vdwg.mxu0
      %vm8131 = vcmask 400384
      %v8132 = vsel %vm8131, %v8045, 0.0
      %8133 = vadd.xlane.f32.xlu0 %v8132
      %v8134 = vpop.xlane.xlu0 %8133
      %v8135 = vsel %vm8131, %v8048, 0.0
      %8136 = vadd.xlane.f32.xlu0 %v8135
      %v8137 = vpop.xlane.xlu0 %8136
      %v8138 = vsel %vm8131, %v8053, 0.0
      %8139 = vadd.xlane.f32.xlu0 %v8138
      %v8140 = vpop.xlane.xlu0 %8139
      %v8141 = vsel %vm8131, %v8056, 0.0
      %8142 = vadd.xlane.f32.xlu0 %v8141
      %v8143 = vpop.xlane.xlu0 %8142
      %v8144 = vsel %vm8131, %v8061, 0.0
      %8145 = vadd.xlane.f32.xlu0 %v8144
      %v8146 = vpop.xlane.xlu0 %8145
      %v8147 = vsel %vm8131, %v8064, 0.0
      %8148 = vadd.xlane.f32.xlu0 %v8147
      %v8149 = vpop.xlane.xlu0 %8148
      %v8150 = vsel %vm8131, %v8069, 0.0
      %8151 = vadd.xlane.f32.xlu0 %v8150
      %v8152 = vpop.xlane.xlu0 %8151
      %v8153 = vsel %vm8131, %v8072, 0.0
      %8154 = vadd.xlane.f32.xlu0 %v8153
      %v8155 = vpop.xlane.xlu0 %8154
      %v8156 = vsel %vm8131, %v8077, 0.0
      %8157 = vadd.xlane.f32.xlu0 %v8156
      %v8158 = vpop.xlane.xlu0 %8157
      %v8159 = vsel %vm8131, %v8080, 0.0
      %8160 = vadd.xlane.f32.xlu0 %v8159
      %v8161 = vpop.xlane.xlu0 %8160
      %v8162 = vsel %vm8131, %v8085, 0.0
      %8163 = vadd.xlane.f32.xlu0 %v8162
      %v8164 = vpop.xlane.xlu0 %8163
      %v8165 = vsel %vm8131, %v8088, 0.0
      %8166 = vadd.xlane.f32.xlu0 %v8165
      %v8167 = vpop.xlane.xlu0 %8166
      %v8168 = vsel %vm8131, %v8093, 0.0
      %8169 = vadd.xlane.f32.xlu0 %v8168
      %v8170 = vpop.xlane.xlu0 %8169
      %v8171 = vsel %vm8131, %v8096, 0.0
      %8172 = vadd.xlane.f32.xlu0 %v8171
      %v8173 = vpop.xlane.xlu0 %8172
      %v8174 = vsel %vm8131, %v8101, 0.0
      %8175 = vadd.xlane.f32.xlu0 %v8174
      %v8176 = vpop.xlane.xlu0 %8175
      %v8177 = vsel %vm8131, %v8104, 0.0
      %8178 = vadd.xlane.f32.xlu0 %v8177
      %v8179 = vpop.xlane.xlu0 %8178
      %v8180 = vsel %vm8131, %v8109, 0.0
      %8181 = vadd.xlane.f32.xlu0 %v8180
      %v8182 = vpop.xlane.xlu0 %8181
      %v8183 = vsel %vm8131, %v8112, 0.0
      %8184 = vadd.xlane.f32.xlu0 %v8183
      %v8185 = vpop.xlane.xlu0 %8184
      %v8186 = vsel %vm8131, %v8117, 0.0
      %8187 = vadd.xlane.f32.xlu0 %v8186
      %v8188 = vpop.xlane.xlu0 %8187
      %v8189 = vsel %vm8131, %v8120, 0.0
      %8190 = vadd.xlane.f32.xlu0 %v8189
      %v8191 = vpop.xlane.xlu0 %8190
      %v8192 = vsel %vm8131, %v8125, 0.0
      %8193 = vadd.xlane.f32.xlu0 %v8192
      %v8194 = vpop.xlane.xlu0 %8193
      %vm8195 = vcmask 396288
      %v8196 = vsel %vm8195, %v8128, 0.0
      %8197 = vadd.xlane.f32.xlu0 %v8196
      %v8198 = vpop.xlane.xlu0 %8197
      %v8199 = vmul.f32 %v8134, 0.020408163
      %v8200 = vmul.f32 %v8137, 0.020408163
      %v8201 = vmul.f32 %v8140, 0.020408163
      %v8202 = vmul.f32 %v8143, 0.020408163
      %v8203 = vmul.f32 %v8146, 0.020408163
      %v8204 = vmul.f32 %v8149, 0.020408163
      %v8205 = vmul.f32 %v8152, 0.020408163
      %v8206 = vmul.f32 %v8155, 0.020408163
      %v8207 = vmul.f32 %v8158, 0.020408163
      %v8208 = vmul.f32 %v8161, 0.020408163
      %v8209 = vmul.f32 %v8164, 0.020408163
      %v8210 = vmul.f32 %v8167, 0.020408163
      %v8211 = vmul.f32 %v8170, 0.020408163
      %v8212 = vmul.f32 %v8173, 0.020408163
      %v8213 = vmul.f32 %v8176, 0.020408163
      %v8214 = vmul.f32 %v8179, 0.020408163
      %v8215 = vmul.f32 %v8182, 0.020408163
      %v8216 = vmul.f32 %v8185, 0.020408163
      %v8217 = vmul.f32 %v8188, 0.020408163
      %v8218 = vmul.f32 %v8191, 0.020408163
      %v8219 = vmul.f32 %v8194, 0.020408163
      %v8220 = vmul.f32 %v8198, 0.020408163
      %v8221 = vsub.f32 %v8045, %v8199
      %v8222 = vsub.f32 %v8048, %v8200
      %v8223 = vsub.f32 %v8053, %v8201
      %v8224 = vsub.f32 %v8056, %v8202
      %v8225 = vsub.f32 %v8061, %v8203
      %v8226 = vsub.f32 %v8064, %v8204
      %v8227 = vsub.f32 %v8069, %v8205
      %v8228 = vsub.f32 %v8072, %v8206
      %v8229 = vsub.f32 %v8077, %v8207
      %v8230 = vsub.f32 %v8080, %v8208
      %v8231 = vsub.f32 %v8085, %v8209
      %v8232 = vsub.f32 %v8088, %v8210
      %v8233 = vsub.f32 %v8093, %v8211
      %v8234 = vsub.f32 %v8096, %v8212
      %v8235 = vsub.f32 %v8101, %v8213
      %v8236 = vsub.f32 %v8104, %v8214
      %v8237 = vsub.f32 %v8109, %v8215
      %v8238 = vsub.f32 %v8112, %v8216
      %v8239 = vsub.f32 %v8117, %v8217
      %v8240 = vsub.f32 %v8120, %v8218
      %v8241 = vsub.f32 %v8125, %v8219
      %v8242 = vsub.f32 %v8128, %v8220
      %v8243 = vmul.f32 %v8221, %v8221
      %v8244 = vmul.f32 %v8222, %v8222
      %v8245 = vmul.f32 %v8223, %v8223
      %v8246 = vmul.f32 %v8224, %v8224
      %v8247 = vmul.f32 %v8225, %v8225
      %v8248 = vmul.f32 %v8226, %v8226
      %v8249 = vmul.f32 %v8227, %v8227
      %v8250 = vmul.f32 %v8228, %v8228
      %v8251 = vmul.f32 %v8229, %v8229
      %v8252 = vmul.f32 %v8230, %v8230
      %v8253 = vmul.f32 %v8231, %v8231
      %v8254 = vmul.f32 %v8232, %v8232
      %v8255 = vmul.f32 %v8233, %v8233
      %v8256 = vmul.f32 %v8234, %v8234
      %v8257 = vmul.f32 %v8235, %v8235
      %v8258 = vmul.f32 %v8236, %v8236
      %v8259 = vmul.f32 %v8237, %v8237
      %v8260 = vmul.f32 %v8238, %v8238
      %v8261 = vmul.f32 %v8239, %v8239
      %v8262 = vmul.f32 %v8240, %v8240
      %v8263 = vmul.f32 %v8241, %v8241
      %v8264 = vmul.f32 %v8242, %v8242
      %v8265 = vsel %vm8131, %v8243, 0.0
      %8266 = vadd.xlane.f32.xlu0 %v8265
      %v8267 = vpop.xlane.xlu0 %8266
      %v8268 = vsel %vm8131, %v8244, 0.0
      %8269 = vadd.xlane.f32.xlu0 %v8268
      %v8270 = vpop.xlane.xlu0 %8269
      %v8271 = vsel %vm8131, %v8245, 0.0
      %8272 = vadd.xlane.f32.xlu0 %v8271
      %v8273 = vpop.xlane.xlu0 %8272
      %v8274 = vsel %vm8131, %v8246, 0.0
      %8275 = vadd.xlane.f32.xlu0 %v8274
      %v8276 = vpop.xlane.xlu0 %8275
      %v8277 = vsel %vm8131, %v8247, 0.0
      %8278 = vadd.xlane.f32.xlu0 %v8277
      %v8279 = vpop.xlane.xlu0 %8278
      %v8280 = vsel %vm8131, %v8248, 0.0
      %8281 = vadd.xlane.f32.xlu0 %v8280
      %v8282 = vpop.xlane.xlu0 %8281
      %v8283 = vsel %vm8131, %v8249, 0.0
      %8284 = vadd.xlane.f32.xlu0 %v8283
      %v8285 = vpop.xlane.xlu0 %8284
      %v8286 = vsel %vm8131, %v8250, 0.0
      %8287 = vadd.xlane.f32.xlu0 %v8286
      %v8288 = vpop.xlane.xlu0 %8287
      %v8289 = vsel %vm8131, %v8251, 0.0
      %8290 = vadd.xlane.f32.xlu0 %v8289
      %v8291 = vpop.xlane.xlu0 %8290
      %v8292 = vsel %vm8131, %v8252, 0.0
      %8293 = vadd.xlane.f32.xlu0 %v8292
      %v8294 = vpop.xlane.xlu0 %8293
      %v8295 = vsel %vm8131, %v8253, 0.0
      %8296 = vadd.xlane.f32.xlu0 %v8295
      %v8297 = vpop.xlane.xlu0 %8296
      %v8298 = vsel %vm8131, %v8254, 0.0
      %8299 = vadd.xlane.f32.xlu0 %v8298
      %v8300 = vpop.xlane.xlu0 %8299
      %v8301 = vsel %vm8131, %v8255, 0.0
      %8302 = vadd.xlane.f32.xlu0 %v8301
      %v8303 = vpop.xlane.xlu0 %8302
      %v8304 = vsel %vm8131, %v8256, 0.0
      %8305 = vadd.xlane.f32.xlu0 %v8304
      %v8306 = vpop.xlane.xlu0 %8305
      %v8307 = vsel %vm8131, %v8257, 0.0
      %8308 = vadd.xlane.f32.xlu0 %v8307
      %v8309 = vpop.xlane.xlu0 %8308
      %v8310 = vsel %vm8131, %v8258, 0.0
      %8311 = vadd.xlane.f32.xlu0 %v8310
      %v8312 = vpop.xlane.xlu0 %8311
      %v8313 = vsel %vm8131, %v8259, 0.0
      %8314 = vadd.xlane.f32.xlu0 %v8313
      %v8315 = vpop.xlane.xlu0 %8314
      %v8316 = vsel %vm8131, %v8260, 0.0
      %8317 = vadd.xlane.f32.xlu0 %v8316
      %v8318 = vpop.xlane.xlu0 %8317
      %v8319 = vsel %vm8131, %v8261, 0.0
      %8320 = vadd.xlane.f32.xlu0 %v8319
      %v8321 = vpop.xlane.xlu0 %8320
      %v8322 = vsel %vm8131, %v8262, 0.0
      %8323 = vadd.xlane.f32.xlu0 %v8322
      %v8324 = vpop.xlane.xlu0 %8323
      %v8325 = vsel %vm8131, %v8263, 0.0
      %8326 = vadd.xlane.f32.xlu0 %v8325
      %v8327 = vpop.xlane.xlu0 %8326
      %v8328 = vsel %vm8195, %v8264, 0.0
      %8329 = vadd.xlane.f32.xlu0 %v8328
      %v8330 = vpop.xlane.xlu0 %8329
      %v8331 = vmul.f32 %v8267, 0.020408163
      %v8332 = vmul.f32 %v8270, 0.020408163
      %v8333 = vmul.f32 %v8273, 0.020408163
      %v8334 = vmul.f32 %v8276, 0.020408163
      %v8335 = vmul.f32 %v8279, 0.020408163
      %v8336 = vmul.f32 %v8282, 0.020408163
      %v8337 = vmul.f32 %v8285, 0.020408163
      %v8338 = vmul.f32 %v8288, 0.020408163
      %v8339 = vmul.f32 %v8291, 0.020408163
      %v8340 = vmul.f32 %v8294, 0.020408163
      %v8341 = vmul.f32 %v8297, 0.020408163
      %v8342 = vmul.f32 %v8300, 0.020408163
      %v8343 = vmul.f32 %v8303, 0.020408163
      %v8344 = vmul.f32 %v8306, 0.020408163
      %v8345 = vmul.f32 %v8309, 0.020408163
      %v8346 = vmul.f32 %v8312, 0.020408163
      %v8347 = vmul.f32 %v8315, 0.020408163
      %v8348 = vmul.f32 %v8318, 0.020408163
      %v8349 = vmul.f32 %v8321, 0.020408163
      %v8350 = vmul.f32 %v8324, 0.020408163
      %v8351 = vmul.f32 %v8327, 0.020408163
      %v8352 = vmul.f32 %v8330, 0.020408163
      %v8353 = vadd.f32 %v8331, 0.001
      %v8354 = vadd.f32 %v8332, 0.001
      %v8355 = vadd.f32 %v8333, 0.001
      %v8356 = vadd.f32 %v8334, 0.001
      %v8357 = vadd.f32 %v8335, 0.001
      %v8358 = vadd.f32 %v8336, 0.001
      %v8359 = vadd.f32 %v8337, 0.001
      %v8360 = vadd.f32 %v8338, 0.001
      %v8361 = vadd.f32 %v8339, 0.001
      %v8362 = vadd.f32 %v8340, 0.001
      %v8363 = vadd.f32 %v8341, 0.001
      %v8364 = vadd.f32 %v8342, 0.001
      %v8365 = vadd.f32 %v8343, 0.001
      %v8366 = vadd.f32 %v8344, 0.001
      %v8367 = vadd.f32 %v8345, 0.001
      %v8368 = vadd.f32 %v8346, 0.001
      %v8369 = vadd.f32 %v8347, 0.001
      %v8370 = vadd.f32 %v8348, 0.001
      %v8371 = vadd.f32 %v8349, 0.001
      %v8372 = vadd.f32 %v8350, 0.001
      %v8373 = vadd.f32 %v8351, 0.001
      %v8374 = vadd.f32 %v8352, 0.001
      %v8375 = vrsqrt.pop %v8353
      %v8376 = vrsqrt.pop %v8354
      %v8377 = vrsqrt.pop %v8355
      %v8378 = vrsqrt.pop %v8356
      %v8379 = vrsqrt.pop %v8357
      %v8380 = vrsqrt.pop %v8358
      %v8381 = vrsqrt.pop %v8359
      %v8382 = vrsqrt.pop %v8360
      %v8383 = vrsqrt.pop %v8361
      %v8384 = vrsqrt.pop %v8362
      %v8385 = vrsqrt.pop %v8363
      %v8386 = vrsqrt.pop %v8364
      %v8387 = vrsqrt.pop %v8365
      %v8388 = vrsqrt.pop %v8366
      %v8389 = vrsqrt.pop %v8367
      %v8390 = vrsqrt.pop %v8368
      %v8391 = vrsqrt.pop %v8369
      %v8392 = vrsqrt.pop %v8370
      %v8393 = vrsqrt.pop %v8371
      %v8394 = vrsqrt.pop %v8372
      %v8395 = vrsqrt.pop %v8373
      %v8396 = vrsqrt.pop %v8374
      %v8397 = vld [vmem:[%s308] sm:$0xff]
      %v8398 = vld [vmem:[%s308 + $0x8] sm:$0xff]
      %v8399 = vld [vmem:[%s308 + $0x10] sm:$0xff]
      %v8400 = vld [vmem:[%s308 + $0x18] sm:$0xff]
      %v8401 = vld [vmem:[%s308 + $0x20] sm:$0xff]
      %v8402 = vld [vmem:[%s308 + $0x28] sm:$0xff]
      %v8403 = vld [vmem:[%s308 + $0x30] sm:$0xff]
      %v8404 = vld [vmem:[%s308 + $0x38] sm:$0xff]
      %v8405 = vld [vmem:[%s308 + $0x40] sm:$0xff]
      %v8406 = vld [vmem:[%s308 + $0x48] sm:$0xff]
      %v8407 = vld [vmem:[%s308 + $0x50] sm:$0xff]
      %v8408 = vld [vmem:[%s308 + $0x58] sm:$0xff]
      %v8409 = vld [vmem:[%s308 + $0x60] sm:$0xff]
      %v8410 = vld [vmem:[%s308 + $0x68] sm:$0xff]
      %v8411 = vld [vmem:[%s308 + $0x70] sm:$0xff]
      %v8412 = vld [vmem:[%s308 + $0x78] sm:$0xff]
      %v8413 = vld [vmem:[%s308 + $0x80] sm:$0xff]
      %v8414 = vld [vmem:[%s308 + $0x88] sm:$0xff]
      %v8415 = vld [vmem:[%s308 + $0x90] sm:$0xff]
      %v8416 = vld [vmem:[%s308 + $0x98] sm:$0xff]
      %v8417 = vld [vmem:[%s308 + $0xa0] sm:$0xff]
      %v8418 = vld [vmem:[%s308 + $0xa8] sm:$0xf]
      %v8419 = vmul.f32 %v8375, %v8397
      %v8420 = vmul.f32 %v8376, %v8398
      %v8421 = vmul.f32 %v8377, %v8399
      %v8422 = vmul.f32 %v8378, %v8400
      %v8423 = vmul.f32 %v8379, %v8401
      %v8424 = vmul.f32 %v8380, %v8402
      %v8425 = vmul.f32 %v8381, %v8403
      %v8426 = vmul.f32 %v8382, %v8404
      %v8427 = vmul.f32 %v8383, %v8405
      %v8428 = vmul.f32 %v8384, %v8406
      %v8429 = vmul.f32 %v8385, %v8407
      %v8430 = vmul.f32 %v8386, %v8408
      %v8431 = vmul.f32 %v8387, %v8409
      %v8432 = vmul.f32 %v8388, %v8410
      %v8433 = vmul.f32 %v8389, %v8411
      %v8434 = vmul.f32 %v8390, %v8412
      %v8435 = vmul.f32 %v8391, %v8413
      %v8436 = vmul.f32 %v8392, %v8414
      %v8437 = vmul.f32 %v8393, %v8415
      %v8438 = vmul.f32 %v8394, %v8416
      %v8439 = vmul.f32 %v8395, %v8417
      %v8440 = vmul.f32 %v8396, %v8418
      %8442 = vset.pattern.permute.xlu0 0
      %8443 = vperm.xlu0 %8442, %v8419
      %v8444 = vpop.permute.xlu0 %8443
      %8447 = vset.pattern.permute.xlu0 0
      %8448 = vperm.xlu0 %8447, %v8420
      %v8449 = vpop.permute.xlu0 %8448
      %8452 = vset.pattern.permute.xlu0 0
      %8453 = vperm.xlu0 %8452, %v8421
      %v8454 = vpop.permute.xlu0 %8453
      %8457 = vset.pattern.permute.xlu0 0
      %8458 = vperm.xlu0 %8457, %v8422
      %v8459 = vpop.permute.xlu0 %8458
      %8462 = vset.pattern.permute.xlu0 0
      %8463 = vperm.xlu0 %8462, %v8423
      %v8464 = vpop.permute.xlu0 %8463
      %8467 = vset.pattern.permute.xlu0 0
      %8468 = vperm.xlu0 %8467, %v8424
      %v8469 = vpop.permute.xlu0 %8468
      %8472 = vset.pattern.permute.xlu0 0
      %8473 = vperm.xlu0 %8472, %v8425
      %v8474 = vpop.permute.xlu0 %8473
      %8477 = vset.pattern.permute.xlu0 0
      %8478 = vperm.xlu0 %8477, %v8426
      %v8479 = vpop.permute.xlu0 %8478
      %8482 = vset.pattern.permute.xlu0 0
      %8483 = vperm.xlu0 %8482, %v8427
      %v8484 = vpop.permute.xlu0 %8483
      %8487 = vset.pattern.permute.xlu0 0
      %8488 = vperm.xlu0 %8487, %v8428
      %v8489 = vpop.permute.xlu0 %8488
      %8492 = vset.pattern.permute.xlu0 0
      %8493 = vperm.xlu0 %8492, %v8429
      %v8494 = vpop.permute.xlu0 %8493
      %8497 = vset.pattern.permute.xlu0 0
      %8498 = vperm.xlu0 %8497, %v8430
      %v8499 = vpop.permute.xlu0 %8498
      %8502 = vset.pattern.permute.xlu0 0
      %8503 = vperm.xlu0 %8502, %v8431
      %v8504 = vpop.permute.xlu0 %8503
      %8507 = vset.pattern.permute.xlu0 0
      %8508 = vperm.xlu0 %8507, %v8432
      %v8509 = vpop.permute.xlu0 %8508
      %8512 = vset.pattern.permute.xlu0 0
      %8513 = vperm.xlu0 %8512, %v8433
      %v8514 = vpop.permute.xlu0 %8513
      %8517 = vset.pattern.permute.xlu0 0
      %8518 = vperm.xlu0 %8517, %v8434
      %v8519 = vpop.permute.xlu0 %8518
      %8522 = vset.pattern.permute.xlu0 0
      %8523 = vperm.xlu0 %8522, %v8435
      %v8524 = vpop.permute.xlu0 %8523
      %8527 = vset.pattern.permute.xlu0 0
      %8528 = vperm.xlu0 %8527, %v8436
      %v8529 = vpop.permute.xlu0 %8528
      %8532 = vset.pattern.permute.xlu0 0
      %8533 = vperm.xlu0 %8532, %v8437
      %v8534 = vpop.permute.xlu0 %8533
      %8537 = vset.pattern.permute.xlu0 0
      %8538 = vperm.xlu0 %8537, %v8438
      %v8539 = vpop.permute.xlu0 %8538
      %8542 = vset.pattern.permute.xlu0 0
      %8543 = vperm.xlu0 %8542, %v8439
      %v8544 = vpop.permute.xlu0 %8543
      %8547 = vset.pattern.permute.xlu0 0
      %8548 = vperm.xlu0 %8547, %v8440
      %v8549 = vpop.permute.xlu0 %8548
      %v8551 = vmul.f32 %v8221, %v8444
      %v8552 = vmul.f32 %v8222, %v8449
      %v8553 = vmul.f32 %v8223, %v8454
      %v8554 = vmul.f32 %v8224, %v8459
      %v8555 = vmul.f32 %v8225, %v8464
      %v8556 = vmul.f32 %v8226, %v8469
      %v8557 = vmul.f32 %v8227, %v8474
      %v8558 = vmul.f32 %v8228, %v8479
      %v8559 = vmul.f32 %v8229, %v8484
      %v8560 = vmul.f32 %v8230, %v8489
      %v8561 = vmul.f32 %v8231, %v8494
      %v8562 = vmul.f32 %v8232, %v8499
      %v8563 = vmul.f32 %v8233, %v8504
      %v8564 = vmul.f32 %v8234, %v8509
      %v8565 = vmul.f32 %v8235, %v8514
      %v8566 = vmul.f32 %v8236, %v8519
      %v8567 = vmul.f32 %v8237, %v8524
      %v8568 = vmul.f32 %v8238, %v8529
      %v8569 = vmul.f32 %v8239, %v8534
      %v8570 = vmul.f32 %v8240, %v8539
      %v8571 = vmul.f32 %v8241, %v8544
      %v8572 = vmul.f32 %v8242, %v8549
      %v8573 = vld [vmem:[%s313] sm:$0xff]
      %v8574 = vld [vmem:[%s313 + $0x8] sm:$0xff]
      %v8575 = vld [vmem:[%s313 + $0x10] sm:$0xff]
      %v8576 = vld [vmem:[%s313 + $0x18] sm:$0xff]
      %v8577 = vld [vmem:[%s313 + $0x20] sm:$0xff]
      %v8578 = vld [vmem:[%s313 + $0x28] sm:$0xff]
      %v8579 = vld [vmem:[%s313 + $0x30] sm:$0xff]
      %v8580 = vld [vmem:[%s313 + $0x38] sm:$0xff]
      %v8581 = vld [vmem:[%s313 + $0x40] sm:$0xff]
      %v8582 = vld [vmem:[%s313 + $0x48] sm:$0xff]
      %v8583 = vld [vmem:[%s313 + $0x50] sm:$0xff]
      %v8584 = vld [vmem:[%s313 + $0x58] sm:$0xff]
      %v8585 = vld [vmem:[%s313 + $0x60] sm:$0xff]
      %v8586 = vld [vmem:[%s313 + $0x68] sm:$0xff]
      %v8587 = vld [vmem:[%s313 + $0x70] sm:$0xff]
      %v8588 = vld [vmem:[%s313 + $0x78] sm:$0xff]
      %v8589 = vld [vmem:[%s313 + $0x80] sm:$0xff]
      %v8590 = vld [vmem:[%s313 + $0x88] sm:$0xff]
      %v8591 = vld [vmem:[%s313 + $0x90] sm:$0xff]
      %v8592 = vld [vmem:[%s313 + $0x98] sm:$0xff]
      %v8593 = vld [vmem:[%s313 + $0xa0] sm:$0xff]
      %v8594 = vld [vmem:[%s313 + $0xa8] sm:$0xf]
      %8596 = vset.pattern.permute.xlu0 0
      %8597 = vperm.xlu0 %8596, %v8573
      %v8598 = vpop.permute.xlu0 %8597
      %8601 = vset.pattern.permute.xlu0 0
      %8602 = vperm.xlu0 %8601, %v8574
      %v8603 = vpop.permute.xlu0 %8602
      %8606 = vset.pattern.permute.xlu0 0
      %8607 = vperm.xlu0 %8606, %v8575
      %v8608 = vpop.permute.xlu0 %8607
      %8611 = vset.pattern.permute.xlu0 0
      %8612 = vperm.xlu0 %8611, %v8576
      %v8613 = vpop.permute.xlu0 %8612
      %8616 = vset.pattern.permute.xlu0 0
      %8617 = vperm.xlu0 %8616, %v8577
      %v8618 = vpop.permute.xlu0 %8617
      %8621 = vset.pattern.permute.xlu0 0
      %8622 = vperm.xlu0 %8621, %v8578
      %v8623 = vpop.permute.xlu0 %8622
      %8626 = vset.pattern.permute.xlu0 0
      %8627 = vperm.xlu0 %8626, %v8579
      %v8628 = vpop.permute.xlu0 %8627
      %8631 = vset.pattern.permute.xlu0 0
      %8632 = vperm.xlu0 %8631, %v8580
      %v8633 = vpop.permute.xlu0 %8632
      %8636 = vset.pattern.permute.xlu0 0
      %8637 = vperm.xlu0 %8636, %v8581
      %v8638 = vpop.permute.xlu0 %8637
      %8641 = vset.pattern.permute.xlu0 0
      %8642 = vperm.xlu0 %8641, %v8582
      %v8643 = vpop.permute.xlu0 %8642
      %8646 = vset.pattern.permute.xlu0 0
      %8647 = vperm.xlu0 %8646, %v8583
      %v8648 = vpop.permute.xlu0 %8647
      %8651 = vset.pattern.permute.xlu0 0
      %8652 = vperm.xlu0 %8651, %v8584
      %v8653 = vpop.permute.xlu0 %8652
      %8656 = vset.pattern.permute.xlu0 0
      %8657 = vperm.xlu0 %8656, %v8585
      %v8658 = vpop.permute.xlu0 %8657
      %8661 = vset.pattern.permute.xlu0 0
      %8662 = vperm.xlu0 %8661, %v8586
      %v8663 = vpop.permute.xlu0 %8662
      %8666 = vset.pattern.permute.xlu0 0
      %8667 = vperm.xlu0 %8666, %v8587
      %v8668 = vpop.permute.xlu0 %8667
      %8671 = vset.pattern.permute.xlu0 0
      %8672 = vperm.xlu0 %8671, %v8588
      %v8673 = vpop.permute.xlu0 %8672
      %8676 = vset.pattern.permute.xlu0 0
      %8677 = vperm.xlu0 %8676, %v8589
      %v8678 = vpop.permute.xlu0 %8677
      %8681 = vset.pattern.permute.xlu0 0
      %8682 = vperm.xlu0 %8681, %v8590
      %v8683 = vpop.permute.xlu0 %8682
      %8686 = vset.pattern.permute.xlu0 0
      %8687 = vperm.xlu0 %8686, %v8591
      %v8688 = vpop.permute.xlu0 %8687
      %8691 = vset.pattern.permute.xlu0 0
      %8692 = vperm.xlu0 %8691, %v8592
      %v8693 = vpop.permute.xlu0 %8692
      %8696 = vset.pattern.permute.xlu0 0
      %8697 = vperm.xlu0 %8696, %v8593
      %v8698 = vpop.permute.xlu0 %8697
      %8701 = vset.pattern.permute.xlu0 0
      %8702 = vperm.xlu0 %8701, %v8594
      %v8703 = vpop.permute.xlu0 %8702
      %v8705 = vadd.f32 %v8551, %v8598
      %v8706 = vadd.f32 %v8552, %v8603
      %v8707 = vadd.f32 %v8553, %v8608
      %v8708 = vadd.f32 %v8554, %v8613
      %v8709 = vadd.f32 %v8555, %v8618
      %v8710 = vadd.f32 %v8556, %v8623
      %v8711 = vadd.f32 %v8557, %v8628
      %v8712 = vadd.f32 %v8558, %v8633
      %v8713 = vadd.f32 %v8559, %v8638
      %v8714 = vadd.f32 %v8560, %v8643
      %v8715 = vadd.f32 %v8561, %v8648
      %v8716 = vadd.f32 %v8562, %v8653
      %v8717 = vadd.f32 %v8563, %v8658
      %v8718 = vadd.f32 %v8564, %v8663
      %v8719 = vadd.f32 %v8565, %v8668
      %v8720 = vadd.f32 %v8566, %v8673
      %v8721 = vadd.f32 %v8567, %v8678
      %v8722 = vadd.f32 %v8568, %v8683
      %v8723 = vadd.f32 %v8569, %v8688
      %v8724 = vadd.f32 %v8570, %v8693
      %v8725 = vadd.f32 %v8571, %v8698
      %v8726 = vadd.f32 %v8572, %v8703
      %8727 = vst.msk [vmem:[%s318] sm:$0xff] %vm8131, %v8705
      %8728 = vst.msk [vmem:[%s318 + $0x8] sm:$0xff] %vm8131, %v8706
      %8729 = vst.msk [vmem:[%s318 + $0x10] sm:$0xff] %vm8131, %v8707
      %8730 = vst.msk [vmem:[%s318 + $0x18] sm:$0xff] %vm8131, %v8708
      %8731 = vst.msk [vmem:[%s318 + $0x20] sm:$0xff] %vm8131, %v8709
      %8732 = vst.msk [vmem:[%s318 + $0x28] sm:$0xff] %vm8131, %v8710
      %8733 = vst.msk [vmem:[%s318 + $0x30] sm:$0xff] %vm8131, %v8711
      %8734 = vst.msk [vmem:[%s318 + $0x38] sm:$0xff] %vm8131, %v8712
      %8735 = vst.msk [vmem:[%s318 + $0x40] sm:$0xff] %vm8131, %v8713
      %8736 = vst.msk [vmem:[%s318 + $0x48] sm:$0xff] %vm8131, %v8714
      %8737 = vst.msk [vmem:[%s318 + $0x50] sm:$0xff] %vm8131, %v8715
      %8738 = vst.msk [vmem:[%s318 + $0x58] sm:$0xff] %vm8131, %v8716
      %8739 = vst.msk [vmem:[%s318 + $0x60] sm:$0xff] %vm8131, %v8717
      %8740 = vst.msk [vmem:[%s318 + $0x68] sm:$0xff] %vm8131, %v8718
      %8741 = vst.msk [vmem:[%s318 + $0x70] sm:$0xff] %vm8131, %v8719
      %8742 = vst.msk [vmem:[%s318 + $0x78] sm:$0xff] %vm8131, %v8720
      %8743 = vst.msk [vmem:[%s318 + $0x80] sm:$0xff] %vm8131, %v8721
      %8744 = vst.msk [vmem:[%s318 + $0x88] sm:$0xff] %vm8131, %v8722
      %8745 = vst.msk [vmem:[%s318 + $0x90] sm:$0xff] %vm8131, %v8723
      %8746 = vst.msk [vmem:[%s318 + $0x98] sm:$0xff] %vm8131, %v8724
      %8747 = vst.msk [vmem:[%s318 + $0xa0] sm:$0xff] %vm8131, %v8725
      %8748 = vst.msk [vmem:[%s318 + $0xa8] sm:$0xf] %vm8195, %v8726
      %p8749 = scmp.lt.s32.totalorder %s18, 1
      %s8750 = scalar_select %p8749, %s18, 1
      %s8751 = smul.addr %s8750, 22
      %s8752 = smul.addr %s8751, 8
      %s8753 = scalar_lea.vmem %s7, %s8752
      // Predicated region
      $region49: #{tpu_custom_call.1} parent=47 // pred_check
        %p8754 = pneg %p198
      $region50: #{tpu_custom_call.1} parent=47 // pred_check_branch
        %8756 = sbr.rel (%p8754) target = $region52
      $region51: #{tpu_custom_call.1} parent=47 // pred_region
        _
      $region52: #{tpu_custom_call.1} parent=47 // pred_fallthru
        _
    $region48: #{tpu_custom_call.1} parent=5 // pred_fallthru
      _
    %p8757 = scmp.le.s32.totalorder 2, %s13
    // Predicated region
    $region53: #{tpu_custom_call.1} parent=5 // pred_check
      %p8758 = pneg %p8757
    $region54: #{tpu_custom_call.1} parent=5 // pred_check_branch
      %8760 = sbr.rel (%p8758) target = $region56
    $region55: #{tpu_custom_call.1} parent=5 // pred_region
      %s8761 = ssub.s32 %s13, 2
      // Predicated region
      $region57: #{tpu_custom_call.1} parent=55 // pred_check
        %p8762 = pneg %p204
      $region58: #{tpu_custom_call.1} parent=55 // pred_check_branch
        %8764 = sbr.rel (%p8762) target = $region60
      $region59: #{tpu_custom_call.1} parent=55 // pred_region
        %p8765 = scmp.lt.s32.totalorder %s19, 1
        %s8766 = scalar_select %p8765, %s19, 1
        %s8767 = smul.addr %s8766, 22
        %s8768 = smul.addr %s8767, 8
        %s8769 = scalar_lea.vmem %s7, %s8768
      $region60: #{tpu_custom_call.1} parent=55 // pred_fallthru
        _
    $region56: #{tpu_custom_call.1} parent=5 // pred_fallthru
      _
  $region6: #{tpu_custom_call.1} parent=0 // loop_footer
    %s17 = sadd.s32 1, %s13
  $region7: #{tpu_custom_call.1} parent=0 // loop_footer_branch
    %12 = sbr.rel target = $region3
  $region8: #{tpu_custom_call.1} parent=0 // loop_exit
    _

</llo_original>
